<compile_context>
chip_gen: v7x
topology: tpu7x:2x2x1
jax: 0.10.0
libtpu: 0.0.40
codegen_flags: <defaults>
</compile_context>

<pallas_src>
import jax
import jax.numpy as jnp
from jax.experimental import pallas as pl
from jax.experimental.pallas import tpu as pltpu

NUM_CLASSES = 10
FC_PAD = 128      # final logits padded to a lane-dense 128-wide store
B_BLK_MAX = 128   # images per grid step (~8 MB VMEM at 128 -> fits default scoped VMEM on v5e/v6e/v7x)


# ----------------------------------------------------------------------------
# Fused kernel (one grid step = one block of B images)
# ----------------------------------------------------------------------------
def _make_kernel(*, W, M1, SP1, M2, Hp1, Wp1, Hp2, Wp2):
    def kernel(x_ref, w1_ref, b1_ref, w2_ref, b2_ref,
               fc1w_ref, fc1b_ref, fc2w_ref, fc2b_ref,
               o_ref, acc1_ref, pool1_ref, acc2_ref, fc1in_ref):
        B = x_ref.shape[0]
        Cin = x_ref.shape[-1]
        C1 = w1_ref.shape[-1]
        C2 = w2_ref.shape[-1]

        # ---- conv1: 9 shift-and-accumulate MXU matmuls, M = B * Ho1 * W ----
        # x rows are flat h*W + w; tap (i, j) is a contiguous row window.
        for t in range(9):
            i, j = divmod(t, 3)
            lhs = x_ref[:, pl.ds(i * W + j, M1), :].reshape(B * M1, Cin)
            r = jnp.dot(lhs, w1_ref[t],
                        preferred_element_type=jnp.float32).reshape(B, M1, C1)
            if t == 0:
                acc1_ref[...] = r
            else:
                acc1_ref[...] += r

        # ---- maxpool1 (2x2 / 2, floor) + bias + ReLU on the f32 acc,
        #      single cast to bf16 at the pooled write ----
        pool1_ref[...] = jnp.zeros_like(pool1_ref)   # pad rows deterministic
        for ph in range(Hp1):
            win = None
            for di in (0, 1):
                for dj in (0, 1):
                    v = acc1_ref[:, pl.ds((2 * ph + di) * W + dj, Wp1, stride=2), :]
                    win = v if win is None else jnp.maximum(win, v)
            pooled = jnp.maximum(win + b1_ref[...], 0.0)          # (B, Wp1, C1) f32
            pool1_ref[:, pl.ds(ph * SP1, Wp1), :] = pooled.astype(pool1_ref.dtype)

        # ---- conv2: same shift-and-accumulate structure, M = B * Ho2 * SP1 ----
        for t in range(9):
            i, j = divmod(t, 3)
            lhs = pool1_ref[:, pl.ds(i * SP1 + j, M2), :].reshape(B * M2, C1)
            r = jnp.dot(lhs, w2_ref[t],
                        preferred_element_type=jnp.float32).reshape(B, M2, C2)
            if t == 0:
                acc2_ref[...] = r
            else:
                acc2_ref[...] += r

        # ---- maxpool2 (floor: drops the odd last row/col) + bias + ReLU,
        #      assembled into the (B, Hp2*Wp2*C2) fc1 input slab.
        #      PyTorch's NCHW flatten order is folded into fc1w's rows. ----
        for p in range(Hp2 * Wp2):
            ph, pw = divmod(p, Wp2)
            win = None
            for di in (0, 1):
                for dj in (0, 1):
                    v = acc2_ref[:, (2 * ph + di) * SP1 + (2 * pw + dj), :]  # (B, C2)
                    win = v if win is None else jnp.maximum(win, v)
            pooled = jnp.maximum(win + b2_ref[...], 0.0)          # (B, C2) f32
            fc1in_ref[:, pl.ds(p * C2, C2)] = pooled.astype(fc1in_ref.dtype)

        # ---- fc1 + ReLU (one (B,256)x(256,128) matmul), fc2 (padded, lane-dense) ----
        h1 = jnp.dot(fc1in_ref[...], fc1w_ref[...],
                     preferred_element_type=jnp.float32)
        h1 = jnp.maximum(h1 + fc1b_ref[...], 0.0).astype(jnp.bfloat16)
        logits = jnp.dot(h1, fc2w_ref[...], preferred_element_type=jnp.float32)
        o_ref[...] = (logits + fc2b_ref[...]).astype(o_ref.dtype)

    return kernel


# ----------------------------------------------------------------------------
# Host-side: one fused, batch-blocked pallas_call for the whole forward
# ----------------------------------------------------------------------------
@jax.jit
def simple_cnn_forward(kp, x_nchw):
    N, Cin, H, W = x_nchw.shape
    C1 = kp["w1"].shape[-1]
    C2 = kp["w2"].shape[-1]
    Ho1, Wo1 = H - 2, W - 2              # conv1 valid output
    Hp1, Wp1 = Ho1 // 2, Wo1 // 2        # pool1 (floor)
    Ho2, Wo2 = Hp1 - 2, Wp1 - 2          # conv2 valid output
    Hp2, Wp2 = Ho2 // 2, Wo2 // 2        # pool2 (floor)
    assert kp["fc1w"].shape[0] == Hp2 * Wp2 * C2, "fc1 weight does not match geometry"

    S0 = (H + 1) * W      # flat input rows per image (padded so every tap window is in-bounds)
    M1 = Ho1 * W          # conv1 rows computed per image (cols >= Wo1 are ignored garbage)
    SP1 = W               # flat row stride of pool1 / conv2 layouts
    P1R = (Hp1 + 1) * SP1 # pool1 scratch rows (padded for conv2 tap windows)
    M2 = Ho2 * SP1        # conv2 rows computed per image

    # NCHW f32 -> bf16 (cast first), -> NHWC, -> flat (row = h*W + w), pad rows with zeros.
    x = jnp.transpose(x_nchw.astype(jnp.bfloat16), (0, 2, 3, 1)).reshape(N, H * W, Cin)
    x = jnp.pad(x, ((0, 0), (0, S0 - H * W), (0, 0)))

    # Batch blocking: B_blk images per grid step; pad the batch to a whole number of blocks.
    B_blk = min(N, B_BLK_MAX)
    n_blocks = pl.cdiv(N, B_blk)
    N_pad = n_blocks * B_blk
    if N_pad != N:
        x = jnp.pad(x, ((0, N_pad - N), (0, 0), (0, 0)))

    kernel = _make_kernel(W=W, M1=M1, SP1=SP1, M2=M2,
                          Hp1=Hp1, Wp1=Wp1, Hp2=Hp2, Wp2=Wp2)

    out = pl.pallas_call(
        kernel,
        out_shape=jax.ShapeDtypeStruct((N_pad, FC_PAD), jnp.float32),
        grid=(n_blocks,),
        in_specs=[
            pl.BlockSpec((B_blk, S0, Cin), lambda n: (n, 0, 0)),
            pl.BlockSpec(kp["w1"].shape, lambda n: (0, 0, 0)),
            pl.BlockSpec(kp["b1"].shape, lambda n: (0, 0)),
            pl.BlockSpec(kp["w2"].shape, lambda n: (0, 0, 0)),
            pl.BlockSpec(kp["b2"].shape, lambda n: (0, 0)),
            pl.BlockSpec(kp["fc1w"].shape, lambda n: (0, 0)),
            pl.BlockSpec(kp["fc1b"].shape, lambda n: (0, 0)),
            pl.BlockSpec(kp["fc2w"].shape, lambda n: (0, 0)),
            pl.BlockSpec(kp["fc2b"].shape, lambda n: (0, 0)),
        ],
        out_specs=pl.BlockSpec((B_blk, FC_PAD), lambda n: (n, 0)),
        scratch_shapes=[
            pltpu.VMEM((B_blk, M1, C1), jnp.float32),            # conv1 f32 accumulator
            pltpu.VMEM((B_blk, P1R, C1), jnp.bfloat16),          # pool1 activation (padded rows)
            pltpu.VMEM((B_blk, M2, C2), jnp.float32),            # conv2 f32 accumulator
            pltpu.VMEM((B_blk, Hp2 * Wp2 * C2), jnp.bfloat16),   # flattened fc1 input
        ],
        compiler_params=pltpu.CompilerParams(
            dimension_semantics=("parallel",)),
    )(x, kp["w1"], kp["b1"], kp["w2"], kp["b2"],
      kp["fc1w"], kp["fc1b"], kp["fc2w"], kp["fc2b"])
    return out[:N, :NUM_CLASSES]


# ----------------------------------------------------------------------------
# Parameters (PyTorch layout) and one-time kernel re-layout
# ----------------------------------------------------------------------------
def init_params(key, in_channels):
    ks = jax.random.split(key, 8)
    scale = 0.05
    return {
        "conv1_w": scale * jax.random.normal(ks[0], (32, in_channels, 3, 3), jnp.float32),
        "conv1_b": scale * jax.random.normal(ks[1], (32,), jnp.float32),
        "conv2_w": scale * jax.random.normal(ks[2], (64, 32, 3, 3), jnp.float32),
        "conv2_b": scale * jax.random.normal(ks[3], (64,), jnp.float32),
        # With input (N, 4, 16, 16): 16->14->7->5->2, flatten = 64*2*2 = 256
        "fc1_w": scale * jax.random.normal(ks[4], (128, 256), jnp.float32),
        "fc1_b": scale * jax.random.normal(ks[5], (128,), jnp.float32),
        "fc2_w": scale * jax.random.normal(ks[6], (10, 128), jnp.float32),
        "fc2_b": scale * jax.random.normal(ks[7], (10,), jnp.float32),
    }


def prepare_params(p):
    """One-time re-layout of the PyTorch weights into kernel layout (outside jit):
    conv (O,I,3,3)->(9,I,O); fc1 rows reordered so the kernel's (spatial, channel)
    flatten matches PyTorch's NCHW flatten; fc2 padded to FC_PAD output columns."""
    c1o, c1i = p["conv1_w"].shape[:2]
    c2o, c2i = p["conv2_w"].shape[:2]
    f1o, f1i = p["fc1_w"].shape
    f2o, f2i = p["fc2_w"].shape
    hp2 = wp2 = 2  # pool2 spatial size for the 16x16 input geometry
    assert f1i == c2o * hp2 * wp2

    # conv weight tap t = i*3 + j, entry [t][cin, cout]
    w1 = jnp.transpose(p["conv1_w"], (2, 3, 1, 0)).reshape(9, c1i, c1o)
    w2 = jnp.transpose(p["conv2_w"], (2, 3, 1, 0)).reshape(9, c2i, c2o)

    # PyTorch flatten index = c*(hp2*wp2) + ph*wp2 + pw ; kernel column = (ph*wp2+pw)*C2 + c
    fc1 = p["fc1_w"].reshape(f1o, c2o, hp2, wp2)
    fc1 = jnp.transpose(fc1, (2, 3, 1, 0)).reshape(hp2 * wp2 * c2o, f1o)

    fc2 = jnp.zeros((f2i, FC_PAD), jnp.float32).at[:, :f2o].set(p["fc2_w"].T)
    fc2b = jnp.zeros((1, FC_PAD), jnp.float32).at[0, :f2o].set(p["fc2_b"])

    return {
        "w1": w1.astype(jnp.bfloat16),
        "b1": p["conv1_b"].reshape(1, c1o).astype(jnp.float32),
        "w2": w2.astype(jnp.bfloat16),
        "b2": p["conv2_b"].reshape(1, c2o).astype(jnp.float32),
        "fc1w": fc1.astype(jnp.bfloat16),
        "fc1b": p["fc1_b"].reshape(1, f1o).astype(jnp.float32),
        "fc2w": fc2.astype(jnp.bfloat16),
        "fc2b": fc2b,
    }


if __name__ == "__main__":
    key = jax.random.PRNGKey(0)
    k_in, k_param = jax.random.split(key)

    batch, channels, spatial = 2, 4, 16
    x = jax.random.normal(k_in, (batch, channels, spatial, spatial), jnp.float32)

    params = init_params(k_param, in_channels=channels)
    kparams = prepare_params(params)  # one-time weight re-layout (outside jit)

    out = simple_cnn_forward(kparams, x)
    out = jax.block_until_ready(out)

    assert out.shape == (batch, NUM_CLASSES), out.shape
    assert out.dtype == jnp.float32
    print("KERNEL_OK")
</pallas_src>

<mosaic_0001>
module attributes {stable_mosaic.version = 11 : i64} {
  func.func @kernel(%arg0: i32, %arg1: memref<2x272x4xbf16, #tpu.memory_space<vmem>>, %arg2: memref<9x4x32xbf16, #tpu.memory_space<vmem>>, %arg3: memref<1x32xf32, #tpu.memory_space<vmem>>, %arg4: memref<9x32x64xbf16, #tpu.memory_space<vmem>>, %arg5: memref<1x64xf32, #tpu.memory_space<vmem>>, %arg6: memref<256x128xbf16, #tpu.memory_space<vmem>>, %arg7: memref<1x128xf32, #tpu.memory_space<vmem>>, %arg8: memref<128x128xbf16, #tpu.memory_space<vmem>>, %arg9: memref<1x128xf32, #tpu.memory_space<vmem>>, %arg10: memref<2x128xf32, #tpu.memory_space<vmem>>, %arg11: memref<2x224x32xf32, #tpu.memory_space<vmem>>, %arg12: memref<2x128x32xbf16, #tpu.memory_space<vmem>>, %arg13: memref<2x80x64xf32, #tpu.memory_space<vmem>>, %arg14: memref<2x256xbf16, #tpu.memory_space<vmem>>) attributes {dimension_semantics = [#tpu.dimension_semantics<parallel>], iteration_bounds = array<i64: 1>, scalar_prefetch = 0 : i64, scratch_operands = 4 : i64, tpu.core_type = #tpu.core_type<tc>, window_params = [{transform_indices = @transform_0, window_bounds = array<i64: 2, 272, 4>}, {pipeline_mode = #tpu.pipeline_mode<synchronous>, transform_indices = @transform_1, window_bounds = array<i64: 9, 4, 32>}, {pipeline_mode = #tpu.pipeline_mode<synchronous>, transform_indices = @transform_2, window_bounds = array<i64: 1, 32>}, {pipeline_mode = #tpu.pipeline_mode<synchronous>, transform_indices = @transform_3, window_bounds = array<i64: 9, 32, 64>}, {pipeline_mode = #tpu.pipeline_mode<synchronous>, transform_indices = @transform_4, window_bounds = array<i64: 1, 64>}, {pipeline_mode = #tpu.pipeline_mode<synchronous>, transform_indices = @transform_5, window_bounds = array<i64: 256, 128>}, {pipeline_mode = #tpu.pipeline_mode<synchronous>, transform_indices = @transform_6, window_bounds = array<i64: 1, 128>}, {pipeline_mode = #tpu.pipeline_mode<synchronous>, transform_indices = @transform_7, window_bounds = array<i64: 128, 128>}, {pipeline_mode = #tpu.pipeline_mode<synchronous>, transform_indices = @transform_8, window_bounds = array<i64: 1, 128>}, {transform_indices = @transform_9, window_bounds = array<i64: 2, 128>}]} {
    %c0 = arith.constant 0 : index
    %c0_0 = arith.constant 0 : index
    %c0_1 = arith.constant 0 : index
    %0 = vector.load %arg1[%c0, %c0_0, %c0_1] : memref<2x272x4xbf16, #tpu.memory_space<vmem>>, vector<2x224x4xbf16>
    %1 = vector.shape_cast %0 : vector<2x224x4xbf16> to vector<448x4xbf16>
    %c0_2 = arith.constant 0 : index
    %c0_3 = arith.constant 0 : index
    %c0_4 = arith.constant 0 : index
    %2 = vector.load %arg2[%c0_2, %c0_3, %c0_4] : memref<9x4x32xbf16, #tpu.memory_space<vmem>>, vector<1x4x32xbf16>
    %3 = vector.shape_cast %2 : vector<1x4x32xbf16> to vector<4x32xbf16>
    %cst = arith.constant dense<0.000000e+00> : vector<448x32xf32>
    %4 = tpu.matmul %1, %3, %cst {dimension_numbers = #tpu.dot_dimension_numbers<[1], [0], [0], [1], [0, 0, 1, 1], [], []>} : vector<448x4xbf16>, vector<4x32xbf16>, vector<448x32xf32> -> vector<448x32xf32>
    %5 = vector.shape_cast %4 : vector<448x32xf32> to vector<2x224x32xf32>
    %c0_5 = arith.constant 0 : index
    %c0_6 = arith.constant 0 : index
    %c0_7 = arith.constant 0 : index
    %6 = vector.load %arg11[%c0_5, %c0_6, %c0_7] : memref<2x224x32xf32, #tpu.memory_space<vmem>>, vector<2x224x32xf32>
    tpu.vector_store %arg11[%c0_5, %c0_6, %c0_7], %5 {strides = array<i32>} : memref<2x224x32xf32, #tpu.memory_space<vmem>>, vector<2x224x32xf32>,
    %c0_8 = arith.constant 0 : index
    %c1 = arith.constant 1 : index
    %c0_9 = arith.constant 0 : index
    %7 = vector.load %arg1[%c0_8, %c1, %c0_9] : memref<2x272x4xbf16, #tpu.memory_space<vmem>>, vector<2x224x4xbf16>
    %8 = vector.shape_cast %7 : vector<2x224x4xbf16> to vector<448x4xbf16>
    %c1_10 = arith.constant 1 : index
    %c0_11 = arith.constant 0 : index
    %c0_12 = arith.constant 0 : index
    %9 = vector.load %arg2[%c1_10, %c0_11, %c0_12] : memref<9x4x32xbf16, #tpu.memory_space<vmem>>, vector<1x4x32xbf16>
    %10 = vector.shape_cast %9 : vector<1x4x32xbf16> to vector<4x32xbf16>
    %cst_13 = arith.constant dense<0.000000e+00> : vector<448x32xf32>
    %11 = tpu.matmul %8, %10, %cst_13 {dimension_numbers = #tpu.dot_dimension_numbers<[1], [0], [0], [1], [0, 0, 1, 1], [], []>} : vector<448x4xbf16>, vector<4x32xbf16>, vector<448x32xf32> -> vector<448x32xf32>
    %12 = vector.shape_cast %11 : vector<448x32xf32> to vector<2x224x32xf32>
    %c0_14 = arith.constant 0 : index
    %c0_15 = arith.constant 0 : index
    %c0_16 = arith.constant 0 : index
    %13 = vector.load %arg11[%c0_14, %c0_15, %c0_16] : memref<2x224x32xf32, #tpu.memory_space<vmem>>, vector<2x224x32xf32>
    %14 = arith.addf %13, %12 : vector<2x224x32xf32>
    %c0_17 = arith.constant 0 : index
    %c0_18 = arith.constant 0 : index
    %c0_19 = arith.constant 0 : index
    %15 = vector.load %arg11[%c0_17, %c0_18, %c0_19] : memref<2x224x32xf32, #tpu.memory_space<vmem>>, vector<2x224x32xf32>
    tpu.vector_store %arg11[%c0_17, %c0_18, %c0_19], %14 {strides = array<i32>} : memref<2x224x32xf32, #tpu.memory_space<vmem>>, vector<2x224x32xf32>,
    %c0_20 = arith.constant 0 : index
    %c2 = arith.constant 2 : index
    %c0_21 = arith.constant 0 : index
    %16 = vector.load %arg1[%c0_20, %c2, %c0_21] : memref<2x272x4xbf16, #tpu.memory_space<vmem>>, vector<2x224x4xbf16>
    %17 = vector.shape_cast %16 : vector<2x224x4xbf16> to vector<448x4xbf16>
    %c2_22 = arith.constant 2 : index
    %c0_23 = arith.constant 0 : index
    %c0_24 = arith.constant 0 : index
    %18 = vector.load %arg2[%c2_22, %c0_23, %c0_24] : memref<9x4x32xbf16, #tpu.memory_space<vmem>>, vector<1x4x32xbf16>
    %19 = vector.shape_cast %18 : vector<1x4x32xbf16> to vector<4x32xbf16>
    %cst_25 = arith.constant dense<0.000000e+00> : vector<448x32xf32>
    %20 = tpu.matmul %17, %19, %cst_25 {dimension_numbers = #tpu.dot_dimension_numbers<[1], [0], [0], [1], [0, 0, 1, 1], [], []>} : vector<448x4xbf16>, vector<4x32xbf16>, vector<448x32xf32> -> vector<448x32xf32>
    %21 = vector.shape_cast %20 : vector<448x32xf32> to vector<2x224x32xf32>
    %c0_26 = arith.constant 0 : index
    %c0_27 = arith.constant 0 : index
    %c0_28 = arith.constant 0 : index
    %22 = vector.load %arg11[%c0_26, %c0_27, %c0_28] : memref<2x224x32xf32, #tpu.memory_space<vmem>>, vector<2x224x32xf32>
    %23 = arith.addf %22, %21 : vector<2x224x32xf32>
    %c0_29 = arith.constant 0 : index
    %c0_30 = arith.constant 0 : index
    %c0_31 = arith.constant 0 : index
    %24 = vector.load %arg11[%c0_29, %c0_30, %c0_31] : memref<2x224x32xf32, #tpu.memory_space<vmem>>, vector<2x224x32xf32>
    tpu.vector_store %arg11[%c0_29, %c0_30, %c0_31], %23 {strides = array<i32>} : memref<2x224x32xf32, #tpu.memory_space<vmem>>, vector<2x224x32xf32>,
    %c0_32 = arith.constant 0 : index
    %c16 = arith.constant 16 : index
    %c0_33 = arith.constant 0 : index
    %25 = vector.load %arg1[%c0_32, %c16, %c0_33] : memref<2x272x4xbf16, #tpu.memory_space<vmem>>, vector<2x224x4xbf16>
    %26 = vector.shape_cast %25 : vector<2x224x4xbf16> to vector<448x4xbf16>
    %c3 = arith.constant 3 : index
    %c0_34 = arith.constant 0 : index
    %c0_35 = arith.constant 0 : index
    %27 = vector.load %arg2[%c3, %c0_34, %c0_35] : memref<9x4x32xbf16, #tpu.memory_space<vmem>>, vector<1x4x32xbf16>
    %28 = vector.shape_cast %27 : vector<1x4x32xbf16> to vector<4x32xbf16>
    %cst_36 = arith.constant dense<0.000000e+00> : vector<448x32xf32>
    %29 = tpu.matmul %26, %28, %cst_36 {dimension_numbers = #tpu.dot_dimension_numbers<[1], [0], [0], [1], [0, 0, 1, 1], [], []>} : vector<448x4xbf16>, vector<4x32xbf16>, vector<448x32xf32> -> vector<448x32xf32>
    %30 = vector.shape_cast %29 : vector<448x32xf32> to vector<2x224x32xf32>
    %c0_37 = arith.constant 0 : index
    %c0_38 = arith.constant 0 : index
    %c0_39 = arith.constant 0 : index
    %31 = vector.load %arg11[%c0_37, %c0_38, %c0_39] : memref<2x224x32xf32, #tpu.memory_space<vmem>>, vector<2x224x32xf32>
    %32 = arith.addf %31, %30 : vector<2x224x32xf32>
    %c0_40 = arith.constant 0 : index
    %c0_41 = arith.constant 0 : index
    %c0_42 = arith.constant 0 : index
    %33 = vector.load %arg11[%c0_40, %c0_41, %c0_42] : memref<2x224x32xf32, #tpu.memory_space<vmem>>, vector<2x224x32xf32>
    tpu.vector_store %arg11[%c0_40, %c0_41, %c0_42], %32 {strides = array<i32>} : memref<2x224x32xf32, #tpu.memory_space<vmem>>, vector<2x224x32xf32>,
    %c0_43 = arith.constant 0 : index
    %c17 = arith.constant 17 : index
    %c0_44 = arith.constant 0 : index
    %34 = vector.load %arg1[%c0_43, %c17, %c0_44] : memref<2x272x4xbf16, #tpu.memory_space<vmem>>, vector<2x224x4xbf16>
    %35 = vector.shape_cast %34 : vector<2x224x4xbf16> to vector<448x4xbf16>
    %c4 = arith.constant 4 : index
    %c0_45 = arith.constant 0 : index
    %c0_46 = arith.constant 0 : index
    %36 = vector.load %arg2[%c4, %c0_45, %c0_46] : memref<9x4x32xbf16, #tpu.memory_space<vmem>>, vector<1x4x32xbf16>
    %37 = vector.shape_cast %36 : vector<1x4x32xbf16> to vector<4x32xbf16>
    %cst_47 = arith.constant dense<0.000000e+00> : vector<448x32xf32>
    %38 = tpu.matmul %35, %37, %cst_47 {dimension_numbers = #tpu.dot_dimension_numbers<[1], [0], [0], [1], [0, 0, 1, 1], [], []>} : vector<448x4xbf16>, vector<4x32xbf16>, vector<448x32xf32> -> vector<448x32xf32>
    %39 = vector.shape_cast %38 : vector<448x32xf32> to vector<2x224x32xf32>
    %c0_48 = arith.constant 0 : index
    %c0_49 = arith.constant 0 : index
    %c0_50 = arith.constant 0 : index
    %40 = vector.load %arg11[%c0_48, %c0_49, %c0_50] : memref<2x224x32xf32, #tpu.memory_space<vmem>>, vector<2x224x32xf32>
    %41 = arith.addf %40, %39 : vector<2x224x32xf32>
    %c0_51 = arith.constant 0 : index
    %c0_52 = arith.constant 0 : index
    %c0_53 = arith.constant 0 : index
    %42 = vector.load %arg11[%c0_51, %c0_52, %c0_53] : memref<2x224x32xf32, #tpu.memory_space<vmem>>, vector<2x224x32xf32>
    tpu.vector_store %arg11[%c0_51, %c0_52, %c0_53], %41 {strides = array<i32>} : memref<2x224x32xf32, #tpu.memory_space<vmem>>, vector<2x224x32xf32>,
    %c0_54 = arith.constant 0 : index
    %c18 = arith.constant 18 : index
    %c0_55 = arith.constant 0 : index
    %43 = vector.load %arg1[%c0_54, %c18, %c0_55] : memref<2x272x4xbf16, #tpu.memory_space<vmem>>, vector<2x224x4xbf16>
    %44 = vector.shape_cast %43 : vector<2x224x4xbf16> to vector<448x4xbf16>
    %c5 = arith.constant 5 : index
    %c0_56 = arith.constant 0 : index
    %c0_57 = arith.constant 0 : index
    %45 = vector.load %arg2[%c5, %c0_56, %c0_57] : memref<9x4x32xbf16, #tpu.memory_space<vmem>>, vector<1x4x32xbf16>
    %46 = vector.shape_cast %45 : vector<1x4x32xbf16> to vector<4x32xbf16>
    %cst_58 = arith.constant dense<0.000000e+00> : vector<448x32xf32>
    %47 = tpu.matmul %44, %46, %cst_58 {dimension_numbers = #tpu.dot_dimension_numbers<[1], [0], [0], [1], [0, 0, 1, 1], [], []>} : vector<448x4xbf16>, vector<4x32xbf16>, vector<448x32xf32> -> vector<448x32xf32>
    %48 = vector.shape_cast %47 : vector<448x32xf32> to vector<2x224x32xf32>
    %c0_59 = arith.constant 0 : index
    %c0_60 = arith.constant 0 : index
    %c0_61 = arith.constant 0 : index
    %49 = vector.load %arg11[%c0_59, %c0_60, %c0_61] : memref<2x224x32xf32, #tpu.memory_space<vmem>>, vector<2x224x32xf32>
    %50 = arith.addf %49, %48 : vector<2x224x32xf32>
    %c0_62 = arith.constant 0 : index
    %c0_63 = arith.constant 0 : index
    %c0_64 = arith.constant 0 : index
    %51 = vector.load %arg11[%c0_62, %c0_63, %c0_64] : memref<2x224x32xf32, #tpu.memory_space<vmem>>, vector<2x224x32xf32>
    tpu.vector_store %arg11[%c0_62, %c0_63, %c0_64], %50 {strides = array<i32>} : memref<2x224x32xf32, #tpu.memory_space<vmem>>, vector<2x224x32xf32>,
    %c0_65 = arith.constant 0 : index
    %c32 = arith.constant 32 : index
    %c0_66 = arith.constant 0 : index
    %52 = vector.load %arg1[%c0_65, %c32, %c0_66] : memref<2x272x4xbf16, #tpu.memory_space<vmem>>, vector<2x224x4xbf16>
    %53 = vector.shape_cast %52 : vector<2x224x4xbf16> to vector<448x4xbf16>
    %c6 = arith.constant 6 : index
    %c0_67 = arith.constant 0 : index
    %c0_68 = arith.constant 0 : index
    %54 = vector.load %arg2[%c6, %c0_67, %c0_68] : memref<9x4x32xbf16, #tpu.memory_space<vmem>>, vector<1x4x32xbf16>
    %55 = vector.shape_cast %54 : vector<1x4x32xbf16> to vector<4x32xbf16>
    %cst_69 = arith.constant dense<0.000000e+00> : vector<448x32xf32>
    %56 = tpu.matmul %53, %55, %cst_69 {dimension_numbers = #tpu.dot_dimension_numbers<[1], [0], [0], [1], [0, 0, 1, 1], [], []>} : vector<448x4xbf16>, vector<4x32xbf16>, vector<448x32xf32> -> vector<448x32xf32>
    %57 = vector.shape_cast %56 : vector<448x32xf32> to vector<2x224x32xf32>
    %c0_70 = arith.constant 0 : index
    %c0_71 = arith.constant 0 : index
    %c0_72 = arith.constant 0 : index
    %58 = vector.load %arg11[%c0_70, %c0_71, %c0_72] : memref<2x224x32xf32, #tpu.memory_space<vmem>>, vector<2x224x32xf32>
    %59 = arith.addf %58, %57 : vector<2x224x32xf32>
    %c0_73 = arith.constant 0 : index
    %c0_74 = arith.constant 0 : index
    %c0_75 = arith.constant 0 : index
    %60 = vector.load %arg11[%c0_73, %c0_74, %c0_75] : memref<2x224x32xf32, #tpu.memory_space<vmem>>, vector<2x224x32xf32>
    tpu.vector_store %arg11[%c0_73, %c0_74, %c0_75], %59 {strides = array<i32>} : memref<2x224x32xf32, #tpu.memory_space<vmem>>, vector<2x224x32xf32>,
    %c0_76 = arith.constant 0 : index
    %c33 = arith.constant 33 : index
    %c0_77 = arith.constant 0 : index
    %61 = vector.load %arg1[%c0_76, %c33, %c0_77] : memref<2x272x4xbf16, #tpu.memory_space<vmem>>, vector<2x224x4xbf16>
    %62 = vector.shape_cast %61 : vector<2x224x4xbf16> to vector<448x4xbf16>
    %c7 = arith.constant 7 : index
    %c0_78 = arith.constant 0 : index
    %c0_79 = arith.constant 0 : index
    %63 = vector.load %arg2[%c7, %c0_78, %c0_79] : memref<9x4x32xbf16, #tpu.memory_space<vmem>>, vector<1x4x32xbf16>
    %64 = vector.shape_cast %63 : vector<1x4x32xbf16> to vector<4x32xbf16>
    %cst_80 = arith.constant dense<0.000000e+00> : vector<448x32xf32>
    %65 = tpu.matmul %62, %64, %cst_80 {dimension_numbers = #tpu.dot_dimension_numbers<[1], [0], [0], [1], [0, 0, 1, 1], [], []>} : vector<448x4xbf16>, vector<4x32xbf16>, vector<448x32xf32> -> vector<448x32xf32>
    %66 = vector.shape_cast %65 : vector<448x32xf32> to vector<2x224x32xf32>
    %c0_81 = arith.constant 0 : index
    %c0_82 = arith.constant 0 : index
    %c0_83 = arith.constant 0 : index
    %67 = vector.load %arg11[%c0_81, %c0_82, %c0_83] : memref<2x224x32xf32, #tpu.memory_space<vmem>>, vector<2x224x32xf32>
    %68 = arith.addf %67, %66 : vector<2x224x32xf32>
    %c0_84 = arith.constant 0 : index
    %c0_85 = arith.constant 0 : index
    %c0_86 = arith.constant 0 : index
    %69 = vector.load %arg11[%c0_84, %c0_85, %c0_86] : memref<2x224x32xf32, #tpu.memory_space<vmem>>, vector<2x224x32xf32>
    tpu.vector_store %arg11[%c0_84, %c0_85, %c0_86], %68 {strides = array<i32>} : memref<2x224x32xf32, #tpu.memory_space<vmem>>, vector<2x224x32xf32>,
    %c0_87 = arith.constant 0 : index
    %c34 = arith.constant 34 : index
    %c0_88 = arith.constant 0 : index
    %70 = vector.load %arg1[%c0_87, %c34, %c0_88] : memref<2x272x4xbf16, #tpu.memory_space<vmem>>, vector<2x224x4xbf16>
    %71 = vector.shape_cast %70 : vector<2x224x4xbf16> to vector<448x4xbf16>
    %c8 = arith.constant 8 : index
    %c0_89 = arith.constant 0 : index
    %c0_90 = arith.constant 0 : index
    %72 = vector.load %arg2[%c8, %c0_89, %c0_90] : memref<9x4x32xbf16, #tpu.memory_space<vmem>>, vector<1x4x32xbf16>
    %73 = vector.shape_cast %72 : vector<1x4x32xbf16> to vector<4x32xbf16>
    %cst_91 = arith.constant dense<0.000000e+00> : vector<448x32xf32>
    %74 = tpu.matmul %71, %73, %cst_91 {dimension_numbers = #tpu.dot_dimension_numbers<[1], [0], [0], [1], [0, 0, 1, 1], [], []>} : vector<448x4xbf16>, vector<4x32xbf16>, vector<448x32xf32> -> vector<448x32xf32>
    %75 = vector.shape_cast %74 : vector<448x32xf32> to vector<2x224x32xf32>
    %c0_92 = arith.constant 0 : index
    %c0_93 = arith.constant 0 : index
    %c0_94 = arith.constant 0 : index
    %76 = vector.load %arg11[%c0_92, %c0_93, %c0_94] : memref<2x224x32xf32, #tpu.memory_space<vmem>>, vector<2x224x32xf32>
    %77 = arith.addf %76, %75 : vector<2x224x32xf32>
    %c0_95 = arith.constant 0 : index
    %c0_96 = arith.constant 0 : index
    %c0_97 = arith.constant 0 : index
    %78 = vector.load %arg11[%c0_95, %c0_96, %c0_97] : memref<2x224x32xf32, #tpu.memory_space<vmem>>, vector<2x224x32xf32>
    tpu.vector_store %arg11[%c0_95, %c0_96, %c0_97], %77 {strides = array<i32>} : memref<2x224x32xf32, #tpu.memory_space<vmem>>, vector<2x224x32xf32>,
    %cst_98 = arith.constant 0.000000e+00 : bf16
    %79 = vector.broadcast %cst_98 : bf16 to vector<2x128x32xbf16>
    %c0_99 = arith.constant 0 : index
    %c0_100 = arith.constant 0 : index
    %c0_101 = arith.constant 0 : index
    %80 = vector.load %arg12[%c0_99, %c0_100, %c0_101] : memref<2x128x32xbf16, #tpu.memory_space<vmem>>, vector<2x128x32xbf16>
    tpu.vector_store %arg12[%c0_99, %c0_100, %c0_101], %79 {strides = array<i32>} : memref<2x128x32xbf16, #tpu.memory_space<vmem>>, vector<2x128x32xbf16>,
    %c0_102 = arith.constant 0 : index
    %c0_103 = arith.constant 0 : index
    %c0_104 = arith.constant 0 : index
    %81 = tpu.strided_load %arg11[%c0_102, %c0_103, %c0_104] {strides = array<i32: 1, 2, 1>} : memref<2x224x32xf32, #tpu.memory_space<vmem>>, vector<2x7x32xf32>
    %c0_105 = arith.constant 0 : index
    %c1_106 = arith.constant 1 : index
    %c0_107 = arith.constant 0 : index
    %82 = tpu.strided_load %arg11[%c0_105, %c1_106, %c0_107] {strides = array<i32: 1, 2, 1>} : memref<2x224x32xf32, #tpu.memory_space<vmem>>, vector<2x7x32xf32>
    %83 = arith.maximumf %81, %82 : vector<2x7x32xf32>
    %c0_108 = arith.constant 0 : index
    %c16_109 = arith.constant 16 : index
    %c0_110 = arith.constant 0 : index
    %84 = tpu.strided_load %arg11[%c0_108, %c16_109, %c0_110] {strides = array<i32: 1, 2, 1>} : memref<2x224x32xf32, #tpu.memory_space<vmem>>, vector<2x7x32xf32>
    %85 = arith.maximumf %83, %84 : vector<2x7x32xf32>
    %c0_111 = arith.constant 0 : index
    %c17_112 = arith.constant 17 : index
    %c0_113 = arith.constant 0 : index
    %86 = tpu.strided_load %arg11[%c0_111, %c17_112, %c0_113] {strides = array<i32: 1, 2, 1>} : memref<2x224x32xf32, #tpu.memory_space<vmem>>, vector<2x7x32xf32>
    %87 = arith.maximumf %85, %86 : vector<2x7x32xf32>
    %c0_114 = arith.constant 0 : index
    %c0_115 = arith.constant 0 : index
    %88 = vector.load %arg3[%c0_114, %c0_115] : memref<1x32xf32, #tpu.memory_space<vmem>>, vector<1x32xf32>
    %89 = vector.shape_cast %88 : vector<1x32xf32> to vector<1x1x32xf32>
    %90 = vector.broadcast %89 : vector<1x1x32xf32> to vector<2x7x32xf32>
    %91 = arith.addf %87, %90 : vector<2x7x32xf32>
    %cst_116 = arith.constant 0.000000e+00 : f32
    %92 = vector.broadcast %cst_116 : f32 to vector<2x7x32xf32>
    %93 = arith.maximumf %91, %92 : vector<2x7x32xf32>
    %94 = arith.truncf %93 : vector<2x7x32xf32> to vector<2x7x32xbf16>
    %c0_117 = arith.constant 0 : index
    %c0_118 = arith.constant 0 : index
    %c0_119 = arith.constant 0 : index
    %95 = vector.load %arg12[%c0_117, %c0_118, %c0_119] : memref<2x128x32xbf16, #tpu.memory_space<vmem>>, vector<2x7x32xbf16>
    tpu.vector_store %arg12[%c0_117, %c0_118, %c0_119], %94 {strides = array<i32>} : memref<2x128x32xbf16, #tpu.memory_space<vmem>>, vector<2x7x32xbf16>,
    %c0_120 = arith.constant 0 : index
    %c32_121 = arith.constant 32 : index
    %c0_122 = arith.constant 0 : index
    %96 = tpu.strided_load %arg11[%c0_120, %c32_121, %c0_122] {strides = array<i32: 1, 2, 1>} : memref<2x224x32xf32, #tpu.memory_space<vmem>>, vector<2x7x32xf32>
    %c0_123 = arith.constant 0 : index
    %c33_124 = arith.constant 33 : index
    %c0_125 = arith.constant 0 : index
    %97 = tpu.strided_load %arg11[%c0_123, %c33_124, %c0_125] {strides = array<i32: 1, 2, 1>} : memref<2x224x32xf32, #tpu.memory_space<vmem>>, vector<2x7x32xf32>
    %98 = arith.maximumf %96, %97 : vector<2x7x32xf32>
    %c0_126 = arith.constant 0 : index
    %c48 = arith.constant 48 : index
    %c0_127 = arith.constant 0 : index
    %99 = tpu.strided_load %arg11[%c0_126, %c48, %c0_127] {strides = array<i32: 1, 2, 1>} : memref<2x224x32xf32, #tpu.memory_space<vmem>>, vector<2x7x32xf32>
    %100 = arith.maximumf %98, %99 : vector<2x7x32xf32>
    %c0_128 = arith.constant 0 : index
    %c49 = arith.constant 49 : index
    %c0_129 = arith.constant 0 : index
    %101 = tpu.strided_load %arg11[%c0_128, %c49, %c0_129] {strides = array<i32: 1, 2, 1>} : memref<2x224x32xf32, #tpu.memory_space<vmem>>, vector<2x7x32xf32>
    %102 = arith.maximumf %100, %101 : vector<2x7x32xf32>
    %c0_130 = arith.constant 0 : index
    %c0_131 = arith.constant 0 : index
    %103 = vector.load %arg3[%c0_130, %c0_131] : memref<1x32xf32, #tpu.memory_space<vmem>>, vector<1x32xf32>
    %104 = vector.shape_cast %103 : vector<1x32xf32> to vector<1x1x32xf32>
    %105 = vector.broadcast %104 : vector<1x1x32xf32> to vector<2x7x32xf32>
    %106 = arith.addf %102, %105 : vector<2x7x32xf32>
    %cst_132 = arith.constant 0.000000e+00 : f32
    %107 = vector.broadcast %cst_132 : f32 to vector<2x7x32xf32>
    %108 = arith.maximumf %106, %107 : vector<2x7x32xf32>
    %109 = arith.truncf %108 : vector<2x7x32xf32> to vector<2x7x32xbf16>
    %c0_133 = arith.constant 0 : index
    %c16_134 = arith.constant 16 : index
    %c0_135 = arith.constant 0 : index
    %110 = vector.load %arg12[%c0_133, %c16_134, %c0_135] : memref<2x128x32xbf16, #tpu.memory_space<vmem>>, vector<2x7x32xbf16>
    tpu.vector_store %arg12[%c0_133, %c16_134, %c0_135], %109 {strides = array<i32>} : memref<2x128x32xbf16, #tpu.memory_space<vmem>>, vector<2x7x32xbf16>,
    %c0_136 = arith.constant 0 : index
    %c64 = arith.constant 64 : index
    %c0_137 = arith.constant 0 : index
    %111 = tpu.strided_load %arg11[%c0_136, %c64, %c0_137] {strides = array<i32: 1, 2, 1>} : memref<2x224x32xf32, #tpu.memory_space<vmem>>, vector<2x7x32xf32>
    %c0_138 = arith.constant 0 : index
    %c65 = arith.constant 65 : index
    %c0_139 = arith.constant 0 : index
    %112 = tpu.strided_load %arg11[%c0_138, %c65, %c0_139] {strides = array<i32: 1, 2, 1>} : memref<2x224x32xf32, #tpu.memory_space<vmem>>, vector<2x7x32xf32>
    %113 = arith.maximumf %111, %112 : vector<2x7x32xf32>
    %c0_140 = arith.constant 0 : index
    %c80 = arith.constant 80 : index
    %c0_141 = arith.constant 0 : index
    %114 = tpu.strided_load %arg11[%c0_140, %c80, %c0_141] {strides = array<i32: 1, 2, 1>} : memref<2x224x32xf32, #tpu.memory_space<vmem>>, vector<2x7x32xf32>
    %115 = arith.maximumf %113, %114 : vector<2x7x32xf32>
    %c0_142 = arith.constant 0 : index
    %c81 = arith.constant 81 : index
    %c0_143 = arith.constant 0 : index
    %116 = tpu.strided_load %arg11[%c0_142, %c81, %c0_143] {strides = array<i32: 1, 2, 1>} : memref<2x224x32xf32, #tpu.memory_space<vmem>>, vector<2x7x32xf32>
    %117 = arith.maximumf %115, %116 : vector<2x7x32xf32>
    %c0_144 = arith.constant 0 : index
    %c0_145 = arith.constant 0 : index
    %118 = vector.load %arg3[%c0_144, %c0_145] : memref<1x32xf32, #tpu.memory_space<vmem>>, vector<1x32xf32>
    %119 = vector.shape_cast %118 : vector<1x32xf32> to vector<1x1x32xf32>
    %120 = vector.broadcast %119 : vector<1x1x32xf32> to vector<2x7x32xf32>
    %121 = arith.addf %117, %120 : vector<2x7x32xf32>
    %cst_146 = arith.constant 0.000000e+00 : f32
    %122 = vector.broadcast %cst_146 : f32 to vector<2x7x32xf32>
    %123 = arith.maximumf %121, %122 : vector<2x7x32xf32>
    %124 = arith.truncf %123 : vector<2x7x32xf32> to vector<2x7x32xbf16>
    %c0_147 = arith.constant 0 : index
    %c32_148 = arith.constant 32 : index
    %c0_149 = arith.constant 0 : index
    %125 = vector.load %arg12[%c0_147, %c32_148, %c0_149] : memref<2x128x32xbf16, #tpu.memory_space<vmem>>, vector<2x7x32xbf16>
    tpu.vector_store %arg12[%c0_147, %c32_148, %c0_149], %124 {strides = array<i32>} : memref<2x128x32xbf16, #tpu.memory_space<vmem>>, vector<2x7x32xbf16>,
    %c0_150 = arith.constant 0 : index
    %c96 = arith.constant 96 : index
    %c0_151 = arith.constant 0 : index
    %126 = tpu.strided_load %arg11[%c0_150, %c96, %c0_151] {strides = array<i32: 1, 2, 1>} : memref<2x224x32xf32, #tpu.memory_space<vmem>>, vector<2x7x32xf32>
    %c0_152 = arith.constant 0 : index
    %c97 = arith.constant 97 : index
    %c0_153 = arith.constant 0 : index
    %127 = tpu.strided_load %arg11[%c0_152, %c97, %c0_153] {strides = array<i32: 1, 2, 1>} : memref<2x224x32xf32, #tpu.memory_space<vmem>>, vector<2x7x32xf32>
    %128 = arith.maximumf %126, %127 : vector<2x7x32xf32>
    %c0_154 = arith.constant 0 : index
    %c112 = arith.constant 112 : index
    %c0_155 = arith.constant 0 : index
    %129 = tpu.strided_load %arg11[%c0_154, %c112, %c0_155] {strides = array<i32: 1, 2, 1>} : memref<2x224x32xf32, #tpu.memory_space<vmem>>, vector<2x7x32xf32>
    %130 = arith.maximumf %128, %129 : vector<2x7x32xf32>
    %c0_156 = arith.constant 0 : index
    %c113 = arith.constant 113 : index
    %c0_157 = arith.constant 0 : index
    %131 = tpu.strided_load %arg11[%c0_156, %c113, %c0_157] {strides = array<i32: 1, 2, 1>} : memref<2x224x32xf32, #tpu.memory_space<vmem>>, vector<2x7x32xf32>
    %132 = arith.maximumf %130, %131 : vector<2x7x32xf32>
    %c0_158 = arith.constant 0 : index
    %c0_159 = arith.constant 0 : index
    %133 = vector.load %arg3[%c0_158, %c0_159] : memref<1x32xf32, #tpu.memory_space<vmem>>, vector<1x32xf32>
    %134 = vector.shape_cast %133 : vector<1x32xf32> to vector<1x1x32xf32>
    %135 = vector.broadcast %134 : vector<1x1x32xf32> to vector<2x7x32xf32>
    %136 = arith.addf %132, %135 : vector<2x7x32xf32>
    %cst_160 = arith.constant 0.000000e+00 : f32
    %137 = vector.broadcast %cst_160 : f32 to vector<2x7x32xf32>
    %138 = arith.maximumf %136, %137 : vector<2x7x32xf32>
    %139 = arith.truncf %138 : vector<2x7x32xf32> to vector<2x7x32xbf16>
    %c0_161 = arith.constant 0 : index
    %c48_162 = arith.constant 48 : index
    %c0_163 = arith.constant 0 : index
    %140 = vector.load %arg12[%c0_161, %c48_162, %c0_163] : memref<2x128x32xbf16, #tpu.memory_space<vmem>>, vector<2x7x32xbf16>
    tpu.vector_store %arg12[%c0_161, %c48_162, %c0_163], %139 {strides = array<i32>} : memref<2x128x32xbf16, #tpu.memory_space<vmem>>, vector<2x7x32xbf16>,
    %c0_164 = arith.constant 0 : index
    %c128 = arith.constant 128 : index
    %c0_165 = arith.constant 0 : index
    %141 = tpu.strided_load %arg11[%c0_164, %c128, %c0_165] {strides = array<i32: 1, 2, 1>} : memref<2x224x32xf32, #tpu.memory_space<vmem>>, vector<2x7x32xf32>
    %c0_166 = arith.constant 0 : index
    %c129 = arith.constant 129 : index
    %c0_167 = arith.constant 0 : index
    %142 = tpu.strided_load %arg11[%c0_166, %c129, %c0_167] {strides = array<i32: 1, 2, 1>} : memref<2x224x32xf32, #tpu.memory_space<vmem>>, vector<2x7x32xf32>
    %143 = arith.maximumf %141, %142 : vector<2x7x32xf32>
    %c0_168 = arith.constant 0 : index
    %c144 = arith.constant 144 : index
    %c0_169 = arith.constant 0 : index
    %144 = tpu.strided_load %arg11[%c0_168, %c144, %c0_169] {strides = array<i32: 1, 2, 1>} : memref<2x224x32xf32, #tpu.memory_space<vmem>>, vector<2x7x32xf32>
    %145 = arith.maximumf %143, %144 : vector<2x7x32xf32>
    %c0_170 = arith.constant 0 : index
    %c145 = arith.constant 145 : index
    %c0_171 = arith.constant 0 : index
    %146 = tpu.strided_load %arg11[%c0_170, %c145, %c0_171] {strides = array<i32: 1, 2, 1>} : memref<2x224x32xf32, #tpu.memory_space<vmem>>, vector<2x7x32xf32>
    %147 = arith.maximumf %145, %146 : vector<2x7x32xf32>
    %c0_172 = arith.constant 0 : index
    %c0_173 = arith.constant 0 : index
    %148 = vector.load %arg3[%c0_172, %c0_173] : memref<1x32xf32, #tpu.memory_space<vmem>>, vector<1x32xf32>
    %149 = vector.shape_cast %148 : vector<1x32xf32> to vector<1x1x32xf32>
    %150 = vector.broadcast %149 : vector<1x1x32xf32> to vector<2x7x32xf32>
    %151 = arith.addf %147, %150 : vector<2x7x32xf32>
    %cst_174 = arith.constant 0.000000e+00 : f32
    %152 = vector.broadcast %cst_174 : f32 to vector<2x7x32xf32>
    %153 = arith.maximumf %151, %152 : vector<2x7x32xf32>
    %154 = arith.truncf %153 : vector<2x7x32xf32> to vector<2x7x32xbf16>
    %c0_175 = arith.constant 0 : index
    %c64_176 = arith.constant 64 : index
    %c0_177 = arith.constant 0 : index
    %155 = vector.load %arg12[%c0_175, %c64_176, %c0_177] : memref<2x128x32xbf16, #tpu.memory_space<vmem>>, vector<2x7x32xbf16>
    tpu.vector_store %arg12[%c0_175, %c64_176, %c0_177], %154 {strides = array<i32>} : memref<2x128x32xbf16, #tpu.memory_space<vmem>>, vector<2x7x32xbf16>,
    %c0_178 = arith.constant 0 : index
    %c160 = arith.constant 160 : index
    %c0_179 = arith.constant 0 : index
    %156 = tpu.strided_load %arg11[%c0_178, %c160, %c0_179] {strides = array<i32: 1, 2, 1>} : memref<2x224x32xf32, #tpu.memory_space<vmem>>, vector<2x7x32xf32>
    %c0_180 = arith.constant 0 : index
    %c161 = arith.constant 161 : index
    %c0_181 = arith.constant 0 : index
    %157 = tpu.strided_load %arg11[%c0_180, %c161, %c0_181] {strides = array<i32: 1, 2, 1>} : memref<2x224x32xf32, #tpu.memory_space<vmem>>, vector<2x7x32xf32>
    %158 = arith.maximumf %156, %157 : vector<2x7x32xf32>
    %c0_182 = arith.constant 0 : index
    %c176 = arith.constant 176 : index
    %c0_183 = arith.constant 0 : index
    %159 = tpu.strided_load %arg11[%c0_182, %c176, %c0_183] {strides = array<i32: 1, 2, 1>} : memref<2x224x32xf32, #tpu.memory_space<vmem>>, vector<2x7x32xf32>
    %160 = arith.maximumf %158, %159 : vector<2x7x32xf32>
    %c0_184 = arith.constant 0 : index
    %c177 = arith.constant 177 : index
    %c0_185 = arith.constant 0 : index
    %161 = tpu.strided_load %arg11[%c0_184, %c177, %c0_185] {strides = array<i32: 1, 2, 1>} : memref<2x224x32xf32, #tpu.memory_space<vmem>>, vector<2x7x32xf32>
    %162 = arith.maximumf %160, %161 : vector<2x7x32xf32>
    %c0_186 = arith.constant 0 : index
    %c0_187 = arith.constant 0 : index
    %163 = vector.load %arg3[%c0_186, %c0_187] : memref<1x32xf32, #tpu.memory_space<vmem>>, vector<1x32xf32>
    %164 = vector.shape_cast %163 : vector<1x32xf32> to vector<1x1x32xf32>
    %165 = vector.broadcast %164 : vector<1x1x32xf32> to vector<2x7x32xf32>
    %166 = arith.addf %162, %165 : vector<2x7x32xf32>
    %cst_188 = arith.constant 0.000000e+00 : f32
    %167 = vector.broadcast %cst_188 : f32 to vector<2x7x32xf32>
    %168 = arith.maximumf %166, %167 : vector<2x7x32xf32>
    %169 = arith.truncf %168 : vector<2x7x32xf32> to vector<2x7x32xbf16>
    %c0_189 = arith.constant 0 : index
    %c80_190 = arith.constant 80 : index
    %c0_191 = arith.constant 0 : index
    %170 = vector.load %arg12[%c0_189, %c80_190, %c0_191] : memref<2x128x32xbf16, #tpu.memory_space<vmem>>, vector<2x7x32xbf16>
    tpu.vector_store %arg12[%c0_189, %c80_190, %c0_191], %169 {strides = array<i32>} : memref<2x128x32xbf16, #tpu.memory_space<vmem>>, vector<2x7x32xbf16>,
    %c0_192 = arith.constant 0 : index
    %c192 = arith.constant 192 : index
    %c0_193 = arith.constant 0 : index
    %171 = tpu.strided_load %arg11[%c0_192, %c192, %c0_193] {strides = array<i32: 1, 2, 1>} : memref<2x224x32xf32, #tpu.memory_space<vmem>>, vector<2x7x32xf32>
    %c0_194 = arith.constant 0 : index
    %c193 = arith.constant 193 : index
    %c0_195 = arith.constant 0 : index
    %172 = tpu.strided_load %arg11[%c0_194, %c193, %c0_195] {strides = array<i32: 1, 2, 1>} : memref<2x224x32xf32, #tpu.memory_space<vmem>>, vector<2x7x32xf32>
    %173 = arith.maximumf %171, %172 : vector<2x7x32xf32>
    %c0_196 = arith.constant 0 : index
    %c208 = arith.constant 208 : index
    %c0_197 = arith.constant 0 : index
    %174 = tpu.strided_load %arg11[%c0_196, %c208, %c0_197] {strides = array<i32: 1, 2, 1>} : memref<2x224x32xf32, #tpu.memory_space<vmem>>, vector<2x7x32xf32>
    %175 = arith.maximumf %173, %174 : vector<2x7x32xf32>
    %c0_198 = arith.constant 0 : index
    %c209 = arith.constant 209 : index
    %c0_199 = arith.constant 0 : index
    %176 = tpu.strided_load %arg11[%c0_198, %c209, %c0_199] {strides = array<i32: 1, 2, 1>} : memref<2x224x32xf32, #tpu.memory_space<vmem>>, vector<2x7x32xf32>
    %177 = arith.maximumf %175, %176 : vector<2x7x32xf32>
    %c0_200 = arith.constant 0 : index
    %c0_201 = arith.constant 0 : index
    %178 = vector.load %arg3[%c0_200, %c0_201] : memref<1x32xf32, #tpu.memory_space<vmem>>, vector<1x32xf32>
    %179 = vector.shape_cast %178 : vector<1x32xf32> to vector<1x1x32xf32>
    %180 = vector.broadcast %179 : vector<1x1x32xf32> to vector<2x7x32xf32>
    %181 = arith.addf %177, %180 : vector<2x7x32xf32>
    %cst_202 = arith.constant 0.000000e+00 : f32
    %182 = vector.broadcast %cst_202 : f32 to vector<2x7x32xf32>
    %183 = arith.maximumf %181, %182 : vector<2x7x32xf32>
    %184 = arith.truncf %183 : vector<2x7x32xf32> to vector<2x7x32xbf16>
    %c0_203 = arith.constant 0 : index
    %c96_204 = arith.constant 96 : index
    %c0_205 = arith.constant 0 : index
    %185 = vector.load %arg12[%c0_203, %c96_204, %c0_205] : memref<2x128x32xbf16, #tpu.memory_space<vmem>>, vector<2x7x32xbf16>
    tpu.vector_store %arg12[%c0_203, %c96_204, %c0_205], %184 {strides = array<i32>} : memref<2x128x32xbf16, #tpu.memory_space<vmem>>, vector<2x7x32xbf16>,
    %c0_206 = arith.constant 0 : index
    %c0_207 = arith.constant 0 : index
    %c0_208 = arith.constant 0 : index
    %186 = vector.load %arg12[%c0_206, %c0_207, %c0_208] : memref<2x128x32xbf16, #tpu.memory_space<vmem>>, vector<2x80x32xbf16>
    %187 = vector.shape_cast %186 : vector<2x80x32xbf16> to vector<160x32xbf16>
    %c0_209 = arith.constant 0 : index
    %c0_210 = arith.constant 0 : index
    %c0_211 = arith.constant 0 : index
    %188 = vector.load %arg4[%c0_209, %c0_210, %c0_211] : memref<9x32x64xbf16, #tpu.memory_space<vmem>>, vector<1x32x64xbf16>
    %189 = vector.shape_cast %188 : vector<1x32x64xbf16> to vector<32x64xbf16>
    %cst_212 = arith.constant dense<0.000000e+00> : vector<160x64xf32>
    %190 = tpu.matmul %187, %189, %cst_212 {dimension_numbers = #tpu.dot_dimension_numbers<[1], [0], [0], [1], [0, 0, 1, 1], [], []>} : vector<160x32xbf16>, vector<32x64xbf16>, vector<160x64xf32> -> vector<160x64xf32>
    %191 = vector.shape_cast %190 : vector<160x64xf32> to vector<2x80x64xf32>
    %c0_213 = arith.constant 0 : index
    %c0_214 = arith.constant 0 : index
    %c0_215 = arith.constant 0 : index
    %192 = vector.load %arg13[%c0_213, %c0_214, %c0_215] : memref<2x80x64xf32, #tpu.memory_space<vmem>>, vector<2x80x64xf32>
    tpu.vector_store %arg13[%c0_213, %c0_214, %c0_215], %191 {strides = array<i32>} : memref<2x80x64xf32, #tpu.memory_space<vmem>>, vector<2x80x64xf32>,
    %c0_216 = arith.constant 0 : index
    %c1_217 = arith.constant 1 : index
    %c0_218 = arith.constant 0 : index
    %193 = vector.load %arg12[%c0_216, %c1_217, %c0_218] : memref<2x128x32xbf16, #tpu.memory_space<vmem>>, vector<2x80x32xbf16>
    %194 = vector.shape_cast %193 : vector<2x80x32xbf16> to vector<160x32xbf16>
    %c1_219 = arith.constant 1 : index
    %c0_220 = arith.constant 0 : index
    %c0_221 = arith.constant 0 : index
    %195 = vector.load %arg4[%c1_219, %c0_220, %c0_221] : memref<9x32x64xbf16, #tpu.memory_space<vmem>>, vector<1x32x64xbf16>
    %196 = vector.shape_cast %195 : vector<1x32x64xbf16> to vector<32x64xbf16>
    %cst_222 = arith.constant dense<0.000000e+00> : vector<160x64xf32>
    %197 = tpu.matmul %194, %196, %cst_222 {dimension_numbers = #tpu.dot_dimension_numbers<[1], [0], [0], [1], [0, 0, 1, 1], [], []>} : vector<160x32xbf16>, vector<32x64xbf16>, vector<160x64xf32> -> vector<160x64xf32>
    %198 = vector.shape_cast %197 : vector<160x64xf32> to vector<2x80x64xf32>
    %c0_223 = arith.constant 0 : index
    %c0_224 = arith.constant 0 : index
    %c0_225 = arith.constant 0 : index
    %199 = vector.load %arg13[%c0_223, %c0_224, %c0_225] : memref<2x80x64xf32, #tpu.memory_space<vmem>>, vector<2x80x64xf32>
    %200 = arith.addf %199, %198 : vector<2x80x64xf32>
    %c0_226 = arith.constant 0 : index
    %c0_227 = arith.constant 0 : index
    %c0_228 = arith.constant 0 : index
    %201 = vector.load %arg13[%c0_226, %c0_227, %c0_228] : memref<2x80x64xf32, #tpu.memory_space<vmem>>, vector<2x80x64xf32>
    tpu.vector_store %arg13[%c0_226, %c0_227, %c0_228], %200 {strides = array<i32>} : memref<2x80x64xf32, #tpu.memory_space<vmem>>, vector<2x80x64xf32>,
    %c0_229 = arith.constant 0 : index
    %c2_230 = arith.constant 2 : index
    %c0_231 = arith.constant 0 : index
    %202 = vector.load %arg12[%c0_229, %c2_230, %c0_231] : memref<2x128x32xbf16, #tpu.memory_space<vmem>>, vector<2x80x32xbf16>
    %203 = vector.shape_cast %202 : vector<2x80x32xbf16> to vector<160x32xbf16>
    %c2_232 = arith.constant 2 : index
    %c0_233 = arith.constant 0 : index
    %c0_234 = arith.constant 0 : index
    %204 = vector.load %arg4[%c2_232, %c0_233, %c0_234] : memref<9x32x64xbf16, #tpu.memory_space<vmem>>, vector<1x32x64xbf16>
    %205 = vector.shape_cast %204 : vector<1x32x64xbf16> to vector<32x64xbf16>
    %cst_235 = arith.constant dense<0.000000e+00> : vector<160x64xf32>
    %206 = tpu.matmul %203, %205, %cst_235 {dimension_numbers = #tpu.dot_dimension_numbers<[1], [0], [0], [1], [0, 0, 1, 1], [], []>} : vector<160x32xbf16>, vector<32x64xbf16>, vector<160x64xf32> -> vector<160x64xf32>
    %207 = vector.shape_cast %206 : vector<160x64xf32> to vector<2x80x64xf32>
    %c0_236 = arith.constant 0 : index
    %c0_237 = arith.constant 0 : index
    %c0_238 = arith.constant 0 : index
    %208 = vector.load %arg13[%c0_236, %c0_237, %c0_238] : memref<2x80x64xf32, #tpu.memory_space<vmem>>, vector<2x80x64xf32>
    %209 = arith.addf %208, %207 : vector<2x80x64xf32>
    %c0_239 = arith.constant 0 : index
    %c0_240 = arith.constant 0 : index
    %c0_241 = arith.constant 0 : index
    %210 = vector.load %arg13[%c0_239, %c0_240, %c0_241] : memref<2x80x64xf32, #tpu.memory_space<vmem>>, vector<2x80x64xf32>
    tpu.vector_store %arg13[%c0_239, %c0_240, %c0_241], %209 {strides = array<i32>} : memref<2x80x64xf32, #tpu.memory_space<vmem>>, vector<2x80x64xf32>,
    %c0_242 = arith.constant 0 : index
    %c16_243 = arith.constant 16 : index
    %c0_244 = arith.constant 0 : index
    %211 = vector.load %arg12[%c0_242, %c16_243, %c0_244] : memref<2x128x32xbf16, #tpu.memory_space<vmem>>, vector<2x80x32xbf16>
    %212 = vector.shape_cast %211 : vector<2x80x32xbf16> to vector<160x32xbf16>
    %c3_245 = arith.constant 3 : index
    %c0_246 = arith.constant 0 : index
    %c0_247 = arith.constant 0 : index
    %213 = vector.load %arg4[%c3_245, %c0_246, %c0_247] : memref<9x32x64xbf16, #tpu.memory_space<vmem>>, vector<1x32x64xbf16>
    %214 = vector.shape_cast %213 : vector<1x32x64xbf16> to vector<32x64xbf16>
    %cst_248 = arith.constant dense<0.000000e+00> : vector<160x64xf32>
    %215 = tpu.matmul %212, %214, %cst_248 {dimension_numbers = #tpu.dot_dimension_numbers<[1], [0], [0], [1], [0, 0, 1, 1], [], []>} : vector<160x32xbf16>, vector<32x64xbf16>, vector<160x64xf32> -> vector<160x64xf32>
    %216 = vector.shape_cast %215 : vector<160x64xf32> to vector<2x80x64xf32>
    %c0_249 = arith.constant 0 : index
    %c0_250 = arith.constant 0 : index
    %c0_251 = arith.constant 0 : index
    %217 = vector.load %arg13[%c0_249, %c0_250, %c0_251] : memref<2x80x64xf32, #tpu.memory_space<vmem>>, vector<2x80x64xf32>
    %218 = arith.addf %217, %216 : vector<2x80x64xf32>
    %c0_252 = arith.constant 0 : index
    %c0_253 = arith.constant 0 : index
    %c0_254 = arith.constant 0 : index
    %219 = vector.load %arg13[%c0_252, %c0_253, %c0_254] : memref<2x80x64xf32, #tpu.memory_space<vmem>>, vector<2x80x64xf32>
    tpu.vector_store %arg13[%c0_252, %c0_253, %c0_254], %218 {strides = array<i32>} : memref<2x80x64xf32, #tpu.memory_space<vmem>>, vector<2x80x64xf32>,
    %c0_255 = arith.constant 0 : index
    %c17_256 = arith.constant 17 : index
    %c0_257 = arith.constant 0 : index
    %220 = vector.load %arg12[%c0_255, %c17_256, %c0_257] : memref<2x128x32xbf16, #tpu.memory_space<vmem>>, vector<2x80x32xbf16>
    %221 = vector.shape_cast %220 : vector<2x80x32xbf16> to vector<160x32xbf16>
    %c4_258 = arith.constant 4 : index
    %c0_259 = arith.constant 0 : index
    %c0_260 = arith.constant 0 : index
    %222 = vector.load %arg4[%c4_258, %c0_259, %c0_260] : memref<9x32x64xbf16, #tpu.memory_space<vmem>>, vector<1x32x64xbf16>
    %223 = vector.shape_cast %222 : vector<1x32x64xbf16> to vector<32x64xbf16>
    %cst_261 = arith.constant dense<0.000000e+00> : vector<160x64xf32>
    %224 = tpu.matmul %221, %223, %cst_261 {dimension_numbers = #tpu.dot_dimension_numbers<[1], [0], [0], [1], [0, 0, 1, 1], [], []>} : vector<160x32xbf16>, vector<32x64xbf16>, vector<160x64xf32> -> vector<160x64xf32>
    %225 = vector.shape_cast %224 : vector<160x64xf32> to vector<2x80x64xf32>
    %c0_262 = arith.constant 0 : index
    %c0_263 = arith.constant 0 : index
    %c0_264 = arith.constant 0 : index
    %226 = vector.load %arg13[%c0_262, %c0_263, %c0_264] : memref<2x80x64xf32, #tpu.memory_space<vmem>>, vector<2x80x64xf32>
    %227 = arith.addf %226, %225 : vector<2x80x64xf32>
    %c0_265 = arith.constant 0 : index
    %c0_266 = arith.constant 0 : index
    %c0_267 = arith.constant 0 : index
    %228 = vector.load %arg13[%c0_265, %c0_266, %c0_267] : memref<2x80x64xf32, #tpu.memory_space<vmem>>, vector<2x80x64xf32>
    tpu.vector_store %arg13[%c0_265, %c0_266, %c0_267], %227 {strides = array<i32>} : memref<2x80x64xf32, #tpu.memory_space<vmem>>, vector<2x80x64xf32>,
    %c0_268 = arith.constant 0 : index
    %c18_269 = arith.constant 18 : index
    %c0_270 = arith.constant 0 : index
    %229 = vector.load %arg12[%c0_268, %c18_269, %c0_270] : memref<2x128x32xbf16, #tpu.memory_space<vmem>>, vector<2x80x32xbf16>
    %230 = vector.shape_cast %229 : vector<2x80x32xbf16> to vector<160x32xbf16>
    %c5_271 = arith.constant 5 : index
    %c0_272 = arith.constant 0 : index
    %c0_273 = arith.constant 0 : index
    %231 = vector.load %arg4[%c5_271, %c0_272, %c0_273] : memref<9x32x64xbf16, #tpu.memory_space<vmem>>, vector<1x32x64xbf16>
    %232 = vector.shape_cast %231 : vector<1x32x64xbf16> to vector<32x64xbf16>
    %cst_274 = arith.constant dense<0.000000e+00> : vector<160x64xf32>
    %233 = tpu.matmul %230, %232, %cst_274 {dimension_numbers = #tpu.dot_dimension_numbers<[1], [0], [0], [1], [0, 0, 1, 1], [], []>} : vector<160x32xbf16>, vector<32x64xbf16>, vector<160x64xf32> -> vector<160x64xf32>
    %234 = vector.shape_cast %233 : vector<160x64xf32> to vector<2x80x64xf32>
    %c0_275 = arith.constant 0 : index
    %c0_276 = arith.constant 0 : index
    %c0_277 = arith.constant 0 : index
    %235 = vector.load %arg13[%c0_275, %c0_276, %c0_277] : memref<2x80x64xf32, #tpu.memory_space<vmem>>, vector<2x80x64xf32>
    %236 = arith.addf %235, %234 : vector<2x80x64xf32>
    %c0_278 = arith.constant 0 : index
    %c0_279 = arith.constant 0 : index
    %c0_280 = arith.constant 0 : index
    %237 = vector.load %arg13[%c0_278, %c0_279, %c0_280] : memref<2x80x64xf32, #tpu.memory_space<vmem>>, vector<2x80x64xf32>
    tpu.vector_store %arg13[%c0_278, %c0_279, %c0_280], %236 {strides = array<i32>} : memref<2x80x64xf32, #tpu.memory_space<vmem>>, vector<2x80x64xf32>,
    %c0_281 = arith.constant 0 : index
    %c32_282 = arith.constant 32 : index
    %c0_283 = arith.constant 0 : index
    %238 = vector.load %arg12[%c0_281, %c32_282, %c0_283] : memref<2x128x32xbf16, #tpu.memory_space<vmem>>, vector<2x80x32xbf16>
    %239 = vector.shape_cast %238 : vector<2x80x32xbf16> to vector<160x32xbf16>
    %c6_284 = arith.constant 6 : index
    %c0_285 = arith.constant 0 : index
    %c0_286 = arith.constant 0 : index
    %240 = vector.load %arg4[%c6_284, %c0_285, %c0_286] : memref<9x32x64xbf16, #tpu.memory_space<vmem>>, vector<1x32x64xbf16>
    %241 = vector.shape_cast %240 : vector<1x32x64xbf16> to vector<32x64xbf16>
    %cst_287 = arith.constant dense<0.000000e+00> : vector<160x64xf32>
    %242 = tpu.matmul %239, %241, %cst_287 {dimension_numbers = #tpu.dot_dimension_numbers<[1], [0], [0], [1], [0, 0, 1, 1], [], []>} : vector<160x32xbf16>, vector<32x64xbf16>, vector<160x64xf32> -> vector<160x64xf32>
    %243 = vector.shape_cast %242 : vector<160x64xf32> to vector<2x80x64xf32>
    %c0_288 = arith.constant 0 : index
    %c0_289 = arith.constant 0 : index
    %c0_290 = arith.constant 0 : index
    %244 = vector.load %arg13[%c0_288, %c0_289, %c0_290] : memref<2x80x64xf32, #tpu.memory_space<vmem>>, vector<2x80x64xf32>
    %245 = arith.addf %244, %243 : vector<2x80x64xf32>
    %c0_291 = arith.constant 0 : index
    %c0_292 = arith.constant 0 : index
    %c0_293 = arith.constant 0 : index
    %246 = vector.load %arg13[%c0_291, %c0_292, %c0_293] : memref<2x80x64xf32, #tpu.memory_space<vmem>>, vector<2x80x64xf32>
    tpu.vector_store %arg13[%c0_291, %c0_292, %c0_293], %245 {strides = array<i32>} : memref<2x80x64xf32, #tpu.memory_space<vmem>>, vector<2x80x64xf32>,
    %c0_294 = arith.constant 0 : index
    %c33_295 = arith.constant 33 : index
    %c0_296 = arith.constant 0 : index
    %247 = vector.load %arg12[%c0_294, %c33_295, %c0_296] : memref<2x128x32xbf16, #tpu.memory_space<vmem>>, vector<2x80x32xbf16>
    %248 = vector.shape_cast %247 : vector<2x80x32xbf16> to vector<160x32xbf16>
    %c7_297 = arith.constant 7 : index
    %c0_298 = arith.constant 0 : index
    %c0_299 = arith.constant 0 : index
    %249 = vector.load %arg4[%c7_297, %c0_298, %c0_299] : memref<9x32x64xbf16, #tpu.memory_space<vmem>>, vector<1x32x64xbf16>
    %250 = vector.shape_cast %249 : vector<1x32x64xbf16> to vector<32x64xbf16>
    %cst_300 = arith.constant dense<0.000000e+00> : vector<160x64xf32>
    %251 = tpu.matmul %248, %250, %cst_300 {dimension_numbers = #tpu.dot_dimension_numbers<[1], [0], [0], [1], [0, 0, 1, 1], [], []>} : vector<160x32xbf16>, vector<32x64xbf16>, vector<160x64xf32> -> vector<160x64xf32>
    %252 = vector.shape_cast %251 : vector<160x64xf32> to vector<2x80x64xf32>
    %c0_301 = arith.constant 0 : index
    %c0_302 = arith.constant 0 : index
    %c0_303 = arith.constant 0 : index
    %253 = vector.load %arg13[%c0_301, %c0_302, %c0_303] : memref<2x80x64xf32, #tpu.memory_space<vmem>>, vector<2x80x64xf32>
    %254 = arith.addf %253, %252 : vector<2x80x64xf32>
    %c0_304 = arith.constant 0 : index
    %c0_305 = arith.constant 0 : index
    %c0_306 = arith.constant 0 : index
    %255 = vector.load %arg13[%c0_304, %c0_305, %c0_306] : memref<2x80x64xf32, #tpu.memory_space<vmem>>, vector<2x80x64xf32>
    tpu.vector_store %arg13[%c0_304, %c0_305, %c0_306], %254 {strides = array<i32>} : memref<2x80x64xf32, #tpu.memory_space<vmem>>, vector<2x80x64xf32>,
    %c0_307 = arith.constant 0 : index
    %c34_308 = arith.constant 34 : index
    %c0_309 = arith.constant 0 : index
    %256 = vector.load %arg12[%c0_307, %c34_308, %c0_309] : memref<2x128x32xbf16, #tpu.memory_space<vmem>>, vector<2x80x32xbf16>
    %257 = vector.shape_cast %256 : vector<2x80x32xbf16> to vector<160x32xbf16>
    %c8_310 = arith.constant 8 : index
    %c0_311 = arith.constant 0 : index
    %c0_312 = arith.constant 0 : index
    %258 = vector.load %arg4[%c8_310, %c0_311, %c0_312] : memref<9x32x64xbf16, #tpu.memory_space<vmem>>, vector<1x32x64xbf16>
    %259 = vector.shape_cast %258 : vector<1x32x64xbf16> to vector<32x64xbf16>
    %cst_313 = arith.constant dense<0.000000e+00> : vector<160x64xf32>
    %260 = tpu.matmul %257, %259, %cst_313 {dimension_numbers = #tpu.dot_dimension_numbers<[1], [0], [0], [1], [0, 0, 1, 1], [], []>} : vector<160x32xbf16>, vector<32x64xbf16>, vector<160x64xf32> -> vector<160x64xf32>
    %261 = vector.shape_cast %260 : vector<160x64xf32> to vector<2x80x64xf32>
    %c0_314 = arith.constant 0 : index
    %c0_315 = arith.constant 0 : index
    %c0_316 = arith.constant 0 : index
    %262 = vector.load %arg13[%c0_314, %c0_315, %c0_316] : memref<2x80x64xf32, #tpu.memory_space<vmem>>, vector<2x80x64xf32>
    %263 = arith.addf %262, %261 : vector<2x80x64xf32>
    %c0_317 = arith.constant 0 : index
    %c0_318 = arith.constant 0 : index
    %c0_319 = arith.constant 0 : index
    %264 = vector.load %arg13[%c0_317, %c0_318, %c0_319] : memref<2x80x64xf32, #tpu.memory_space<vmem>>, vector<2x80x64xf32>
    tpu.vector_store %arg13[%c0_317, %c0_318, %c0_319], %263 {strides = array<i32>} : memref<2x80x64xf32, #tpu.memory_space<vmem>>, vector<2x80x64xf32>,
    %c0_320 = arith.constant 0 : index
    %c0_321 = arith.constant 0 : index
    %c0_322 = arith.constant 0 : index
    %265 = vector.load %arg13[%c0_320, %c0_321, %c0_322] : memref<2x80x64xf32, #tpu.memory_space<vmem>>, vector<2x1x64xf32>
    %266 = vector.shape_cast %265 : vector<2x1x64xf32> to vector<2x64xf32>
    %c0_323 = arith.constant 0 : index
    %c1_324 = arith.constant 1 : index
    %c0_325 = arith.constant 0 : index
    %267 = vector.load %arg13[%c0_323, %c1_324, %c0_325] : memref<2x80x64xf32, #tpu.memory_space<vmem>>, vector<2x1x64xf32>
    %268 = vector.shape_cast %267 : vector<2x1x64xf32> to vector<2x64xf32>
    %269 = arith.maximumf %266, %268 : vector<2x64xf32>
    %c0_326 = arith.constant 0 : index
    %c16_327 = arith.constant 16 : index
    %c0_328 = arith.constant 0 : index
    %270 = vector.load %arg13[%c0_326, %c16_327, %c0_328] : memref<2x80x64xf32, #tpu.memory_space<vmem>>, vector<2x1x64xf32>
    %271 = vector.shape_cast %270 : vector<2x1x64xf32> to vector<2x64xf32>
    %272 = arith.maximumf %269, %271 : vector<2x64xf32>
    %c0_329 = arith.constant 0 : index
    %c17_330 = arith.constant 17 : index
    %c0_331 = arith.constant 0 : index
    %273 = vector.load %arg13[%c0_329, %c17_330, %c0_331] : memref<2x80x64xf32, #tpu.memory_space<vmem>>, vector<2x1x64xf32>
    %274 = vector.shape_cast %273 : vector<2x1x64xf32> to vector<2x64xf32>
    %275 = arith.maximumf %272, %274 : vector<2x64xf32>
    %c0_332 = arith.constant 0 : index
    %c0_333 = arith.constant 0 : index
    %276 = vector.load %arg5[%c0_332, %c0_333] : memref<1x64xf32, #tpu.memory_space<vmem>>, vector<1x64xf32>
    %277 = vector.broadcast %276 : vector<1x64xf32> to vector<2x64xf32>
    %278 = arith.addf %275, %277 : vector<2x64xf32>
    %cst_334 = arith.constant 0.000000e+00 : f32
    %279 = vector.broadcast %cst_334 : f32 to vector<2x64xf32>
    %280 = arith.maximumf %278, %279 : vector<2x64xf32>
    %281 = arith.truncf %280 : vector<2x64xf32> to vector<2x64xbf16>
    %c0_335 = arith.constant 0 : index
    %c0_336 = arith.constant 0 : index
    %282 = vector.load %arg14[%c0_335, %c0_336] : memref<2x256xbf16, #tpu.memory_space<vmem>>, vector<2x64xbf16>
    tpu.vector_store %arg14[%c0_335, %c0_336], %281 {strides = array<i32>} : memref<2x256xbf16, #tpu.memory_space<vmem>>, vector<2x64xbf16>,
    %c0_337 = arith.constant 0 : index
    %c2_338 = arith.constant 2 : index
    %c0_339 = arith.constant 0 : index
    %283 = vector.load %arg13[%c0_337, %c2_338, %c0_339] : memref<2x80x64xf32, #tpu.memory_space<vmem>>, vector<2x1x64xf32>
    %284 = vector.shape_cast %283 : vector<2x1x64xf32> to vector<2x64xf32>
    %c0_340 = arith.constant 0 : index
    %c3_341 = arith.constant 3 : index
    %c0_342 = arith.constant 0 : index
    %285 = vector.load %arg13[%c0_340, %c3_341, %c0_342] : memref<2x80x64xf32, #tpu.memory_space<vmem>>, vector<2x1x64xf32>
    %286 = vector.shape_cast %285 : vector<2x1x64xf32> to vector<2x64xf32>
    %287 = arith.maximumf %284, %286 : vector<2x64xf32>
    %c0_343 = arith.constant 0 : index
    %c18_344 = arith.constant 18 : index
    %c0_345 = arith.constant 0 : index
    %288 = vector.load %arg13[%c0_343, %c18_344, %c0_345] : memref<2x80x64xf32, #tpu.memory_space<vmem>>, vector<2x1x64xf32>
    %289 = vector.shape_cast %288 : vector<2x1x64xf32> to vector<2x64xf32>
    %290 = arith.maximumf %287, %289 : vector<2x64xf32>
    %c0_346 = arith.constant 0 : index
    %c19 = arith.constant 19 : index
    %c0_347 = arith.constant 0 : index
    %291 = vector.load %arg13[%c0_346, %c19, %c0_347] : memref<2x80x64xf32, #tpu.memory_space<vmem>>, vector<2x1x64xf32>
    %292 = vector.shape_cast %291 : vector<2x1x64xf32> to vector<2x64xf32>
    %293 = arith.maximumf %290, %292 : vector<2x64xf32>
    %c0_348 = arith.constant 0 : index
    %c0_349 = arith.constant 0 : index
    %294 = vector.load %arg5[%c0_348, %c0_349] : memref<1x64xf32, #tpu.memory_space<vmem>>, vector<1x64xf32>
    %295 = vector.broadcast %294 : vector<1x64xf32> to vector<2x64xf32>
    %296 = arith.addf %293, %295 : vector<2x64xf32>
    %cst_350 = arith.constant 0.000000e+00 : f32
    %297 = vector.broadcast %cst_350 : f32 to vector<2x64xf32>
    %298 = arith.maximumf %296, %297 : vector<2x64xf32>
    %299 = arith.truncf %298 : vector<2x64xf32> to vector<2x64xbf16>
    %c0_351 = arith.constant 0 : index
    %c64_352 = arith.constant 64 : index
    %300 = vector.load %arg14[%c0_351, %c64_352] : memref<2x256xbf16, #tpu.memory_space<vmem>>, vector<2x64xbf16>
    tpu.vector_store %arg14[%c0_351, %c64_352], %299 {strides = array<i32>} : memref<2x256xbf16, #tpu.memory_space<vmem>>, vector<2x64xbf16>,
    %c0_353 = arith.constant 0 : index
    %c32_354 = arith.constant 32 : index
    %c0_355 = arith.constant 0 : index
    %301 = vector.load %arg13[%c0_353, %c32_354, %c0_355] : memref<2x80x64xf32, #tpu.memory_space<vmem>>, vector<2x1x64xf32>
    %302 = vector.shape_cast %301 : vector<2x1x64xf32> to vector<2x64xf32>
    %c0_356 = arith.constant 0 : index
    %c33_357 = arith.constant 33 : index
    %c0_358 = arith.constant 0 : index
    %303 = vector.load %arg13[%c0_356, %c33_357, %c0_358] : memref<2x80x64xf32, #tpu.memory_space<vmem>>, vector<2x1x64xf32>
    %304 = vector.shape_cast %303 : vector<2x1x64xf32> to vector<2x64xf32>
    %305 = arith.maximumf %302, %304 : vector<2x64xf32>
    %c0_359 = arith.constant 0 : index
    %c48_360 = arith.constant 48 : index
    %c0_361 = arith.constant 0 : index
    %306 = vector.load %arg13[%c0_359, %c48_360, %c0_361] : memref<2x80x64xf32, #tpu.memory_space<vmem>>, vector<2x1x64xf32>
    %307 = vector.shape_cast %306 : vector<2x1x64xf32> to vector<2x64xf32>
    %308 = arith.maximumf %305, %307 : vector<2x64xf32>
    %c0_362 = arith.constant 0 : index
    %c49_363 = arith.constant 49 : index
    %c0_364 = arith.constant 0 : index
    %309 = vector.load %arg13[%c0_362, %c49_363, %c0_364] : memref<2x80x64xf32, #tpu.memory_space<vmem>>, vector<2x1x64xf32>
    %310 = vector.shape_cast %309 : vector<2x1x64xf32> to vector<2x64xf32>
    %311 = arith.maximumf %308, %310 : vector<2x64xf32>
    %c0_365 = arith.constant 0 : index
    %c0_366 = arith.constant 0 : index
    %312 = vector.load %arg5[%c0_365, %c0_366] : memref<1x64xf32, #tpu.memory_space<vmem>>, vector<1x64xf32>
    %313 = vector.broadcast %312 : vector<1x64xf32> to vector<2x64xf32>
    %314 = arith.addf %311, %313 : vector<2x64xf32>
    %cst_367 = arith.constant 0.000000e+00 : f32
    %315 = vector.broadcast %cst_367 : f32 to vector<2x64xf32>
    %316 = arith.maximumf %314, %315 : vector<2x64xf32>
    %317 = arith.truncf %316 : vector<2x64xf32> to vector<2x64xbf16>
    %c0_368 = arith.constant 0 : index
    %c128_369 = arith.constant 128 : index
    %318 = vector.load %arg14[%c0_368, %c128_369] : memref<2x256xbf16, #tpu.memory_space<vmem>>, vector<2x64xbf16>
    tpu.vector_store %arg14[%c0_368, %c128_369], %317 {strides = array<i32>} : memref<2x256xbf16, #tpu.memory_space<vmem>>, vector<2x64xbf16>,
    %c0_370 = arith.constant 0 : index
    %c34_371 = arith.constant 34 : index
    %c0_372 = arith.constant 0 : index
    %319 = vector.load %arg13[%c0_370, %c34_371, %c0_372] : memref<2x80x64xf32, #tpu.memory_space<vmem>>, vector<2x1x64xf32>
    %320 = vector.shape_cast %319 : vector<2x1x64xf32> to vector<2x64xf32>
    %c0_373 = arith.constant 0 : index
    %c35 = arith.constant 35 : index
    %c0_374 = arith.constant 0 : index
    %321 = vector.load %arg13[%c0_373, %c35, %c0_374] : memref<2x80x64xf32, #tpu.memory_space<vmem>>, vector<2x1x64xf32>
    %322 = vector.shape_cast %321 : vector<2x1x64xf32> to vector<2x64xf32>
    %323 = arith.maximumf %320, %322 : vector<2x64xf32>
    %c0_375 = arith.constant 0 : index
    %c50 = arith.constant 50 : index
    %c0_376 = arith.constant 0 : index
    %324 = vector.load %arg13[%c0_375, %c50, %c0_376] : memref<2x80x64xf32, #tpu.memory_space<vmem>>, vector<2x1x64xf32>
    %325 = vector.shape_cast %324 : vector<2x1x64xf32> to vector<2x64xf32>
    %326 = arith.maximumf %323, %325 : vector<2x64xf32>
    %c0_377 = arith.constant 0 : index
    %c51 = arith.constant 51 : index
    %c0_378 = arith.constant 0 : index
    %327 = vector.load %arg13[%c0_377, %c51, %c0_378] : memref<2x80x64xf32, #tpu.memory_space<vmem>>, vector<2x1x64xf32>
    %328 = vector.shape_cast %327 : vector<2x1x64xf32> to vector<2x64xf32>
    %329 = arith.maximumf %326, %328 : vector<2x64xf32>
    %c0_379 = arith.constant 0 : index
    %c0_380 = arith.constant 0 : index
    %330 = vector.load %arg5[%c0_379, %c0_380] : memref<1x64xf32, #tpu.memory_space<vmem>>, vector<1x64xf32>
    %331 = vector.broadcast %330 : vector<1x64xf32> to vector<2x64xf32>
    %332 = arith.addf %329, %331 : vector<2x64xf32>
    %cst_381 = arith.constant 0.000000e+00 : f32
    %333 = vector.broadcast %cst_381 : f32 to vector<2x64xf32>
    %334 = arith.maximumf %332, %333 : vector<2x64xf32>
    %335 = arith.truncf %334 : vector<2x64xf32> to vector<2x64xbf16>
    %c0_382 = arith.constant 0 : index
    %c192_383 = arith.constant 192 : index
    %336 = vector.load %arg14[%c0_382, %c192_383] : memref<2x256xbf16, #tpu.memory_space<vmem>>, vector<2x64xbf16>
    tpu.vector_store %arg14[%c0_382, %c192_383], %335 {strides = array<i32>} : memref<2x256xbf16, #tpu.memory_space<vmem>>, vector<2x64xbf16>,
    %c0_384 = arith.constant 0 : index
    %c0_385 = arith.constant 0 : index
    %337 = vector.load %arg14[%c0_384, %c0_385] : memref<2x256xbf16, #tpu.memory_space<vmem>>, vector<2x256xbf16>
    %c0_386 = arith.constant 0 : index
    %c0_387 = arith.constant 0 : index
    %338 = vector.load %arg6[%c0_386, %c0_387] : memref<256x128xbf16, #tpu.memory_space<vmem>>, vector<256x128xbf16>
    %cst_388 = arith.constant dense<0.000000e+00> : vector<2x128xf32>
    %339 = tpu.matmul %337, %338, %cst_388 {dimension_numbers = #tpu.dot_dimension_numbers<[1], [0], [0], [1], [0, 0, 1, 1], [], []>} : vector<2x256xbf16>, vector<256x128xbf16>, vector<2x128xf32> -> vector<2x128xf32>
    %c0_389 = arith.constant 0 : index
    %c0_390 = arith.constant 0 : index
    %340 = vector.load %arg7[%c0_389, %c0_390] : memref<1x128xf32, #tpu.memory_space<vmem>>, vector<1x128xf32>
    %341 = vector.broadcast %340 : vector<1x128xf32> to vector<2x128xf32>
    %342 = arith.addf %339, %341 : vector<2x128xf32>
    %cst_391 = arith.constant 0.000000e+00 : f32
    %343 = vector.broadcast %cst_391 : f32 to vector<2x128xf32>
    %344 = arith.maximumf %342, %343 : vector<2x128xf32>
    %345 = arith.truncf %344 : vector<2x128xf32> to vector<2x128xbf16>
    %c0_392 = arith.constant 0 : index
    %c0_393 = arith.constant 0 : index
    %346 = vector.load %arg8[%c0_392, %c0_393] : memref<128x128xbf16, #tpu.memory_space<vmem>>, vector<128x128xbf16>
    %cst_394 = arith.constant dense<0.000000e+00> : vector<2x128xf32>
    %347 = tpu.matmul %345, %346, %cst_394 {dimension_numbers = #tpu.dot_dimension_numbers<[1], [0], [0], [1], [0, 0, 1, 1], [], []>} : vector<2x128xbf16>, vector<128x128xbf16>, vector<2x128xf32> -> vector<2x128xf32>
    %c0_395 = arith.constant 0 : index
    %c0_396 = arith.constant 0 : index
    %348 = vector.load %arg9[%c0_395, %c0_396] : memref<1x128xf32, #tpu.memory_space<vmem>>, vector<1x128xf32>
    %349 = vector.broadcast %348 : vector<1x128xf32> to vector<2x128xf32>
    %350 = arith.addf %347, %349 : vector<2x128xf32>
    %c0_397 = arith.constant 0 : index
    %c0_398 = arith.constant 0 : index
    %351 = vector.load %arg10[%c0_397, %c0_398] : memref<2x128xf32, #tpu.memory_space<vmem>>, vector<2x128xf32>
    tpu.vector_store %arg10[%c0_397, %c0_398], %350 {strides = array<i32>} : memref<2x128xf32, #tpu.memory_space<vmem>>, vector<2x128xf32>,
    return
  }
  func.func @transform_0(%arg0: i32) -> (i32, i32, i32) {
    %c0_i32 = arith.constant 0 : i32
    %c0_i32_0 = arith.constant 0 : i32
    %c0_i32_1 = arith.constant 0 : i32
    return %arg0, %c0_i32, %c0_i32_0 : i32, i32, i32
  }
  func.func @transform_1(%arg0: i32) -> (i32, i32, i32) {
    %c0_i32 = arith.constant 0 : i32
    %c0_i32_0 = arith.constant 0 : i32
    %c0_i32_1 = arith.constant 0 : i32
    %c0_i32_2 = arith.constant 0 : i32
    return %c0_i32, %c0_i32_0, %c0_i32_1 : i32, i32, i32
  }
  func.func @transform_2(%arg0: i32) -> (i32, i32) {
    %c0_i32 = arith.constant 0 : i32
    %c0_i32_0 = arith.constant 0 : i32
    %c0_i32_1 = arith.constant 0 : i32
    return %c0_i32, %c0_i32_0 : i32, i32
  }
  func.func @transform_3(%arg0: i32) -> (i32, i32, i32) {
    %c0_i32 = arith.constant 0 : i32
    %c0_i32_0 = arith.constant 0 : i32
    %c0_i32_1 = arith.constant 0 : i32
    %c0_i32_2 = arith.constant 0 : i32
    return %c0_i32, %c0_i32_0, %c0_i32_1 : i32, i32, i32
  }
  func.func @transform_4(%arg0: i32) -> (i32, i32) {
    %c0_i32 = arith.constant 0 : i32
    %c0_i32_0 = arith.constant 0 : i32
    %c0_i32_1 = arith.constant 0 : i32
    return %c0_i32, %c0_i32_0 : i32, i32
  }
  func.func @transform_5(%arg0: i32) -> (i32, i32) {
    %c0_i32 = arith.constant 0 : i32
    %c0_i32_0 = arith.constant 0 : i32
    %c0_i32_1 = arith.constant 0 : i32
    return %c0_i32, %c0_i32_0 : i32, i32
  }
  func.func @transform_6(%arg0: i32) -> (i32, i32) {
    %c0_i32 = arith.constant 0 : i32
    %c0_i32_0 = arith.constant 0 : i32
    %c0_i32_1 = arith.constant 0 : i32
    return %c0_i32, %c0_i32_0 : i32, i32
  }
  func.func @transform_7(%arg0: i32) -> (i32, i32) {
    %c0_i32 = arith.constant 0 : i32
    %c0_i32_0 = arith.constant 0 : i32
    %c0_i32_1 = arith.constant 0 : i32
    return %c0_i32, %c0_i32_0 : i32, i32
  }
  func.func @transform_8(%arg0: i32) -> (i32, i32) {
    %c0_i32 = arith.constant 0 : i32
    %c0_i32_0 = arith.constant 0 : i32
    %c0_i32_1 = arith.constant 0 : i32
    return %c0_i32, %c0_i32_0 : i32, i32
  }
  func.func @transform_9(%arg0: i32) -> (i32, i32) {
    %c0_i32 = arith.constant 0 : i32
    %c0_i32_0 = arith.constant 0 : i32
    return %arg0, %c0_i32 : i32, i32
  }
}

</mosaic_0001>

<llo_original>
// kernel: simple_cnn_forward.1
$region0: #{simple_cnn_forward.1}
  #allocation0 [shape = 'u32[]', space=smem, size = 0x4, offset = 0x4, fixed_abs, tag = 'smem constant byte address 0x4 - core index']
  #allocation1 [shape = 'u32[144,128]{1,0:T(1,128)}', space=vmem, size = 0x12000, scoped, tag = 'internal scratch']
  #allocation2 [shape = 'f32[2,224,32]{2,1,0:T(8,128)}', space=vmem, size = 0x38000, scoped, tag = 'scratch operand']
  #allocation3 [shape = 'bf16[2,128,32]{2,1,0:T(16,128)(2,1)}', space=vmem, size = 0x10000, scoped, tag = 'scratch operand']
  #allocation4 [shape = 'f32[2,80,64]{2,1,0:T(8,128)}', space=vmem, size = 0x14000, scoped, tag = 'scratch operand']
  #allocation5 [shape = 'bf16[2,256]{1,0:T(2,128)(2,1)}', space=vmem, size = 0x400, scoped, tag = 'scratch operand']
  %s0 = inlined_call_operand.vmem [shape: bf16[2,272,4], index: 0, kind: input, shape index: {}]
  %s1 = inlined_call_operand.vmem [shape: bf16[9,4,32], index: 1, kind: input, shape index: {}]
  %s2 = inlined_call_operand.vmem [shape: f32[1,32], index: 2, kind: input, shape index: {}]
  %s3 = inlined_call_operand.vmem [shape: bf16[9,32,64], index: 3, kind: input, shape index: {}]
  %s4 = inlined_call_operand.vmem [shape: f32[1,64], index: 4, kind: input, shape index: {}]
  %s5 = inlined_call_operand.vmem [shape: bf16[256,128], index: 5, kind: input, shape index: {}]
  %s6 = inlined_call_operand.vmem [shape: f32[1,128], index: 6, kind: input, shape index: {}]
  %s7 = inlined_call_operand.vmem [shape: bf16[128,128], index: 7, kind: input, shape index: {}]
  %s8 = inlined_call_operand.vmem [shape: f32[1,128], index: 8, kind: input, shape index: {}]
  %s9 = inlined_call_operand.hbm [shape: f32[2,128], index: 9, kind: output, shape index: {}]
  %s10 = sld [smem:[#allocation0]]
  $region46: #{simple_cnn_forward.1} parent=0
    _
  %s12 = ssub.s32 1, %s10
  %s13 = scalar_select 0, %s12, %s10
  $region1: #{simple_cnn_forward.1} parent=0
    #allocation6 [shape = 'u8[1024]{0}', space=vmem, size = 0x400, scoped, tag = 'output window, operand 0, single buffered']
    #allocation7 [shape = 's32[1]{0}', space=sflag, size = 0x4, scoped, tag = 'scoped memory for simple_cnn_forward.1']
    %14 = vsyncpa [#allocation7], 0
    // Predicated region
    $region2: #{simple_cnn_forward.1} parent=1 // pred_check
      _
    $region3: #{simple_cnn_forward.1} parent=1 // pred_check_branch
      %16 = sbr.rel (0) target = $region5
    $region4: #{simple_cnn_forward.1} parent=1 // pred_region
      _
    $region5: #{simple_cnn_forward.1} parent=1 // pred_fallthru
      _
    // Predicated region
    $region6: #{simple_cnn_forward.1} parent=1 // pred_check
      _
    $region7: #{simple_cnn_forward.1} parent=1 // pred_check_branch
      %18 = sbr.rel (0) target = $region9
    $region8: #{simple_cnn_forward.1} parent=1 // pred_region
      _
    $region9: #{simple_cnn_forward.1} parent=1 // pred_fallthru
      _
    // Predicated region
    $region10: #{simple_cnn_forward.1} parent=1 // pred_check
      _
    $region11: #{simple_cnn_forward.1} parent=1 // pred_check_branch
      %20 = sbr.rel (0) target = $region13
    $region12: #{simple_cnn_forward.1} parent=1 // pred_region
      _
    $region13: #{simple_cnn_forward.1} parent=1 // pred_fallthru
      _
    // Predicated region
    $region14: #{simple_cnn_forward.1} parent=1 // pred_check
      _
    $region15: #{simple_cnn_forward.1} parent=1 // pred_check_branch
      %22 = sbr.rel (0) target = $region17
    $region16: #{simple_cnn_forward.1} parent=1 // pred_region
      _
    $region17: #{simple_cnn_forward.1} parent=1 // pred_fallthru
      _
    // Predicated region
    $region18: #{simple_cnn_forward.1} parent=1 // pred_check
      _
    $region19: #{simple_cnn_forward.1} parent=1 // pred_check_branch
      %24 = sbr.rel (0) target = $region21
    $region20: #{simple_cnn_forward.1} parent=1 // pred_region
      _
    $region21: #{simple_cnn_forward.1} parent=1 // pred_fallthru
      _
    // Predicated region
    $region22: #{simple_cnn_forward.1} parent=1 // pred_check
      _
    $region23: #{simple_cnn_forward.1} parent=1 // pred_check_branch
      %26 = sbr.rel (0) target = $region25
    $region24: #{simple_cnn_forward.1} parent=1 // pred_region
      _
    $region25: #{simple_cnn_forward.1} parent=1 // pred_fallthru
      _
    // Predicated region
    $region26: #{simple_cnn_forward.1} parent=1 // pred_check
      _
    $region27: #{simple_cnn_forward.1} parent=1 // pred_check_branch
      %28 = sbr.rel (0) target = $region29
    $region28: #{simple_cnn_forward.1} parent=1 // pred_region
      _
    $region29: #{simple_cnn_forward.1} parent=1 // pred_fallthru
      _
    // Predicated region
    $region30: #{simple_cnn_forward.1} parent=1 // pred_check
      _
    $region31: #{simple_cnn_forward.1} parent=1 // pred_check_branch
      %30 = sbr.rel (0) target = $region33
    $region32: #{simple_cnn_forward.1} parent=1 // pred_region
      _
    $region33: #{simple_cnn_forward.1} parent=1 // pred_fallthru
      _
    // Predicated region
    $region34: #{simple_cnn_forward.1} parent=1 // pred_check
      _
    $region35: #{simple_cnn_forward.1} parent=1 // pred_check_branch
      %32 = sbr.rel (0) target = $region37
    $region36: #{simple_cnn_forward.1} parent=1 // pred_region
      _
    $region37: #{simple_cnn_forward.1} parent=1 // pred_fallthru
      _
    %v34 = vld [vmem:[%s0] sm:$0xf]
    %v35 = vld [vmem:[%s0 + $0x4] sm:$0xf]
    %v36 = vld [vmem:[%s0 + $0x8] sm:$0xf]
    %v37 = vld [vmem:[%s0 + $0xc] sm:$0xf]
    %v38 = vld [vmem:[%s0 + $0x10] sm:$0xf]
    %v39 = vld [vmem:[%s0 + $0x14] sm:$0xf]
    %v40 = vld [vmem:[%s0 + $0x18] sm:$0xf]
    %v41 = vld [vmem:[%s0 + $0x1c] sm:$0xf]
    %v42 = vld [vmem:[%s0 + $0x20] sm:$0xf]
    %v43 = vld [vmem:[%s0 + $0x24] sm:$0xf]
    %v44 = vld [vmem:[%s0 + $0x28] sm:$0xf]
    %v45 = vld [vmem:[%s0 + $0x2c] sm:$0xf]
    %v46 = vld [vmem:[%s0 + $0x30] sm:$0xf]
    %v47 = vld [vmem:[%s0 + $0x34] sm:$0xf]
    %v48 = vld [vmem:[%s0 + $0x38] sm:$0xf]
    %v49 = vld [vmem:[%s0 + $0x3c] sm:$0xf]
    %v50 = vld [vmem:[%s0 + $0x40] sm:$0xf]
    %v51 = vld [vmem:[%s0 + $0x44] sm:$0xf]
    %v52 = vld [vmem:[%s0 + $0x48] sm:$0xf]
    %v53 = vld [vmem:[%s0 + $0x4c] sm:$0xf]
    %v54 = vld [vmem:[%s0 + $0x50] sm:$0xf]
    %v55 = vld [vmem:[%s0 + $0x54] sm:$0xf]
    %v56 = vld [vmem:[%s0 + $0x58] sm:$0xf]
    %v57 = vld [vmem:[%s0 + $0x5c] sm:$0xf]
    %v58 = vld [vmem:[%s0 + $0x60] sm:$0xf]
    %v59 = vld [vmem:[%s0 + $0x64] sm:$0xf]
    %v60 = vld [vmem:[%s0 + $0x68] sm:$0xf]
    %v61 = vld [vmem:[%s0 + $0x6c] sm:$0xf]
    %v62 = vld [vmem:[%s0 + $0x88] sm:$0xf]
    %v63 = vld [vmem:[%s0 + $0x8c] sm:$0xf]
    %v64 = vld [vmem:[%s0 + $0x90] sm:$0xf]
    %v65 = vld [vmem:[%s0 + $0x94] sm:$0xf]
    %v66 = vld [vmem:[%s0 + $0x98] sm:$0xf]
    %v67 = vld [vmem:[%s0 + $0x9c] sm:$0xf]
    %v68 = vld [vmem:[%s0 + $0xa0] sm:$0xf]
    %v69 = vld [vmem:[%s0 + $0xa4] sm:$0xf]
    %v70 = vld [vmem:[%s0 + $0xa8] sm:$0xf]
    %v71 = vld [vmem:[%s0 + $0xac] sm:$0xf]
    %v72 = vld [vmem:[%s0 + $0xb0] sm:$0xf]
    %v73 = vld [vmem:[%s0 + $0xb4] sm:$0xf]
    %v74 = vld [vmem:[%s0 + $0xb8] sm:$0xf]
    %v75 = vld [vmem:[%s0 + $0xbc] sm:$0xf]
    %v76 = vld [vmem:[%s0 + $0xc0] sm:$0xf]
    %v77 = vld [vmem:[%s0 + $0xc4] sm:$0xf]
    %v78 = vld [vmem:[%s0 + $0xc8] sm:$0xf]
    %v79 = vld [vmem:[%s0 + $0xcc] sm:$0xf]
    %v80 = vld [vmem:[%s0 + $0xd0] sm:$0xf]
    %v81 = vld [vmem:[%s0 + $0xd4] sm:$0xf]
    %v82 = vld [vmem:[%s0 + $0xd8] sm:$0xf]
    %v83 = vld [vmem:[%s0 + $0xdc] sm:$0xf]
    %v84 = vld [vmem:[%s0 + $0xe0] sm:$0xf]
    %v85 = vld [vmem:[%s0 + $0xe4] sm:$0xf]
    %v86 = vld [vmem:[%s0 + $0xe8] sm:$0xf]
    %v87 = vld [vmem:[%s0 + $0xec] sm:$0xf]
    %v88 = vld [vmem:[%s0 + $0xf0] sm:$0xf]
    %v89 = vld [vmem:[%s0 + $0xf4] sm:$0xf]
    %v90 = vld [vmem:[%s1] sm:$0x3]
    %v147 = vunpack.c.l.b16 %v34
    %v148 = vunpack.c.l.b16 %v35
    %v149 = vunpack.c.l.b16 %v36
    %v150 = vunpack.c.l.b16 %v37
    %v151 = vunpack.c.l.b16 %v38
    %v152 = vunpack.c.l.b16 %v39
    %v153 = vunpack.c.l.b16 %v40
    %v154 = vunpack.c.l.b16 %v41
    %v155 = vunpack.c.l.b16 %v42
    %v156 = vunpack.c.l.b16 %v43
    %v157 = vunpack.c.l.b16 %v44
    %v158 = vunpack.c.l.b16 %v45
    %v159 = vunpack.c.l.b16 %v46
    %v160 = vunpack.c.l.b16 %v47
    %v161 = vunpack.c.l.b16 %v48
    %v162 = vunpack.c.l.b16 %v49
    %v163 = vunpack.c.l.b16 %v50
    %v164 = vunpack.c.l.b16 %v51
    %v165 = vunpack.c.l.b16 %v52
    %v166 = vunpack.c.l.b16 %v53
    %v167 = vunpack.c.l.b16 %v54
    %v168 = vunpack.c.l.b16 %v55
    %v169 = vunpack.c.l.b16 %v56
    %v170 = vunpack.c.l.b16 %v57
    %v171 = vunpack.c.l.b16 %v58
    %v172 = vunpack.c.l.b16 %v59
    %v173 = vunpack.c.l.b16 %v60
    %v174 = vunpack.c.l.b16 %v61
    %v175 = vunpack.c.l.b16 %v62
    %v176 = vunpack.c.l.b16 %v63
    %v177 = vunpack.c.l.b16 %v64
    %v178 = vunpack.c.l.b16 %v65
    %v179 = vunpack.c.l.b16 %v66
    %v180 = vunpack.c.l.b16 %v67
    %v181 = vunpack.c.l.b16 %v68
    %v182 = vunpack.c.l.b16 %v69
    %v183 = vunpack.c.l.b16 %v70
    %v184 = vunpack.c.l.b16 %v71
    %v185 = vunpack.c.l.b16 %v72
    %v186 = vunpack.c.l.b16 %v73
    %v187 = vunpack.c.l.b16 %v74
    %v188 = vunpack.c.l.b16 %v75
    %v189 = vunpack.c.l.b16 %v76
    %v190 = vunpack.c.l.b16 %v77
    %v191 = vunpack.c.l.b16 %v78
    %v192 = vunpack.c.l.b16 %v79
    %v193 = vunpack.c.l.b16 %v80
    %v194 = vunpack.c.l.b16 %v81
    %v195 = vunpack.c.l.b16 %v82
    %v196 = vunpack.c.l.b16 %v83
    %v197 = vunpack.c.l.b16 %v84
    %v198 = vunpack.c.l.b16 %v85
    %v199 = vunpack.c.l.b16 %v86
    %v200 = vunpack.c.l.b16 %v87
    %v201 = vunpack.c.l.b16 %v88
    %v202 = vunpack.c.l.b16 %v89
    %v203 = vpack.c.b16 %v148, %v147
    %v204 = vpack.c.b16 %v150, %v149
    %v205 = vpack.c.b16 %v152, %v151
    %v206 = vpack.c.b16 %v154, %v153
    %v207 = vpack.c.b16 %v156, %v155
    %v208 = vpack.c.b16 %v158, %v157
    %v209 = vpack.c.b16 %v160, %v159
    %v210 = vpack.c.b16 %v162, %v161
    %v211 = vpack.c.b16 %v164, %v163
    %v212 = vpack.c.b16 %v166, %v165
    %v213 = vpack.c.b16 %v168, %v167
    %v214 = vpack.c.b16 %v170, %v169
    %v215 = vpack.c.b16 %v172, %v171
    %v216 = vpack.c.b16 %v174, %v173
    %v217 = vpack.c.b16 %v176, %v175
    %v218 = vpack.c.b16 %v178, %v177
    %v219 = vpack.c.b16 %v180, %v179
    %v220 = vpack.c.b16 %v182, %v181
    %v221 = vpack.c.b16 %v184, %v183
    %v222 = vpack.c.b16 %v186, %v185
    %v223 = vpack.c.b16 %v188, %v187
    %v224 = vpack.c.b16 %v190, %v189
    %v225 = vpack.c.b16 %v192, %v191
    %v226 = vpack.c.b16 %v194, %v193
    %v227 = vpack.c.b16 %v196, %v195
    %v228 = vpack.c.b16 %v198, %v197
    %v229 = vpack.c.b16 %v200, %v199
    %v230 = vpack.c.b16 %v202, %v201
    %vm231 = vcmask 31744
    %v233 = vsel %vm231, %v203, 0
    %v236 = vsel %vm231, %v204, 0
    %v239 = vsel %vm231, %v205, 0
    %v242 = vsel %vm231, %v206, 0
    %v245 = vsel %vm231, %v207, 0
    %v248 = vsel %vm231, %v208, 0
    %v251 = vsel %vm231, %v209, 0
    %v254 = vsel %vm231, %v210, 0
    %v257 = vsel %vm231, %v211, 0
    %v260 = vsel %vm231, %v212, 0
    %v263 = vsel %vm231, %v213, 0
    %v266 = vsel %vm231, %v214, 0
    %v269 = vsel %vm231, %v215, 0
    %v272 = vsel %vm231, %v216, 0
    %v275 = vsel %vm231, %v217, 0
    %v278 = vsel %vm231, %v218, 0
    %v281 = vsel %vm231, %v219, 0
    %v284 = vsel %vm231, %v220, 0
    %v287 = vsel %vm231, %v221, 0
    %v290 = vsel %vm231, %v222, 0
    %v293 = vsel %vm231, %v223, 0
    %v296 = vsel %vm231, %v224, 0
    %v299 = vsel %vm231, %v225, 0
    %v302 = vsel %vm231, %v226, 0
    %v305 = vsel %vm231, %v227, 0
    %v308 = vsel %vm231, %v228, 0
    %v311 = vsel %vm231, %v229, 0
    %v314 = vsel %vm231, %v230, 0
    %vm316 = vcmask 1041408
    %v318 = vsel %vm316, %v90, 0
    %320 = vmatprep.subr.bf16.mxu0 0
    %321 = vmatpush1.bf16.msra.mxu0 %v318
    %322 = vmatprep.subr.bf16.mxu0 0
    %323 = vmatpush1.bf16.msra.mxu0 0
    %324 = vmatprep.subr.bf16.mxu0 0
    %325 = vmatpush1.bf16.msra.mxu0 0
    %326 = vmatprep.subr.bf16.mxu0 0
    %327 = vmatpush1.bf16.msra.mxu0 0
    %328 = vmatprep.subr.bf16.mxu0 0
    %329 = vmatpush1.bf16.msra.mxu0 0
    %330 = vmatprep.subr.bf16.mxu0 0
    %331 = vmatpush1.bf16.msra.mxu0 0
    %332 = vmatprep.subr.bf16.mxu0 0
    %333 = vmatpush1.bf16.msra.mxu0 0
    %334 = vmatprep.subr.bf16.mxu0 0
    %335 = vmatpush1.bf16.msra.mxu0 0
    %336 = vmatprep.subr.bf16.mxu0 0
    %337 = vmatpush1.bf16.msra.mxu0 0
    %338 = vmatprep.subr.bf16.mxu0 0
    %339 = vmatpush1.bf16.msra.mxu0 0
    %340 = vmatprep.subr.bf16.mxu0 0
    %341 = vmatpush1.bf16.msra.mxu0 0
    %342 = vmatprep.subr.bf16.mxu0 0
    %343 = vmatpush1.bf16.msra.mxu0 0
    %344 = vmatprep.subr.bf16.mxu0 0
    %345 = vmatpush1.bf16.msra.mxu0 0
    %346 = vmatprep.subr.bf16.mxu0 0
    %347 = vmatpush1.bf16.msra.mxu0 0
    %348 = vmatprep.subr.bf16.mxu0 0
    %349 = vmatpush1.bf16.msra.mxu0 0
    %350 = vmatprep.subr.bf16.mxu0 0
    %351 = vmatpush1.bf16.msra.mxu0 0
    %352 = vmatprep.mubr.bf16.mxu0 0
    %353 = vmatmul.mubr.bf16.gmra.mrb[0].mxu0 %v233
    %v354 = vpop.f32.mrb[0].mxu0
    %v355 = vadd.f32 0.0, %v354
    %v356 = vpop.f32.mrb[0].mxu0
    %v357 = vpop.f32.mrb[0].mxu0
    %v358 = vadd.f32 0.0, %v357
    %v359 = vpop.f32.mrb[0].mxu0
    %360 = vmatprep.mubr.bf16.mxu0 0
    %361 = vmatmul.mubr.bf16.gmra.mrb[0].mxu0 %v236
    %v362 = vpop.f32.mrb[0].mxu0
    %v363 = vadd.f32 0.0, %v362
    %v364 = vpop.f32.mrb[0].mxu0
    %v365 = vpop.f32.mrb[0].mxu0
    %v366 = vadd.f32 0.0, %v365
    %v367 = vpop.f32.mrb[0].mxu0
    %368 = vmatprep.mubr.bf16.mxu0 0
    %369 = vmatmul.mubr.bf16.gmra.mrb[0].mxu0 %v239
    %v370 = vpop.f32.mrb[0].mxu0
    %v371 = vadd.f32 0.0, %v370
    %v372 = vpop.f32.mrb[0].mxu0
    %v373 = vpop.f32.mrb[0].mxu0
    %v374 = vadd.f32 0.0, %v373
    %v375 = vpop.f32.mrb[0].mxu0
    %376 = vmatprep.mubr.bf16.mxu0 0
    %377 = vmatmul.mubr.bf16.gmra.mrb[0].mxu0 %v242
    %v378 = vpop.f32.mrb[0].mxu0
    %v379 = vadd.f32 0.0, %v378
    %v380 = vpop.f32.mrb[0].mxu0
    %v381 = vpop.f32.mrb[0].mxu0
    %v382 = vadd.f32 0.0, %v381
    %v383 = vpop.f32.mrb[0].mxu0
    %384 = vmatprep.mubr.bf16.mxu0 0
    %385 = vmatmul.mubr.bf16.gmra.mrb[0].mxu0 %v245
    %v386 = vpop.f32.mrb[0].mxu0
    %v387 = vadd.f32 0.0, %v386
    %v388 = vpop.f32.mrb[0].mxu0
    %v389 = vpop.f32.mrb[0].mxu0
    %v390 = vadd.f32 0.0, %v389
    %v391 = vpop.f32.mrb[0].mxu0
    %392 = vmatprep.mubr.bf16.mxu0 0
    %393 = vmatmul.mubr.bf16.gmra.mrb[0].mxu0 %v248
    %v394 = vpop.f32.mrb[0].mxu0
    %v395 = vadd.f32 0.0, %v394
    %v396 = vpop.f32.mrb[0].mxu0
    %v397 = vpop.f32.mrb[0].mxu0
    %v398 = vadd.f32 0.0, %v397
    %v399 = vpop.f32.mrb[0].mxu0
    %400 = vmatprep.mubr.bf16.mxu0 0
    %401 = vmatmul.mubr.bf16.gmra.mrb[0].mxu0 %v251
    %v402 = vpop.f32.mrb[0].mxu0
    %v403 = vadd.f32 0.0, %v402
    %v404 = vpop.f32.mrb[0].mxu0
    %v405 = vpop.f32.mrb[0].mxu0
    %v406 = vadd.f32 0.0, %v405
    %v407 = vpop.f32.mrb[0].mxu0
    %408 = vmatprep.mubr.bf16.mxu0 0
    %409 = vmatmul.mubr.bf16.gmra.mrb[0].mxu0 %v254
    %v410 = vpop.f32.mrb[0].mxu0
    %v411 = vadd.f32 0.0, %v410
    %v412 = vpop.f32.mrb[0].mxu0
    %v413 = vpop.f32.mrb[0].mxu0
    %v414 = vadd.f32 0.0, %v413
    %v415 = vpop.f32.mrb[0].mxu0
    %416 = vmatprep.mubr.bf16.mxu0 0
    %417 = vmatmul.mubr.bf16.gmra.mrb[0].mxu0 %v257
    %v418 = vpop.f32.mrb[0].mxu0
    %v419 = vadd.f32 0.0, %v418
    %v420 = vpop.f32.mrb[0].mxu0
    %v421 = vpop.f32.mrb[0].mxu0
    %v422 = vadd.f32 0.0, %v421
    %v423 = vpop.f32.mrb[0].mxu0
    %424 = vmatprep.mubr.bf16.mxu0 0
    %425 = vmatmul.mubr.bf16.gmra.mrb[0].mxu0 %v260
    %v426 = vpop.f32.mrb[0].mxu0
    %v427 = vadd.f32 0.0, %v426
    %v428 = vpop.f32.mrb[0].mxu0
    %v429 = vpop.f32.mrb[0].mxu0
    %v430 = vadd.f32 0.0, %v429
    %v431 = vpop.f32.mrb[0].mxu0
    %432 = vmatprep.mubr.bf16.mxu0 0
    %433 = vmatmul.mubr.bf16.gmra.mrb[0].mxu0 %v263
    %v434 = vpop.f32.mrb[0].mxu0
    %v435 = vadd.f32 0.0, %v434
    %v436 = vpop.f32.mrb[0].mxu0
    %v437 = vpop.f32.mrb[0].mxu0
    %v438 = vadd.f32 0.0, %v437
    %v439 = vpop.f32.mrb[0].mxu0
    %440 = vmatprep.mubr.bf16.mxu0 0
    %441 = vmatmul.mubr.bf16.gmra.mrb[0].mxu0 %v266
    %v442 = vpop.f32.mrb[0].mxu0
    %v443 = vadd.f32 0.0, %v442
    %v444 = vpop.f32.mrb[0].mxu0
    %v445 = vpop.f32.mrb[0].mxu0
    %v446 = vadd.f32 0.0, %v445
    %v447 = vpop.f32.mrb[0].mxu0
    %448 = vmatprep.mubr.bf16.mxu0 0
    %449 = vmatmul.mubr.bf16.gmra.mrb[0].mxu0 %v269
    %v450 = vpop.f32.mrb[0].mxu0
    %v451 = vadd.f32 0.0, %v450
    %v452 = vpop.f32.mrb[0].mxu0
    %v453 = vpop.f32.mrb[0].mxu0
    %v454 = vadd.f32 0.0, %v453
    %v455 = vpop.f32.mrb[0].mxu0
    %456 = vmatprep.mubr.bf16.mxu0 0
    %457 = vmatmul.mubr.bf16.gmra.mrb[0].mxu0 %v272
    %v458 = vpop.f32.mrb[0].mxu0
    %v459 = vadd.f32 0.0, %v458
    %v460 = vpop.f32.mrb[0].mxu0
    %v461 = vpop.f32.mrb[0].mxu0
    %v462 = vadd.f32 0.0, %v461
    %v463 = vpop.f32.mrb[0].mxu0
    %464 = vmatprep.mubr.bf16.mxu0 0
    %465 = vmatmul.mubr.bf16.gmra.mrb[0].mxu0 %v275
    %v466 = vpop.f32.mrb[0].mxu0
    %v467 = vadd.f32 0.0, %v466
    %v468 = vpop.f32.mrb[0].mxu0
    %v469 = vpop.f32.mrb[0].mxu0
    %v470 = vadd.f32 0.0, %v469
    %v471 = vpop.f32.mrb[0].mxu0
    %472 = vmatprep.mubr.bf16.mxu0 0
    %473 = vmatmul.mubr.bf16.gmra.mrb[0].mxu0 %v278
    %v474 = vpop.f32.mrb[0].mxu0
    %v475 = vadd.f32 0.0, %v474
    %v476 = vpop.f32.mrb[0].mxu0
    %v477 = vpop.f32.mrb[0].mxu0
    %v478 = vadd.f32 0.0, %v477
    %v479 = vpop.f32.mrb[0].mxu0
    %480 = vmatprep.mubr.bf16.mxu0 0
    %481 = vmatmul.mubr.bf16.gmra.mrb[0].mxu0 %v281
    %v482 = vpop.f32.mrb[0].mxu0
    %v483 = vadd.f32 0.0, %v482
    %v484 = vpop.f32.mrb[0].mxu0
    %v485 = vpop.f32.mrb[0].mxu0
    %v486 = vadd.f32 0.0, %v485
    %v487 = vpop.f32.mrb[0].mxu0
    %488 = vmatprep.mubr.bf16.mxu0 0
    %489 = vmatmul.mubr.bf16.gmra.mrb[0].mxu0 %v284
    %v490 = vpop.f32.mrb[0].mxu0
    %v491 = vadd.f32 0.0, %v490
    %v492 = vpop.f32.mrb[0].mxu0
    %v493 = vpop.f32.mrb[0].mxu0
    %v494 = vadd.f32 0.0, %v493
    %v495 = vpop.f32.mrb[0].mxu0
    %496 = vmatprep.mubr.bf16.mxu0 0
    %497 = vmatmul.mubr.bf16.gmra.mrb[0].mxu0 %v287
    %v498 = vpop.f32.mrb[0].mxu0
    %v499 = vadd.f32 0.0, %v498
    %v500 = vpop.f32.mrb[0].mxu0
    %v501 = vpop.f32.mrb[0].mxu0
    %v502 = vadd.f32 0.0, %v501
    %v503 = vpop.f32.mrb[0].mxu0
    %504 = vmatprep.mubr.bf16.mxu0 0
    %505 = vmatmul.mubr.bf16.gmra.mrb[0].mxu0 %v290
    %v506 = vpop.f32.mrb[0].mxu0
    %v507 = vadd.f32 0.0, %v506
    %v508 = vpop.f32.mrb[0].mxu0
    %v509 = vpop.f32.mrb[0].mxu0
    %v510 = vadd.f32 0.0, %v509
    %v511 = vpop.f32.mrb[0].mxu0
    %512 = vmatprep.mubr.bf16.mxu0 0
    %513 = vmatmul.mubr.bf16.gmra.mrb[0].mxu0 %v293
    %v514 = vpop.f32.mrb[0].mxu0
    %v515 = vadd.f32 0.0, %v514
    %v516 = vpop.f32.mrb[0].mxu0
    %v517 = vpop.f32.mrb[0].mxu0
    %v518 = vadd.f32 0.0, %v517
    %v519 = vpop.f32.mrb[0].mxu0
    %520 = vmatprep.mubr.bf16.mxu0 0
    %521 = vmatmul.mubr.bf16.gmra.mrb[0].mxu0 %v296
    %v522 = vpop.f32.mrb[0].mxu0
    %v523 = vadd.f32 0.0, %v522
    %v524 = vpop.f32.mrb[0].mxu0
    %v525 = vpop.f32.mrb[0].mxu0
    %v526 = vadd.f32 0.0, %v525
    %v527 = vpop.f32.mrb[0].mxu0
    %528 = vmatprep.mubr.bf16.mxu0 0
    %529 = vmatmul.mubr.bf16.gmra.mrb[0].mxu0 %v299
    %v530 = vpop.f32.mrb[0].mxu0
    %v531 = vadd.f32 0.0, %v530
    %v532 = vpop.f32.mrb[0].mxu0
    %v533 = vpop.f32.mrb[0].mxu0
    %v534 = vadd.f32 0.0, %v533
    %v535 = vpop.f32.mrb[0].mxu0
    %536 = vmatprep.mubr.bf16.mxu0 0
    %537 = vmatmul.mubr.bf16.gmra.mrb[0].mxu0 %v302
    %v538 = vpop.f32.mrb[0].mxu0
    %v539 = vadd.f32 0.0, %v538
    %v540 = vpop.f32.mrb[0].mxu0
    %v541 = vpop.f32.mrb[0].mxu0
    %v542 = vadd.f32 0.0, %v541
    %v543 = vpop.f32.mrb[0].mxu0
    %544 = vmatprep.mubr.bf16.mxu0 0
    %545 = vmatmul.mubr.bf16.gmra.mrb[0].mxu0 %v305
    %v546 = vpop.f32.mrb[0].mxu0
    %v547 = vadd.f32 0.0, %v546
    %v548 = vpop.f32.mrb[0].mxu0
    %v549 = vpop.f32.mrb[0].mxu0
    %v550 = vadd.f32 0.0, %v549
    %v551 = vpop.f32.mrb[0].mxu0
    %552 = vmatprep.mubr.bf16.mxu0 0
    %553 = vmatmul.mubr.bf16.gmra.mrb[0].mxu0 %v308
    %v554 = vpop.f32.mrb[0].mxu0
    %v555 = vadd.f32 0.0, %v554
    %v556 = vpop.f32.mrb[0].mxu0
    %v557 = vpop.f32.mrb[0].mxu0
    %v558 = vadd.f32 0.0, %v557
    %v559 = vpop.f32.mrb[0].mxu0
    %560 = vmatprep.mubr.bf16.mxu0 0
    %561 = vmatmul.mubr.bf16.gmra.mrb[0].mxu0 %v311
    %v562 = vpop.f32.mrb[0].mxu0
    %v563 = vadd.f32 0.0, %v562
    %v564 = vpop.f32.mrb[0].mxu0
    %v565 = vpop.f32.mrb[0].mxu0
    %v566 = vadd.f32 0.0, %v565
    %v567 = vpop.f32.mrb[0].mxu0
    %568 = vmatprep.mubr.bf16.mxu0 0
    %569 = vmatmul.mubr.bf16.gmra.mrb[0].mxu0 %v314
    %v570 = vpop.f32.mrb[0].mxu0
    %v571 = vadd.f32 0.0, %v570
    %v572 = vpop.f32.mrb[0].mxu0
    %v573 = vpop.f32.mrb[0].mxu0
    %v574 = vadd.f32 0.0, %v573
    %v575 = vpop.f32.mrb[0].mxu0
    %576 = vdwg.mxu0
    %vm577 = vcmask 261120
    %578 = vst.msk [vmem:[#allocation2] sm:$0xff] %vm577, %v355
    %579 = vst.msk [vmem:[#allocation2 + $0x8] sm:$0xff] %vm577, %v358
    %580 = vst.msk [vmem:[#allocation2 + $0x10] sm:$0xff] %vm577, %v363
    %581 = vst.msk [vmem:[#allocation2 + $0x18] sm:$0xff] %vm577, %v366
    %582 = vst.msk [vmem:[#allocation2 + $0x20] sm:$0xff] %vm577, %v371
    %583 = vst.msk [vmem:[#allocation2 + $0x28] sm:$0xff] %vm577, %v374
    %584 = vst.msk [vmem:[#allocation2 + $0x30] sm:$0xff] %vm577, %v379
    %585 = vst.msk [vmem:[#allocation2 + $0x38] sm:$0xff] %vm577, %v382
    %586 = vst.msk [vmem:[#allocation2 + $0x40] sm:$0xff] %vm577, %v387
    %587 = vst.msk [vmem:[#allocation2 + $0x48] sm:$0xff] %vm577, %v390
    %588 = vst.msk [vmem:[#allocation2 + $0x50] sm:$0xff] %vm577, %v395
    %589 = vst.msk [vmem:[#allocation2 + $0x58] sm:$0xff] %vm577, %v398
    %590 = vst.msk [vmem:[#allocation2 + $0x60] sm:$0xff] %vm577, %v403
    %591 = vst.msk [vmem:[#allocation2 + $0x68] sm:$0xff] %vm577, %v406
    %592 = vst.msk [vmem:[#allocation2 + $0x70] sm:$0xff] %vm577, %v411
    %593 = vst.msk [vmem:[#allocation2 + $0x78] sm:$0xff] %vm577, %v414
    %594 = vst.msk [vmem:[#allocation2 + $0x80] sm:$0xff] %vm577, %v419
    %595 = vst.msk [vmem:[#allocation2 + $0x88] sm:$0xff] %vm577, %v422
    %596 = vst.msk [vmem:[#allocation2 + $0x90] sm:$0xff] %vm577, %v427
    %597 = vst.msk [vmem:[#allocation2 + $0x98] sm:$0xff] %vm577, %v430
    %598 = vst.msk [vmem:[#allocation2 + $0xa0] sm:$0xff] %vm577, %v435
    %599 = vst.msk [vmem:[#allocation2 + $0xa8] sm:$0xff] %vm577, %v438
    %600 = vst.msk [vmem:[#allocation2 + $0xb0] sm:$0xff] %vm577, %v443
    %601 = vst.msk [vmem:[#allocation2 + $0xb8] sm:$0xff] %vm577, %v446
    %602 = vst.msk [vmem:[#allocation2 + $0xc0] sm:$0xff] %vm577, %v451
    %603 = vst.msk [vmem:[#allocation2 + $0xc8] sm:$0xff] %vm577, %v454
    %604 = vst.msk [vmem:[#allocation2 + $0xd0] sm:$0xff] %vm577, %v459
    %605 = vst.msk [vmem:[#allocation2 + $0xd8] sm:$0xff] %vm577, %v462
    %606 = vst.msk [vmem:[#allocation2 + $0xe0] sm:$0xff] %vm577, %v467
    %607 = vst.msk [vmem:[#allocation2 + $0xe8] sm:$0xff] %vm577, %v470
    %608 = vst.msk [vmem:[#allocation2 + $0xf0] sm:$0xff] %vm577, %v475
    %609 = vst.msk [vmem:[#allocation2 + $0xf8] sm:$0xff] %vm577, %v478
    %610 = vst.msk [vmem:[#allocation2 + $0x100] sm:$0xff] %vm577, %v483
    %611 = vst.msk [vmem:[#allocation2 + $0x108] sm:$0xff] %vm577, %v486
    %612 = vst.msk [vmem:[#allocation2 + $0x110] sm:$0xff] %vm577, %v491
    %613 = vst.msk [vmem:[#allocation2 + $0x118] sm:$0xff] %vm577, %v494
    %614 = vst.msk [vmem:[#allocation2 + $0x120] sm:$0xff] %vm577, %v499
    %615 = vst.msk [vmem:[#allocation2 + $0x128] sm:$0xff] %vm577, %v502
    %616 = vst.msk [vmem:[#allocation2 + $0x130] sm:$0xff] %vm577, %v507
    %617 = vst.msk [vmem:[#allocation2 + $0x138] sm:$0xff] %vm577, %v510
    %618 = vst.msk [vmem:[#allocation2 + $0x140] sm:$0xff] %vm577, %v515
    %619 = vst.msk [vmem:[#allocation2 + $0x148] sm:$0xff] %vm577, %v518
    %620 = vst.msk [vmem:[#allocation2 + $0x150] sm:$0xff] %vm577, %v523
    %621 = vst.msk [vmem:[#allocation2 + $0x158] sm:$0xff] %vm577, %v526
    %622 = vst.msk [vmem:[#allocation2 + $0x160] sm:$0xff] %vm577, %v531
    %623 = vst.msk [vmem:[#allocation2 + $0x168] sm:$0xff] %vm577, %v534
    %624 = vst.msk [vmem:[#allocation2 + $0x170] sm:$0xff] %vm577, %v539
    %625 = vst.msk [vmem:[#allocation2 + $0x178] sm:$0xff] %vm577, %v542
    %626 = vst.msk [vmem:[#allocation2 + $0x180] sm:$0xff] %vm577, %v547
    %627 = vst.msk [vmem:[#allocation2 + $0x188] sm:$0xff] %vm577, %v550
    %628 = vst.msk [vmem:[#allocation2 + $0x190] sm:$0xff] %vm577, %v555
    %629 = vst.msk [vmem:[#allocation2 + $0x198] sm:$0xff] %vm577, %v558
    %630 = vst.msk [vmem:[#allocation2 + $0x1a0] sm:$0xff] %vm577, %v563
    %631 = vst.msk [vmem:[#allocation2 + $0x1a8] sm:$0xff] %vm577, %v566
    %632 = vst.msk [vmem:[#allocation2 + $0x1b0] sm:$0xff] %vm577, %v571
    %633 = vst.msk [vmem:[#allocation2 + $0x1b8] sm:$0xff] %vm577, %v574
    %v634 = vld [vmem:[%s0] sm:$0xf]
    %v635 = vld [vmem:[%s0 + $0x4] sm:$0xf]
    %v636 = vld [vmem:[%s0 + $0x8] sm:$0xf]
    %v637 = vld [vmem:[%s0 + $0xc] sm:$0xf]
    %v638 = vld [vmem:[%s0 + $0x10] sm:$0xf]
    %v639 = vld [vmem:[%s0 + $0x14] sm:$0xf]
    %v640 = vld [vmem:[%s0 + $0x18] sm:$0xf]
    %v641 = vld [vmem:[%s0 + $0x1c] sm:$0xf]
    %v642 = vld [vmem:[%s0 + $0x20] sm:$0xf]
    %v643 = vld [vmem:[%s0 + $0x24] sm:$0xf]
    %v644 = vld [vmem:[%s0 + $0x28] sm:$0xf]
    %v645 = vld [vmem:[%s0 + $0x2c] sm:$0xf]
    %v646 = vld [vmem:[%s0 + $0x30] sm:$0xf]
    %v647 = vld [vmem:[%s0 + $0x34] sm:$0xf]
    %v648 = vld [vmem:[%s0 + $0x38] sm:$0xf]
    %v649 = vld [vmem:[%s0 + $0x3c] sm:$0xf]
    %v650 = vld [vmem:[%s0 + $0x40] sm:$0xf]
    %v651 = vld [vmem:[%s0 + $0x44] sm:$0xf]
    %v652 = vld [vmem:[%s0 + $0x48] sm:$0xf]
    %v653 = vld [vmem:[%s0 + $0x4c] sm:$0xf]
    %v654 = vld [vmem:[%s0 + $0x50] sm:$0xf]
    %v655 = vld [vmem:[%s0 + $0x54] sm:$0xf]
    %v656 = vld [vmem:[%s0 + $0x58] sm:$0xf]
    %v657 = vld [vmem:[%s0 + $0x5c] sm:$0xf]
    %v658 = vld [vmem:[%s0 + $0x60] sm:$0xf]
    %v659 = vld [vmem:[%s0 + $0x64] sm:$0xf]
    %v660 = vld [vmem:[%s0 + $0x68] sm:$0xf]
    %v661 = vld [vmem:[%s0 + $0x6c] sm:$0xf]
    %v662 = vld [vmem:[%s0 + $0x70] sm:$0x1]
    %v663 = vld [vmem:[%s0 + $0x88] sm:$0xf]
    %v664 = vld [vmem:[%s0 + $0x8c] sm:$0xf]
    %v665 = vld [vmem:[%s0 + $0x90] sm:$0xf]
    %v666 = vld [vmem:[%s0 + $0x94] sm:$0xf]
    %v667 = vld [vmem:[%s0 + $0x98] sm:$0xf]
    %v668 = vld [vmem:[%s0 + $0x9c] sm:$0xf]
    %v669 = vld [vmem:[%s0 + $0xa0] sm:$0xf]
    %v670 = vld [vmem:[%s0 + $0xa4] sm:$0xf]
    %v671 = vld [vmem:[%s0 + $0xa8] sm:$0xf]
    %v672 = vld [vmem:[%s0 + $0xac] sm:$0xf]
    %v673 = vld [vmem:[%s0 + $0xb0] sm:$0xf]
    %v674 = vld [vmem:[%s0 + $0xb4] sm:$0xf]
    %v675 = vld [vmem:[%s0 + $0xb8] sm:$0xf]
    %v676 = vld [vmem:[%s0 + $0xbc] sm:$0xf]
    %v677 = vld [vmem:[%s0 + $0xc0] sm:$0xf]
    %v678 = vld [vmem:[%s0 + $0xc4] sm:$0xf]
    %v679 = vld [vmem:[%s0 + $0xc8] sm:$0xf]
    %v680 = vld [vmem:[%s0 + $0xcc] sm:$0xf]
    %v681 = vld [vmem:[%s0 + $0xd0] sm:$0xf]
    %v682 = vld [vmem:[%s0 + $0xd4] sm:$0xf]
    %v683 = vld [vmem:[%s0 + $0xd8] sm:$0xf]
    %v684 = vld [vmem:[%s0 + $0xdc] sm:$0xf]
    %v685 = vld [vmem:[%s0 + $0xe0] sm:$0xf]
    %v686 = vld [vmem:[%s0 + $0xe4] sm:$0xf]
    %v687 = vld [vmem:[%s0 + $0xe8] sm:$0xf]
    %v688 = vld [vmem:[%s0 + $0xec] sm:$0xf]
    %v689 = vld [vmem:[%s0 + $0xf0] sm:$0xf]
    %v690 = vld [vmem:[%s0 + $0xf4] sm:$0xf]
    %v691 = vld [vmem:[%s0 + $0xf8] sm:$0x1]
    %vm692 = vsmask.f32 3328
    %vm693 = vsmask.f32 7440
    %vm694 = vmor %vm692, %vm693
    %v696 = vshrl.u32 %v634, 16
    %v698 = vrot.slane %v696, 4
    %v699 = vshll.u32 %v634, 16
    %v701 = vrot.slane %v699, 5
    %v702 = vor.u32 %v698, %v701
    %v703 = vrot.slane %v702, 4
    %v705 = vshll.u32 %v635, 16
    %v707 = vrot.slane %v705, 5
    %v708 = vsel %vm694, %v703, %v707
    %v709 = vshrl.u32 %v635, 16
    %v711 = vrot.slane %v709, 4
    %v712 = vor.u32 %v711, %v707
    %v713 = vrot.slane %v712, 4
    %v715 = vshll.u32 %v636, 16
    %v717 = vrot.slane %v715, 5
    %v718 = vsel %vm694, %v713, %v717
    %v719 = vshrl.u32 %v636, 16
    %v721 = vrot.slane %v719, 4
    %v722 = vor.u32 %v721, %v717
    %v723 = vrot.slane %v722, 4
    %v725 = vshll.u32 %v637, 16
    %v727 = vrot.slane %v725, 5
    %v728 = vsel %vm694, %v723, %v727
    %v729 = vshrl.u32 %v637, 16
    %v731 = vrot.slane %v729, 4
    %v732 = vor.u32 %v731, %v727
    %v733 = vrot.slane %v732, 4
    %v735 = vshll.u32 %v638, 16
    %v737 = vrot.slane %v735, 5
    %v738 = vsel %vm694, %v733, %v737
    %v739 = vshrl.u32 %v638, 16
    %v741 = vrot.slane %v739, 4
    %v742 = vor.u32 %v741, %v737
    %v743 = vrot.slane %v742, 4
    %v745 = vshll.u32 %v639, 16
    %v747 = vrot.slane %v745, 5
    %v748 = vsel %vm694, %v743, %v747
    %v749 = vshrl.u32 %v639, 16
    %v751 = vrot.slane %v749, 4
    %v752 = vor.u32 %v751, %v747
    %v753 = vrot.slane %v752, 4
    %v755 = vshll.u32 %v640, 16
    %v757 = vrot.slane %v755, 5
    %v758 = vsel %vm694, %v753, %v757
    %v759 = vshrl.u32 %v640, 16
    %v761 = vrot.slane %v759, 4
    %v762 = vor.u32 %v761, %v757
    %v763 = vrot.slane %v762, 4
    %v765 = vshll.u32 %v641, 16
    %v767 = vrot.slane %v765, 5
    %v768 = vsel %vm694, %v763, %v767
    %v769 = vshrl.u32 %v641, 16
    %v771 = vrot.slane %v769, 4
    %v772 = vor.u32 %v771, %v767
    %v773 = vrot.slane %v772, 4
    %v775 = vshll.u32 %v642, 16
    %v777 = vrot.slane %v775, 5
    %v778 = vsel %vm694, %v773, %v777
    %v779 = vshrl.u32 %v642, 16
    %v781 = vrot.slane %v779, 4
    %v782 = vor.u32 %v781, %v777
    %v783 = vrot.slane %v782, 4
    %v785 = vshll.u32 %v643, 16
    %v787 = vrot.slane %v785, 5
    %v788 = vsel %vm694, %v783, %v787
    %v789 = vshrl.u32 %v643, 16
    %v791 = vrot.slane %v789, 4
    %v792 = vor.u32 %v791, %v787
    %v793 = vrot.slane %v792, 4
    %v795 = vshll.u32 %v644, 16
    %v797 = vrot.slane %v795, 5
    %v798 = vsel %vm694, %v793, %v797
    %v799 = vshrl.u32 %v644, 16
    %v801 = vrot.slane %v799, 4
    %v802 = vor.u32 %v801, %v797
    %v803 = vrot.slane %v802, 4
    %v805 = vshll.u32 %v645, 16
    %v807 = vrot.slane %v805, 5
    %v808 = vsel %vm694, %v803, %v807
    %v809 = vshrl.u32 %v645, 16
    %v811 = vrot.slane %v809, 4
    %v812 = vor.u32 %v811, %v807
    %v813 = vrot.slane %v812, 4
    %v815 = vshll.u32 %v646, 16
    %v817 = vrot.slane %v815, 5
    %v818 = vsel %vm694, %v813, %v817
    %v819 = vshrl.u32 %v646, 16
    %v821 = vrot.slane %v819, 4
    %v822 = vor.u32 %v821, %v817
    %v823 = vrot.slane %v822, 4
    %v825 = vshll.u32 %v647, 16
    %v827 = vrot.slane %v825, 5
    %v828 = vsel %vm694, %v823, %v827
    %v829 = vshrl.u32 %v647, 16
    %v831 = vrot.slane %v829, 4
    %v832 = vor.u32 %v831, %v827
    %v833 = vrot.slane %v832, 4
    %v835 = vshll.u32 %v648, 16
    %v837 = vrot.slane %v835, 5
    %v838 = vsel %vm694, %v833, %v837
    %v839 = vshrl.u32 %v648, 16
    %v841 = vrot.slane %v839, 4
    %v842 = vor.u32 %v841, %v837
    %v843 = vrot.slane %v842, 4
    %v845 = vshll.u32 %v649, 16
    %v847 = vrot.slane %v845, 5
    %v848 = vsel %vm694, %v843, %v847
    %v849 = vshrl.u32 %v649, 16
    %v851 = vrot.slane %v849, 4
    %v852 = vor.u32 %v851, %v847
    %v853 = vrot.slane %v852, 4
    %v855 = vshll.u32 %v650, 16
    %v857 = vrot.slane %v855, 5
    %v858 = vsel %vm694, %v853, %v857
    %v859 = vshrl.u32 %v650, 16
    %v861 = vrot.slane %v859, 4
    %v862 = vor.u32 %v861, %v857
    %v863 = vrot.slane %v862, 4
    %v865 = vshll.u32 %v651, 16
    %v867 = vrot.slane %v865, 5
    %v868 = vsel %vm694, %v863, %v867
    %v869 = vshrl.u32 %v651, 16
    %v871 = vrot.slane %v869, 4
    %v872 = vor.u32 %v871, %v867
    %v873 = vrot.slane %v872, 4
    %v875 = vshll.u32 %v652, 16
    %v877 = vrot.slane %v875, 5
    %v878 = vsel %vm694, %v873, %v877
    %v879 = vshrl.u32 %v652, 16
    %v881 = vrot.slane %v879, 4
    %v882 = vor.u32 %v881, %v877
    %v883 = vrot.slane %v882, 4
    %v885 = vshll.u32 %v653, 16
    %v887 = vrot.slane %v885, 5
    %v888 = vsel %vm694, %v883, %v887
    %v889 = vshrl.u32 %v653, 16
    %v891 = vrot.slane %v889, 4
    %v892 = vor.u32 %v891, %v887
    %v893 = vrot.slane %v892, 4
    %v895 = vshll.u32 %v654, 16
    %v897 = vrot.slane %v895, 5
    %v898 = vsel %vm694, %v893, %v897
    %v899 = vshrl.u32 %v654, 16
    %v901 = vrot.slane %v899, 4
    %v902 = vor.u32 %v901, %v897
    %v903 = vrot.slane %v902, 4
    %v905 = vshll.u32 %v655, 16
    %v907 = vrot.slane %v905, 5
    %v908 = vsel %vm694, %v903, %v907
    %v909 = vshrl.u32 %v655, 16
    %v911 = vrot.slane %v909, 4
    %v912 = vor.u32 %v911, %v907
    %v913 = vrot.slane %v912, 4
    %v915 = vshll.u32 %v656, 16
    %v917 = vrot.slane %v915, 5
    %v918 = vsel %vm694, %v913, %v917
    %v919 = vshrl.u32 %v656, 16
    %v921 = vrot.slane %v919, 4
    %v922 = vor.u32 %v921, %v917
    %v923 = vrot.slane %v922, 4
    %v925 = vshll.u32 %v657, 16
    %v927 = vrot.slane %v925, 5
    %v928 = vsel %vm694, %v923, %v927
    %v929 = vshrl.u32 %v657, 16
    %v931 = vrot.slane %v929, 4
    %v932 = vor.u32 %v931, %v927
    %v933 = vrot.slane %v932, 4
    %v935 = vshll.u32 %v658, 16
    %v937 = vrot.slane %v935, 5
    %v938 = vsel %vm694, %v933, %v937
    %v939 = vshrl.u32 %v658, 16
    %v941 = vrot.slane %v939, 4
    %v942 = vor.u32 %v941, %v937
    %v943 = vrot.slane %v942, 4
    %v945 = vshll.u32 %v659, 16
    %v947 = vrot.slane %v945, 5
    %v948 = vsel %vm694, %v943, %v947
    %v949 = vshrl.u32 %v659, 16
    %v951 = vrot.slane %v949, 4
    %v952 = vor.u32 %v951, %v947
    %v953 = vrot.slane %v952, 4
    %v955 = vshll.u32 %v660, 16
    %v957 = vrot.slane %v955, 5
    %v958 = vsel %vm694, %v953, %v957
    %v959 = vshrl.u32 %v660, 16
    %v961 = vrot.slane %v959, 4
    %v962 = vor.u32 %v961, %v957
    %v963 = vrot.slane %v962, 4
    %v965 = vshll.u32 %v661, 16
    %v967 = vrot.slane %v965, 5
    %v968 = vsel %vm694, %v963, %v967
    %v969 = vshrl.u32 %v661, 16
    %v971 = vrot.slane %v969, 4
    %v972 = vor.u32 %v971, %v967
    %v973 = vrot.slane %v972, 4
    %v975 = vshll.u32 %v662, 16
    %v977 = vrot.slane %v975, 5
    %v978 = vsel %vm694, %v973, %v977
    %v980 = vshrl.u32 %v663, 16
    %v982 = vrot.slane %v980, 4
    %v983 = vshll.u32 %v663, 16
    %v985 = vrot.slane %v983, 5
    %v986 = vor.u32 %v982, %v985
    %v987 = vrot.slane %v986, 4
    %v989 = vshll.u32 %v664, 16
    %v991 = vrot.slane %v989, 5
    %v992 = vsel %vm694, %v987, %v991
    %v993 = vshrl.u32 %v664, 16
    %v995 = vrot.slane %v993, 4
    %v996 = vor.u32 %v995, %v991
    %v997 = vrot.slane %v996, 4
    %v999 = vshll.u32 %v665, 16
    %v1001 = vrot.slane %v999, 5
    %v1002 = vsel %vm694, %v997, %v1001
    %v1003 = vshrl.u32 %v665, 16
    %v1005 = vrot.slane %v1003, 4
    %v1006 = vor.u32 %v1005, %v1001
    %v1007 = vrot.slane %v1006, 4
    %v1009 = vshll.u32 %v666, 16
    %v1011 = vrot.slane %v1009, 5
    %v1012 = vsel %vm694, %v1007, %v1011
    %v1013 = vshrl.u32 %v666, 16
    %v1015 = vrot.slane %v1013, 4
    %v1016 = vor.u32 %v1015, %v1011
    %v1017 = vrot.slane %v1016, 4
    %v1019 = vshll.u32 %v667, 16
    %v1021 = vrot.slane %v1019, 5
    %v1022 = vsel %vm694, %v1017, %v1021
    %v1023 = vshrl.u32 %v667, 16
    %v1025 = vrot.slane %v1023, 4
    %v1026 = vor.u32 %v1025, %v1021
    %v1027 = vrot.slane %v1026, 4
    %v1029 = vshll.u32 %v668, 16
    %v1031 = vrot.slane %v1029, 5
    %v1032 = vsel %vm694, %v1027, %v1031
    %v1033 = vshrl.u32 %v668, 16
    %v1035 = vrot.slane %v1033, 4
    %v1036 = vor.u32 %v1035, %v1031
    %v1037 = vrot.slane %v1036, 4
    %v1039 = vshll.u32 %v669, 16
    %v1041 = vrot.slane %v1039, 5
    %v1042 = vsel %vm694, %v1037, %v1041
    %v1043 = vshrl.u32 %v669, 16
    %v1045 = vrot.slane %v1043, 4
    %v1046 = vor.u32 %v1045, %v1041
    %v1047 = vrot.slane %v1046, 4
    %v1049 = vshll.u32 %v670, 16
    %v1051 = vrot.slane %v1049, 5
    %v1052 = vsel %vm694, %v1047, %v1051
    %v1053 = vshrl.u32 %v670, 16
    %v1055 = vrot.slane %v1053, 4
    %v1056 = vor.u32 %v1055, %v1051
    %v1057 = vrot.slane %v1056, 4
    %v1059 = vshll.u32 %v671, 16
    %v1061 = vrot.slane %v1059, 5
    %v1062 = vsel %vm694, %v1057, %v1061
    %v1063 = vshrl.u32 %v671, 16
    %v1065 = vrot.slane %v1063, 4
    %v1066 = vor.u32 %v1065, %v1061
    %v1067 = vrot.slane %v1066, 4
    %v1069 = vshll.u32 %v672, 16
    %v1071 = vrot.slane %v1069, 5
    %v1072 = vsel %vm694, %v1067, %v1071
    %v1073 = vshrl.u32 %v672, 16
    %v1075 = vrot.slane %v1073, 4
    %v1076 = vor.u32 %v1075, %v1071
    %v1077 = vrot.slane %v1076, 4
    %v1079 = vshll.u32 %v673, 16
    %v1081 = vrot.slane %v1079, 5
    %v1082 = vsel %vm694, %v1077, %v1081
    %v1083 = vshrl.u32 %v673, 16
    %v1085 = vrot.slane %v1083, 4
    %v1086 = vor.u32 %v1085, %v1081
    %v1087 = vrot.slane %v1086, 4
    %v1089 = vshll.u32 %v674, 16
    %v1091 = vrot.slane %v1089, 5
    %v1092 = vsel %vm694, %v1087, %v1091
    %v1093 = vshrl.u32 %v674, 16
    %v1095 = vrot.slane %v1093, 4
    %v1096 = vor.u32 %v1095, %v1091
    %v1097 = vrot.slane %v1096, 4
    %v1099 = vshll.u32 %v675, 16
    %v1101 = vrot.slane %v1099, 5
    %v1102 = vsel %vm694, %v1097, %v1101
    %v1103 = vshrl.u32 %v675, 16
    %v1105 = vrot.slane %v1103, 4
    %v1106 = vor.u32 %v1105, %v1101
    %v1107 = vrot.slane %v1106, 4
    %v1109 = vshll.u32 %v676, 16
    %v1111 = vrot.slane %v1109, 5
    %v1112 = vsel %vm694, %v1107, %v1111
    %v1113 = vshrl.u32 %v676, 16
    %v1115 = vrot.slane %v1113, 4
    %v1116 = vor.u32 %v1115, %v1111
    %v1117 = vrot.slane %v1116, 4
    %v1119 = vshll.u32 %v677, 16
    %v1121 = vrot.slane %v1119, 5
    %v1122 = vsel %vm694, %v1117, %v1121
    %v1123 = vshrl.u32 %v677, 16
    %v1125 = vrot.slane %v1123, 4
    %v1126 = vor.u32 %v1125, %v1121
    %v1127 = vrot.slane %v1126, 4
    %v1129 = vshll.u32 %v678, 16
    %v1131 = vrot.slane %v1129, 5
    %v1132 = vsel %vm694, %v1127, %v1131
    %v1133 = vshrl.u32 %v678, 16
    %v1135 = vrot.slane %v1133, 4
    %v1136 = vor.u32 %v1135, %v1131
    %v1137 = vrot.slane %v1136, 4
    %v1139 = vshll.u32 %v679, 16
    %v1141 = vrot.slane %v1139, 5
    %v1142 = vsel %vm694, %v1137, %v1141
    %v1143 = vshrl.u32 %v679, 16
    %v1145 = vrot.slane %v1143, 4
    %v1146 = vor.u32 %v1145, %v1141
    %v1147 = vrot.slane %v1146, 4
    %v1149 = vshll.u32 %v680, 16
    %v1151 = vrot.slane %v1149, 5
    %v1152 = vsel %vm694, %v1147, %v1151
    %v1153 = vshrl.u32 %v680, 16
    %v1155 = vrot.slane %v1153, 4
    %v1156 = vor.u32 %v1155, %v1151
    %v1157 = vrot.slane %v1156, 4
    %v1159 = vshll.u32 %v681, 16
    %v1161 = vrot.slane %v1159, 5
    %v1162 = vsel %vm694, %v1157, %v1161
    %v1163 = vshrl.u32 %v681, 16
    %v1165 = vrot.slane %v1163, 4
    %v1166 = vor.u32 %v1165, %v1161
    %v1167 = vrot.slane %v1166, 4
    %v1169 = vshll.u32 %v682, 16
    %v1171 = vrot.slane %v1169, 5
    %v1172 = vsel %vm694, %v1167, %v1171
    %v1173 = vshrl.u32 %v682, 16
    %v1175 = vrot.slane %v1173, 4
    %v1176 = vor.u32 %v1175, %v1171
    %v1177 = vrot.slane %v1176, 4
    %v1179 = vshll.u32 %v683, 16
    %v1181 = vrot.slane %v1179, 5
    %v1182 = vsel %vm694, %v1177, %v1181
    %v1183 = vshrl.u32 %v683, 16
    %v1185 = vrot.slane %v1183, 4
    %v1186 = vor.u32 %v1185, %v1181
    %v1187 = vrot.slane %v1186, 4
    %v1189 = vshll.u32 %v684, 16
    %v1191 = vrot.slane %v1189, 5
    %v1192 = vsel %vm694, %v1187, %v1191
    %v1193 = vshrl.u32 %v684, 16
    %v1195 = vrot.slane %v1193, 4
    %v1196 = vor.u32 %v1195, %v1191
    %v1197 = vrot.slane %v1196, 4
    %v1199 = vshll.u32 %v685, 16
    %v1201 = vrot.slane %v1199, 5
    %v1202 = vsel %vm694, %v1197, %v1201
    %v1203 = vshrl.u32 %v685, 16
    %v1205 = vrot.slane %v1203, 4
    %v1206 = vor.u32 %v1205, %v1201
    %v1207 = vrot.slane %v1206, 4
    %v1209 = vshll.u32 %v686, 16
    %v1211 = vrot.slane %v1209, 5
    %v1212 = vsel %vm694, %v1207, %v1211
    %v1213 = vshrl.u32 %v686, 16
    %v1215 = vrot.slane %v1213, 4
    %v1216 = vor.u32 %v1215, %v1211
    %v1217 = vrot.slane %v1216, 4
    %v1219 = vshll.u32 %v687, 16
    %v1221 = vrot.slane %v1219, 5
    %v1222 = vsel %vm694, %v1217, %v1221
    %v1223 = vshrl.u32 %v687, 16
    %v1225 = vrot.slane %v1223, 4
    %v1226 = vor.u32 %v1225, %v1221
    %v1227 = vrot.slane %v1226, 4
    %v1229 = vshll.u32 %v688, 16
    %v1231 = vrot.slane %v1229, 5
    %v1232 = vsel %vm694, %v1227, %v1231
    %v1233 = vshrl.u32 %v688, 16
    %v1235 = vrot.slane %v1233, 4
    %v1236 = vor.u32 %v1235, %v1231
    %v1237 = vrot.slane %v1236, 4
    %v1239 = vshll.u32 %v689, 16
    %v1241 = vrot.slane %v1239, 5
    %v1242 = vsel %vm694, %v1237, %v1241
    %v1243 = vshrl.u32 %v689, 16
    %v1245 = vrot.slane %v1243, 4
    %v1246 = vor.u32 %v1245, %v1241
    %v1247 = vrot.slane %v1246, 4
    %v1249 = vshll.u32 %v690, 16
    %v1251 = vrot.slane %v1249, 5
    %v1252 = vsel %vm694, %v1247, %v1251
    %v1253 = vshrl.u32 %v690, 16
    %v1255 = vrot.slane %v1253, 4
    %v1256 = vor.u32 %v1255, %v1251
    %v1257 = vrot.slane %v1256, 4
    %v1259 = vshll.u32 %v691, 16
    %v1261 = vrot.slane %v1259, 5
    %v1262 = vsel %vm694, %v1257, %v1261
    %s1263 = scalar_lea.vmem %s1, 2
    %v1264 = vld [vmem:[%s1263] sm:$0x3]
    %v1265 = vunpack.c.l.b16 %v708
    %v1266 = vunpack.c.l.b16 %v718
    %v1267 = vunpack.c.l.b16 %v728
    %v1268 = vunpack.c.l.b16 %v738
    %v1269 = vunpack.c.l.b16 %v748
    %v1270 = vunpack.c.l.b16 %v758
    %v1271 = vunpack.c.l.b16 %v768
    %v1272 = vunpack.c.l.b16 %v778
    %v1273 = vunpack.c.l.b16 %v788
    %v1274 = vunpack.c.l.b16 %v798
    %v1275 = vunpack.c.l.b16 %v808
    %v1276 = vunpack.c.l.b16 %v818
    %v1277 = vunpack.c.l.b16 %v828
    %v1278 = vunpack.c.l.b16 %v838
    %v1279 = vunpack.c.l.b16 %v848
    %v1280 = vunpack.c.l.b16 %v858
    %v1281 = vunpack.c.l.b16 %v868
    %v1282 = vunpack.c.l.b16 %v878
    %v1283 = vunpack.c.l.b16 %v888
    %v1284 = vunpack.c.l.b16 %v898
    %v1285 = vunpack.c.l.b16 %v908
    %v1286 = vunpack.c.l.b16 %v918
    %v1287 = vunpack.c.l.b16 %v928
    %v1288 = vunpack.c.l.b16 %v938
    %v1289 = vunpack.c.l.b16 %v948
    %v1290 = vunpack.c.l.b16 %v958
    %v1291 = vunpack.c.l.b16 %v968
    %v1292 = vunpack.c.l.b16 %v978
    %v1293 = vunpack.c.l.b16 %v992
    %v1294 = vunpack.c.l.b16 %v1002
    %v1295 = vunpack.c.l.b16 %v1012
    %v1296 = vunpack.c.l.b16 %v1022
    %v1297 = vunpack.c.l.b16 %v1032
    %v1298 = vunpack.c.l.b16 %v1042
    %v1299 = vunpack.c.l.b16 %v1052
    %v1300 = vunpack.c.l.b16 %v1062
    %v1301 = vunpack.c.l.b16 %v1072
    %v1302 = vunpack.c.l.b16 %v1082
    %v1303 = vunpack.c.l.b16 %v1092
    %v1304 = vunpack.c.l.b16 %v1102
    %v1305 = vunpack.c.l.b16 %v1112
    %v1306 = vunpack.c.l.b16 %v1122
    %v1307 = vunpack.c.l.b16 %v1132
    %v1308 = vunpack.c.l.b16 %v1142
    %v1309 = vunpack.c.l.b16 %v1152
    %v1310 = vunpack.c.l.b16 %v1162
    %v1311 = vunpack.c.l.b16 %v1172
    %v1312 = vunpack.c.l.b16 %v1182
    %v1313 = vunpack.c.l.b16 %v1192
    %v1314 = vunpack.c.l.b16 %v1202
    %v1315 = vunpack.c.l.b16 %v1212
    %v1316 = vunpack.c.l.b16 %v1222
    %v1317 = vunpack.c.l.b16 %v1232
    %v1318 = vunpack.c.l.b16 %v1242
    %v1319 = vunpack.c.l.b16 %v1252
    %v1320 = vunpack.c.l.b16 %v1262
    %v1321 = vpack.c.b16 %v1266, %v1265
    %v1322 = vpack.c.b16 %v1268, %v1267
    %v1323 = vpack.c.b16 %v1270, %v1269
    %v1324 = vpack.c.b16 %v1272, %v1271
    %v1325 = vpack.c.b16 %v1274, %v1273
    %v1326 = vpack.c.b16 %v1276, %v1275
    %v1327 = vpack.c.b16 %v1278, %v1277
    %v1328 = vpack.c.b16 %v1280, %v1279
    %v1329 = vpack.c.b16 %v1282, %v1281
    %v1330 = vpack.c.b16 %v1284, %v1283
    %v1331 = vpack.c.b16 %v1286, %v1285
    %v1332 = vpack.c.b16 %v1288, %v1287
    %v1333 = vpack.c.b16 %v1290, %v1289
    %v1334 = vpack.c.b16 %v1292, %v1291
    %v1335 = vpack.c.b16 %v1294, %v1293
    %v1336 = vpack.c.b16 %v1296, %v1295
    %v1337 = vpack.c.b16 %v1298, %v1297
    %v1338 = vpack.c.b16 %v1300, %v1299
    %v1339 = vpack.c.b16 %v1302, %v1301
    %v1340 = vpack.c.b16 %v1304, %v1303
    %v1341 = vpack.c.b16 %v1306, %v1305
    %v1342 = vpack.c.b16 %v1308, %v1307
    %v1343 = vpack.c.b16 %v1310, %v1309
    %v1344 = vpack.c.b16 %v1312, %v1311
    %v1345 = vpack.c.b16 %v1314, %v1313
    %v1346 = vpack.c.b16 %v1316, %v1315
    %v1347 = vpack.c.b16 %v1318, %v1317
    %v1348 = vpack.c.b16 %v1320, %v1319
    %v1350 = vsel %vm231, %v1321, 0
    %v1353 = vsel %vm231, %v1322, 0
    %v1356 = vsel %vm231, %v1323, 0
    %v1359 = vsel %vm231, %v1324, 0
    %v1362 = vsel %vm231, %v1325, 0
    %v1365 = vsel %vm231, %v1326, 0
    %v1368 = vsel %vm231, %v1327, 0
    %v1371 = vsel %vm231, %v1328, 0
    %v1374 = vsel %vm231, %v1329, 0
    %v1377 = vsel %vm231, %v1330, 0
    %v1380 = vsel %vm231, %v1331, 0
    %v1383 = vsel %vm231, %v1332, 0
    %v1386 = vsel %vm231, %v1333, 0
    %v1389 = vsel %vm231, %v1334, 0
    %v1392 = vsel %vm231, %v1335, 0
    %v1395 = vsel %vm231, %v1336, 0
    %v1398 = vsel %vm231, %v1337, 0
    %v1401 = vsel %vm231, %v1338, 0
    %v1404 = vsel %vm231, %v1339, 0
    %v1407 = vsel %vm231, %v1340, 0
    %v1410 = vsel %vm231, %v1341, 0
    %v1413 = vsel %vm231, %v1342, 0
    %v1416 = vsel %vm231, %v1343, 0
    %v1419 = vsel %vm231, %v1344, 0
    %v1422 = vsel %vm231, %v1345, 0
    %v1425 = vsel %vm231, %v1346, 0
    %v1428 = vsel %vm231, %v1347, 0
    %v1431 = vsel %vm231, %v1348, 0
    %v1434 = vsel %vm316, %v1264, 0
    %1436 = vmatprep.subr.bf16.mxu0 0
    %1437 = vmatpush1.bf16.msra.mxu0 %v1434
    %1438 = vmatprep.subr.bf16.mxu0 0
    %1439 = vmatpush1.bf16.msra.mxu0 0
    %1440 = vmatprep.subr.bf16.mxu0 0
    %1441 = vmatpush1.bf16.msra.mxu0 0
    %1442 = vmatprep.subr.bf16.mxu0 0
    %1443 = vmatpush1.bf16.msra.mxu0 0
    %1444 = vmatprep.subr.bf16.mxu0 0
    %1445 = vmatpush1.bf16.msra.mxu0 0
    %1446 = vmatprep.subr.bf16.mxu0 0
    %1447 = vmatpush1.bf16.msra.mxu0 0
    %1448 = vmatprep.subr.bf16.mxu0 0
    %1449 = vmatpush1.bf16.msra.mxu0 0
    %1450 = vmatprep.subr.bf16.mxu0 0
    %1451 = vmatpush1.bf16.msra.mxu0 0
    %1452 = vmatprep.subr.bf16.mxu0 0
    %1453 = vmatpush1.bf16.msra.mxu0 0
    %1454 = vmatprep.subr.bf16.mxu0 0
    %1455 = vmatpush1.bf16.msra.mxu0 0
    %1456 = vmatprep.subr.bf16.mxu0 0
    %1457 = vmatpush1.bf16.msra.mxu0 0
    %1458 = vmatprep.subr.bf16.mxu0 0
    %1459 = vmatpush1.bf16.msra.mxu0 0
    %1460 = vmatprep.subr.bf16.mxu0 0
    %1461 = vmatpush1.bf16.msra.mxu0 0
    %1462 = vmatprep.subr.bf16.mxu0 0
    %1463 = vmatpush1.bf16.msra.mxu0 0
    %1464 = vmatprep.subr.bf16.mxu0 0
    %1465 = vmatpush1.bf16.msra.mxu0 0
    %1466 = vmatprep.subr.bf16.mxu0 0
    %1467 = vmatpush1.bf16.msra.mxu0 0
    %1468 = vmatprep.mubr.bf16.mxu0 0
    %1469 = vmatmul.mubr.bf16.gmra.mrb[0].mxu0 %v1350
    %v1470 = vpop.f32.mrb[0].mxu0
    %v1471 = vadd.f32 0.0, %v1470
    %v1472 = vpop.f32.mrb[0].mxu0
    %v1473 = vpop.f32.mrb[0].mxu0
    %v1474 = vadd.f32 0.0, %v1473
    %v1475 = vpop.f32.mrb[0].mxu0
    %1476 = vmatprep.mubr.bf16.mxu0 0
    %1477 = vmatmul.mubr.bf16.gmra.mrb[0].mxu0 %v1353
    %v1478 = vpop.f32.mrb[0].mxu0
    %v1479 = vadd.f32 0.0, %v1478
    %v1480 = vpop.f32.mrb[0].mxu0
    %v1481 = vpop.f32.mrb[0].mxu0
    %v1482 = vadd.f32 0.0, %v1481
    %v1483 = vpop.f32.mrb[0].mxu0
    %1484 = vmatprep.mubr.bf16.mxu0 0
    %1485 = vmatmul.mubr.bf16.gmra.mrb[0].mxu0 %v1356
    %v1486 = vpop.f32.mrb[0].mxu0
    %v1487 = vadd.f32 0.0, %v1486
    %v1488 = vpop.f32.mrb[0].mxu0
    %v1489 = vpop.f32.mrb[0].mxu0
    %v1490 = vadd.f32 0.0, %v1489
    %v1491 = vpop.f32.mrb[0].mxu0
    %1492 = vmatprep.mubr.bf16.mxu0 0
    %1493 = vmatmul.mubr.bf16.gmra.mrb[0].mxu0 %v1359
    %v1494 = vpop.f32.mrb[0].mxu0
    %v1495 = vadd.f32 0.0, %v1494
    %v1496 = vpop.f32.mrb[0].mxu0
    %v1497 = vpop.f32.mrb[0].mxu0
    %v1498 = vadd.f32 0.0, %v1497
    %v1499 = vpop.f32.mrb[0].mxu0
    %1500 = vmatprep.mubr.bf16.mxu0 0
    %1501 = vmatmul.mubr.bf16.gmra.mrb[0].mxu0 %v1362
    %v1502 = vpop.f32.mrb[0].mxu0
    %v1503 = vadd.f32 0.0, %v1502
    %v1504 = vpop.f32.mrb[0].mxu0
    %v1505 = vpop.f32.mrb[0].mxu0
    %v1506 = vadd.f32 0.0, %v1505
    %v1507 = vpop.f32.mrb[0].mxu0
    %1508 = vmatprep.mubr.bf16.mxu0 0
    %1509 = vmatmul.mubr.bf16.gmra.mrb[0].mxu0 %v1365
    %v1510 = vpop.f32.mrb[0].mxu0
    %v1511 = vadd.f32 0.0, %v1510
    %v1512 = vpop.f32.mrb[0].mxu0
    %v1513 = vpop.f32.mrb[0].mxu0
    %v1514 = vadd.f32 0.0, %v1513
    %v1515 = vpop.f32.mrb[0].mxu0
    %1516 = vmatprep.mubr.bf16.mxu0 0
    %1517 = vmatmul.mubr.bf16.gmra.mrb[0].mxu0 %v1368
    %v1518 = vpop.f32.mrb[0].mxu0
    %v1519 = vadd.f32 0.0, %v1518
    %v1520 = vpop.f32.mrb[0].mxu0
    %v1521 = vpop.f32.mrb[0].mxu0
    %v1522 = vadd.f32 0.0, %v1521
    %v1523 = vpop.f32.mrb[0].mxu0
    %1524 = vmatprep.mubr.bf16.mxu0 0
    %1525 = vmatmul.mubr.bf16.gmra.mrb[0].mxu0 %v1371
    %v1526 = vpop.f32.mrb[0].mxu0
    %v1527 = vadd.f32 0.0, %v1526
    %v1528 = vpop.f32.mrb[0].mxu0
    %v1529 = vpop.f32.mrb[0].mxu0
    %v1530 = vadd.f32 0.0, %v1529
    %v1531 = vpop.f32.mrb[0].mxu0
    %1532 = vmatprep.mubr.bf16.mxu0 0
    %1533 = vmatmul.mubr.bf16.gmra.mrb[0].mxu0 %v1374
    %v1534 = vpop.f32.mrb[0].mxu0
    %v1535 = vadd.f32 0.0, %v1534
    %v1536 = vpop.f32.mrb[0].mxu0
    %v1537 = vpop.f32.mrb[0].mxu0
    %v1538 = vadd.f32 0.0, %v1537
    %v1539 = vpop.f32.mrb[0].mxu0
    %1540 = vmatprep.mubr.bf16.mxu0 0
    %1541 = vmatmul.mubr.bf16.gmra.mrb[0].mxu0 %v1377
    %v1542 = vpop.f32.mrb[0].mxu0
    %v1543 = vadd.f32 0.0, %v1542
    %v1544 = vpop.f32.mrb[0].mxu0
    %v1545 = vpop.f32.mrb[0].mxu0
    %v1546 = vadd.f32 0.0, %v1545
    %v1547 = vpop.f32.mrb[0].mxu0
    %1548 = vmatprep.mubr.bf16.mxu0 0
    %1549 = vmatmul.mubr.bf16.gmra.mrb[0].mxu0 %v1380
    %v1550 = vpop.f32.mrb[0].mxu0
    %v1551 = vadd.f32 0.0, %v1550
    %v1552 = vpop.f32.mrb[0].mxu0
    %v1553 = vpop.f32.mrb[0].mxu0
    %v1554 = vadd.f32 0.0, %v1553
    %v1555 = vpop.f32.mrb[0].mxu0
    %1556 = vmatprep.mubr.bf16.mxu0 0
    %1557 = vmatmul.mubr.bf16.gmra.mrb[0].mxu0 %v1383
    %v1558 = vpop.f32.mrb[0].mxu0
    %v1559 = vadd.f32 0.0, %v1558
    %v1560 = vpop.f32.mrb[0].mxu0
    %v1561 = vpop.f32.mrb[0].mxu0
    %v1562 = vadd.f32 0.0, %v1561
    %v1563 = vpop.f32.mrb[0].mxu0
    %1564 = vmatprep.mubr.bf16.mxu0 0
    %1565 = vmatmul.mubr.bf16.gmra.mrb[0].mxu0 %v1386
    %v1566 = vpop.f32.mrb[0].mxu0
    %v1567 = vadd.f32 0.0, %v1566
    %v1568 = vpop.f32.mrb[0].mxu0
    %v1569 = vpop.f32.mrb[0].mxu0
    %v1570 = vadd.f32 0.0, %v1569
    %v1571 = vpop.f32.mrb[0].mxu0
    %1572 = vmatprep.mubr.bf16.mxu0 0
    %1573 = vmatmul.mubr.bf16.gmra.mrb[0].mxu0 %v1389
    %v1574 = vpop.f32.mrb[0].mxu0
    %v1575 = vadd.f32 0.0, %v1574
    %v1576 = vpop.f32.mrb[0].mxu0
    %v1577 = vpop.f32.mrb[0].mxu0
    %v1578 = vadd.f32 0.0, %v1577
    %v1579 = vpop.f32.mrb[0].mxu0
    %1580 = vmatprep.mubr.bf16.mxu0 0
    %1581 = vmatmul.mubr.bf16.gmra.mrb[0].mxu0 %v1392
    %v1582 = vpop.f32.mrb[0].mxu0
    %v1583 = vadd.f32 0.0, %v1582
    %v1584 = vpop.f32.mrb[0].mxu0
    %v1585 = vpop.f32.mrb[0].mxu0
    %v1586 = vadd.f32 0.0, %v1585
    %v1587 = vpop.f32.mrb[0].mxu0
    %1588 = vmatprep.mubr.bf16.mxu0 0
    %1589 = vmatmul.mubr.bf16.gmra.mrb[0].mxu0 %v1395
    %v1590 = vpop.f32.mrb[0].mxu0
    %v1591 = vadd.f32 0.0, %v1590
    %v1592 = vpop.f32.mrb[0].mxu0
    %v1593 = vpop.f32.mrb[0].mxu0
    %v1594 = vadd.f32 0.0, %v1593
    %v1595 = vpop.f32.mrb[0].mxu0
    %1596 = vmatprep.mubr.bf16.mxu0 0
    %1597 = vmatmul.mubr.bf16.gmra.mrb[0].mxu0 %v1398
    %v1598 = vpop.f32.mrb[0].mxu0
    %v1599 = vadd.f32 0.0, %v1598
    %v1600 = vpop.f32.mrb[0].mxu0
    %v1601 = vpop.f32.mrb[0].mxu0
    %v1602 = vadd.f32 0.0, %v1601
    %v1603 = vpop.f32.mrb[0].mxu0
    %1604 = vmatprep.mubr.bf16.mxu0 0
    %1605 = vmatmul.mubr.bf16.gmra.mrb[0].mxu0 %v1401
    %v1606 = vpop.f32.mrb[0].mxu0
    %v1607 = vadd.f32 0.0, %v1606
    %v1608 = vpop.f32.mrb[0].mxu0
    %v1609 = vpop.f32.mrb[0].mxu0
    %v1610 = vadd.f32 0.0, %v1609
    %v1611 = vpop.f32.mrb[0].mxu0
    %1612 = vmatprep.mubr.bf16.mxu0 0
    %1613 = vmatmul.mubr.bf16.gmra.mrb[0].mxu0 %v1404
    %v1614 = vpop.f32.mrb[0].mxu0
    %v1615 = vadd.f32 0.0, %v1614
    %v1616 = vpop.f32.mrb[0].mxu0
    %v1617 = vpop.f32.mrb[0].mxu0
    %v1618 = vadd.f32 0.0, %v1617
    %v1619 = vpop.f32.mrb[0].mxu0
    %1620 = vmatprep.mubr.bf16.mxu0 0
    %1621 = vmatmul.mubr.bf16.gmra.mrb[0].mxu0 %v1407
    %v1622 = vpop.f32.mrb[0].mxu0
    %v1623 = vadd.f32 0.0, %v1622
    %v1624 = vpop.f32.mrb[0].mxu0
    %v1625 = vpop.f32.mrb[0].mxu0
    %v1626 = vadd.f32 0.0, %v1625
    %v1627 = vpop.f32.mrb[0].mxu0
    %1628 = vmatprep.mubr.bf16.mxu0 0
    %1629 = vmatmul.mubr.bf16.gmra.mrb[0].mxu0 %v1410
    %v1630 = vpop.f32.mrb[0].mxu0
    %v1631 = vadd.f32 0.0, %v1630
    %v1632 = vpop.f32.mrb[0].mxu0
    %v1633 = vpop.f32.mrb[0].mxu0
    %v1634 = vadd.f32 0.0, %v1633
    %v1635 = vpop.f32.mrb[0].mxu0
    %1636 = vmatprep.mubr.bf16.mxu0 0
    %1637 = vmatmul.mubr.bf16.gmra.mrb[0].mxu0 %v1413
    %v1638 = vpop.f32.mrb[0].mxu0
    %v1639 = vadd.f32 0.0, %v1638
    %v1640 = vpop.f32.mrb[0].mxu0
    %v1641 = vpop.f32.mrb[0].mxu0
    %v1642 = vadd.f32 0.0, %v1641
    %v1643 = vpop.f32.mrb[0].mxu0
    %1644 = vmatprep.mubr.bf16.mxu0 0
    %1645 = vmatmul.mubr.bf16.gmra.mrb[0].mxu0 %v1416
    %v1646 = vpop.f32.mrb[0].mxu0
    %v1647 = vadd.f32 0.0, %v1646
    %v1648 = vpop.f32.mrb[0].mxu0
    %v1649 = vpop.f32.mrb[0].mxu0
    %v1650 = vadd.f32 0.0, %v1649
    %v1651 = vpop.f32.mrb[0].mxu0
    %1652 = vmatprep.mubr.bf16.mxu0 0
    %1653 = vmatmul.mubr.bf16.gmra.mrb[0].mxu0 %v1419
    %v1654 = vpop.f32.mrb[0].mxu0
    %v1655 = vadd.f32 0.0, %v1654
    %v1656 = vpop.f32.mrb[0].mxu0
    %v1657 = vpop.f32.mrb[0].mxu0
    %v1658 = vadd.f32 0.0, %v1657
    %v1659 = vpop.f32.mrb[0].mxu0
    %1660 = vmatprep.mubr.bf16.mxu0 0
    %1661 = vmatmul.mubr.bf16.gmra.mrb[0].mxu0 %v1422
    %v1662 = vpop.f32.mrb[0].mxu0
    %v1663 = vadd.f32 0.0, %v1662
    %v1664 = vpop.f32.mrb[0].mxu0
    %v1665 = vpop.f32.mrb[0].mxu0
    %v1666 = vadd.f32 0.0, %v1665
    %v1667 = vpop.f32.mrb[0].mxu0
    %1668 = vmatprep.mubr.bf16.mxu0 0
    %1669 = vmatmul.mubr.bf16.gmra.mrb[0].mxu0 %v1425
    %v1670 = vpop.f32.mrb[0].mxu0
    %v1671 = vadd.f32 0.0, %v1670
    %v1672 = vpop.f32.mrb[0].mxu0
    %v1673 = vpop.f32.mrb[0].mxu0
    %v1674 = vadd.f32 0.0, %v1673
    %v1675 = vpop.f32.mrb[0].mxu0
    %1676 = vmatprep.mubr.bf16.mxu0 0
    %1677 = vmatmul.mubr.bf16.gmra.mrb[0].mxu0 %v1428
    %v1678 = vpop.f32.mrb[0].mxu0
    %v1679 = vadd.f32 0.0, %v1678
    %v1680 = vpop.f32.mrb[0].mxu0
    %v1681 = vpop.f32.mrb[0].mxu0
    %v1682 = vadd.f32 0.0, %v1681
    %v1683 = vpop.f32.mrb[0].mxu0
    %1684 = vmatprep.mubr.bf16.mxu0 0
    %1685 = vmatmul.mubr.bf16.gmra.mrb[0].mxu0 %v1431
    %v1686 = vpop.f32.mrb[0].mxu0
    %v1687 = vadd.f32 0.0, %v1686
    %v1688 = vpop.f32.mrb[0].mxu0
    %v1689 = vpop.f32.mrb[0].mxu0
    %v1690 = vadd.f32 0.0, %v1689
    %v1691 = vpop.f32.mrb[0].mxu0
    %1692 = vdwg.mxu0
    %v1693 = vld [vmem:[#allocation2] sm:$0xff]
    %v1694 = vld [vmem:[#allocation2 + $0x8] sm:$0xff]
    %v1695 = vld [vmem:[#allocation2 + $0x10] sm:$0xff]
    %v1696 = vld [vmem:[#allocation2 + $0x18] sm:$0xff]
    %v1697 = vld [vmem:[#allocation2 + $0x20] sm:$0xff]
    %v1698 = vld [vmem:[#allocation2 + $0x28] sm:$0xff]
    %v1699 = vld [vmem:[#allocation2 + $0x30] sm:$0xff]
    %v1700 = vld [vmem:[#allocation2 + $0x38] sm:$0xff]
    %v1701 = vld [vmem:[#allocation2 + $0x40] sm:$0xff]
    %v1702 = vld [vmem:[#allocation2 + $0x48] sm:$0xff]
    %v1703 = vld [vmem:[#allocation2 + $0x50] sm:$0xff]
    %v1704 = vld [vmem:[#allocation2 + $0x58] sm:$0xff]
    %v1705 = vld [vmem:[#allocation2 + $0x60] sm:$0xff]
    %v1706 = vld [vmem:[#allocation2 + $0x68] sm:$0xff]
    %v1707 = vld [vmem:[#allocation2 + $0x70] sm:$0xff]
    %v1708 = vld [vmem:[#allocation2 + $0x78] sm:$0xff]
    %v1709 = vld [vmem:[#allocation2 + $0x80] sm:$0xff]
    %v1710 = vld [vmem:[#allocation2 + $0x88] sm:$0xff]
    %v1711 = vld [vmem:[#allocation2 + $0x90] sm:$0xff]
    %v1712 = vld [vmem:[#allocation2 + $0x98] sm:$0xff]
    %v1713 = vld [vmem:[#allocation2 + $0xa0] sm:$0xff]
    %v1714 = vld [vmem:[#allocation2 + $0xa8] sm:$0xff]
    %v1715 = vld [vmem:[#allocation2 + $0xb0] sm:$0xff]
    %v1716 = vld [vmem:[#allocation2 + $0xb8] sm:$0xff]
    %v1717 = vld [vmem:[#allocation2 + $0xc0] sm:$0xff]
    %v1718 = vld [vmem:[#allocation2 + $0xc8] sm:$0xff]
    %v1719 = vld [vmem:[#allocation2 + $0xd0] sm:$0xff]
    %v1720 = vld [vmem:[#allocation2 + $0xd8] sm:$0xff]
    %v1721 = vld [vmem:[#allocation2 + $0xe0] sm:$0xff]
    %v1722 = vld [vmem:[#allocation2 + $0xe8] sm:$0xff]
    %v1723 = vld [vmem:[#allocation2 + $0xf0] sm:$0xff]
    %v1724 = vld [vmem:[#allocation2 + $0xf8] sm:$0xff]
    %v1725 = vld [vmem:[#allocation2 + $0x100] sm:$0xff]
    %v1726 = vld [vmem:[#allocation2 + $0x108] sm:$0xff]
    %v1727 = vld [vmem:[#allocation2 + $0x110] sm:$0xff]
    %v1728 = vld [vmem:[#allocation2 + $0x118] sm:$0xff]
    %v1729 = vld [vmem:[#allocation2 + $0x120] sm:$0xff]
    %v1730 = vld [vmem:[#allocation2 + $0x128] sm:$0xff]
    %v1731 = vld [vmem:[#allocation2 + $0x130] sm:$0xff]
    %v1732 = vld [vmem:[#allocation2 + $0x138] sm:$0xff]
    %v1733 = vld [vmem:[#allocation2 + $0x140] sm:$0xff]
    %v1734 = vld [vmem:[#allocation2 + $0x148] sm:$0xff]
    %v1735 = vld [vmem:[#allocation2 + $0x150] sm:$0xff]
    %v1736 = vld [vmem:[#allocation2 + $0x158] sm:$0xff]
    %v1737 = vld [vmem:[#allocation2 + $0x160] sm:$0xff]
    %v1738 = vld [vmem:[#allocation2 + $0x168] sm:$0xff]
    %v1739 = vld [vmem:[#allocation2 + $0x170] sm:$0xff]
    %v1740 = vld [vmem:[#allocation2 + $0x178] sm:$0xff]
    %v1741 = vld [vmem:[#allocation2 + $0x180] sm:$0xff]
    %v1742 = vld [vmem:[#allocation2 + $0x188] sm:$0xff]
    %v1743 = vld [vmem:[#allocation2 + $0x190] sm:$0xff]
    %v1744 = vld [vmem:[#allocation2 + $0x198] sm:$0xff]
    %v1745 = vld [vmem:[#allocation2 + $0x1a0] sm:$0xff]
    %v1746 = vld [vmem:[#allocation2 + $0x1a8] sm:$0xff]
    %v1747 = vld [vmem:[#allocation2 + $0x1b0] sm:$0xff]
    %v1748 = vld [vmem:[#allocation2 + $0x1b8] sm:$0xff]
    %v1749 = vadd.f32 %v1693, %v1471
    %v1750 = vadd.f32 %v1694, %v1474
    %v1751 = vadd.f32 %v1695, %v1479
    %v1752 = vadd.f32 %v1696, %v1482
    %v1753 = vadd.f32 %v1697, %v1487
    %v1754 = vadd.f32 %v1698, %v1490
    %v1755 = vadd.f32 %v1699, %v1495
    %v1756 = vadd.f32 %v1700, %v1498
    %v1757 = vadd.f32 %v1701, %v1503
    %v1758 = vadd.f32 %v1702, %v1506
    %v1759 = vadd.f32 %v1703, %v1511
    %v1760 = vadd.f32 %v1704, %v1514
    %v1761 = vadd.f32 %v1705, %v1519
    %v1762 = vadd.f32 %v1706, %v1522
    %v1763 = vadd.f32 %v1707, %v1527
    %v1764 = vadd.f32 %v1708, %v1530
    %v1765 = vadd.f32 %v1709, %v1535
    %v1766 = vadd.f32 %v1710, %v1538
    %v1767 = vadd.f32 %v1711, %v1543
    %v1768 = vadd.f32 %v1712, %v1546
    %v1769 = vadd.f32 %v1713, %v1551
    %v1770 = vadd.f32 %v1714, %v1554
    %v1771 = vadd.f32 %v1715, %v1559
    %v1772 = vadd.f32 %v1716, %v1562
    %v1773 = vadd.f32 %v1717, %v1567
    %v1774 = vadd.f32 %v1718, %v1570
    %v1775 = vadd.f32 %v1719, %v1575
    %v1776 = vadd.f32 %v1720, %v1578
    %v1777 = vadd.f32 %v1721, %v1583
    %v1778 = vadd.f32 %v1722, %v1586
    %v1779 = vadd.f32 %v1723, %v1591
    %v1780 = vadd.f32 %v1724, %v1594
    %v1781 = vadd.f32 %v1725, %v1599
    %v1782 = vadd.f32 %v1726, %v1602
    %v1783 = vadd.f32 %v1727, %v1607
    %v1784 = vadd.f32 %v1728, %v1610
    %v1785 = vadd.f32 %v1729, %v1615
    %v1786 = vadd.f32 %v1730, %v1618
    %v1787 = vadd.f32 %v1731, %v1623
    %v1788 = vadd.f32 %v1732, %v1626
    %v1789 = vadd.f32 %v1733, %v1631
    %v1790 = vadd.f32 %v1734, %v1634
    %v1791 = vadd.f32 %v1735, %v1639
    %v1792 = vadd.f32 %v1736, %v1642
    %v1793 = vadd.f32 %v1737, %v1647
    %v1794 = vadd.f32 %v1738, %v1650
    %v1795 = vadd.f32 %v1739, %v1655
    %v1796 = vadd.f32 %v1740, %v1658
    %v1797 = vadd.f32 %v1741, %v1663
    %v1798 = vadd.f32 %v1742, %v1666
    %v1799 = vadd.f32 %v1743, %v1671
    %v1800 = vadd.f32 %v1744, %v1674
    %v1801 = vadd.f32 %v1745, %v1679
    %v1802 = vadd.f32 %v1746, %v1682
    %v1803 = vadd.f32 %v1747, %v1687
    %v1804 = vadd.f32 %v1748, %v1690
    %1805 = vst.msk [vmem:[#allocation2] sm:$0xff] %vm577, %v1749
    %1806 = vst.msk [vmem:[#allocation2 + $0x8] sm:$0xff] %vm577, %v1750
    %1807 = vst.msk [vmem:[#allocation2 + $0x10] sm:$0xff] %vm577, %v1751
    %1808 = vst.msk [vmem:[#allocation2 + $0x18] sm:$0xff] %vm577, %v1752
    %1809 = vst.msk [vmem:[#allocation2 + $0x20] sm:$0xff] %vm577, %v1753
    %1810 = vst.msk [vmem:[#allocation2 + $0x28] sm:$0xff] %vm577, %v1754
    %1811 = vst.msk [vmem:[#allocation2 + $0x30] sm:$0xff] %vm577, %v1755
    %1812 = vst.msk [vmem:[#allocation2 + $0x38] sm:$0xff] %vm577, %v1756
    %1813 = vst.msk [vmem:[#allocation2 + $0x40] sm:$0xff] %vm577, %v1757
    %1814 = vst.msk [vmem:[#allocation2 + $0x48] sm:$0xff] %vm577, %v1758
    %1815 = vst.msk [vmem:[#allocation2 + $0x50] sm:$0xff] %vm577, %v1759
    %1816 = vst.msk [vmem:[#allocation2 + $0x58] sm:$0xff] %vm577, %v1760
    %1817 = vst.msk [vmem:[#allocation2 + $0x60] sm:$0xff] %vm577, %v1761
    %1818 = vst.msk [vmem:[#allocation2 + $0x68] sm:$0xff] %vm577, %v1762
    %1819 = vst.msk [vmem:[#allocation2 + $0x70] sm:$0xff] %vm577, %v1763
    %1820 = vst.msk [vmem:[#allocation2 + $0x78] sm:$0xff] %vm577, %v1764
    %1821 = vst.msk [vmem:[#allocation2 + $0x80] sm:$0xff] %vm577, %v1765
    %1822 = vst.msk [vmem:[#allocation2 + $0x88] sm:$0xff] %vm577, %v1766
    %1823 = vst.msk [vmem:[#allocation2 + $0x90] sm:$0xff] %vm577, %v1767
    %1824 = vst.msk [vmem:[#allocation2 + $0x98] sm:$0xff] %vm577, %v1768
    %1825 = vst.msk [vmem:[#allocation2 + $0xa0] sm:$0xff] %vm577, %v1769
    %1826 = vst.msk [vmem:[#allocation2 + $0xa8] sm:$0xff] %vm577, %v1770
    %1827 = vst.msk [vmem:[#allocation2 + $0xb0] sm:$0xff] %vm577, %v1771
    %1828 = vst.msk [vmem:[#allocation2 + $0xb8] sm:$0xff] %vm577, %v1772
    %1829 = vst.msk [vmem:[#allocation2 + $0xc0] sm:$0xff] %vm577, %v1773
    %1830 = vst.msk [vmem:[#allocation2 + $0xc8] sm:$0xff] %vm577, %v1774
    %1831 = vst.msk [vmem:[#allocation2 + $0xd0] sm:$0xff] %vm577, %v1775
    %1832 = vst.msk [vmem:[#allocation2 + $0xd8] sm:$0xff] %vm577, %v1776
    %1833 = vst.msk [vmem:[#allocation2 + $0xe0] sm:$0xff] %vm577, %v1777
    %1834 = vst.msk [vmem:[#allocation2 + $0xe8] sm:$0xff] %vm577, %v1778
    %1835 = vst.msk [vmem:[#allocation2 + $0xf0] sm:$0xff] %vm577, %v1779
    %1836 = vst.msk [vmem:[#allocation2 + $0xf8] sm:$0xff] %vm577, %v1780
    %1837 = vst.msk [vmem:[#allocation2 + $0x100] sm:$0xff] %vm577, %v1781
    %1838 = vst.msk [vmem:[#allocation2 + $0x108] sm:$0xff] %vm577, %v1782
    %1839 = vst.msk [vmem:[#allocation2 + $0x110] sm:$0xff] %vm577, %v1783
    %1840 = vst.msk [vmem:[#allocation2 + $0x118] sm:$0xff] %vm577, %v1784
    %1841 = vst.msk [vmem:[#allocation2 + $0x120] sm:$0xff] %vm577, %v1785
    %1842 = vst.msk [vmem:[#allocation2 + $0x128] sm:$0xff] %vm577, %v1786
    %1843 = vst.msk [vmem:[#allocation2 + $0x130] sm:$0xff] %vm577, %v1787
    %1844 = vst.msk [vmem:[#allocation2 + $0x138] sm:$0xff] %vm577, %v1788
    %1845 = vst.msk [vmem:[#allocation2 + $0x140] sm:$0xff] %vm577, %v1789
    %1846 = vst.msk [vmem:[#allocation2 + $0x148] sm:$0xff] %vm577, %v1790
    %1847 = vst.msk [vmem:[#allocation2 + $0x150] sm:$0xff] %vm577, %v1791
    %1848 = vst.msk [vmem:[#allocation2 + $0x158] sm:$0xff] %vm577, %v1792
    %1849 = vst.msk [vmem:[#allocation2 + $0x160] sm:$0xff] %vm577, %v1793
    %1850 = vst.msk [vmem:[#allocation2 + $0x168] sm:$0xff] %vm577, %v1794
    %1851 = vst.msk [vmem:[#allocation2 + $0x170] sm:$0xff] %vm577, %v1795
    %1852 = vst.msk [vmem:[#allocation2 + $0x178] sm:$0xff] %vm577, %v1796
    %1853 = vst.msk [vmem:[#allocation2 + $0x180] sm:$0xff] %vm577, %v1797
    %1854 = vst.msk [vmem:[#allocation2 + $0x188] sm:$0xff] %vm577, %v1798
    %1855 = vst.msk [vmem:[#allocation2 + $0x190] sm:$0xff] %vm577, %v1799
    %1856 = vst.msk [vmem:[#allocation2 + $0x198] sm:$0xff] %vm577, %v1800
    %1857 = vst.msk [vmem:[#allocation2 + $0x1a0] sm:$0xff] %vm577, %v1801
    %1858 = vst.msk [vmem:[#allocation2 + $0x1a8] sm:$0xff] %vm577, %v1802
    %1859 = vst.msk [vmem:[#allocation2 + $0x1b0] sm:$0xff] %vm577, %v1803
    %1860 = vst.msk [vmem:[#allocation2 + $0x1b8] sm:$0xff] %vm577, %v1804
    %v1861 = vld [vmem:[%s0] sm:$0xe]
    %v1862 = vld [vmem:[%s0 + $0x4] sm:$0xf]
    %v1863 = vld [vmem:[%s0 + $0x8] sm:$0xf]
    %v1864 = vld [vmem:[%s0 + $0xc] sm:$0xf]
    %v1865 = vld [vmem:[%s0 + $0x10] sm:$0xf]
    %v1866 = vld [vmem:[%s0 + $0x14] sm:$0xf]
    %v1867 = vld [vmem:[%s0 + $0x18] sm:$0xf]
    %v1868 = vld [vmem:[%s0 + $0x1c] sm:$0xf]
    %v1869 = vld [vmem:[%s0 + $0x20] sm:$0xf]
    %v1870 = vld [vmem:[%s0 + $0x24] sm:$0xf]
    %v1871 = vld [vmem:[%s0 + $0x28] sm:$0xf]
    %v1872 = vld [vmem:[%s0 + $0x2c] sm:$0xf]
    %v1873 = vld [vmem:[%s0 + $0x30] sm:$0xf]
    %v1874 = vld [vmem:[%s0 + $0x34] sm:$0xf]
    %v1875 = vld [vmem:[%s0 + $0x38] sm:$0xf]
    %v1876 = vld [vmem:[%s0 + $0x3c] sm:$0xf]
    %v1877 = vld [vmem:[%s0 + $0x40] sm:$0xf]
    %v1878 = vld [vmem:[%s0 + $0x44] sm:$0xf]
    %v1879 = vld [vmem:[%s0 + $0x48] sm:$0xf]
    %v1880 = vld [vmem:[%s0 + $0x4c] sm:$0xf]
    %v1881 = vld [vmem:[%s0 + $0x50] sm:$0xf]
    %v1882 = vld [vmem:[%s0 + $0x54] sm:$0xf]
    %v1883 = vld [vmem:[%s0 + $0x58] sm:$0xf]
    %v1884 = vld [vmem:[%s0 + $0x5c] sm:$0xf]
    %v1885 = vld [vmem:[%s0 + $0x60] sm:$0xf]
    %v1886 = vld [vmem:[%s0 + $0x64] sm:$0xf]
    %v1887 = vld [vmem:[%s0 + $0x68] sm:$0xf]
    %v1888 = vld [vmem:[%s0 + $0x6c] sm:$0xf]
    %v1889 = vld [vmem:[%s0 + $0x70] sm:$0x1]
    %v1890 = vld [vmem:[%s0 + $0x88] sm:$0xe]
    %v1891 = vld [vmem:[%s0 + $0x8c] sm:$0xf]
    %v1892 = vld [vmem:[%s0 + $0x90] sm:$0xf]
    %v1893 = vld [vmem:[%s0 + $0x94] sm:$0xf]
    %v1894 = vld [vmem:[%s0 + $0x98] sm:$0xf]
    %v1895 = vld [vmem:[%s0 + $0x9c] sm:$0xf]
    %v1896 = vld [vmem:[%s0 + $0xa0] sm:$0xf]
    %v1897 = vld [vmem:[%s0 + $0xa4] sm:$0xf]
    %v1898 = vld [vmem:[%s0 + $0xa8] sm:$0xf]
    %v1899 = vld [vmem:[%s0 + $0xac] sm:$0xf]
    %v1900 = vld [vmem:[%s0 + $0xb0] sm:$0xf]
    %v1901 = vld [vmem:[%s0 + $0xb4] sm:$0xf]
    %v1902 = vld [vmem:[%s0 + $0xb8] sm:$0xf]
    %v1903 = vld [vmem:[%s0 + $0xbc] sm:$0xf]
    %v1904 = vld [vmem:[%s0 + $0xc0] sm:$0xf]
    %v1905 = vld [vmem:[%s0 + $0xc4] sm:$0xf]
    %v1906 = vld [vmem:[%s0 + $0xc8] sm:$0xf]
    %v1907 = vld [vmem:[%s0 + $0xcc] sm:$0xf]
    %v1908 = vld [vmem:[%s0 + $0xd0] sm:$0xf]
    %v1909 = vld [vmem:[%s0 + $0xd4] sm:$0xf]
    %v1910 = vld [vmem:[%s0 + $0xd8] sm:$0xf]
    %v1911 = vld [vmem:[%s0 + $0xdc] sm:$0xf]
    %v1912 = vld [vmem:[%s0 + $0xe0] sm:$0xf]
    %v1913 = vld [vmem:[%s0 + $0xe4] sm:$0xf]
    %v1914 = vld [vmem:[%s0 + $0xe8] sm:$0xf]
    %v1915 = vld [vmem:[%s0 + $0xec] sm:$0xf]
    %v1916 = vld [vmem:[%s0 + $0xf0] sm:$0xf]
    %v1917 = vld [vmem:[%s0 + $0xf4] sm:$0xf]
    %v1918 = vld [vmem:[%s0 + $0xf8] sm:$0x1]
    %vm1977 = vcmask 1042432
    %vm1978 = vcmask 1046532
    %vm1979 = vmor %vm1977, %vm1978
    %v1980 = vrot.slane %v1861, 5
    %v1981 = vrot.slane %v1980, 4
    %v1982 = vrot.slane %v1862, 5
    %v1983 = vsel %vm1979, %v1981, %v1982
    %v1984 = vrot.slane %v1982, 4
    %v1985 = vrot.slane %v1863, 5
    %v1986 = vsel %vm1979, %v1984, %v1985
    %v1987 = vrot.slane %v1985, 4
    %v1988 = vrot.slane %v1864, 5
    %v1989 = vsel %vm1979, %v1987, %v1988
    %v1990 = vrot.slane %v1988, 4
    %v1991 = vrot.slane %v1865, 5
    %v1992 = vsel %vm1979, %v1990, %v1991
    %v1993 = vrot.slane %v1991, 4
    %v1994 = vrot.slane %v1866, 5
    %v1995 = vsel %vm1979, %v1993, %v1994
    %v1996 = vrot.slane %v1994, 4
    %v1997 = vrot.slane %v1867, 5
    %v1998 = vsel %vm1979, %v1996, %v1997
    %v1999 = vrot.slane %v1997, 4
    %v2000 = vrot.slane %v1868, 5
    %v2001 = vsel %vm1979, %v1999, %v2000
    %v2002 = vrot.slane %v2000, 4
    %v2003 = vrot.slane %v1869, 5
    %v2004 = vsel %vm1979, %v2002, %v2003
    %v2005 = vrot.slane %v2003, 4
    %v2006 = vrot.slane %v1870, 5
    %v2007 = vsel %vm1979, %v2005, %v2006
    %v2008 = vrot.slane %v2006, 4
    %v2009 = vrot.slane %v1871, 5
    %v2010 = vsel %vm1979, %v2008, %v2009
    %v2011 = vrot.slane %v2009, 4
    %v2012 = vrot.slane %v1872, 5
    %v2013 = vsel %vm1979, %v2011, %v2012
    %v2014 = vrot.slane %v2012, 4
    %v2015 = vrot.slane %v1873, 5
    %v2016 = vsel %vm1979, %v2014, %v2015
    %v2017 = vrot.slane %v2015, 4
    %v2018 = vrot.slane %v1874, 5
    %v2019 = vsel %vm1979, %v2017, %v2018
    %v2020 = vrot.slane %v2018, 4
    %v2021 = vrot.slane %v1875, 5
    %v2022 = vsel %vm1979, %v2020, %v2021
    %v2023 = vrot.slane %v2021, 4
    %v2024 = vrot.slane %v1876, 5
    %v2025 = vsel %vm1979, %v2023, %v2024
    %v2026 = vrot.slane %v2024, 4
    %v2027 = vrot.slane %v1877, 5
    %v2028 = vsel %vm1979, %v2026, %v2027
    %v2029 = vrot.slane %v2027, 4
    %v2030 = vrot.slane %v1878, 5
    %v2031 = vsel %vm1979, %v2029, %v2030
    %v2032 = vrot.slane %v2030, 4
    %v2033 = vrot.slane %v1879, 5
    %v2034 = vsel %vm1979, %v2032, %v2033
    %v2035 = vrot.slane %v2033, 4
    %v2036 = vrot.slane %v1880, 5
    %v2037 = vsel %vm1979, %v2035, %v2036
    %v2038 = vrot.slane %v2036, 4
    %v2039 = vrot.slane %v1881, 5
    %v2040 = vsel %vm1979, %v2038, %v2039
    %v2041 = vrot.slane %v2039, 4
    %v2042 = vrot.slane %v1882, 5
    %v2043 = vsel %vm1979, %v2041, %v2042
    %v2044 = vrot.slane %v2042, 4
    %v2045 = vrot.slane %v1883, 5
    %v2046 = vsel %vm1979, %v2044, %v2045
    %v2047 = vrot.slane %v2045, 4
    %v2048 = vrot.slane %v1884, 5
    %v2049 = vsel %vm1979, %v2047, %v2048
    %v2050 = vrot.slane %v2048, 4
    %v2051 = vrot.slane %v1885, 5
    %v2052 = vsel %vm1979, %v2050, %v2051
    %v2053 = vrot.slane %v2051, 4
    %v2054 = vrot.slane %v1886, 5
    %v2055 = vsel %vm1979, %v2053, %v2054
    %v2056 = vrot.slane %v2054, 4
    %v2057 = vrot.slane %v1887, 5
    %v2058 = vsel %vm1979, %v2056, %v2057
    %v2059 = vrot.slane %v2057, 4
    %v2060 = vrot.slane %v1888, 5
    %v2061 = vsel %vm1979, %v2059, %v2060
    %v2062 = vrot.slane %v2060, 4
    %v2063 = vrot.slane %v1889, 5
    %v2064 = vsel %vm1979, %v2062, %v2063
    %v2065 = vrot.slane %v1890, 5
    %v2066 = vrot.slane %v2065, 4
    %v2067 = vrot.slane %v1891, 5
    %v2068 = vsel %vm1979, %v2066, %v2067
    %v2069 = vrot.slane %v2067, 4
    %v2070 = vrot.slane %v1892, 5
    %v2071 = vsel %vm1979, %v2069, %v2070
    %v2072 = vrot.slane %v2070, 4
    %v2073 = vrot.slane %v1893, 5
    %v2074 = vsel %vm1979, %v2072, %v2073
    %v2075 = vrot.slane %v2073, 4
    %v2076 = vrot.slane %v1894, 5
    %v2077 = vsel %vm1979, %v2075, %v2076
    %v2078 = vrot.slane %v2076, 4
    %v2079 = vrot.slane %v1895, 5
    %v2080 = vsel %vm1979, %v2078, %v2079
    %v2081 = vrot.slane %v2079, 4
    %v2082 = vrot.slane %v1896, 5
    %v2083 = vsel %vm1979, %v2081, %v2082
    %v2084 = vrot.slane %v2082, 4
    %v2085 = vrot.slane %v1897, 5
    %v2086 = vsel %vm1979, %v2084, %v2085
    %v2087 = vrot.slane %v2085, 4
    %v2088 = vrot.slane %v1898, 5
    %v2089 = vsel %vm1979, %v2087, %v2088
    %v2090 = vrot.slane %v2088, 4
    %v2091 = vrot.slane %v1899, 5
    %v2092 = vsel %vm1979, %v2090, %v2091
    %v2093 = vrot.slane %v2091, 4
    %v2094 = vrot.slane %v1900, 5
    %v2095 = vsel %vm1979, %v2093, %v2094
    %v2096 = vrot.slane %v2094, 4
    %v2097 = vrot.slane %v1901, 5
    %v2098 = vsel %vm1979, %v2096, %v2097
    %v2099 = vrot.slane %v2097, 4
    %v2100 = vrot.slane %v1902, 5
    %v2101 = vsel %vm1979, %v2099, %v2100
    %v2102 = vrot.slane %v2100, 4
    %v2103 = vrot.slane %v1903, 5
    %v2104 = vsel %vm1979, %v2102, %v2103
    %v2105 = vrot.slane %v2103, 4
    %v2106 = vrot.slane %v1904, 5
    %v2107 = vsel %vm1979, %v2105, %v2106
    %v2108 = vrot.slane %v2106, 4
    %v2109 = vrot.slane %v1905, 5
    %v2110 = vsel %vm1979, %v2108, %v2109
    %v2111 = vrot.slane %v2109, 4
    %v2112 = vrot.slane %v1906, 5
    %v2113 = vsel %vm1979, %v2111, %v2112
    %v2114 = vrot.slane %v2112, 4
    %v2115 = vrot.slane %v1907, 5
    %v2116 = vsel %vm1979, %v2114, %v2115
    %v2117 = vrot.slane %v2115, 4
    %v2118 = vrot.slane %v1908, 5
    %v2119 = vsel %vm1979, %v2117, %v2118
    %v2120 = vrot.slane %v2118, 4
    %v2121 = vrot.slane %v1909, 5
    %v2122 = vsel %vm1979, %v2120, %v2121
    %v2123 = vrot.slane %v2121, 4
    %v2124 = vrot.slane %v1910, 5
    %v2125 = vsel %vm1979, %v2123, %v2124
    %v2126 = vrot.slane %v2124, 4
    %v2127 = vrot.slane %v1911, 5
    %v2128 = vsel %vm1979, %v2126, %v2127
    %v2129 = vrot.slane %v2127, 4
    %v2130 = vrot.slane %v1912, 5
    %v2131 = vsel %vm1979, %v2129, %v2130
    %v2132 = vrot.slane %v2130, 4
    %v2133 = vrot.slane %v1913, 5
    %v2134 = vsel %vm1979, %v2132, %v2133
    %v2135 = vrot.slane %v2133, 4
    %v2136 = vrot.slane %v1914, 5
    %v2137 = vsel %vm1979, %v2135, %v2136
    %v2138 = vrot.slane %v2136, 4
    %v2139 = vrot.slane %v1915, 5
    %v2140 = vsel %vm1979, %v2138, %v2139
    %v2141 = vrot.slane %v2139, 4
    %v2142 = vrot.slane %v1916, 5
    %v2143 = vsel %vm1979, %v2141, %v2142
    %v2144 = vrot.slane %v2142, 4
    %v2145 = vrot.slane %v1917, 5
    %v2146 = vsel %vm1979, %v2144, %v2145
    %v2147 = vrot.slane %v2145, 4
    %v2148 = vrot.slane %v1918, 5
    %v2149 = vsel %vm1979, %v2147, %v2148
    %s2150 = scalar_lea.vmem %s1, 4
    %v2151 = vld [vmem:[%s2150] sm:$0x3]
    %v2152 = vunpack.c.l.b16 %v1983
    %v2153 = vunpack.c.l.b16 %v1986
    %v2154 = vunpack.c.l.b16 %v1989
    %v2155 = vunpack.c.l.b16 %v1992
    %v2156 = vunpack.c.l.b16 %v1995
    %v2157 = vunpack.c.l.b16 %v1998
    %v2158 = vunpack.c.l.b16 %v2001
    %v2159 = vunpack.c.l.b16 %v2004
    %v2160 = vunpack.c.l.b16 %v2007
    %v2161 = vunpack.c.l.b16 %v2010
    %v2162 = vunpack.c.l.b16 %v2013
    %v2163 = vunpack.c.l.b16 %v2016
    %v2164 = vunpack.c.l.b16 %v2019
    %v2165 = vunpack.c.l.b16 %v2022
    %v2166 = vunpack.c.l.b16 %v2025
    %v2167 = vunpack.c.l.b16 %v2028
    %v2168 = vunpack.c.l.b16 %v2031
    %v2169 = vunpack.c.l.b16 %v2034
    %v2170 = vunpack.c.l.b16 %v2037
    %v2171 = vunpack.c.l.b16 %v2040
    %v2172 = vunpack.c.l.b16 %v2043
    %v2173 = vunpack.c.l.b16 %v2046
    %v2174 = vunpack.c.l.b16 %v2049
    %v2175 = vunpack.c.l.b16 %v2052
    %v2176 = vunpack.c.l.b16 %v2055
    %v2177 = vunpack.c.l.b16 %v2058
    %v2178 = vunpack.c.l.b16 %v2061
    %v2179 = vunpack.c.l.b16 %v2064
    %v2180 = vunpack.c.l.b16 %v2068
    %v2181 = vunpack.c.l.b16 %v2071
    %v2182 = vunpack.c.l.b16 %v2074
    %v2183 = vunpack.c.l.b16 %v2077
    %v2184 = vunpack.c.l.b16 %v2080
    %v2185 = vunpack.c.l.b16 %v2083
    %v2186 = vunpack.c.l.b16 %v2086
    %v2187 = vunpack.c.l.b16 %v2089
    %v2188 = vunpack.c.l.b16 %v2092
    %v2189 = vunpack.c.l.b16 %v2095
    %v2190 = vunpack.c.l.b16 %v2098
    %v2191 = vunpack.c.l.b16 %v2101
    %v2192 = vunpack.c.l.b16 %v2104
    %v2193 = vunpack.c.l.b16 %v2107
    %v2194 = vunpack.c.l.b16 %v2110
    %v2195 = vunpack.c.l.b16 %v2113
    %v2196 = vunpack.c.l.b16 %v2116
    %v2197 = vunpack.c.l.b16 %v2119
    %v2198 = vunpack.c.l.b16 %v2122
    %v2199 = vunpack.c.l.b16 %v2125
    %v2200 = vunpack.c.l.b16 %v2128
    %v2201 = vunpack.c.l.b16 %v2131
    %v2202 = vunpack.c.l.b16 %v2134
    %v2203 = vunpack.c.l.b16 %v2137
    %v2204 = vunpack.c.l.b16 %v2140
    %v2205 = vunpack.c.l.b16 %v2143
    %v2206 = vunpack.c.l.b16 %v2146
    %v2207 = vunpack.c.l.b16 %v2149
    %v2208 = vpack.c.b16 %v2153, %v2152
    %v2209 = vpack.c.b16 %v2155, %v2154
    %v2210 = vpack.c.b16 %v2157, %v2156
    %v2211 = vpack.c.b16 %v2159, %v2158
    %v2212 = vpack.c.b16 %v2161, %v2160
    %v2213 = vpack.c.b16 %v2163, %v2162
    %v2214 = vpack.c.b16 %v2165, %v2164
    %v2215 = vpack.c.b16 %v2167, %v2166
    %v2216 = vpack.c.b16 %v2169, %v2168
    %v2217 = vpack.c.b16 %v2171, %v2170
    %v2218 = vpack.c.b16 %v2173, %v2172
    %v2219 = vpack.c.b16 %v2175, %v2174
    %v2220 = vpack.c.b16 %v2177, %v2176
    %v2221 = vpack.c.b16 %v2179, %v2178
    %v2222 = vpack.c.b16 %v2181, %v2180
    %v2223 = vpack.c.b16 %v2183, %v2182
    %v2224 = vpack.c.b16 %v2185, %v2184
    %v2225 = vpack.c.b16 %v2187, %v2186
    %v2226 = vpack.c.b16 %v2189, %v2188
    %v2227 = vpack.c.b16 %v2191, %v2190
    %v2228 = vpack.c.b16 %v2193, %v2192
    %v2229 = vpack.c.b16 %v2195, %v2194
    %v2230 = vpack.c.b16 %v2197, %v2196
    %v2231 = vpack.c.b16 %v2199, %v2198
    %v2232 = vpack.c.b16 %v2201, %v2200
    %v2233 = vpack.c.b16 %v2203, %v2202
    %v2234 = vpack.c.b16 %v2205, %v2204
    %v2235 = vpack.c.b16 %v2207, %v2206
    %v2237 = vsel %vm231, %v2208, 0
    %v2240 = vsel %vm231, %v2209, 0
    %v2243 = vsel %vm231, %v2210, 0
    %v2246 = vsel %vm231, %v2211, 0
    %v2249 = vsel %vm231, %v2212, 0
    %v2252 = vsel %vm231, %v2213, 0
    %v2255 = vsel %vm231, %v2214, 0
    %v2258 = vsel %vm231, %v2215, 0
    %v2261 = vsel %vm231, %v2216, 0
    %v2264 = vsel %vm231, %v2217, 0
    %v2267 = vsel %vm231, %v2218, 0
    %v2270 = vsel %vm231, %v2219, 0
    %v2273 = vsel %vm231, %v2220, 0
    %v2276 = vsel %vm231, %v2221, 0
    %v2279 = vsel %vm231, %v2222, 0
    %v2282 = vsel %vm231, %v2223, 0
    %v2285 = vsel %vm231, %v2224, 0
    %v2288 = vsel %vm231, %v2225, 0
    %v2291 = vsel %vm231, %v2226, 0
    %v2294 = vsel %vm231, %v2227, 0
    %v2297 = vsel %vm231, %v2228, 0
    %v2300 = vsel %vm231, %v2229, 0
    %v2303 = vsel %vm231, %v2230, 0
    %v2306 = vsel %vm231, %v2231, 0
    %v2309 = vsel %vm231, %v2232, 0
    %v2312 = vsel %vm231, %v2233, 0
    %v2315 = vsel %vm231, %v2234, 0
    %v2318 = vsel %vm231, %v2235, 0
    %v2321 = vsel %vm316, %v2151, 0
    %2323 = vmatprep.subr.bf16.mxu0 0
    %2324 = vmatpush1.bf16.msra.mxu0 %v2321
    %2325 = vmatprep.subr.bf16.mxu0 0
    %2326 = vmatpush1.bf16.msra.mxu0 0
    %2327 = vmatprep.subr.bf16.mxu0 0
    %2328 = vmatpush1.bf16.msra.mxu0 0
    %2329 = vmatprep.subr.bf16.mxu0 0
    %2330 = vmatpush1.bf16.msra.mxu0 0
    %2331 = vmatprep.subr.bf16.mxu0 0
    %2332 = vmatpush1.bf16.msra.mxu0 0
    %2333 = vmatprep.subr.bf16.mxu0 0
    %2334 = vmatpush1.bf16.msra.mxu0 0
    %2335 = vmatprep.subr.bf16.mxu0 0
    %2336 = vmatpush1.bf16.msra.mxu0 0
    %2337 = vmatprep.subr.bf16.mxu0 0
    %2338 = vmatpush1.bf16.msra.mxu0 0
    %2339 = vmatprep.subr.bf16.mxu0 0
    %2340 = vmatpush1.bf16.msra.mxu0 0
    %2341 = vmatprep.subr.bf16.mxu0 0
    %2342 = vmatpush1.bf16.msra.mxu0 0
    %2343 = vmatprep.subr.bf16.mxu0 0
    %2344 = vmatpush1.bf16.msra.mxu0 0
    %2345 = vmatprep.subr.bf16.mxu0 0
    %2346 = vmatpush1.bf16.msra.mxu0 0
    %2347 = vmatprep.subr.bf16.mxu0 0
    %2348 = vmatpush1.bf16.msra.mxu0 0
    %2349 = vmatprep.subr.bf16.mxu0 0
    %2350 = vmatpush1.bf16.msra.mxu0 0
    %2351 = vmatprep.subr.bf16.mxu0 0
    %2352 = vmatpush1.bf16.msra.mxu0 0
    %2353 = vmatprep.subr.bf16.mxu0 0
    %2354 = vmatpush1.bf16.msra.mxu0 0
    %2355 = vmatprep.mubr.bf16.mxu0 0
    %2356 = vmatmul.mubr.bf16.gmra.mrb[0].mxu0 %v2237
    %v2357 = vpop.f32.mrb[0].mxu0
    %v2358 = vadd.f32 0.0, %v2357
    %v2359 = vpop.f32.mrb[0].mxu0
    %v2360 = vpop.f32.mrb[0].mxu0
    %v2361 = vadd.f32 0.0, %v2360
    %v2362 = vpop.f32.mrb[0].mxu0
    %2363 = vmatprep.mubr.bf16.mxu0 0
    %2364 = vmatmul.mubr.bf16.gmra.mrb[0].mxu0 %v2240
    %v2365 = vpop.f32.mrb[0].mxu0
    %v2366 = vadd.f32 0.0, %v2365
    %v2367 = vpop.f32.mrb[0].mxu0
    %v2368 = vpop.f32.mrb[0].mxu0
    %v2369 = vadd.f32 0.0, %v2368
    %v2370 = vpop.f32.mrb[0].mxu0
    %2371 = vmatprep.mubr.bf16.mxu0 0
    %2372 = vmatmul.mubr.bf16.gmra.mrb[0].mxu0 %v2243
    %v2373 = vpop.f32.mrb[0].mxu0
    %v2374 = vadd.f32 0.0, %v2373
    %v2375 = vpop.f32.mrb[0].mxu0
    %v2376 = vpop.f32.mrb[0].mxu0
    %v2377 = vadd.f32 0.0, %v2376
    %v2378 = vpop.f32.mrb[0].mxu0
    %2379 = vmatprep.mubr.bf16.mxu0 0
    %2380 = vmatmul.mubr.bf16.gmra.mrb[0].mxu0 %v2246
    %v2381 = vpop.f32.mrb[0].mxu0
    %v2382 = vadd.f32 0.0, %v2381
    %v2383 = vpop.f32.mrb[0].mxu0
    %v2384 = vpop.f32.mrb[0].mxu0
    %v2385 = vadd.f32 0.0, %v2384
    %v2386 = vpop.f32.mrb[0].mxu0
    %2387 = vmatprep.mubr.bf16.mxu0 0
    %2388 = vmatmul.mubr.bf16.gmra.mrb[0].mxu0 %v2249
    %v2389 = vpop.f32.mrb[0].mxu0
    %v2390 = vadd.f32 0.0, %v2389
    %v2391 = vpop.f32.mrb[0].mxu0
    %v2392 = vpop.f32.mrb[0].mxu0
    %v2393 = vadd.f32 0.0, %v2392
    %v2394 = vpop.f32.mrb[0].mxu0
    %2395 = vmatprep.mubr.bf16.mxu0 0
    %2396 = vmatmul.mubr.bf16.gmra.mrb[0].mxu0 %v2252
    %v2397 = vpop.f32.mrb[0].mxu0
    %v2398 = vadd.f32 0.0, %v2397
    %v2399 = vpop.f32.mrb[0].mxu0
    %v2400 = vpop.f32.mrb[0].mxu0
    %v2401 = vadd.f32 0.0, %v2400
    %v2402 = vpop.f32.mrb[0].mxu0
    %2403 = vmatprep.mubr.bf16.mxu0 0
    %2404 = vmatmul.mubr.bf16.gmra.mrb[0].mxu0 %v2255
    %v2405 = vpop.f32.mrb[0].mxu0
    %v2406 = vadd.f32 0.0, %v2405
    %v2407 = vpop.f32.mrb[0].mxu0
    %v2408 = vpop.f32.mrb[0].mxu0
    %v2409 = vadd.f32 0.0, %v2408
    %v2410 = vpop.f32.mrb[0].mxu0
    %2411 = vmatprep.mubr.bf16.mxu0 0
    %2412 = vmatmul.mubr.bf16.gmra.mrb[0].mxu0 %v2258
    %v2413 = vpop.f32.mrb[0].mxu0
    %v2414 = vadd.f32 0.0, %v2413
    %v2415 = vpop.f32.mrb[0].mxu0
    %v2416 = vpop.f32.mrb[0].mxu0
    %v2417 = vadd.f32 0.0, %v2416
    %v2418 = vpop.f32.mrb[0].mxu0
    %2419 = vmatprep.mubr.bf16.mxu0 0
    %2420 = vmatmul.mubr.bf16.gmra.mrb[0].mxu0 %v2261
    %v2421 = vpop.f32.mrb[0].mxu0
    %v2422 = vadd.f32 0.0, %v2421
    %v2423 = vpop.f32.mrb[0].mxu0
    %v2424 = vpop.f32.mrb[0].mxu0
    %v2425 = vadd.f32 0.0, %v2424
    %v2426 = vpop.f32.mrb[0].mxu0
    %2427 = vmatprep.mubr.bf16.mxu0 0
    %2428 = vmatmul.mubr.bf16.gmra.mrb[0].mxu0 %v2264
    %v2429 = vpop.f32.mrb[0].mxu0
    %v2430 = vadd.f32 0.0, %v2429
    %v2431 = vpop.f32.mrb[0].mxu0
    %v2432 = vpop.f32.mrb[0].mxu0
    %v2433 = vadd.f32 0.0, %v2432
    %v2434 = vpop.f32.mrb[0].mxu0
    %2435 = vmatprep.mubr.bf16.mxu0 0
    %2436 = vmatmul.mubr.bf16.gmra.mrb[0].mxu0 %v2267
    %v2437 = vpop.f32.mrb[0].mxu0
    %v2438 = vadd.f32 0.0, %v2437
    %v2439 = vpop.f32.mrb[0].mxu0
    %v2440 = vpop.f32.mrb[0].mxu0
    %v2441 = vadd.f32 0.0, %v2440
    %v2442 = vpop.f32.mrb[0].mxu0
    %2443 = vmatprep.mubr.bf16.mxu0 0
    %2444 = vmatmul.mubr.bf16.gmra.mrb[0].mxu0 %v2270
    %v2445 = vpop.f32.mrb[0].mxu0
    %v2446 = vadd.f32 0.0, %v2445
    %v2447 = vpop.f32.mrb[0].mxu0
    %v2448 = vpop.f32.mrb[0].mxu0
    %v2449 = vadd.f32 0.0, %v2448
    %v2450 = vpop.f32.mrb[0].mxu0
    %2451 = vmatprep.mubr.bf16.mxu0 0
    %2452 = vmatmul.mubr.bf16.gmra.mrb[0].mxu0 %v2273
    %v2453 = vpop.f32.mrb[0].mxu0
    %v2454 = vadd.f32 0.0, %v2453
    %v2455 = vpop.f32.mrb[0].mxu0
    %v2456 = vpop.f32.mrb[0].mxu0
    %v2457 = vadd.f32 0.0, %v2456
    %v2458 = vpop.f32.mrb[0].mxu0
    %2459 = vmatprep.mubr.bf16.mxu0 0
    %2460 = vmatmul.mubr.bf16.gmra.mrb[0].mxu0 %v2276
    %v2461 = vpop.f32.mrb[0].mxu0
    %v2462 = vadd.f32 0.0, %v2461
    %v2463 = vpop.f32.mrb[0].mxu0
    %v2464 = vpop.f32.mrb[0].mxu0
    %v2465 = vadd.f32 0.0, %v2464
    %v2466 = vpop.f32.mrb[0].mxu0
    %2467 = vmatprep.mubr.bf16.mxu0 0
    %2468 = vmatmul.mubr.bf16.gmra.mrb[0].mxu0 %v2279
    %v2469 = vpop.f32.mrb[0].mxu0
    %v2470 = vadd.f32 0.0, %v2469
    %v2471 = vpop.f32.mrb[0].mxu0
    %v2472 = vpop.f32.mrb[0].mxu0
    %v2473 = vadd.f32 0.0, %v2472
    %v2474 = vpop.f32.mrb[0].mxu0
    %2475 = vmatprep.mubr.bf16.mxu0 0
    %2476 = vmatmul.mubr.bf16.gmra.mrb[0].mxu0 %v2282
    %v2477 = vpop.f32.mrb[0].mxu0
    %v2478 = vadd.f32 0.0, %v2477
    %v2479 = vpop.f32.mrb[0].mxu0
    %v2480 = vpop.f32.mrb[0].mxu0
    %v2481 = vadd.f32 0.0, %v2480
    %v2482 = vpop.f32.mrb[0].mxu0
    %2483 = vmatprep.mubr.bf16.mxu0 0
    %2484 = vmatmul.mubr.bf16.gmra.mrb[0].mxu0 %v2285
    %v2485 = vpop.f32.mrb[0].mxu0
    %v2486 = vadd.f32 0.0, %v2485
    %v2487 = vpop.f32.mrb[0].mxu0
    %v2488 = vpop.f32.mrb[0].mxu0
    %v2489 = vadd.f32 0.0, %v2488
    %v2490 = vpop.f32.mrb[0].mxu0
    %2491 = vmatprep.mubr.bf16.mxu0 0
    %2492 = vmatmul.mubr.bf16.gmra.mrb[0].mxu0 %v2288
    %v2493 = vpop.f32.mrb[0].mxu0
    %v2494 = vadd.f32 0.0, %v2493
    %v2495 = vpop.f32.mrb[0].mxu0
    %v2496 = vpop.f32.mrb[0].mxu0
    %v2497 = vadd.f32 0.0, %v2496
    %v2498 = vpop.f32.mrb[0].mxu0
    %2499 = vmatprep.mubr.bf16.mxu0 0
    %2500 = vmatmul.mubr.bf16.gmra.mrb[0].mxu0 %v2291
    %v2501 = vpop.f32.mrb[0].mxu0
    %v2502 = vadd.f32 0.0, %v2501
    %v2503 = vpop.f32.mrb[0].mxu0
    %v2504 = vpop.f32.mrb[0].mxu0
    %v2505 = vadd.f32 0.0, %v2504
    %v2506 = vpop.f32.mrb[0].mxu0
    %2507 = vmatprep.mubr.bf16.mxu0 0
    %2508 = vmatmul.mubr.bf16.gmra.mrb[0].mxu0 %v2294
    %v2509 = vpop.f32.mrb[0].mxu0
    %v2510 = vadd.f32 0.0, %v2509
    %v2511 = vpop.f32.mrb[0].mxu0
    %v2512 = vpop.f32.mrb[0].mxu0
    %v2513 = vadd.f32 0.0, %v2512
    %v2514 = vpop.f32.mrb[0].mxu0
    %2515 = vmatprep.mubr.bf16.mxu0 0
    %2516 = vmatmul.mubr.bf16.gmra.mrb[0].mxu0 %v2297
    %v2517 = vpop.f32.mrb[0].mxu0
    %v2518 = vadd.f32 0.0, %v2517
    %v2519 = vpop.f32.mrb[0].mxu0
    %v2520 = vpop.f32.mrb[0].mxu0
    %v2521 = vadd.f32 0.0, %v2520
    %v2522 = vpop.f32.mrb[0].mxu0
    %2523 = vmatprep.mubr.bf16.mxu0 0
    %2524 = vmatmul.mubr.bf16.gmra.mrb[0].mxu0 %v2300
    %v2525 = vpop.f32.mrb[0].mxu0
    %v2526 = vadd.f32 0.0, %v2525
    %v2527 = vpop.f32.mrb[0].mxu0
    %v2528 = vpop.f32.mrb[0].mxu0
    %v2529 = vadd.f32 0.0, %v2528
    %v2530 = vpop.f32.mrb[0].mxu0
    %2531 = vmatprep.mubr.bf16.mxu0 0
    %2532 = vmatmul.mubr.bf16.gmra.mrb[0].mxu0 %v2303
    %v2533 = vpop.f32.mrb[0].mxu0
    %v2534 = vadd.f32 0.0, %v2533
    %v2535 = vpop.f32.mrb[0].mxu0
    %v2536 = vpop.f32.mrb[0].mxu0
    %v2537 = vadd.f32 0.0, %v2536
    %v2538 = vpop.f32.mrb[0].mxu0
    %2539 = vmatprep.mubr.bf16.mxu0 0
    %2540 = vmatmul.mubr.bf16.gmra.mrb[0].mxu0 %v2306
    %v2541 = vpop.f32.mrb[0].mxu0
    %v2542 = vadd.f32 0.0, %v2541
    %v2543 = vpop.f32.mrb[0].mxu0
    %v2544 = vpop.f32.mrb[0].mxu0
    %v2545 = vadd.f32 0.0, %v2544
    %v2546 = vpop.f32.mrb[0].mxu0
    %2547 = vmatprep.mubr.bf16.mxu0 0
    %2548 = vmatmul.mubr.bf16.gmra.mrb[0].mxu0 %v2309
    %v2549 = vpop.f32.mrb[0].mxu0
    %v2550 = vadd.f32 0.0, %v2549
    %v2551 = vpop.f32.mrb[0].mxu0
    %v2552 = vpop.f32.mrb[0].mxu0
    %v2553 = vadd.f32 0.0, %v2552
    %v2554 = vpop.f32.mrb[0].mxu0
    %2555 = vmatprep.mubr.bf16.mxu0 0
    %2556 = vmatmul.mubr.bf16.gmra.mrb[0].mxu0 %v2312
    %v2557 = vpop.f32.mrb[0].mxu0
    %v2558 = vadd.f32 0.0, %v2557
    %v2559 = vpop.f32.mrb[0].mxu0
    %v2560 = vpop.f32.mrb[0].mxu0
    %v2561 = vadd.f32 0.0, %v2560
    %v2562 = vpop.f32.mrb[0].mxu0
    %2563 = vmatprep.mubr.bf16.mxu0 0
    %2564 = vmatmul.mubr.bf16.gmra.mrb[0].mxu0 %v2315
    %v2565 = vpop.f32.mrb[0].mxu0
    %v2566 = vadd.f32 0.0, %v2565
    %v2567 = vpop.f32.mrb[0].mxu0
    %v2568 = vpop.f32.mrb[0].mxu0
    %v2569 = vadd.f32 0.0, %v2568
    %v2570 = vpop.f32.mrb[0].mxu0
    %2571 = vmatprep.mubr.bf16.mxu0 0
    %2572 = vmatmul.mubr.bf16.gmra.mrb[0].mxu0 %v2318
    %v2573 = vpop.f32.mrb[0].mxu0
    %v2574 = vadd.f32 0.0, %v2573
    %v2575 = vpop.f32.mrb[0].mxu0
    %v2576 = vpop.f32.mrb[0].mxu0
    %v2577 = vadd.f32 0.0, %v2576
    %v2578 = vpop.f32.mrb[0].mxu0
    %2579 = vdwg.mxu0
    %v2580 = vld [vmem:[#allocation2] sm:$0xff]
    %v2581 = vld [vmem:[#allocation2 + $0x8] sm:$0xff]
    %v2582 = vld [vmem:[#allocation2 + $0x10] sm:$0xff]
    %v2583 = vld [vmem:[#allocation2 + $0x18] sm:$0xff]
    %v2584 = vld [vmem:[#allocation2 + $0x20] sm:$0xff]
    %v2585 = vld [vmem:[#allocation2 + $0x28] sm:$0xff]
    %v2586 = vld [vmem:[#allocation2 + $0x30] sm:$0xff]
    %v2587 = vld [vmem:[#allocation2 + $0x38] sm:$0xff]
    %v2588 = vld [vmem:[#allocation2 + $0x40] sm:$0xff]
    %v2589 = vld [vmem:[#allocation2 + $0x48] sm:$0xff]
    %v2590 = vld [vmem:[#allocation2 + $0x50] sm:$0xff]
    %v2591 = vld [vmem:[#allocation2 + $0x58] sm:$0xff]
    %v2592 = vld [vmem:[#allocation2 + $0x60] sm:$0xff]
    %v2593 = vld [vmem:[#allocation2 + $0x68] sm:$0xff]
    %v2594 = vld [vmem:[#allocation2 + $0x70] sm:$0xff]
    %v2595 = vld [vmem:[#allocation2 + $0x78] sm:$0xff]
    %v2596 = vld [vmem:[#allocation2 + $0x80] sm:$0xff]
    %v2597 = vld [vmem:[#allocation2 + $0x88] sm:$0xff]
    %v2598 = vld [vmem:[#allocation2 + $0x90] sm:$0xff]
    %v2599 = vld [vmem:[#allocation2 + $0x98] sm:$0xff]
    %v2600 = vld [vmem:[#allocation2 + $0xa0] sm:$0xff]
    %v2601 = vld [vmem:[#allocation2 + $0xa8] sm:$0xff]
    %v2602 = vld [vmem:[#allocation2 + $0xb0] sm:$0xff]
    %v2603 = vld [vmem:[#allocation2 + $0xb8] sm:$0xff]
    %v2604 = vld [vmem:[#allocation2 + $0xc0] sm:$0xff]
    %v2605 = vld [vmem:[#allocation2 + $0xc8] sm:$0xff]
    %v2606 = vld [vmem:[#allocation2 + $0xd0] sm:$0xff]
    %v2607 = vld [vmem:[#allocation2 + $0xd8] sm:$0xff]
    %v2608 = vld [vmem:[#allocation2 + $0xe0] sm:$0xff]
    %v2609 = vld [vmem:[#allocation2 + $0xe8] sm:$0xff]
    %v2610 = vld [vmem:[#allocation2 + $0xf0] sm:$0xff]
    %v2611 = vld [vmem:[#allocation2 + $0xf8] sm:$0xff]
    %v2612 = vld [vmem:[#allocation2 + $0x100] sm:$0xff]
    %v2613 = vld [vmem:[#allocation2 + $0x108] sm:$0xff]
    %v2614 = vld [vmem:[#allocation2 + $0x110] sm:$0xff]
    %v2615 = vld [vmem:[#allocation2 + $0x118] sm:$0xff]
    %v2616 = vld [vmem:[#allocation2 + $0x120] sm:$0xff]
    %v2617 = vld [vmem:[#allocation2 + $0x128] sm:$0xff]
    %v2618 = vld [vmem:[#allocation2 + $0x130] sm:$0xff]
    %v2619 = vld [vmem:[#allocation2 + $0x138] sm:$0xff]
    %v2620 = vld [vmem:[#allocation2 + $0x140] sm:$0xff]
    %v2621 = vld [vmem:[#allocation2 + $0x148] sm:$0xff]
    %v2622 = vld [vmem:[#allocation2 + $0x150] sm:$0xff]
    %v2623 = vld [vmem:[#allocation2 + $0x158] sm:$0xff]
    %v2624 = vld [vmem:[#allocation2 + $0x160] sm:$0xff]
    %v2625 = vld [vmem:[#allocation2 + $0x168] sm:$0xff]
    %v2626 = vld [vmem:[#allocation2 + $0x170] sm:$0xff]
    %v2627 = vld [vmem:[#allocation2 + $0x178] sm:$0xff]
    %v2628 = vld [vmem:[#allocation2 + $0x180] sm:$0xff]
    %v2629 = vld [vmem:[#allocation2 + $0x188] sm:$0xff]
    %v2630 = vld [vmem:[#allocation2 + $0x190] sm:$0xff]
    %v2631 = vld [vmem:[#allocation2 + $0x198] sm:$0xff]
    %v2632 = vld [vmem:[#allocation2 + $0x1a0] sm:$0xff]
    %v2633 = vld [vmem:[#allocation2 + $0x1a8] sm:$0xff]
    %v2634 = vld [vmem:[#allocation2 + $0x1b0] sm:$0xff]
    %v2635 = vld [vmem:[#allocation2 + $0x1b8] sm:$0xff]
    %v2636 = vadd.f32 %v2580, %v2358
    %v2637 = vadd.f32 %v2581, %v2361
    %v2638 = vadd.f32 %v2582, %v2366
    %v2639 = vadd.f32 %v2583, %v2369
    %v2640 = vadd.f32 %v2584, %v2374
    %v2641 = vadd.f32 %v2585, %v2377
    %v2642 = vadd.f32 %v2586, %v2382
    %v2643 = vadd.f32 %v2587, %v2385
    %v2644 = vadd.f32 %v2588, %v2390
    %v2645 = vadd.f32 %v2589, %v2393
    %v2646 = vadd.f32 %v2590, %v2398
    %v2647 = vadd.f32 %v2591, %v2401
    %v2648 = vadd.f32 %v2592, %v2406
    %v2649 = vadd.f32 %v2593, %v2409
    %v2650 = vadd.f32 %v2594, %v2414
    %v2651 = vadd.f32 %v2595, %v2417
    %v2652 = vadd.f32 %v2596, %v2422
    %v2653 = vadd.f32 %v2597, %v2425
    %v2654 = vadd.f32 %v2598, %v2430
    %v2655 = vadd.f32 %v2599, %v2433
    %v2656 = vadd.f32 %v2600, %v2438
    %v2657 = vadd.f32 %v2601, %v2441
    %v2658 = vadd.f32 %v2602, %v2446
    %v2659 = vadd.f32 %v2603, %v2449
    %v2660 = vadd.f32 %v2604, %v2454
    %v2661 = vadd.f32 %v2605, %v2457
    %v2662 = vadd.f32 %v2606, %v2462
    %v2663 = vadd.f32 %v2607, %v2465
    %v2664 = vadd.f32 %v2608, %v2470
    %v2665 = vadd.f32 %v2609, %v2473
    %v2666 = vadd.f32 %v2610, %v2478
    %v2667 = vadd.f32 %v2611, %v2481
    %v2668 = vadd.f32 %v2612, %v2486
    %v2669 = vadd.f32 %v2613, %v2489
    %v2670 = vadd.f32 %v2614, %v2494
    %v2671 = vadd.f32 %v2615, %v2497
    %v2672 = vadd.f32 %v2616, %v2502
    %v2673 = vadd.f32 %v2617, %v2505
    %v2674 = vadd.f32 %v2618, %v2510
    %v2675 = vadd.f32 %v2619, %v2513
    %v2676 = vadd.f32 %v2620, %v2518
    %v2677 = vadd.f32 %v2621, %v2521
    %v2678 = vadd.f32 %v2622, %v2526
    %v2679 = vadd.f32 %v2623, %v2529
    %v2680 = vadd.f32 %v2624, %v2534
    %v2681 = vadd.f32 %v2625, %v2537
    %v2682 = vadd.f32 %v2626, %v2542
    %v2683 = vadd.f32 %v2627, %v2545
    %v2684 = vadd.f32 %v2628, %v2550
    %v2685 = vadd.f32 %v2629, %v2553
    %v2686 = vadd.f32 %v2630, %v2558
    %v2687 = vadd.f32 %v2631, %v2561
    %v2688 = vadd.f32 %v2632, %v2566
    %v2689 = vadd.f32 %v2633, %v2569
    %v2690 = vadd.f32 %v2634, %v2574
    %v2691 = vadd.f32 %v2635, %v2577
    %2692 = vst.msk [vmem:[#allocation2] sm:$0xff] %vm577, %v2636
    %2693 = vst.msk [vmem:[#allocation2 + $0x8] sm:$0xff] %vm577, %v2637
    %2694 = vst.msk [vmem:[#allocation2 + $0x10] sm:$0xff] %vm577, %v2638
    %2695 = vst.msk [vmem:[#allocation2 + $0x18] sm:$0xff] %vm577, %v2639
    %2696 = vst.msk [vmem:[#allocation2 + $0x20] sm:$0xff] %vm577, %v2640
    %2697 = vst.msk [vmem:[#allocation2 + $0x28] sm:$0xff] %vm577, %v2641
    %2698 = vst.msk [vmem:[#allocation2 + $0x30] sm:$0xff] %vm577, %v2642
    %2699 = vst.msk [vmem:[#allocation2 + $0x38] sm:$0xff] %vm577, %v2643
    %2700 = vst.msk [vmem:[#allocation2 + $0x40] sm:$0xff] %vm577, %v2644
    %2701 = vst.msk [vmem:[#allocation2 + $0x48] sm:$0xff] %vm577, %v2645
    %2702 = vst.msk [vmem:[#allocation2 + $0x50] sm:$0xff] %vm577, %v2646
    %2703 = vst.msk [vmem:[#allocation2 + $0x58] sm:$0xff] %vm577, %v2647
    %2704 = vst.msk [vmem:[#allocation2 + $0x60] sm:$0xff] %vm577, %v2648
    %2705 = vst.msk [vmem:[#allocation2 + $0x68] sm:$0xff] %vm577, %v2649
    %2706 = vst.msk [vmem:[#allocation2 + $0x70] sm:$0xff] %vm577, %v2650
    %2707 = vst.msk [vmem:[#allocation2 + $0x78] sm:$0xff] %vm577, %v2651
    %2708 = vst.msk [vmem:[#allocation2 + $0x80] sm:$0xff] %vm577, %v2652
    %2709 = vst.msk [vmem:[#allocation2 + $0x88] sm:$0xff] %vm577, %v2653
    %2710 = vst.msk [vmem:[#allocation2 + $0x90] sm:$0xff] %vm577, %v2654
    %2711 = vst.msk [vmem:[#allocation2 + $0x98] sm:$0xff] %vm577, %v2655
    %2712 = vst.msk [vmem:[#allocation2 + $0xa0] sm:$0xff] %vm577, %v2656
    %2713 = vst.msk [vmem:[#allocation2 + $0xa8] sm:$0xff] %vm577, %v2657
    %2714 = vst.msk [vmem:[#allocation2 + $0xb0] sm:$0xff] %vm577, %v2658
    %2715 = vst.msk [vmem:[#allocation2 + $0xb8] sm:$0xff] %vm577, %v2659
    %2716 = vst.msk [vmem:[#allocation2 + $0xc0] sm:$0xff] %vm577, %v2660
    %2717 = vst.msk [vmem:[#allocation2 + $0xc8] sm:$0xff] %vm577, %v2661
    %2718 = vst.msk [vmem:[#allocation2 + $0xd0] sm:$0xff] %vm577, %v2662
    %2719 = vst.msk [vmem:[#allocation2 + $0xd8] sm:$0xff] %vm577, %v2663
    %2720 = vst.msk [vmem:[#allocation2 + $0xe0] sm:$0xff] %vm577, %v2664
    %2721 = vst.msk [vmem:[#allocation2 + $0xe8] sm:$0xff] %vm577, %v2665
    %2722 = vst.msk [vmem:[#allocation2 + $0xf0] sm:$0xff] %vm577, %v2666
    %2723 = vst.msk [vmem:[#allocation2 + $0xf8] sm:$0xff] %vm577, %v2667
    %2724 = vst.msk [vmem:[#allocation2 + $0x100] sm:$0xff] %vm577, %v2668
    %2725 = vst.msk [vmem:[#allocation2 + $0x108] sm:$0xff] %vm577, %v2669
    %2726 = vst.msk [vmem:[#allocation2 + $0x110] sm:$0xff] %vm577, %v2670
    %2727 = vst.msk [vmem:[#allocation2 + $0x118] sm:$0xff] %vm577, %v2671
    %2728 = vst.msk [vmem:[#allocation2 + $0x120] sm:$0xff] %vm577, %v2672
    %2729 = vst.msk [vmem:[#allocation2 + $0x128] sm:$0xff] %vm577, %v2673
    %2730 = vst.msk [vmem:[#allocation2 + $0x130] sm:$0xff] %vm577, %v2674
    %2731 = vst.msk [vmem:[#allocation2 + $0x138] sm:$0xff] %vm577, %v2675
    %2732 = vst.msk [vmem:[#allocation2 + $0x140] sm:$0xff] %vm577, %v2676
    %2733 = vst.msk [vmem:[#allocation2 + $0x148] sm:$0xff] %vm577, %v2677
    %2734 = vst.msk [vmem:[#allocation2 + $0x150] sm:$0xff] %vm577, %v2678
    %2735 = vst.msk [vmem:[#allocation2 + $0x158] sm:$0xff] %vm577, %v2679
    %2736 = vst.msk [vmem:[#allocation2 + $0x160] sm:$0xff] %vm577, %v2680
    %2737 = vst.msk [vmem:[#allocation2 + $0x168] sm:$0xff] %vm577, %v2681
    %2738 = vst.msk [vmem:[#allocation2 + $0x170] sm:$0xff] %vm577, %v2682
    %2739 = vst.msk [vmem:[#allocation2 + $0x178] sm:$0xff] %vm577, %v2683
    %2740 = vst.msk [vmem:[#allocation2 + $0x180] sm:$0xff] %vm577, %v2684
    %2741 = vst.msk [vmem:[#allocation2 + $0x188] sm:$0xff] %vm577, %v2685
    %2742 = vst.msk [vmem:[#allocation2 + $0x190] sm:$0xff] %vm577, %v2686
    %2743 = vst.msk [vmem:[#allocation2 + $0x198] sm:$0xff] %vm577, %v2687
    %2744 = vst.msk [vmem:[#allocation2 + $0x1a0] sm:$0xff] %vm577, %v2688
    %2745 = vst.msk [vmem:[#allocation2 + $0x1a8] sm:$0xff] %vm577, %v2689
    %2746 = vst.msk [vmem:[#allocation2 + $0x1b0] sm:$0xff] %vm577, %v2690
    %2747 = vst.msk [vmem:[#allocation2 + $0x1b8] sm:$0xff] %vm577, %v2691
    %v2748 = vld [vmem:[%s0 + $0x8] sm:$0xf]
    %v2749 = vld [vmem:[%s0 + $0xc] sm:$0xf]
    %v2750 = vld [vmem:[%s0 + $0x10] sm:$0xf]
    %v2751 = vld [vmem:[%s0 + $0x14] sm:$0xf]
    %v2752 = vld [vmem:[%s0 + $0x18] sm:$0xf]
    %v2753 = vld [vmem:[%s0 + $0x1c] sm:$0xf]
    %v2754 = vld [vmem:[%s0 + $0x20] sm:$0xf]
    %v2755 = vld [vmem:[%s0 + $0x24] sm:$0xf]
    %v2756 = vld [vmem:[%s0 + $0x28] sm:$0xf]
    %v2757 = vld [vmem:[%s0 + $0x2c] sm:$0xf]
    %v2758 = vld [vmem:[%s0 + $0x30] sm:$0xf]
    %v2759 = vld [vmem:[%s0 + $0x34] sm:$0xf]
    %v2760 = vld [vmem:[%s0 + $0x38] sm:$0xf]
    %v2761 = vld [vmem:[%s0 + $0x3c] sm:$0xf]
    %v2762 = vld [vmem:[%s0 + $0x40] sm:$0xf]
    %v2763 = vld [vmem:[%s0 + $0x44] sm:$0xf]
    %v2764 = vld [vmem:[%s0 + $0x48] sm:$0xf]
    %v2765 = vld [vmem:[%s0 + $0x4c] sm:$0xf]
    %v2766 = vld [vmem:[%s0 + $0x50] sm:$0xf]
    %v2767 = vld [vmem:[%s0 + $0x54] sm:$0xf]
    %v2768 = vld [vmem:[%s0 + $0x58] sm:$0xf]
    %v2769 = vld [vmem:[%s0 + $0x5c] sm:$0xf]
    %v2770 = vld [vmem:[%s0 + $0x60] sm:$0xf]
    %v2771 = vld [vmem:[%s0 + $0x64] sm:$0xf]
    %v2772 = vld [vmem:[%s0 + $0x68] sm:$0xf]
    %v2773 = vld [vmem:[%s0 + $0x6c] sm:$0xf]
    %v2774 = vld [vmem:[%s0 + $0x70] sm:$0xf]
    %v2775 = vld [vmem:[%s0 + $0x74] sm:$0xf]
    %v2776 = vld [vmem:[%s0 + $0x90] sm:$0xf]
    %v2777 = vld [vmem:[%s0 + $0x94] sm:$0xf]
    %v2778 = vld [vmem:[%s0 + $0x98] sm:$0xf]
    %v2779 = vld [vmem:[%s0 + $0x9c] sm:$0xf]
    %v2780 = vld [vmem:[%s0 + $0xa0] sm:$0xf]
    %v2781 = vld [vmem:[%s0 + $0xa4] sm:$0xf]
    %v2782 = vld [vmem:[%s0 + $0xa8] sm:$0xf]
    %v2783 = vld [vmem:[%s0 + $0xac] sm:$0xf]
    %v2784 = vld [vmem:[%s0 + $0xb0] sm:$0xf]
    %v2785 = vld [vmem:[%s0 + $0xb4] sm:$0xf]
    %v2786 = vld [vmem:[%s0 + $0xb8] sm:$0xf]
    %v2787 = vld [vmem:[%s0 + $0xbc] sm:$0xf]
    %v2788 = vld [vmem:[%s0 + $0xc0] sm:$0xf]
    %v2789 = vld [vmem:[%s0 + $0xc4] sm:$0xf]
    %v2790 = vld [vmem:[%s0 + $0xc8] sm:$0xf]
    %v2791 = vld [vmem:[%s0 + $0xcc] sm:$0xf]
    %v2792 = vld [vmem:[%s0 + $0xd0] sm:$0xf]
    %v2793 = vld [vmem:[%s0 + $0xd4] sm:$0xf]
    %v2794 = vld [vmem:[%s0 + $0xd8] sm:$0xf]
    %v2795 = vld [vmem:[%s0 + $0xdc] sm:$0xf]
    %v2796 = vld [vmem:[%s0 + $0xe0] sm:$0xf]
    %v2797 = vld [vmem:[%s0 + $0xe4] sm:$0xf]
    %v2798 = vld [vmem:[%s0 + $0xe8] sm:$0xf]
    %v2799 = vld [vmem:[%s0 + $0xec] sm:$0xf]
    %v2800 = vld [vmem:[%s0 + $0xf0] sm:$0xf]
    %v2801 = vld [vmem:[%s0 + $0xf4] sm:$0xf]
    %v2802 = vld [vmem:[%s0 + $0xf8] sm:$0xf]
    %v2803 = vld [vmem:[%s0 + $0xfc] sm:$0xf]
    %s2804 = scalar_lea.vmem %s1, 6
    %v2805 = vld [vmem:[%s2804] sm:$0x3]
    %v2862 = vunpack.c.l.b16 %v2748
    %v2863 = vunpack.c.l.b16 %v2749
    %v2864 = vunpack.c.l.b16 %v2750
    %v2865 = vunpack.c.l.b16 %v2751
    %v2866 = vunpack.c.l.b16 %v2752
    %v2867 = vunpack.c.l.b16 %v2753
    %v2868 = vunpack.c.l.b16 %v2754
    %v2869 = vunpack.c.l.b16 %v2755
    %v2870 = vunpack.c.l.b16 %v2756
    %v2871 = vunpack.c.l.b16 %v2757
    %v2872 = vunpack.c.l.b16 %v2758
    %v2873 = vunpack.c.l.b16 %v2759
    %v2874 = vunpack.c.l.b16 %v2760
    %v2875 = vunpack.c.l.b16 %v2761
    %v2876 = vunpack.c.l.b16 %v2762
    %v2877 = vunpack.c.l.b16 %v2763
    %v2878 = vunpack.c.l.b16 %v2764
    %v2879 = vunpack.c.l.b16 %v2765
    %v2880 = vunpack.c.l.b16 %v2766
    %v2881 = vunpack.c.l.b16 %v2767
    %v2882 = vunpack.c.l.b16 %v2768
    %v2883 = vunpack.c.l.b16 %v2769
    %v2884 = vunpack.c.l.b16 %v2770
    %v2885 = vunpack.c.l.b16 %v2771
    %v2886 = vunpack.c.l.b16 %v2772
    %v2887 = vunpack.c.l.b16 %v2773
    %v2888 = vunpack.c.l.b16 %v2774
    %v2889 = vunpack.c.l.b16 %v2775
    %v2890 = vunpack.c.l.b16 %v2776
    %v2891 = vunpack.c.l.b16 %v2777
    %v2892 = vunpack.c.l.b16 %v2778
    %v2893 = vunpack.c.l.b16 %v2779
    %v2894 = vunpack.c.l.b16 %v2780
    %v2895 = vunpack.c.l.b16 %v2781
    %v2896 = vunpack.c.l.b16 %v2782
    %v2897 = vunpack.c.l.b16 %v2783
    %v2898 = vunpack.c.l.b16 %v2784
    %v2899 = vunpack.c.l.b16 %v2785
    %v2900 = vunpack.c.l.b16 %v2786
    %v2901 = vunpack.c.l.b16 %v2787
    %v2902 = vunpack.c.l.b16 %v2788
    %v2903 = vunpack.c.l.b16 %v2789
    %v2904 = vunpack.c.l.b16 %v2790
    %v2905 = vunpack.c.l.b16 %v2791
    %v2906 = vunpack.c.l.b16 %v2792
    %v2907 = vunpack.c.l.b16 %v2793
    %v2908 = vunpack.c.l.b16 %v2794
    %v2909 = vunpack.c.l.b16 %v2795
    %v2910 = vunpack.c.l.b16 %v2796
    %v2911 = vunpack.c.l.b16 %v2797
    %v2912 = vunpack.c.l.b16 %v2798
    %v2913 = vunpack.c.l.b16 %v2799
    %v2914 = vunpack.c.l.b16 %v2800
    %v2915 = vunpack.c.l.b16 %v2801
    %v2916 = vunpack.c.l.b16 %v2802
    %v2917 = vunpack.c.l.b16 %v2803
    %v2918 = vpack.c.b16 %v2863, %v2862
    %v2919 = vpack.c.b16 %v2865, %v2864
    %v2920 = vpack.c.b16 %v2867, %v2866
    %v2921 = vpack.c.b16 %v2869, %v2868
    %v2922 = vpack.c.b16 %v2871, %v2870
    %v2923 = vpack.c.b16 %v2873, %v2872
    %v2924 = vpack.c.b16 %v2875, %v2874
    %v2925 = vpack.c.b16 %v2877, %v2876
    %v2926 = vpack.c.b16 %v2879, %v2878
    %v2927 = vpack.c.b16 %v2881, %v2880
    %v2928 = vpack.c.b16 %v2883, %v2882
    %v2929 = vpack.c.b16 %v2885, %v2884
    %v2930 = vpack.c.b16 %v2887, %v2886
    %v2931 = vpack.c.b16 %v2889, %v2888
    %v2932 = vpack.c.b16 %v2891, %v2890
    %v2933 = vpack.c.b16 %v2893, %v2892
    %v2934 = vpack.c.b16 %v2895, %v2894
    %v2935 = vpack.c.b16 %v2897, %v2896
    %v2936 = vpack.c.b16 %v2899, %v2898
    %v2937 = vpack.c.b16 %v2901, %v2900
    %v2938 = vpack.c.b16 %v2903, %v2902
    %v2939 = vpack.c.b16 %v2905, %v2904
    %v2940 = vpack.c.b16 %v2907, %v2906
    %v2941 = vpack.c.b16 %v2909, %v2908
    %v2942 = vpack.c.b16 %v2911, %v2910
    %v2943 = vpack.c.b16 %v2913, %v2912
    %v2944 = vpack.c.b16 %v2915, %v2914
    %v2945 = vpack.c.b16 %v2917, %v2916
    %v2947 = vsel %vm231, %v2918, 0
    %v2950 = vsel %vm231, %v2919, 0
    %v2953 = vsel %vm231, %v2920, 0
    %v2956 = vsel %vm231, %v2921, 0
    %v2959 = vsel %vm231, %v2922, 0
    %v2962 = vsel %vm231, %v2923, 0
    %v2965 = vsel %vm231, %v2924, 0
    %v2968 = vsel %vm231, %v2925, 0
    %v2971 = vsel %vm231, %v2926, 0
    %v2974 = vsel %vm231, %v2927, 0
    %v2977 = vsel %vm231, %v2928, 0
    %v2980 = vsel %vm231, %v2929, 0
    %v2983 = vsel %vm231, %v2930, 0
    %v2986 = vsel %vm231, %v2931, 0
    %v2989 = vsel %vm231, %v2932, 0
    %v2992 = vsel %vm231, %v2933, 0
    %v2995 = vsel %vm231, %v2934, 0
    %v2998 = vsel %vm231, %v2935, 0
    %v3001 = vsel %vm231, %v2936, 0
    %v3004 = vsel %vm231, %v2937, 0
    %v3007 = vsel %vm231, %v2938, 0
    %v3010 = vsel %vm231, %v2939, 0
    %v3013 = vsel %vm231, %v2940, 0
    %v3016 = vsel %vm231, %v2941, 0
    %v3019 = vsel %vm231, %v2942, 0
    %v3022 = vsel %vm231, %v2943, 0
    %v3025 = vsel %vm231, %v2944, 0
    %v3028 = vsel %vm231, %v2945, 0
    %v3031 = vsel %vm316, %v2805, 0
    %3033 = vmatprep.subr.bf16.mxu0 0
    %3034 = vmatpush1.bf16.msra.mxu0 %v3031
    %3035 = vmatprep.subr.bf16.mxu0 0
    %3036 = vmatpush1.bf16.msra.mxu0 0
    %3037 = vmatprep.subr.bf16.mxu0 0
    %3038 = vmatpush1.bf16.msra.mxu0 0
    %3039 = vmatprep.subr.bf16.mxu0 0
    %3040 = vmatpush1.bf16.msra.mxu0 0
    %3041 = vmatprep.subr.bf16.mxu0 0
    %3042 = vmatpush1.bf16.msra.mxu0 0
    %3043 = vmatprep.subr.bf16.mxu0 0
    %3044 = vmatpush1.bf16.msra.mxu0 0
    %3045 = vmatprep.subr.bf16.mxu0 0
    %3046 = vmatpush1.bf16.msra.mxu0 0
    %3047 = vmatprep.subr.bf16.mxu0 0
    %3048 = vmatpush1.bf16.msra.mxu0 0
    %3049 = vmatprep.subr.bf16.mxu0 0
    %3050 = vmatpush1.bf16.msra.mxu0 0
    %3051 = vmatprep.subr.bf16.mxu0 0
    %3052 = vmatpush1.bf16.msra.mxu0 0
    %3053 = vmatprep.subr.bf16.mxu0 0
    %3054 = vmatpush1.bf16.msra.mxu0 0
    %3055 = vmatprep.subr.bf16.mxu0 0
    %3056 = vmatpush1.bf16.msra.mxu0 0
    %3057 = vmatprep.subr.bf16.mxu0 0
    %3058 = vmatpush1.bf16.msra.mxu0 0
    %3059 = vmatprep.subr.bf16.mxu0 0
    %3060 = vmatpush1.bf16.msra.mxu0 0
    %3061 = vmatprep.subr.bf16.mxu0 0
    %3062 = vmatpush1.bf16.msra.mxu0 0
    %3063 = vmatprep.subr.bf16.mxu0 0
    %3064 = vmatpush1.bf16.msra.mxu0 0
    %3065 = vmatprep.mubr.bf16.mxu0 0
    %3066 = vmatmul.mubr.bf16.gmra.mrb[0].mxu0 %v2947
    %v3067 = vpop.f32.mrb[0].mxu0
    %v3068 = vadd.f32 0.0, %v3067
    %v3069 = vpop.f32.mrb[0].mxu0
    %v3070 = vpop.f32.mrb[0].mxu0
    %v3071 = vadd.f32 0.0, %v3070
    %v3072 = vpop.f32.mrb[0].mxu0
    %3073 = vmatprep.mubr.bf16.mxu0 0
    %3074 = vmatmul.mubr.bf16.gmra.mrb[0].mxu0 %v2950
    %v3075 = vpop.f32.mrb[0].mxu0
    %v3076 = vadd.f32 0.0, %v3075
    %v3077 = vpop.f32.mrb[0].mxu0
    %v3078 = vpop.f32.mrb[0].mxu0
    %v3079 = vadd.f32 0.0, %v3078
    %v3080 = vpop.f32.mrb[0].mxu0
    %3081 = vmatprep.mubr.bf16.mxu0 0
    %3082 = vmatmul.mubr.bf16.gmra.mrb[0].mxu0 %v2953
    %v3083 = vpop.f32.mrb[0].mxu0
    %v3084 = vadd.f32 0.0, %v3083
    %v3085 = vpop.f32.mrb[0].mxu0
    %v3086 = vpop.f32.mrb[0].mxu0
    %v3087 = vadd.f32 0.0, %v3086
    %v3088 = vpop.f32.mrb[0].mxu0
    %3089 = vmatprep.mubr.bf16.mxu0 0
    %3090 = vmatmul.mubr.bf16.gmra.mrb[0].mxu0 %v2956
    %v3091 = vpop.f32.mrb[0].mxu0
    %v3092 = vadd.f32 0.0, %v3091
    %v3093 = vpop.f32.mrb[0].mxu0
    %v3094 = vpop.f32.mrb[0].mxu0
    %v3095 = vadd.f32 0.0, %v3094
    %v3096 = vpop.f32.mrb[0].mxu0
    %3097 = vmatprep.mubr.bf16.mxu0 0
    %3098 = vmatmul.mubr.bf16.gmra.mrb[0].mxu0 %v2959
    %v3099 = vpop.f32.mrb[0].mxu0
    %v3100 = vadd.f32 0.0, %v3099
    %v3101 = vpop.f32.mrb[0].mxu0
    %v3102 = vpop.f32.mrb[0].mxu0
    %v3103 = vadd.f32 0.0, %v3102
    %v3104 = vpop.f32.mrb[0].mxu0
    %3105 = vmatprep.mubr.bf16.mxu0 0
    %3106 = vmatmul.mubr.bf16.gmra.mrb[0].mxu0 %v2962
    %v3107 = vpop.f32.mrb[0].mxu0
    %v3108 = vadd.f32 0.0, %v3107
    %v3109 = vpop.f32.mrb[0].mxu0
    %v3110 = vpop.f32.mrb[0].mxu0
    %v3111 = vadd.f32 0.0, %v3110
    %v3112 = vpop.f32.mrb[0].mxu0
    %3113 = vmatprep.mubr.bf16.mxu0 0
    %3114 = vmatmul.mubr.bf16.gmra.mrb[0].mxu0 %v2965
    %v3115 = vpop.f32.mrb[0].mxu0
    %v3116 = vadd.f32 0.0, %v3115
    %v3117 = vpop.f32.mrb[0].mxu0
    %v3118 = vpop.f32.mrb[0].mxu0
    %v3119 = vadd.f32 0.0, %v3118
    %v3120 = vpop.f32.mrb[0].mxu0
    %3121 = vmatprep.mubr.bf16.mxu0 0
    %3122 = vmatmul.mubr.bf16.gmra.mrb[0].mxu0 %v2968
    %v3123 = vpop.f32.mrb[0].mxu0
    %v3124 = vadd.f32 0.0, %v3123
    %v3125 = vpop.f32.mrb[0].mxu0
    %v3126 = vpop.f32.mrb[0].mxu0
    %v3127 = vadd.f32 0.0, %v3126
    %v3128 = vpop.f32.mrb[0].mxu0
    %3129 = vmatprep.mubr.bf16.mxu0 0
    %3130 = vmatmul.mubr.bf16.gmra.mrb[0].mxu0 %v2971
    %v3131 = vpop.f32.mrb[0].mxu0
    %v3132 = vadd.f32 0.0, %v3131
    %v3133 = vpop.f32.mrb[0].mxu0
    %v3134 = vpop.f32.mrb[0].mxu0
    %v3135 = vadd.f32 0.0, %v3134
    %v3136 = vpop.f32.mrb[0].mxu0
    %3137 = vmatprep.mubr.bf16.mxu0 0
    %3138 = vmatmul.mubr.bf16.gmra.mrb[0].mxu0 %v2974
    %v3139 = vpop.f32.mrb[0].mxu0
    %v3140 = vadd.f32 0.0, %v3139
    %v3141 = vpop.f32.mrb[0].mxu0
    %v3142 = vpop.f32.mrb[0].mxu0
    %v3143 = vadd.f32 0.0, %v3142
    %v3144 = vpop.f32.mrb[0].mxu0
    %3145 = vmatprep.mubr.bf16.mxu0 0
    %3146 = vmatmul.mubr.bf16.gmra.mrb[0].mxu0 %v2977
    %v3147 = vpop.f32.mrb[0].mxu0
    %v3148 = vadd.f32 0.0, %v3147
    %v3149 = vpop.f32.mrb[0].mxu0
    %v3150 = vpop.f32.mrb[0].mxu0
    %v3151 = vadd.f32 0.0, %v3150
    %v3152 = vpop.f32.mrb[0].mxu0
    %3153 = vmatprep.mubr.bf16.mxu0 0
    %3154 = vmatmul.mubr.bf16.gmra.mrb[0].mxu0 %v2980
    %v3155 = vpop.f32.mrb[0].mxu0
    %v3156 = vadd.f32 0.0, %v3155
    %v3157 = vpop.f32.mrb[0].mxu0
    %v3158 = vpop.f32.mrb[0].mxu0
    %v3159 = vadd.f32 0.0, %v3158
    %v3160 = vpop.f32.mrb[0].mxu0
    %3161 = vmatprep.mubr.bf16.mxu0 0
    %3162 = vmatmul.mubr.bf16.gmra.mrb[0].mxu0 %v2983
    %v3163 = vpop.f32.mrb[0].mxu0
    %v3164 = vadd.f32 0.0, %v3163
    %v3165 = vpop.f32.mrb[0].mxu0
    %v3166 = vpop.f32.mrb[0].mxu0
    %v3167 = vadd.f32 0.0, %v3166
    %v3168 = vpop.f32.mrb[0].mxu0
    %3169 = vmatprep.mubr.bf16.mxu0 0
    %3170 = vmatmul.mubr.bf16.gmra.mrb[0].mxu0 %v2986
    %v3171 = vpop.f32.mrb[0].mxu0
    %v3172 = vadd.f32 0.0, %v3171
    %v3173 = vpop.f32.mrb[0].mxu0
    %v3174 = vpop.f32.mrb[0].mxu0
    %v3175 = vadd.f32 0.0, %v3174
    %v3176 = vpop.f32.mrb[0].mxu0
    %3177 = vmatprep.mubr.bf16.mxu0 0
    %3178 = vmatmul.mubr.bf16.gmra.mrb[0].mxu0 %v2989
    %v3179 = vpop.f32.mrb[0].mxu0
    %v3180 = vadd.f32 0.0, %v3179
    %v3181 = vpop.f32.mrb[0].mxu0
    %v3182 = vpop.f32.mrb[0].mxu0
    %v3183 = vadd.f32 0.0, %v3182
    %v3184 = vpop.f32.mrb[0].mxu0
    %3185 = vmatprep.mubr.bf16.mxu0 0
    %3186 = vmatmul.mubr.bf16.gmra.mrb[0].mxu0 %v2992
    %v3187 = vpop.f32.mrb[0].mxu0
    %v3188 = vadd.f32 0.0, %v3187
    %v3189 = vpop.f32.mrb[0].mxu0
    %v3190 = vpop.f32.mrb[0].mxu0
    %v3191 = vadd.f32 0.0, %v3190
    %v3192 = vpop.f32.mrb[0].mxu0
    %3193 = vmatprep.mubr.bf16.mxu0 0
    %3194 = vmatmul.mubr.bf16.gmra.mrb[0].mxu0 %v2995
    %v3195 = vpop.f32.mrb[0].mxu0
    %v3196 = vadd.f32 0.0, %v3195
    %v3197 = vpop.f32.mrb[0].mxu0
    %v3198 = vpop.f32.mrb[0].mxu0
    %v3199 = vadd.f32 0.0, %v3198
    %v3200 = vpop.f32.mrb[0].mxu0
    %3201 = vmatprep.mubr.bf16.mxu0 0
    %3202 = vmatmul.mubr.bf16.gmra.mrb[0].mxu0 %v2998
    %v3203 = vpop.f32.mrb[0].mxu0
    %v3204 = vadd.f32 0.0, %v3203
    %v3205 = vpop.f32.mrb[0].mxu0
    %v3206 = vpop.f32.mrb[0].mxu0
    %v3207 = vadd.f32 0.0, %v3206
    %v3208 = vpop.f32.mrb[0].mxu0
    %3209 = vmatprep.mubr.bf16.mxu0 0
    %3210 = vmatmul.mubr.bf16.gmra.mrb[0].mxu0 %v3001
    %v3211 = vpop.f32.mrb[0].mxu0
    %v3212 = vadd.f32 0.0, %v3211
    %v3213 = vpop.f32.mrb[0].mxu0
    %v3214 = vpop.f32.mrb[0].mxu0
    %v3215 = vadd.f32 0.0, %v3214
    %v3216 = vpop.f32.mrb[0].mxu0
    %3217 = vmatprep.mubr.bf16.mxu0 0
    %3218 = vmatmul.mubr.bf16.gmra.mrb[0].mxu0 %v3004
    %v3219 = vpop.f32.mrb[0].mxu0
    %v3220 = vadd.f32 0.0, %v3219
    %v3221 = vpop.f32.mrb[0].mxu0
    %v3222 = vpop.f32.mrb[0].mxu0
    %v3223 = vadd.f32 0.0, %v3222
    %v3224 = vpop.f32.mrb[0].mxu0
    %3225 = vmatprep.mubr.bf16.mxu0 0
    %3226 = vmatmul.mubr.bf16.gmra.mrb[0].mxu0 %v3007
    %v3227 = vpop.f32.mrb[0].mxu0
    %v3228 = vadd.f32 0.0, %v3227
    %v3229 = vpop.f32.mrb[0].mxu0
    %v3230 = vpop.f32.mrb[0].mxu0
    %v3231 = vadd.f32 0.0, %v3230
    %v3232 = vpop.f32.mrb[0].mxu0
    %3233 = vmatprep.mubr.bf16.mxu0 0
    %3234 = vmatmul.mubr.bf16.gmra.mrb[0].mxu0 %v3010
    %v3235 = vpop.f32.mrb[0].mxu0
    %v3236 = vadd.f32 0.0, %v3235
    %v3237 = vpop.f32.mrb[0].mxu0
    %v3238 = vpop.f32.mrb[0].mxu0
    %v3239 = vadd.f32 0.0, %v3238
    %v3240 = vpop.f32.mrb[0].mxu0
    %3241 = vmatprep.mubr.bf16.mxu0 0
    %3242 = vmatmul.mubr.bf16.gmra.mrb[0].mxu0 %v3013
    %v3243 = vpop.f32.mrb[0].mxu0
    %v3244 = vadd.f32 0.0, %v3243
    %v3245 = vpop.f32.mrb[0].mxu0
    %v3246 = vpop.f32.mrb[0].mxu0
    %v3247 = vadd.f32 0.0, %v3246
    %v3248 = vpop.f32.mrb[0].mxu0
    %3249 = vmatprep.mubr.bf16.mxu0 0
    %3250 = vmatmul.mubr.bf16.gmra.mrb[0].mxu0 %v3016
    %v3251 = vpop.f32.mrb[0].mxu0
    %v3252 = vadd.f32 0.0, %v3251
    %v3253 = vpop.f32.mrb[0].mxu0
    %v3254 = vpop.f32.mrb[0].mxu0
    %v3255 = vadd.f32 0.0, %v3254
    %v3256 = vpop.f32.mrb[0].mxu0
    %3257 = vmatprep.mubr.bf16.mxu0 0
    %3258 = vmatmul.mubr.bf16.gmra.mrb[0].mxu0 %v3019
    %v3259 = vpop.f32.mrb[0].mxu0
    %v3260 = vadd.f32 0.0, %v3259
    %v3261 = vpop.f32.mrb[0].mxu0
    %v3262 = vpop.f32.mrb[0].mxu0
    %v3263 = vadd.f32 0.0, %v3262
    %v3264 = vpop.f32.mrb[0].mxu0
    %3265 = vmatprep.mubr.bf16.mxu0 0
    %3266 = vmatmul.mubr.bf16.gmra.mrb[0].mxu0 %v3022
    %v3267 = vpop.f32.mrb[0].mxu0
    %v3268 = vadd.f32 0.0, %v3267
    %v3269 = vpop.f32.mrb[0].mxu0
    %v3270 = vpop.f32.mrb[0].mxu0
    %v3271 = vadd.f32 0.0, %v3270
    %v3272 = vpop.f32.mrb[0].mxu0
    %3273 = vmatprep.mubr.bf16.mxu0 0
    %3274 = vmatmul.mubr.bf16.gmra.mrb[0].mxu0 %v3025
    %v3275 = vpop.f32.mrb[0].mxu0
    %v3276 = vadd.f32 0.0, %v3275
    %v3277 = vpop.f32.mrb[0].mxu0
    %v3278 = vpop.f32.mrb[0].mxu0
    %v3279 = vadd.f32 0.0, %v3278
    %v3280 = vpop.f32.mrb[0].mxu0
    %3281 = vmatprep.mubr.bf16.mxu0 0
    %3282 = vmatmul.mubr.bf16.gmra.mrb[0].mxu0 %v3028
    %v3283 = vpop.f32.mrb[0].mxu0
    %v3284 = vadd.f32 0.0, %v3283
    %v3285 = vpop.f32.mrb[0].mxu0
    %v3286 = vpop.f32.mrb[0].mxu0
    %v3287 = vadd.f32 0.0, %v3286
    %v3288 = vpop.f32.mrb[0].mxu0
    %3289 = vdwg.mxu0
    %v3290 = vld [vmem:[#allocation2] sm:$0xff]
    %v3291 = vld [vmem:[#allocation2 + $0x8] sm:$0xff]
    %v3292 = vld [vmem:[#allocation2 + $0x10] sm:$0xff]
    %v3293 = vld [vmem:[#allocation2 + $0x18] sm:$0xff]
    %v3294 = vld [vmem:[#allocation2 + $0x20] sm:$0xff]
    %v3295 = vld [vmem:[#allocation2 + $0x28] sm:$0xff]
    %v3296 = vld [vmem:[#allocation2 + $0x30] sm:$0xff]
    %v3297 = vld [vmem:[#allocation2 + $0x38] sm:$0xff]
    %v3298 = vld [vmem:[#allocation2 + $0x40] sm:$0xff]
    %v3299 = vld [vmem:[#allocation2 + $0x48] sm:$0xff]
    %v3300 = vld [vmem:[#allocation2 + $0x50] sm:$0xff]
    %v3301 = vld [vmem:[#allocation2 + $0x58] sm:$0xff]
    %v3302 = vld [vmem:[#allocation2 + $0x60] sm:$0xff]
    %v3303 = vld [vmem:[#allocation2 + $0x68] sm:$0xff]
    %v3304 = vld [vmem:[#allocation2 + $0x70] sm:$0xff]
    %v3305 = vld [vmem:[#allocation2 + $0x78] sm:$0xff]
    %v3306 = vld [vmem:[#allocation2 + $0x80] sm:$0xff]
    %v3307 = vld [vmem:[#allocation2 + $0x88] sm:$0xff]
    %v3308 = vld [vmem:[#allocation2 + $0x90] sm:$0xff]
    %v3309 = vld [vmem:[#allocation2 + $0x98] sm:$0xff]
    %v3310 = vld [vmem:[#allocation2 + $0xa0] sm:$0xff]
    %v3311 = vld [vmem:[#allocation2 + $0xa8] sm:$0xff]
    %v3312 = vld [vmem:[#allocation2 + $0xb0] sm:$0xff]
    %v3313 = vld [vmem:[#allocation2 + $0xb8] sm:$0xff]
    %v3314 = vld [vmem:[#allocation2 + $0xc0] sm:$0xff]
    %v3315 = vld [vmem:[#allocation2 + $0xc8] sm:$0xff]
    %v3316 = vld [vmem:[#allocation2 + $0xd0] sm:$0xff]
    %v3317 = vld [vmem:[#allocation2 + $0xd8] sm:$0xff]
    %v3318 = vld [vmem:[#allocation2 + $0xe0] sm:$0xff]
    %v3319 = vld [vmem:[#allocation2 + $0xe8] sm:$0xff]
    %v3320 = vld [vmem:[#allocation2 + $0xf0] sm:$0xff]
    %v3321 = vld [vmem:[#allocation2 + $0xf8] sm:$0xff]
    %v3322 = vld [vmem:[#allocation2 + $0x100] sm:$0xff]
    %v3323 = vld [vmem:[#allocation2 + $0x108] sm:$0xff]
    %v3324 = vld [vmem:[#allocation2 + $0x110] sm:$0xff]
    %v3325 = vld [vmem:[#allocation2 + $0x118] sm:$0xff]
    %v3326 = vld [vmem:[#allocation2 + $0x120] sm:$0xff]
    %v3327 = vld [vmem:[#allocation2 + $0x128] sm:$0xff]
    %v3328 = vld [vmem:[#allocation2 + $0x130] sm:$0xff]
    %v3329 = vld [vmem:[#allocation2 + $0x138] sm:$0xff]
    %v3330 = vld [vmem:[#allocation2 + $0x140] sm:$0xff]
    %v3331 = vld [vmem:[#allocation2 + $0x148] sm:$0xff]
    %v3332 = vld [vmem:[#allocation2 + $0x150] sm:$0xff]
    %v3333 = vld [vmem:[#allocation2 + $0x158] sm:$0xff]
    %v3334 = vld [vmem:[#allocation2 + $0x160] sm:$0xff]
    %v3335 = vld [vmem:[#allocation2 + $0x168] sm:$0xff]
    %v3336 = vld [vmem:[#allocation2 + $0x170] sm:$0xff]
    %v3337 = vld [vmem:[#allocation2 + $0x178] sm:$0xff]
    %v3338 = vld [vmem:[#allocation2 + $0x180] sm:$0xff]
    %v3339 = vld [vmem:[#allocation2 + $0x188] sm:$0xff]
    %v3340 = vld [vmem:[#allocation2 + $0x190] sm:$0xff]
    %v3341 = vld [vmem:[#allocation2 + $0x198] sm:$0xff]
    %v3342 = vld [vmem:[#allocation2 + $0x1a0] sm:$0xff]
    %v3343 = vld [vmem:[#allocation2 + $0x1a8] sm:$0xff]
    %v3344 = vld [vmem:[#allocation2 + $0x1b0] sm:$0xff]
    %v3345 = vld [vmem:[#allocation2 + $0x1b8] sm:$0xff]
    %v3346 = vadd.f32 %v3290, %v3068
    %v3347 = vadd.f32 %v3291, %v3071
    %v3348 = vadd.f32 %v3292, %v3076
    %v3349 = vadd.f32 %v3293, %v3079
    %v3350 = vadd.f32 %v3294, %v3084
    %v3351 = vadd.f32 %v3295, %v3087
    %v3352 = vadd.f32 %v3296, %v3092
    %v3353 = vadd.f32 %v3297, %v3095
    %v3354 = vadd.f32 %v3298, %v3100
    %v3355 = vadd.f32 %v3299, %v3103
    %v3356 = vadd.f32 %v3300, %v3108
    %v3357 = vadd.f32 %v3301, %v3111
    %v3358 = vadd.f32 %v3302, %v3116
    %v3359 = vadd.f32 %v3303, %v3119
    %v3360 = vadd.f32 %v3304, %v3124
    %v3361 = vadd.f32 %v3305, %v3127
    %v3362 = vadd.f32 %v3306, %v3132
    %v3363 = vadd.f32 %v3307, %v3135
    %v3364 = vadd.f32 %v3308, %v3140
    %v3365 = vadd.f32 %v3309, %v3143
    %v3366 = vadd.f32 %v3310, %v3148
    %v3367 = vadd.f32 %v3311, %v3151
    %v3368 = vadd.f32 %v3312, %v3156
    %v3369 = vadd.f32 %v3313, %v3159
    %v3370 = vadd.f32 %v3314, %v3164
    %v3371 = vadd.f32 %v3315, %v3167
    %v3372 = vadd.f32 %v3316, %v3172
    %v3373 = vadd.f32 %v3317, %v3175
    %v3374 = vadd.f32 %v3318, %v3180
    %v3375 = vadd.f32 %v3319, %v3183
    %v3376 = vadd.f32 %v3320, %v3188
    %v3377 = vadd.f32 %v3321, %v3191
    %v3378 = vadd.f32 %v3322, %v3196
    %v3379 = vadd.f32 %v3323, %v3199
    %v3380 = vadd.f32 %v3324, %v3204
    %v3381 = vadd.f32 %v3325, %v3207
    %v3382 = vadd.f32 %v3326, %v3212
    %v3383 = vadd.f32 %v3327, %v3215
    %v3384 = vadd.f32 %v3328, %v3220
    %v3385 = vadd.f32 %v3329, %v3223
    %v3386 = vadd.f32 %v3330, %v3228
    %v3387 = vadd.f32 %v3331, %v3231
    %v3388 = vadd.f32 %v3332, %v3236
    %v3389 = vadd.f32 %v3333, %v3239
    %v3390 = vadd.f32 %v3334, %v3244
    %v3391 = vadd.f32 %v3335, %v3247
    %v3392 = vadd.f32 %v3336, %v3252
    %v3393 = vadd.f32 %v3337, %v3255
    %v3394 = vadd.f32 %v3338, %v3260
    %v3395 = vadd.f32 %v3339, %v3263
    %v3396 = vadd.f32 %v3340, %v3268
    %v3397 = vadd.f32 %v3341, %v3271
    %v3398 = vadd.f32 %v3342, %v3276
    %v3399 = vadd.f32 %v3343, %v3279
    %v3400 = vadd.f32 %v3344, %v3284
    %v3401 = vadd.f32 %v3345, %v3287
    %3402 = vst.msk [vmem:[#allocation2] sm:$0xff] %vm577, %v3346
    %3403 = vst.msk [vmem:[#allocation2 + $0x8] sm:$0xff] %vm577, %v3347
    %3404 = vst.msk [vmem:[#allocation2 + $0x10] sm:$0xff] %vm577, %v3348
    %3405 = vst.msk [vmem:[#allocation2 + $0x18] sm:$0xff] %vm577, %v3349
    %3406 = vst.msk [vmem:[#allocation2 + $0x20] sm:$0xff] %vm577, %v3350
    %3407 = vst.msk [vmem:[#allocation2 + $0x28] sm:$0xff] %vm577, %v3351
    %3408 = vst.msk [vmem:[#allocation2 + $0x30] sm:$0xff] %vm577, %v3352
    %3409 = vst.msk [vmem:[#allocation2 + $0x38] sm:$0xff] %vm577, %v3353
    %3410 = vst.msk [vmem:[#allocation2 + $0x40] sm:$0xff] %vm577, %v3354
    %3411 = vst.msk [vmem:[#allocation2 + $0x48] sm:$0xff] %vm577, %v3355
    %3412 = vst.msk [vmem:[#allocation2 + $0x50] sm:$0xff] %vm577, %v3356
    %3413 = vst.msk [vmem:[#allocation2 + $0x58] sm:$0xff] %vm577, %v3357
    %3414 = vst.msk [vmem:[#allocation2 + $0x60] sm:$0xff] %vm577, %v3358
    %3415 = vst.msk [vmem:[#allocation2 + $0x68] sm:$0xff] %vm577, %v3359
    %3416 = vst.msk [vmem:[#allocation2 + $0x70] sm:$0xff] %vm577, %v3360
    %3417 = vst.msk [vmem:[#allocation2 + $0x78] sm:$0xff] %vm577, %v3361
    %3418 = vst.msk [vmem:[#allocation2 + $0x80] sm:$0xff] %vm577, %v3362
    %3419 = vst.msk [vmem:[#allocation2 + $0x88] sm:$0xff] %vm577, %v3363
    %3420 = vst.msk [vmem:[#allocation2 + $0x90] sm:$0xff] %vm577, %v3364
    %3421 = vst.msk [vmem:[#allocation2 + $0x98] sm:$0xff] %vm577, %v3365
    %3422 = vst.msk [vmem:[#allocation2 + $0xa0] sm:$0xff] %vm577, %v3366
    %3423 = vst.msk [vmem:[#allocation2 + $0xa8] sm:$0xff] %vm577, %v3367
    %3424 = vst.msk [vmem:[#allocation2 + $0xb0] sm:$0xff] %vm577, %v3368
    %3425 = vst.msk [vmem:[#allocation2 + $0xb8] sm:$0xff] %vm577, %v3369
    %3426 = vst.msk [vmem:[#allocation2 + $0xc0] sm:$0xff] %vm577, %v3370
    %3427 = vst.msk [vmem:[#allocation2 + $0xc8] sm:$0xff] %vm577, %v3371
    %3428 = vst.msk [vmem:[#allocation2 + $0xd0] sm:$0xff] %vm577, %v3372
    %3429 = vst.msk [vmem:[#allocation2 + $0xd8] sm:$0xff] %vm577, %v3373
    %3430 = vst.msk [vmem:[#allocation2 + $0xe0] sm:$0xff] %vm577, %v3374
    %3431 = vst.msk [vmem:[#allocation2 + $0xe8] sm:$0xff] %vm577, %v3375
    %3432 = vst.msk [vmem:[#allocation2 + $0xf0] sm:$0xff] %vm577, %v3376
    %3433 = vst.msk [vmem:[#allocation2 + $0xf8] sm:$0xff] %vm577, %v3377
    %3434 = vst.msk [vmem:[#allocation2 + $0x100] sm:$0xff] %vm577, %v3378
    %3435 = vst.msk [vmem:[#allocation2 + $0x108] sm:$0xff] %vm577, %v3379
    %3436 = vst.msk [vmem:[#allocation2 + $0x110] sm:$0xff] %vm577, %v3380
    %3437 = vst.msk [vmem:[#allocation2 + $0x118] sm:$0xff] %vm577, %v3381
    %3438 = vst.msk [vmem:[#allocation2 + $0x120] sm:$0xff] %vm577, %v3382
    %3439 = vst.msk [vmem:[#allocation2 + $0x128] sm:$0xff] %vm577, %v3383
    %3440 = vst.msk [vmem:[#allocation2 + $0x130] sm:$0xff] %vm577, %v3384
    %3441 = vst.msk [vmem:[#allocation2 + $0x138] sm:$0xff] %vm577, %v3385
    %3442 = vst.msk [vmem:[#allocation2 + $0x140] sm:$0xff] %vm577, %v3386
    %3443 = vst.msk [vmem:[#allocation2 + $0x148] sm:$0xff] %vm577, %v3387
    %3444 = vst.msk [vmem:[#allocation2 + $0x150] sm:$0xff] %vm577, %v3388
    %3445 = vst.msk [vmem:[#allocation2 + $0x158] sm:$0xff] %vm577, %v3389
    %3446 = vst.msk [vmem:[#allocation2 + $0x160] sm:$0xff] %vm577, %v3390
    %3447 = vst.msk [vmem:[#allocation2 + $0x168] sm:$0xff] %vm577, %v3391
    %3448 = vst.msk [vmem:[#allocation2 + $0x170] sm:$0xff] %vm577, %v3392
    %3449 = vst.msk [vmem:[#allocation2 + $0x178] sm:$0xff] %vm577, %v3393
    %3450 = vst.msk [vmem:[#allocation2 + $0x180] sm:$0xff] %vm577, %v3394
    %3451 = vst.msk [vmem:[#allocation2 + $0x188] sm:$0xff] %vm577, %v3395
    %3452 = vst.msk [vmem:[#allocation2 + $0x190] sm:$0xff] %vm577, %v3396
    %3453 = vst.msk [vmem:[#allocation2 + $0x198] sm:$0xff] %vm577, %v3397
    %3454 = vst.msk [vmem:[#allocation2 + $0x1a0] sm:$0xff] %vm577, %v3398
    %3455 = vst.msk [vmem:[#allocation2 + $0x1a8] sm:$0xff] %vm577, %v3399
    %3456 = vst.msk [vmem:[#allocation2 + $0x1b0] sm:$0xff] %vm577, %v3400
    %3457 = vst.msk [vmem:[#allocation2 + $0x1b8] sm:$0xff] %vm577, %v3401
    %v3458 = vld [vmem:[%s0 + $0x8] sm:$0xf]
    %v3459 = vld [vmem:[%s0 + $0xc] sm:$0xf]
    %v3460 = vld [vmem:[%s0 + $0x10] sm:$0xf]
    %v3461 = vld [vmem:[%s0 + $0x14] sm:$0xf]
    %v3462 = vld [vmem:[%s0 + $0x18] sm:$0xf]
    %v3463 = vld [vmem:[%s0 + $0x1c] sm:$0xf]
    %v3464 = vld [vmem:[%s0 + $0x20] sm:$0xf]
    %v3465 = vld [vmem:[%s0 + $0x24] sm:$0xf]
    %v3466 = vld [vmem:[%s0 + $0x28] sm:$0xf]
    %v3467 = vld [vmem:[%s0 + $0x2c] sm:$0xf]
    %v3468 = vld [vmem:[%s0 + $0x30] sm:$0xf]
    %v3469 = vld [vmem:[%s0 + $0x34] sm:$0xf]
    %v3470 = vld [vmem:[%s0 + $0x38] sm:$0xf]
    %v3471 = vld [vmem:[%s0 + $0x3c] sm:$0xf]
    %v3472 = vld [vmem:[%s0 + $0x40] sm:$0xf]
    %v3473 = vld [vmem:[%s0 + $0x44] sm:$0xf]
    %v3474 = vld [vmem:[%s0 + $0x48] sm:$0xf]
    %v3475 = vld [vmem:[%s0 + $0x4c] sm:$0xf]
    %v3476 = vld [vmem:[%s0 + $0x50] sm:$0xf]
    %v3477 = vld [vmem:[%s0 + $0x54] sm:$0xf]
    %v3478 = vld [vmem:[%s0 + $0x58] sm:$0xf]
    %v3479 = vld [vmem:[%s0 + $0x5c] sm:$0xf]
    %v3480 = vld [vmem:[%s0 + $0x60] sm:$0xf]
    %v3481 = vld [vmem:[%s0 + $0x64] sm:$0xf]
    %v3482 = vld [vmem:[%s0 + $0x68] sm:$0xf]
    %v3483 = vld [vmem:[%s0 + $0x6c] sm:$0xf]
    %v3484 = vld [vmem:[%s0 + $0x70] sm:$0xf]
    %v3485 = vld [vmem:[%s0 + $0x74] sm:$0xf]
    %v3486 = vld [vmem:[%s0 + $0x78] sm:$0x1]
    %v3487 = vld [vmem:[%s0 + $0x90] sm:$0xf]
    %v3488 = vld [vmem:[%s0 + $0x94] sm:$0xf]
    %v3489 = vld [vmem:[%s0 + $0x98] sm:$0xf]
    %v3490 = vld [vmem:[%s0 + $0x9c] sm:$0xf]
    %v3491 = vld [vmem:[%s0 + $0xa0] sm:$0xf]
    %v3492 = vld [vmem:[%s0 + $0xa4] sm:$0xf]
    %v3493 = vld [vmem:[%s0 + $0xa8] sm:$0xf]
    %v3494 = vld [vmem:[%s0 + $0xac] sm:$0xf]
    %v3495 = vld [vmem:[%s0 + $0xb0] sm:$0xf]
    %v3496 = vld [vmem:[%s0 + $0xb4] sm:$0xf]
    %v3497 = vld [vmem:[%s0 + $0xb8] sm:$0xf]
    %v3498 = vld [vmem:[%s0 + $0xbc] sm:$0xf]
    %v3499 = vld [vmem:[%s0 + $0xc0] sm:$0xf]
    %v3500 = vld [vmem:[%s0 + $0xc4] sm:$0xf]
    %v3501 = vld [vmem:[%s0 + $0xc8] sm:$0xf]
    %v3502 = vld [vmem:[%s0 + $0xcc] sm:$0xf]
    %v3503 = vld [vmem:[%s0 + $0xd0] sm:$0xf]
    %v3504 = vld [vmem:[%s0 + $0xd4] sm:$0xf]
    %v3505 = vld [vmem:[%s0 + $0xd8] sm:$0xf]
    %v3506 = vld [vmem:[%s0 + $0xdc] sm:$0xf]
    %v3507 = vld [vmem:[%s0 + $0xe0] sm:$0xf]
    %v3508 = vld [vmem:[%s0 + $0xe4] sm:$0xf]
    %v3509 = vld [vmem:[%s0 + $0xe8] sm:$0xf]
    %v3510 = vld [vmem:[%s0 + $0xec] sm:$0xf]
    %v3511 = vld [vmem:[%s0 + $0xf0] sm:$0xf]
    %v3512 = vld [vmem:[%s0 + $0xf4] sm:$0xf]
    %v3513 = vld [vmem:[%s0 + $0xf8] sm:$0xf]
    %v3514 = vld [vmem:[%s0 + $0xfc] sm:$0xf]
    %v3515 = vld [vmem:[%s0 + $0x100] sm:$0x1]
    %v3517 = vshrl.u32 %v3458, 16
    %v3519 = vrot.slane %v3517, 4
    %v3520 = vshll.u32 %v3458, 16
    %v3522 = vrot.slane %v3520, 5
    %v3523 = vor.u32 %v3519, %v3522
    %v3524 = vrot.slane %v3523, 4
    %v3526 = vshll.u32 %v3459, 16
    %v3528 = vrot.slane %v3526, 5
    %v3529 = vsel %vm694, %v3524, %v3528
    %v3530 = vshrl.u32 %v3459, 16
    %v3532 = vrot.slane %v3530, 4
    %v3533 = vor.u32 %v3532, %v3528
    %v3534 = vrot.slane %v3533, 4
    %v3536 = vshll.u32 %v3460, 16
    %v3538 = vrot.slane %v3536, 5
    %v3539 = vsel %vm694, %v3534, %v3538
    %v3540 = vshrl.u32 %v3460, 16
    %v3542 = vrot.slane %v3540, 4
    %v3543 = vor.u32 %v3542, %v3538
    %v3544 = vrot.slane %v3543, 4
    %v3546 = vshll.u32 %v3461, 16
    %v3548 = vrot.slane %v3546, 5
    %v3549 = vsel %vm694, %v3544, %v3548
    %v3550 = vshrl.u32 %v3461, 16
    %v3552 = vrot.slane %v3550, 4
    %v3553 = vor.u32 %v3552, %v3548
    %v3554 = vrot.slane %v3553, 4
    %v3556 = vshll.u32 %v3462, 16
    %v3558 = vrot.slane %v3556, 5
    %v3559 = vsel %vm694, %v3554, %v3558
    %v3560 = vshrl.u32 %v3462, 16
    %v3562 = vrot.slane %v3560, 4
    %v3563 = vor.u32 %v3562, %v3558
    %v3564 = vrot.slane %v3563, 4
    %v3566 = vshll.u32 %v3463, 16
    %v3568 = vrot.slane %v3566, 5
    %v3569 = vsel %vm694, %v3564, %v3568
    %v3570 = vshrl.u32 %v3463, 16
    %v3572 = vrot.slane %v3570, 4
    %v3573 = vor.u32 %v3572, %v3568
    %v3574 = vrot.slane %v3573, 4
    %v3576 = vshll.u32 %v3464, 16
    %v3578 = vrot.slane %v3576, 5
    %v3579 = vsel %vm694, %v3574, %v3578
    %v3580 = vshrl.u32 %v3464, 16
    %v3582 = vrot.slane %v3580, 4
    %v3583 = vor.u32 %v3582, %v3578
    %v3584 = vrot.slane %v3583, 4
    %v3586 = vshll.u32 %v3465, 16
    %v3588 = vrot.slane %v3586, 5
    %v3589 = vsel %vm694, %v3584, %v3588
    %v3590 = vshrl.u32 %v3465, 16
    %v3592 = vrot.slane %v3590, 4
    %v3593 = vor.u32 %v3592, %v3588
    %v3594 = vrot.slane %v3593, 4
    %v3596 = vshll.u32 %v3466, 16
    %v3598 = vrot.slane %v3596, 5
    %v3599 = vsel %vm694, %v3594, %v3598
    %v3600 = vshrl.u32 %v3466, 16
    %v3602 = vrot.slane %v3600, 4
    %v3603 = vor.u32 %v3602, %v3598
    %v3604 = vrot.slane %v3603, 4
    %v3606 = vshll.u32 %v3467, 16
    %v3608 = vrot.slane %v3606, 5
    %v3609 = vsel %vm694, %v3604, %v3608
    %v3610 = vshrl.u32 %v3467, 16
    %v3612 = vrot.slane %v3610, 4
    %v3613 = vor.u32 %v3612, %v3608
    %v3614 = vrot.slane %v3613, 4
    %v3616 = vshll.u32 %v3468, 16
    %v3618 = vrot.slane %v3616, 5
    %v3619 = vsel %vm694, %v3614, %v3618
    %v3620 = vshrl.u32 %v3468, 16
    %v3622 = vrot.slane %v3620, 4
    %v3623 = vor.u32 %v3622, %v3618
    %v3624 = vrot.slane %v3623, 4
    %v3626 = vshll.u32 %v3469, 16
    %v3628 = vrot.slane %v3626, 5
    %v3629 = vsel %vm694, %v3624, %v3628
    %v3630 = vshrl.u32 %v3469, 16
    %v3632 = vrot.slane %v3630, 4
    %v3633 = vor.u32 %v3632, %v3628
    %v3634 = vrot.slane %v3633, 4
    %v3636 = vshll.u32 %v3470, 16
    %v3638 = vrot.slane %v3636, 5
    %v3639 = vsel %vm694, %v3634, %v3638
    %v3640 = vshrl.u32 %v3470, 16
    %v3642 = vrot.slane %v3640, 4
    %v3643 = vor.u32 %v3642, %v3638
    %v3644 = vrot.slane %v3643, 4
    %v3646 = vshll.u32 %v3471, 16
    %v3648 = vrot.slane %v3646, 5
    %v3649 = vsel %vm694, %v3644, %v3648
    %v3650 = vshrl.u32 %v3471, 16
    %v3652 = vrot.slane %v3650, 4
    %v3653 = vor.u32 %v3652, %v3648
    %v3654 = vrot.slane %v3653, 4
    %v3656 = vshll.u32 %v3472, 16
    %v3658 = vrot.slane %v3656, 5
    %v3659 = vsel %vm694, %v3654, %v3658
    %v3660 = vshrl.u32 %v3472, 16
    %v3662 = vrot.slane %v3660, 4
    %v3663 = vor.u32 %v3662, %v3658
    %v3664 = vrot.slane %v3663, 4
    %v3666 = vshll.u32 %v3473, 16
    %v3668 = vrot.slane %v3666, 5
    %v3669 = vsel %vm694, %v3664, %v3668
    %v3670 = vshrl.u32 %v3473, 16
    %v3672 = vrot.slane %v3670, 4
    %v3673 = vor.u32 %v3672, %v3668
    %v3674 = vrot.slane %v3673, 4
    %v3676 = vshll.u32 %v3474, 16
    %v3678 = vrot.slane %v3676, 5
    %v3679 = vsel %vm694, %v3674, %v3678
    %v3680 = vshrl.u32 %v3474, 16
    %v3682 = vrot.slane %v3680, 4
    %v3683 = vor.u32 %v3682, %v3678
    %v3684 = vrot.slane %v3683, 4
    %v3686 = vshll.u32 %v3475, 16
    %v3688 = vrot.slane %v3686, 5
    %v3689 = vsel %vm694, %v3684, %v3688
    %v3690 = vshrl.u32 %v3475, 16
    %v3692 = vrot.slane %v3690, 4
    %v3693 = vor.u32 %v3692, %v3688
    %v3694 = vrot.slane %v3693, 4
    %v3696 = vshll.u32 %v3476, 16
    %v3698 = vrot.slane %v3696, 5
    %v3699 = vsel %vm694, %v3694, %v3698
    %v3700 = vshrl.u32 %v3476, 16
    %v3702 = vrot.slane %v3700, 4
    %v3703 = vor.u32 %v3702, %v3698
    %v3704 = vrot.slane %v3703, 4
    %v3706 = vshll.u32 %v3477, 16
    %v3708 = vrot.slane %v3706, 5
    %v3709 = vsel %vm694, %v3704, %v3708
    %v3710 = vshrl.u32 %v3477, 16
    %v3712 = vrot.slane %v3710, 4
    %v3713 = vor.u32 %v3712, %v3708
    %v3714 = vrot.slane %v3713, 4
    %v3716 = vshll.u32 %v3478, 16
    %v3718 = vrot.slane %v3716, 5
    %v3719 = vsel %vm694, %v3714, %v3718
    %v3720 = vshrl.u32 %v3478, 16
    %v3722 = vrot.slane %v3720, 4
    %v3723 = vor.u32 %v3722, %v3718
    %v3724 = vrot.slane %v3723, 4
    %v3726 = vshll.u32 %v3479, 16
    %v3728 = vrot.slane %v3726, 5
    %v3729 = vsel %vm694, %v3724, %v3728
    %v3730 = vshrl.u32 %v3479, 16
    %v3732 = vrot.slane %v3730, 4
    %v3733 = vor.u32 %v3732, %v3728
    %v3734 = vrot.slane %v3733, 4
    %v3736 = vshll.u32 %v3480, 16
    %v3738 = vrot.slane %v3736, 5
    %v3739 = vsel %vm694, %v3734, %v3738
    %v3740 = vshrl.u32 %v3480, 16
    %v3742 = vrot.slane %v3740, 4
    %v3743 = vor.u32 %v3742, %v3738
    %v3744 = vrot.slane %v3743, 4
    %v3746 = vshll.u32 %v3481, 16
    %v3748 = vrot.slane %v3746, 5
    %v3749 = vsel %vm694, %v3744, %v3748
    %v3750 = vshrl.u32 %v3481, 16
    %v3752 = vrot.slane %v3750, 4
    %v3753 = vor.u32 %v3752, %v3748
    %v3754 = vrot.slane %v3753, 4
    %v3756 = vshll.u32 %v3482, 16
    %v3758 = vrot.slane %v3756, 5
    %v3759 = vsel %vm694, %v3754, %v3758
    %v3760 = vshrl.u32 %v3482, 16
    %v3762 = vrot.slane %v3760, 4
    %v3763 = vor.u32 %v3762, %v3758
    %v3764 = vrot.slane %v3763, 4
    %v3766 = vshll.u32 %v3483, 16
    %v3768 = vrot.slane %v3766, 5
    %v3769 = vsel %vm694, %v3764, %v3768
    %v3770 = vshrl.u32 %v3483, 16
    %v3772 = vrot.slane %v3770, 4
    %v3773 = vor.u32 %v3772, %v3768
    %v3774 = vrot.slane %v3773, 4
    %v3776 = vshll.u32 %v3484, 16
    %v3778 = vrot.slane %v3776, 5
    %v3779 = vsel %vm694, %v3774, %v3778
    %v3780 = vshrl.u32 %v3484, 16
    %v3782 = vrot.slane %v3780, 4
    %v3783 = vor.u32 %v3782, %v3778
    %v3784 = vrot.slane %v3783, 4
    %v3786 = vshll.u32 %v3485, 16
    %v3788 = vrot.slane %v3786, 5
    %v3789 = vsel %vm694, %v3784, %v3788
    %v3790 = vshrl.u32 %v3485, 16
    %v3792 = vrot.slane %v3790, 4
    %v3793 = vor.u32 %v3792, %v3788
    %v3794 = vrot.slane %v3793, 4
    %v3796 = vshll.u32 %v3486, 16
    %v3798 = vrot.slane %v3796, 5
    %v3799 = vsel %vm694, %v3794, %v3798
    %v3801 = vshrl.u32 %v3487, 16
    %v3803 = vrot.slane %v3801, 4
    %v3804 = vshll.u32 %v3487, 16
    %v3806 = vrot.slane %v3804, 5
    %v3807 = vor.u32 %v3803, %v3806
    %v3808 = vrot.slane %v3807, 4
    %v3810 = vshll.u32 %v3488, 16
    %v3812 = vrot.slane %v3810, 5
    %v3813 = vsel %vm694, %v3808, %v3812
    %v3814 = vshrl.u32 %v3488, 16
    %v3816 = vrot.slane %v3814, 4
    %v3817 = vor.u32 %v3816, %v3812
    %v3818 = vrot.slane %v3817, 4
    %v3820 = vshll.u32 %v3489, 16
    %v3822 = vrot.slane %v3820, 5
    %v3823 = vsel %vm694, %v3818, %v3822
    %v3824 = vshrl.u32 %v3489, 16
    %v3826 = vrot.slane %v3824, 4
    %v3827 = vor.u32 %v3826, %v3822
    %v3828 = vrot.slane %v3827, 4
    %v3830 = vshll.u32 %v3490, 16
    %v3832 = vrot.slane %v3830, 5
    %v3833 = vsel %vm694, %v3828, %v3832
    %v3834 = vshrl.u32 %v3490, 16
    %v3836 = vrot.slane %v3834, 4
    %v3837 = vor.u32 %v3836, %v3832
    %v3838 = vrot.slane %v3837, 4
    %v3840 = vshll.u32 %v3491, 16
    %v3842 = vrot.slane %v3840, 5
    %v3843 = vsel %vm694, %v3838, %v3842
    %v3844 = vshrl.u32 %v3491, 16
    %v3846 = vrot.slane %v3844, 4
    %v3847 = vor.u32 %v3846, %v3842
    %v3848 = vrot.slane %v3847, 4
    %v3850 = vshll.u32 %v3492, 16
    %v3852 = vrot.slane %v3850, 5
    %v3853 = vsel %vm694, %v3848, %v3852
    %v3854 = vshrl.u32 %v3492, 16
    %v3856 = vrot.slane %v3854, 4
    %v3857 = vor.u32 %v3856, %v3852
    %v3858 = vrot.slane %v3857, 4
    %v3860 = vshll.u32 %v3493, 16
    %v3862 = vrot.slane %v3860, 5
    %v3863 = vsel %vm694, %v3858, %v3862
    %v3864 = vshrl.u32 %v3493, 16
    %v3866 = vrot.slane %v3864, 4
    %v3867 = vor.u32 %v3866, %v3862
    %v3868 = vrot.slane %v3867, 4
    %v3870 = vshll.u32 %v3494, 16
    %v3872 = vrot.slane %v3870, 5
    %v3873 = vsel %vm694, %v3868, %v3872
    %v3874 = vshrl.u32 %v3494, 16
    %v3876 = vrot.slane %v3874, 4
    %v3877 = vor.u32 %v3876, %v3872
    %v3878 = vrot.slane %v3877, 4
    %v3880 = vshll.u32 %v3495, 16
    %v3882 = vrot.slane %v3880, 5
    %v3883 = vsel %vm694, %v3878, %v3882
    %v3884 = vshrl.u32 %v3495, 16
    %v3886 = vrot.slane %v3884, 4
    %v3887 = vor.u32 %v3886, %v3882
    %v3888 = vrot.slane %v3887, 4
    %v3890 = vshll.u32 %v3496, 16
    %v3892 = vrot.slane %v3890, 5
    %v3893 = vsel %vm694, %v3888, %v3892
    %v3894 = vshrl.u32 %v3496, 16
    %v3896 = vrot.slane %v3894, 4
    %v3897 = vor.u32 %v3896, %v3892
    %v3898 = vrot.slane %v3897, 4
    %v3900 = vshll.u32 %v3497, 16
    %v3902 = vrot.slane %v3900, 5
    %v3903 = vsel %vm694, %v3898, %v3902
    %v3904 = vshrl.u32 %v3497, 16
    %v3906 = vrot.slane %v3904, 4
    %v3907 = vor.u32 %v3906, %v3902
    %v3908 = vrot.slane %v3907, 4
    %v3910 = vshll.u32 %v3498, 16
    %v3912 = vrot.slane %v3910, 5
    %v3913 = vsel %vm694, %v3908, %v3912
    %v3914 = vshrl.u32 %v3498, 16
    %v3916 = vrot.slane %v3914, 4
    %v3917 = vor.u32 %v3916, %v3912
    %v3918 = vrot.slane %v3917, 4
    %v3920 = vshll.u32 %v3499, 16
    %v3922 = vrot.slane %v3920, 5
    %v3923 = vsel %vm694, %v3918, %v3922
    %v3924 = vshrl.u32 %v3499, 16
    %v3926 = vrot.slane %v3924, 4
    %v3927 = vor.u32 %v3926, %v3922
    %v3928 = vrot.slane %v3927, 4
    %v3930 = vshll.u32 %v3500, 16
    %v3932 = vrot.slane %v3930, 5
    %v3933 = vsel %vm694, %v3928, %v3932
    %v3934 = vshrl.u32 %v3500, 16
    %v3936 = vrot.slane %v3934, 4
    %v3937 = vor.u32 %v3936, %v3932
    %v3938 = vrot.slane %v3937, 4
    %v3940 = vshll.u32 %v3501, 16
    %v3942 = vrot.slane %v3940, 5
    %v3943 = vsel %vm694, %v3938, %v3942
    %v3944 = vshrl.u32 %v3501, 16
    %v3946 = vrot.slane %v3944, 4
    %v3947 = vor.u32 %v3946, %v3942
    %v3948 = vrot.slane %v3947, 4
    %v3950 = vshll.u32 %v3502, 16
    %v3952 = vrot.slane %v3950, 5
    %v3953 = vsel %vm694, %v3948, %v3952
    %v3954 = vshrl.u32 %v3502, 16
    %v3956 = vrot.slane %v3954, 4
    %v3957 = vor.u32 %v3956, %v3952
    %v3958 = vrot.slane %v3957, 4
    %v3960 = vshll.u32 %v3503, 16
    %v3962 = vrot.slane %v3960, 5
    %v3963 = vsel %vm694, %v3958, %v3962
    %v3964 = vshrl.u32 %v3503, 16
    %v3966 = vrot.slane %v3964, 4
    %v3967 = vor.u32 %v3966, %v3962
    %v3968 = vrot.slane %v3967, 4
    %v3970 = vshll.u32 %v3504, 16
    %v3972 = vrot.slane %v3970, 5
    %v3973 = vsel %vm694, %v3968, %v3972
    %v3974 = vshrl.u32 %v3504, 16
    %v3976 = vrot.slane %v3974, 4
    %v3977 = vor.u32 %v3976, %v3972
    %v3978 = vrot.slane %v3977, 4
    %v3980 = vshll.u32 %v3505, 16
    %v3982 = vrot.slane %v3980, 5
    %v3983 = vsel %vm694, %v3978, %v3982
    %v3984 = vshrl.u32 %v3505, 16
    %v3986 = vrot.slane %v3984, 4
    %v3987 = vor.u32 %v3986, %v3982
    %v3988 = vrot.slane %v3987, 4
    %v3990 = vshll.u32 %v3506, 16
    %v3992 = vrot.slane %v3990, 5
    %v3993 = vsel %vm694, %v3988, %v3992
    %v3994 = vshrl.u32 %v3506, 16
    %v3996 = vrot.slane %v3994, 4
    %v3997 = vor.u32 %v3996, %v3992
    %v3998 = vrot.slane %v3997, 4
    %v4000 = vshll.u32 %v3507, 16
    %v4002 = vrot.slane %v4000, 5
    %v4003 = vsel %vm694, %v3998, %v4002
    %v4004 = vshrl.u32 %v3507, 16
    %v4006 = vrot.slane %v4004, 4
    %v4007 = vor.u32 %v4006, %v4002
    %v4008 = vrot.slane %v4007, 4
    %v4010 = vshll.u32 %v3508, 16
    %v4012 = vrot.slane %v4010, 5
    %v4013 = vsel %vm694, %v4008, %v4012
    %v4014 = vshrl.u32 %v3508, 16
    %v4016 = vrot.slane %v4014, 4
    %v4017 = vor.u32 %v4016, %v4012
    %v4018 = vrot.slane %v4017, 4
    %v4020 = vshll.u32 %v3509, 16
    %v4022 = vrot.slane %v4020, 5
    %v4023 = vsel %vm694, %v4018, %v4022
    %v4024 = vshrl.u32 %v3509, 16
    %v4026 = vrot.slane %v4024, 4
    %v4027 = vor.u32 %v4026, %v4022
    %v4028 = vrot.slane %v4027, 4
    %v4030 = vshll.u32 %v3510, 16
    %v4032 = vrot.slane %v4030, 5
    %v4033 = vsel %vm694, %v4028, %v4032
    %v4034 = vshrl.u32 %v3510, 16
    %v4036 = vrot.slane %v4034, 4
    %v4037 = vor.u32 %v4036, %v4032
    %v4038 = vrot.slane %v4037, 4
    %v4040 = vshll.u32 %v3511, 16
    %v4042 = vrot.slane %v4040, 5
    %v4043 = vsel %vm694, %v4038, %v4042
    %v4044 = vshrl.u32 %v3511, 16
    %v4046 = vrot.slane %v4044, 4
    %v4047 = vor.u32 %v4046, %v4042
    %v4048 = vrot.slane %v4047, 4
    %v4050 = vshll.u32 %v3512, 16
    %v4052 = vrot.slane %v4050, 5
    %v4053 = vsel %vm694, %v4048, %v4052
    %v4054 = vshrl.u32 %v3512, 16
    %v4056 = vrot.slane %v4054, 4
    %v4057 = vor.u32 %v4056, %v4052
    %v4058 = vrot.slane %v4057, 4
    %v4060 = vshll.u32 %v3513, 16
    %v4062 = vrot.slane %v4060, 5
    %v4063 = vsel %vm694, %v4058, %v4062
    %v4064 = vshrl.u32 %v3513, 16
    %v4066 = vrot.slane %v4064, 4
    %v4067 = vor.u32 %v4066, %v4062
    %v4068 = vrot.slane %v4067, 4
    %v4070 = vshll.u32 %v3514, 16
    %v4072 = vrot.slane %v4070, 5
    %v4073 = vsel %vm694, %v4068, %v4072
    %v4074 = vshrl.u32 %v3514, 16
    %v4076 = vrot.slane %v4074, 4
    %v4077 = vor.u32 %v4076, %v4072
    %v4078 = vrot.slane %v4077, 4
    %v4080 = vshll.u32 %v3515, 16
    %v4082 = vrot.slane %v4080, 5
    %v4083 = vsel %vm694, %v4078, %v4082
    %s4084 = scalar_lea.vmem %s1, 8
    %v4085 = vld [vmem:[%s4084] sm:$0x3]
    %v4086 = vunpack.c.l.b16 %v3529
    %v4087 = vunpack.c.l.b16 %v3539
    %v4088 = vunpack.c.l.b16 %v3549
    %v4089 = vunpack.c.l.b16 %v3559
    %v4090 = vunpack.c.l.b16 %v3569
    %v4091 = vunpack.c.l.b16 %v3579
    %v4092 = vunpack.c.l.b16 %v3589
    %v4093 = vunpack.c.l.b16 %v3599
    %v4094 = vunpack.c.l.b16 %v3609
    %v4095 = vunpack.c.l.b16 %v3619
    %v4096 = vunpack.c.l.b16 %v3629
    %v4097 = vunpack.c.l.b16 %v3639
    %v4098 = vunpack.c.l.b16 %v3649
    %v4099 = vunpack.c.l.b16 %v3659
    %v4100 = vunpack.c.l.b16 %v3669
    %v4101 = vunpack.c.l.b16 %v3679
    %v4102 = vunpack.c.l.b16 %v3689
    %v4103 = vunpack.c.l.b16 %v3699
    %v4104 = vunpack.c.l.b16 %v3709
    %v4105 = vunpack.c.l.b16 %v3719
    %v4106 = vunpack.c.l.b16 %v3729
    %v4107 = vunpack.c.l.b16 %v3739
    %v4108 = vunpack.c.l.b16 %v3749
    %v4109 = vunpack.c.l.b16 %v3759
    %v4110 = vunpack.c.l.b16 %v3769
    %v4111 = vunpack.c.l.b16 %v3779
    %v4112 = vunpack.c.l.b16 %v3789
    %v4113 = vunpack.c.l.b16 %v3799
    %v4114 = vunpack.c.l.b16 %v3813
    %v4115 = vunpack.c.l.b16 %v3823
    %v4116 = vunpack.c.l.b16 %v3833
    %v4117 = vunpack.c.l.b16 %v3843
    %v4118 = vunpack.c.l.b16 %v3853
    %v4119 = vunpack.c.l.b16 %v3863
    %v4120 = vunpack.c.l.b16 %v3873
    %v4121 = vunpack.c.l.b16 %v3883
    %v4122 = vunpack.c.l.b16 %v3893
    %v4123 = vunpack.c.l.b16 %v3903
    %v4124 = vunpack.c.l.b16 %v3913
    %v4125 = vunpack.c.l.b16 %v3923
    %v4126 = vunpack.c.l.b16 %v3933
    %v4127 = vunpack.c.l.b16 %v3943
    %v4128 = vunpack.c.l.b16 %v3953
    %v4129 = vunpack.c.l.b16 %v3963
    %v4130 = vunpack.c.l.b16 %v3973
    %v4131 = vunpack.c.l.b16 %v3983
    %v4132 = vunpack.c.l.b16 %v3993
    %v4133 = vunpack.c.l.b16 %v4003
    %v4134 = vunpack.c.l.b16 %v4013
    %v4135 = vunpack.c.l.b16 %v4023
    %v4136 = vunpack.c.l.b16 %v4033
    %v4137 = vunpack.c.l.b16 %v4043
    %v4138 = vunpack.c.l.b16 %v4053
    %v4139 = vunpack.c.l.b16 %v4063
    %v4140 = vunpack.c.l.b16 %v4073
    %v4141 = vunpack.c.l.b16 %v4083
    %v4142 = vpack.c.b16 %v4087, %v4086
    %v4143 = vpack.c.b16 %v4089, %v4088
    %v4144 = vpack.c.b16 %v4091, %v4090
    %v4145 = vpack.c.b16 %v4093, %v4092
    %v4146 = vpack.c.b16 %v4095, %v4094
    %v4147 = vpack.c.b16 %v4097, %v4096
    %v4148 = vpack.c.b16 %v4099, %v4098
    %v4149 = vpack.c.b16 %v4101, %v4100
    %v4150 = vpack.c.b16 %v4103, %v4102
    %v4151 = vpack.c.b16 %v4105, %v4104
    %v4152 = vpack.c.b16 %v4107, %v4106
    %v4153 = vpack.c.b16 %v4109, %v4108
    %v4154 = vpack.c.b16 %v4111, %v4110
    %v4155 = vpack.c.b16 %v4113, %v4112
    %v4156 = vpack.c.b16 %v4115, %v4114
    %v4157 = vpack.c.b16 %v4117, %v4116
    %v4158 = vpack.c.b16 %v4119, %v4118
    %v4159 = vpack.c.b16 %v4121, %v4120
    %v4160 = vpack.c.b16 %v4123, %v4122
    %v4161 = vpack.c.b16 %v4125, %v4124
    %v4162 = vpack.c.b16 %v4127, %v4126
    %v4163 = vpack.c.b16 %v4129, %v4128
    %v4164 = vpack.c.b16 %v4131, %v4130
    %v4165 = vpack.c.b16 %v4133, %v4132
    %v4166 = vpack.c.b16 %v4135, %v4134
    %v4167 = vpack.c.b16 %v4137, %v4136
    %v4168 = vpack.c.b16 %v4139, %v4138
    %v4169 = vpack.c.b16 %v4141, %v4140
    %v4171 = vsel %vm231, %v4142, 0
    %v4174 = vsel %vm231, %v4143, 0
    %v4177 = vsel %vm231, %v4144, 0
    %v4180 = vsel %vm231, %v4145, 0
    %v4183 = vsel %vm231, %v4146, 0
    %v4186 = vsel %vm231, %v4147, 0
    %v4189 = vsel %vm231, %v4148, 0
    %v4192 = vsel %vm231, %v4149, 0
    %v4195 = vsel %vm231, %v4150, 0
    %v4198 = vsel %vm231, %v4151, 0
    %v4201 = vsel %vm231, %v4152, 0
    %v4204 = vsel %vm231, %v4153, 0
    %v4207 = vsel %vm231, %v4154, 0
    %v4210 = vsel %vm231, %v4155, 0
    %v4213 = vsel %vm231, %v4156, 0
    %v4216 = vsel %vm231, %v4157, 0
    %v4219 = vsel %vm231, %v4158, 0
    %v4222 = vsel %vm231, %v4159, 0
    %v4225 = vsel %vm231, %v4160, 0
    %v4228 = vsel %vm231, %v4161, 0
    %v4231 = vsel %vm231, %v4162, 0
    %v4234 = vsel %vm231, %v4163, 0
    %v4237 = vsel %vm231, %v4164, 0
    %v4240 = vsel %vm231, %v4165, 0
    %v4243 = vsel %vm231, %v4166, 0
    %v4246 = vsel %vm231, %v4167, 0
    %v4249 = vsel %vm231, %v4168, 0
    %v4252 = vsel %vm231, %v4169, 0
    %v4255 = vsel %vm316, %v4085, 0
    %4257 = vmatprep.subr.bf16.mxu0 0
    %4258 = vmatpush1.bf16.msra.mxu0 %v4255
    %4259 = vmatprep.subr.bf16.mxu0 0
    %4260 = vmatpush1.bf16.msra.mxu0 0
    %4261 = vmatprep.subr.bf16.mxu0 0
    %4262 = vmatpush1.bf16.msra.mxu0 0
    %4263 = vmatprep.subr.bf16.mxu0 0
    %4264 = vmatpush1.bf16.msra.mxu0 0
    %4265 = vmatprep.subr.bf16.mxu0 0
    %4266 = vmatpush1.bf16.msra.mxu0 0
    %4267 = vmatprep.subr.bf16.mxu0 0
    %4268 = vmatpush1.bf16.msra.mxu0 0
    %4269 = vmatprep.subr.bf16.mxu0 0
    %4270 = vmatpush1.bf16.msra.mxu0 0
    %4271 = vmatprep.subr.bf16.mxu0 0
    %4272 = vmatpush1.bf16.msra.mxu0 0
    %4273 = vmatprep.subr.bf16.mxu0 0
    %4274 = vmatpush1.bf16.msra.mxu0 0
    %4275 = vmatprep.subr.bf16.mxu0 0
    %4276 = vmatpush1.bf16.msra.mxu0 0
    %4277 = vmatprep.subr.bf16.mxu0 0
    %4278 = vmatpush1.bf16.msra.mxu0 0
    %4279 = vmatprep.subr.bf16.mxu0 0
    %4280 = vmatpush1.bf16.msra.mxu0 0
    %4281 = vmatprep.subr.bf16.mxu0 0
    %4282 = vmatpush1.bf16.msra.mxu0 0
    %4283 = vmatprep.subr.bf16.mxu0 0
    %4284 = vmatpush1.bf16.msra.mxu0 0
    %4285 = vmatprep.subr.bf16.mxu0 0
    %4286 = vmatpush1.bf16.msra.mxu0 0
    %4287 = vmatprep.subr.bf16.mxu0 0
    %4288 = vmatpush1.bf16.msra.mxu0 0
    %4289 = vmatprep.mubr.bf16.mxu0 0
    %4290 = vmatmul.mubr.bf16.gmra.mrb[0].mxu0 %v4171
    %v4291 = vpop.f32.mrb[0].mxu0
    %v4292 = vadd.f32 0.0, %v4291
    %v4293 = vpop.f32.mrb[0].mxu0
    %v4294 = vpop.f32.mrb[0].mxu0
    %v4295 = vadd.f32 0.0, %v4294
    %v4296 = vpop.f32.mrb[0].mxu0
    %4297 = vmatprep.mubr.bf16.mxu0 0
    %4298 = vmatmul.mubr.bf16.gmra.mrb[0].mxu0 %v4174
    %v4299 = vpop.f32.mrb[0].mxu0
    %v4300 = vadd.f32 0.0, %v4299
    %v4301 = vpop.f32.mrb[0].mxu0
    %v4302 = vpop.f32.mrb[0].mxu0
    %v4303 = vadd.f32 0.0, %v4302
    %v4304 = vpop.f32.mrb[0].mxu0
    %4305 = vmatprep.mubr.bf16.mxu0 0
    %4306 = vmatmul.mubr.bf16.gmra.mrb[0].mxu0 %v4177
    %v4307 = vpop.f32.mrb[0].mxu0
    %v4308 = vadd.f32 0.0, %v4307
    %v4309 = vpop.f32.mrb[0].mxu0
    %v4310 = vpop.f32.mrb[0].mxu0
    %v4311 = vadd.f32 0.0, %v4310
    %v4312 = vpop.f32.mrb[0].mxu0
    %4313 = vmatprep.mubr.bf16.mxu0 0
    %4314 = vmatmul.mubr.bf16.gmra.mrb[0].mxu0 %v4180
    %v4315 = vpop.f32.mrb[0].mxu0
    %v4316 = vadd.f32 0.0, %v4315
    %v4317 = vpop.f32.mrb[0].mxu0
    %v4318 = vpop.f32.mrb[0].mxu0
    %v4319 = vadd.f32 0.0, %v4318
    %v4320 = vpop.f32.mrb[0].mxu0
    %4321 = vmatprep.mubr.bf16.mxu0 0
    %4322 = vmatmul.mubr.bf16.gmra.mrb[0].mxu0 %v4183
    %v4323 = vpop.f32.mrb[0].mxu0
    %v4324 = vadd.f32 0.0, %v4323
    %v4325 = vpop.f32.mrb[0].mxu0
    %v4326 = vpop.f32.mrb[0].mxu0
    %v4327 = vadd.f32 0.0, %v4326
    %v4328 = vpop.f32.mrb[0].mxu0
    %4329 = vmatprep.mubr.bf16.mxu0 0
    %4330 = vmatmul.mubr.bf16.gmra.mrb[0].mxu0 %v4186
    %v4331 = vpop.f32.mrb[0].mxu0
    %v4332 = vadd.f32 0.0, %v4331
    %v4333 = vpop.f32.mrb[0].mxu0
    %v4334 = vpop.f32.mrb[0].mxu0
    %v4335 = vadd.f32 0.0, %v4334
    %v4336 = vpop.f32.mrb[0].mxu0
    %4337 = vmatprep.mubr.bf16.mxu0 0
    %4338 = vmatmul.mubr.bf16.gmra.mrb[0].mxu0 %v4189
    %v4339 = vpop.f32.mrb[0].mxu0
    %v4340 = vadd.f32 0.0, %v4339
    %v4341 = vpop.f32.mrb[0].mxu0
    %v4342 = vpop.f32.mrb[0].mxu0
    %v4343 = vadd.f32 0.0, %v4342
    %v4344 = vpop.f32.mrb[0].mxu0
    %4345 = vmatprep.mubr.bf16.mxu0 0
    %4346 = vmatmul.mubr.bf16.gmra.mrb[0].mxu0 %v4192
    %v4347 = vpop.f32.mrb[0].mxu0
    %v4348 = vadd.f32 0.0, %v4347
    %v4349 = vpop.f32.mrb[0].mxu0
    %v4350 = vpop.f32.mrb[0].mxu0
    %v4351 = vadd.f32 0.0, %v4350
    %v4352 = vpop.f32.mrb[0].mxu0
    %4353 = vmatprep.mubr.bf16.mxu0 0
    %4354 = vmatmul.mubr.bf16.gmra.mrb[0].mxu0 %v4195
    %v4355 = vpop.f32.mrb[0].mxu0
    %v4356 = vadd.f32 0.0, %v4355
    %v4357 = vpop.f32.mrb[0].mxu0
    %v4358 = vpop.f32.mrb[0].mxu0
    %v4359 = vadd.f32 0.0, %v4358
    %v4360 = vpop.f32.mrb[0].mxu0
    %4361 = vmatprep.mubr.bf16.mxu0 0
    %4362 = vmatmul.mubr.bf16.gmra.mrb[0].mxu0 %v4198
    %v4363 = vpop.f32.mrb[0].mxu0
    %v4364 = vadd.f32 0.0, %v4363
    %v4365 = vpop.f32.mrb[0].mxu0
    %v4366 = vpop.f32.mrb[0].mxu0
    %v4367 = vadd.f32 0.0, %v4366
    %v4368 = vpop.f32.mrb[0].mxu0
    %4369 = vmatprep.mubr.bf16.mxu0 0
    %4370 = vmatmul.mubr.bf16.gmra.mrb[0].mxu0 %v4201
    %v4371 = vpop.f32.mrb[0].mxu0
    %v4372 = vadd.f32 0.0, %v4371
    %v4373 = vpop.f32.mrb[0].mxu0
    %v4374 = vpop.f32.mrb[0].mxu0
    %v4375 = vadd.f32 0.0, %v4374
    %v4376 = vpop.f32.mrb[0].mxu0
    %4377 = vmatprep.mubr.bf16.mxu0 0
    %4378 = vmatmul.mubr.bf16.gmra.mrb[0].mxu0 %v4204
    %v4379 = vpop.f32.mrb[0].mxu0
    %v4380 = vadd.f32 0.0, %v4379
    %v4381 = vpop.f32.mrb[0].mxu0
    %v4382 = vpop.f32.mrb[0].mxu0
    %v4383 = vadd.f32 0.0, %v4382
    %v4384 = vpop.f32.mrb[0].mxu0
    %4385 = vmatprep.mubr.bf16.mxu0 0
    %4386 = vmatmul.mubr.bf16.gmra.mrb[0].mxu0 %v4207
    %v4387 = vpop.f32.mrb[0].mxu0
    %v4388 = vadd.f32 0.0, %v4387
    %v4389 = vpop.f32.mrb[0].mxu0
    %v4390 = vpop.f32.mrb[0].mxu0
    %v4391 = vadd.f32 0.0, %v4390
    %v4392 = vpop.f32.mrb[0].mxu0
    %4393 = vmatprep.mubr.bf16.mxu0 0
    %4394 = vmatmul.mubr.bf16.gmra.mrb[0].mxu0 %v4210
    %v4395 = vpop.f32.mrb[0].mxu0
    %v4396 = vadd.f32 0.0, %v4395
    %v4397 = vpop.f32.mrb[0].mxu0
    %v4398 = vpop.f32.mrb[0].mxu0
    %v4399 = vadd.f32 0.0, %v4398
    %v4400 = vpop.f32.mrb[0].mxu0
    %4401 = vmatprep.mubr.bf16.mxu0 0
    %4402 = vmatmul.mubr.bf16.gmra.mrb[0].mxu0 %v4213
    %v4403 = vpop.f32.mrb[0].mxu0
    %v4404 = vadd.f32 0.0, %v4403
    %v4405 = vpop.f32.mrb[0].mxu0
    %v4406 = vpop.f32.mrb[0].mxu0
    %v4407 = vadd.f32 0.0, %v4406
    %v4408 = vpop.f32.mrb[0].mxu0
    %4409 = vmatprep.mubr.bf16.mxu0 0
    %4410 = vmatmul.mubr.bf16.gmra.mrb[0].mxu0 %v4216
    %v4411 = vpop.f32.mrb[0].mxu0
    %v4412 = vadd.f32 0.0, %v4411
    %v4413 = vpop.f32.mrb[0].mxu0
    %v4414 = vpop.f32.mrb[0].mxu0
    %v4415 = vadd.f32 0.0, %v4414
    %v4416 = vpop.f32.mrb[0].mxu0
    %4417 = vmatprep.mubr.bf16.mxu0 0
    %4418 = vmatmul.mubr.bf16.gmra.mrb[0].mxu0 %v4219
    %v4419 = vpop.f32.mrb[0].mxu0
    %v4420 = vadd.f32 0.0, %v4419
    %v4421 = vpop.f32.mrb[0].mxu0
    %v4422 = vpop.f32.mrb[0].mxu0
    %v4423 = vadd.f32 0.0, %v4422
    %v4424 = vpop.f32.mrb[0].mxu0
    %4425 = vmatprep.mubr.bf16.mxu0 0
    %4426 = vmatmul.mubr.bf16.gmra.mrb[0].mxu0 %v4222
    %v4427 = vpop.f32.mrb[0].mxu0
    %v4428 = vadd.f32 0.0, %v4427
    %v4429 = vpop.f32.mrb[0].mxu0
    %v4430 = vpop.f32.mrb[0].mxu0
    %v4431 = vadd.f32 0.0, %v4430
    %v4432 = vpop.f32.mrb[0].mxu0
    %4433 = vmatprep.mubr.bf16.mxu0 0
    %4434 = vmatmul.mubr.bf16.gmra.mrb[0].mxu0 %v4225
    %v4435 = vpop.f32.mrb[0].mxu0
    %v4436 = vadd.f32 0.0, %v4435
    %v4437 = vpop.f32.mrb[0].mxu0
    %v4438 = vpop.f32.mrb[0].mxu0
    %v4439 = vadd.f32 0.0, %v4438
    %v4440 = vpop.f32.mrb[0].mxu0
    %4441 = vmatprep.mubr.bf16.mxu0 0
    %4442 = vmatmul.mubr.bf16.gmra.mrb[0].mxu0 %v4228
    %v4443 = vpop.f32.mrb[0].mxu0
    %v4444 = vadd.f32 0.0, %v4443
    %v4445 = vpop.f32.mrb[0].mxu0
    %v4446 = vpop.f32.mrb[0].mxu0
    %v4447 = vadd.f32 0.0, %v4446
    %v4448 = vpop.f32.mrb[0].mxu0
    %4449 = vmatprep.mubr.bf16.mxu0 0
    %4450 = vmatmul.mubr.bf16.gmra.mrb[0].mxu0 %v4231
    %v4451 = vpop.f32.mrb[0].mxu0
    %v4452 = vadd.f32 0.0, %v4451
    %v4453 = vpop.f32.mrb[0].mxu0
    %v4454 = vpop.f32.mrb[0].mxu0
    %v4455 = vadd.f32 0.0, %v4454
    %v4456 = vpop.f32.mrb[0].mxu0
    %4457 = vmatprep.mubr.bf16.mxu0 0
    %4458 = vmatmul.mubr.bf16.gmra.mrb[0].mxu0 %v4234
    %v4459 = vpop.f32.mrb[0].mxu0
    %v4460 = vadd.f32 0.0, %v4459
    %v4461 = vpop.f32.mrb[0].mxu0
    %v4462 = vpop.f32.mrb[0].mxu0
    %v4463 = vadd.f32 0.0, %v4462
    %v4464 = vpop.f32.mrb[0].mxu0
    %4465 = vmatprep.mubr.bf16.mxu0 0
    %4466 = vmatmul.mubr.bf16.gmra.mrb[0].mxu0 %v4237
    %v4467 = vpop.f32.mrb[0].mxu0
    %v4468 = vadd.f32 0.0, %v4467
    %v4469 = vpop.f32.mrb[0].mxu0
    %v4470 = vpop.f32.mrb[0].mxu0
    %v4471 = vadd.f32 0.0, %v4470
    %v4472 = vpop.f32.mrb[0].mxu0
    %4473 = vmatprep.mubr.bf16.mxu0 0
    %4474 = vmatmul.mubr.bf16.gmra.mrb[0].mxu0 %v4240
    %v4475 = vpop.f32.mrb[0].mxu0
    %v4476 = vadd.f32 0.0, %v4475
    %v4477 = vpop.f32.mrb[0].mxu0
    %v4478 = vpop.f32.mrb[0].mxu0
    %v4479 = vadd.f32 0.0, %v4478
    %v4480 = vpop.f32.mrb[0].mxu0
    %4481 = vmatprep.mubr.bf16.mxu0 0
    %4482 = vmatmul.mubr.bf16.gmra.mrb[0].mxu0 %v4243
    %v4483 = vpop.f32.mrb[0].mxu0
    %v4484 = vadd.f32 0.0, %v4483
    %v4485 = vpop.f32.mrb[0].mxu0
    %v4486 = vpop.f32.mrb[0].mxu0
    %v4487 = vadd.f32 0.0, %v4486
    %v4488 = vpop.f32.mrb[0].mxu0
    %4489 = vmatprep.mubr.bf16.mxu0 0
    %4490 = vmatmul.mubr.bf16.gmra.mrb[0].mxu0 %v4246
    %v4491 = vpop.f32.mrb[0].mxu0
    %v4492 = vadd.f32 0.0, %v4491
    %v4493 = vpop.f32.mrb[0].mxu0
    %v4494 = vpop.f32.mrb[0].mxu0
    %v4495 = vadd.f32 0.0, %v4494
    %v4496 = vpop.f32.mrb[0].mxu0
    %4497 = vmatprep.mubr.bf16.mxu0 0
    %4498 = vmatmul.mubr.bf16.gmra.mrb[0].mxu0 %v4249
    %v4499 = vpop.f32.mrb[0].mxu0
    %v4500 = vadd.f32 0.0, %v4499
    %v4501 = vpop.f32.mrb[0].mxu0
    %v4502 = vpop.f32.mrb[0].mxu0
    %v4503 = vadd.f32 0.0, %v4502
    %v4504 = vpop.f32.mrb[0].mxu0
    %4505 = vmatprep.mubr.bf16.mxu0 0
    %4506 = vmatmul.mubr.bf16.gmra.mrb[0].mxu0 %v4252
    %v4507 = vpop.f32.mrb[0].mxu0
    %v4508 = vadd.f32 0.0, %v4507
    %v4509 = vpop.f32.mrb[0].mxu0
    %v4510 = vpop.f32.mrb[0].mxu0
    %v4511 = vadd.f32 0.0, %v4510
    %v4512 = vpop.f32.mrb[0].mxu0
    %4513 = vdwg.mxu0
    %v4514 = vld [vmem:[#allocation2] sm:$0xff]
    %v4515 = vld [vmem:[#allocation2 + $0x8] sm:$0xff]
    %v4516 = vld [vmem:[#allocation2 + $0x10] sm:$0xff]
    %v4517 = vld [vmem:[#allocation2 + $0x18] sm:$0xff]
    %v4518 = vld [vmem:[#allocation2 + $0x20] sm:$0xff]
    %v4519 = vld [vmem:[#allocation2 + $0x28] sm:$0xff]
    %v4520 = vld [vmem:[#allocation2 + $0x30] sm:$0xff]
    %v4521 = vld [vmem:[#allocation2 + $0x38] sm:$0xff]
    %v4522 = vld [vmem:[#allocation2 + $0x40] sm:$0xff]
    %v4523 = vld [vmem:[#allocation2 + $0x48] sm:$0xff]
    %v4524 = vld [vmem:[#allocation2 + $0x50] sm:$0xff]
    %v4525 = vld [vmem:[#allocation2 + $0x58] sm:$0xff]
    %v4526 = vld [vmem:[#allocation2 + $0x60] sm:$0xff]
    %v4527 = vld [vmem:[#allocation2 + $0x68] sm:$0xff]
    %v4528 = vld [vmem:[#allocation2 + $0x70] sm:$0xff]
    %v4529 = vld [vmem:[#allocation2 + $0x78] sm:$0xff]
    %v4530 = vld [vmem:[#allocation2 + $0x80] sm:$0xff]
    %v4531 = vld [vmem:[#allocation2 + $0x88] sm:$0xff]
    %v4532 = vld [vmem:[#allocation2 + $0x90] sm:$0xff]
    %v4533 = vld [vmem:[#allocation2 + $0x98] sm:$0xff]
    %v4534 = vld [vmem:[#allocation2 + $0xa0] sm:$0xff]
    %v4535 = vld [vmem:[#allocation2 + $0xa8] sm:$0xff]
    %v4536 = vld [vmem:[#allocation2 + $0xb0] sm:$0xff]
    %v4537 = vld [vmem:[#allocation2 + $0xb8] sm:$0xff]
    %v4538 = vld [vmem:[#allocation2 + $0xc0] sm:$0xff]
    %v4539 = vld [vmem:[#allocation2 + $0xc8] sm:$0xff]
    %v4540 = vld [vmem:[#allocation2 + $0xd0] sm:$0xff]
    %v4541 = vld [vmem:[#allocation2 + $0xd8] sm:$0xff]
    %v4542 = vld [vmem:[#allocation2 + $0xe0] sm:$0xff]
    %v4543 = vld [vmem:[#allocation2 + $0xe8] sm:$0xff]
    %v4544 = vld [vmem:[#allocation2 + $0xf0] sm:$0xff]
    %v4545 = vld [vmem:[#allocation2 + $0xf8] sm:$0xff]
    %v4546 = vld [vmem:[#allocation2 + $0x100] sm:$0xff]
    %v4547 = vld [vmem:[#allocation2 + $0x108] sm:$0xff]
    %v4548 = vld [vmem:[#allocation2 + $0x110] sm:$0xff]
    %v4549 = vld [vmem:[#allocation2 + $0x118] sm:$0xff]
    %v4550 = vld [vmem:[#allocation2 + $0x120] sm:$0xff]
    %v4551 = vld [vmem:[#allocation2 + $0x128] sm:$0xff]
    %v4552 = vld [vmem:[#allocation2 + $0x130] sm:$0xff]
    %v4553 = vld [vmem:[#allocation2 + $0x138] sm:$0xff]
    %v4554 = vld [vmem:[#allocation2 + $0x140] sm:$0xff]
    %v4555 = vld [vmem:[#allocation2 + $0x148] sm:$0xff]
    %v4556 = vld [vmem:[#allocation2 + $0x150] sm:$0xff]
    %v4557 = vld [vmem:[#allocation2 + $0x158] sm:$0xff]
    %v4558 = vld [vmem:[#allocation2 + $0x160] sm:$0xff]
    %v4559 = vld [vmem:[#allocation2 + $0x168] sm:$0xff]
    %v4560 = vld [vmem:[#allocation2 + $0x170] sm:$0xff]
    %v4561 = vld [vmem:[#allocation2 + $0x178] sm:$0xff]
    %v4562 = vld [vmem:[#allocation2 + $0x180] sm:$0xff]
    %v4563 = vld [vmem:[#allocation2 + $0x188] sm:$0xff]
    %v4564 = vld [vmem:[#allocation2 + $0x190] sm:$0xff]
    %v4565 = vld [vmem:[#allocation2 + $0x198] sm:$0xff]
    %v4566 = vld [vmem:[#allocation2 + $0x1a0] sm:$0xff]
    %v4567 = vld [vmem:[#allocation2 + $0x1a8] sm:$0xff]
    %v4568 = vld [vmem:[#allocation2 + $0x1b0] sm:$0xff]
    %v4569 = vld [vmem:[#allocation2 + $0x1b8] sm:$0xff]
    %v4570 = vadd.f32 %v4514, %v4292
    %v4571 = vadd.f32 %v4515, %v4295
    %v4572 = vadd.f32 %v4516, %v4300
    %v4573 = vadd.f32 %v4517, %v4303
    %v4574 = vadd.f32 %v4518, %v4308
    %v4575 = vadd.f32 %v4519, %v4311
    %v4576 = vadd.f32 %v4520, %v4316
    %v4577 = vadd.f32 %v4521, %v4319
    %v4578 = vadd.f32 %v4522, %v4324
    %v4579 = vadd.f32 %v4523, %v4327
    %v4580 = vadd.f32 %v4524, %v4332
    %v4581 = vadd.f32 %v4525, %v4335
    %v4582 = vadd.f32 %v4526, %v4340
    %v4583 = vadd.f32 %v4527, %v4343
    %v4584 = vadd.f32 %v4528, %v4348
    %v4585 = vadd.f32 %v4529, %v4351
    %v4586 = vadd.f32 %v4530, %v4356
    %v4587 = vadd.f32 %v4531, %v4359
    %v4588 = vadd.f32 %v4532, %v4364
    %v4589 = vadd.f32 %v4533, %v4367
    %v4590 = vadd.f32 %v4534, %v4372
    %v4591 = vadd.f32 %v4535, %v4375
    %v4592 = vadd.f32 %v4536, %v4380
    %v4593 = vadd.f32 %v4537, %v4383
    %v4594 = vadd.f32 %v4538, %v4388
    %v4595 = vadd.f32 %v4539, %v4391
    %v4596 = vadd.f32 %v4540, %v4396
    %v4597 = vadd.f32 %v4541, %v4399
    %v4598 = vadd.f32 %v4542, %v4404
    %v4599 = vadd.f32 %v4543, %v4407
    %v4600 = vadd.f32 %v4544, %v4412
    %v4601 = vadd.f32 %v4545, %v4415
    %v4602 = vadd.f32 %v4546, %v4420
    %v4603 = vadd.f32 %v4547, %v4423
    %v4604 = vadd.f32 %v4548, %v4428
    %v4605 = vadd.f32 %v4549, %v4431
    %v4606 = vadd.f32 %v4550, %v4436
    %v4607 = vadd.f32 %v4551, %v4439
    %v4608 = vadd.f32 %v4552, %v4444
    %v4609 = vadd.f32 %v4553, %v4447
    %v4610 = vadd.f32 %v4554, %v4452
    %v4611 = vadd.f32 %v4555, %v4455
    %v4612 = vadd.f32 %v4556, %v4460
    %v4613 = vadd.f32 %v4557, %v4463
    %v4614 = vadd.f32 %v4558, %v4468
    %v4615 = vadd.f32 %v4559, %v4471
    %v4616 = vadd.f32 %v4560, %v4476
    %v4617 = vadd.f32 %v4561, %v4479
    %v4618 = vadd.f32 %v4562, %v4484
    %v4619 = vadd.f32 %v4563, %v4487
    %v4620 = vadd.f32 %v4564, %v4492
    %v4621 = vadd.f32 %v4565, %v4495
    %v4622 = vadd.f32 %v4566, %v4500
    %v4623 = vadd.f32 %v4567, %v4503
    %v4624 = vadd.f32 %v4568, %v4508
    %v4625 = vadd.f32 %v4569, %v4511
    %4626 = vst.msk [vmem:[#allocation2] sm:$0xff] %vm577, %v4570
    %4627 = vst.msk [vmem:[#allocation2 + $0x8] sm:$0xff] %vm577, %v4571
    %4628 = vst.msk [vmem:[#allocation2 + $0x10] sm:$0xff] %vm577, %v4572
    %4629 = vst.msk [vmem:[#allocation2 + $0x18] sm:$0xff] %vm577, %v4573
    %4630 = vst.msk [vmem:[#allocation2 + $0x20] sm:$0xff] %vm577, %v4574
    %4631 = vst.msk [vmem:[#allocation2 + $0x28] sm:$0xff] %vm577, %v4575
    %4632 = vst.msk [vmem:[#allocation2 + $0x30] sm:$0xff] %vm577, %v4576
    %4633 = vst.msk [vmem:[#allocation2 + $0x38] sm:$0xff] %vm577, %v4577
    %4634 = vst.msk [vmem:[#allocation2 + $0x40] sm:$0xff] %vm577, %v4578
    %4635 = vst.msk [vmem:[#allocation2 + $0x48] sm:$0xff] %vm577, %v4579
    %4636 = vst.msk [vmem:[#allocation2 + $0x50] sm:$0xff] %vm577, %v4580
    %4637 = vst.msk [vmem:[#allocation2 + $0x58] sm:$0xff] %vm577, %v4581
    %4638 = vst.msk [vmem:[#allocation2 + $0x60] sm:$0xff] %vm577, %v4582
    %4639 = vst.msk [vmem:[#allocation2 + $0x68] sm:$0xff] %vm577, %v4583
    %4640 = vst.msk [vmem:[#allocation2 + $0x70] sm:$0xff] %vm577, %v4584
    %4641 = vst.msk [vmem:[#allocation2 + $0x78] sm:$0xff] %vm577, %v4585
    %4642 = vst.msk [vmem:[#allocation2 + $0x80] sm:$0xff] %vm577, %v4586
    %4643 = vst.msk [vmem:[#allocation2 + $0x88] sm:$0xff] %vm577, %v4587
    %4644 = vst.msk [vmem:[#allocation2 + $0x90] sm:$0xff] %vm577, %v4588
    %4645 = vst.msk [vmem:[#allocation2 + $0x98] sm:$0xff] %vm577, %v4589
    %4646 = vst.msk [vmem:[#allocation2 + $0xa0] sm:$0xff] %vm577, %v4590
    %4647 = vst.msk [vmem:[#allocation2 + $0xa8] sm:$0xff] %vm577, %v4591
    %4648 = vst.msk [vmem:[#allocation2 + $0xb0] sm:$0xff] %vm577, %v4592
    %4649 = vst.msk [vmem:[#allocation2 + $0xb8] sm:$0xff] %vm577, %v4593
    %4650 = vst.msk [vmem:[#allocation2 + $0xc0] sm:$0xff] %vm577, %v4594
    %4651 = vst.msk [vmem:[#allocation2 + $0xc8] sm:$0xff] %vm577, %v4595
    %4652 = vst.msk [vmem:[#allocation2 + $0xd0] sm:$0xff] %vm577, %v4596
    %4653 = vst.msk [vmem:[#allocation2 + $0xd8] sm:$0xff] %vm577, %v4597
    %4654 = vst.msk [vmem:[#allocation2 + $0xe0] sm:$0xff] %vm577, %v4598
    %4655 = vst.msk [vmem:[#allocation2 + $0xe8] sm:$0xff] %vm577, %v4599
    %4656 = vst.msk [vmem:[#allocation2 + $0xf0] sm:$0xff] %vm577, %v4600
    %4657 = vst.msk [vmem:[#allocation2 + $0xf8] sm:$0xff] %vm577, %v4601
    %4658 = vst.msk [vmem:[#allocation2 + $0x100] sm:$0xff] %vm577, %v4602
    %4659 = vst.msk [vmem:[#allocation2 + $0x108] sm:$0xff] %vm577, %v4603
    %4660 = vst.msk [vmem:[#allocation2 + $0x110] sm:$0xff] %vm577, %v4604
    %4661 = vst.msk [vmem:[#allocation2 + $0x118] sm:$0xff] %vm577, %v4605
    %4662 = vst.msk [vmem:[#allocation2 + $0x120] sm:$0xff] %vm577, %v4606
    %4663 = vst.msk [vmem:[#allocation2 + $0x128] sm:$0xff] %vm577, %v4607
    %4664 = vst.msk [vmem:[#allocation2 + $0x130] sm:$0xff] %vm577, %v4608
    %4665 = vst.msk [vmem:[#allocation2 + $0x138] sm:$0xff] %vm577, %v4609
    %4666 = vst.msk [vmem:[#allocation2 + $0x140] sm:$0xff] %vm577, %v4610
    %4667 = vst.msk [vmem:[#allocation2 + $0x148] sm:$0xff] %vm577, %v4611
    %4668 = vst.msk [vmem:[#allocation2 + $0x150] sm:$0xff] %vm577, %v4612
    %4669 = vst.msk [vmem:[#allocation2 + $0x158] sm:$0xff] %vm577, %v4613
    %4670 = vst.msk [vmem:[#allocation2 + $0x160] sm:$0xff] %vm577, %v4614
    %4671 = vst.msk [vmem:[#allocation2 + $0x168] sm:$0xff] %vm577, %v4615
    %4672 = vst.msk [vmem:[#allocation2 + $0x170] sm:$0xff] %vm577, %v4616
    %4673 = vst.msk [vmem:[#allocation2 + $0x178] sm:$0xff] %vm577, %v4617
    %4674 = vst.msk [vmem:[#allocation2 + $0x180] sm:$0xff] %vm577, %v4618
    %4675 = vst.msk [vmem:[#allocation2 + $0x188] sm:$0xff] %vm577, %v4619
    %4676 = vst.msk [vmem:[#allocation2 + $0x190] sm:$0xff] %vm577, %v4620
    %4677 = vst.msk [vmem:[#allocation2 + $0x198] sm:$0xff] %vm577, %v4621
    %4678 = vst.msk [vmem:[#allocation2 + $0x1a0] sm:$0xff] %vm577, %v4622
    %4679 = vst.msk [vmem:[#allocation2 + $0x1a8] sm:$0xff] %vm577, %v4623
    %4680 = vst.msk [vmem:[#allocation2 + $0x1b0] sm:$0xff] %vm577, %v4624
    %4681 = vst.msk [vmem:[#allocation2 + $0x1b8] sm:$0xff] %vm577, %v4625
    %v4682 = vld [vmem:[%s0 + $0x8] sm:$0xe]
    %v4683 = vld [vmem:[%s0 + $0xc] sm:$0xf]
    %v4684 = vld [vmem:[%s0 + $0x10] sm:$0xf]
    %v4685 = vld [vmem:[%s0 + $0x14] sm:$0xf]
    %v4686 = vld [vmem:[%s0 + $0x18] sm:$0xf]
    %v4687 = vld [vmem:[%s0 + $0x1c] sm:$0xf]
    %v4688 = vld [vmem:[%s0 + $0x20] sm:$0xf]
    %v4689 = vld [vmem:[%s0 + $0x24] sm:$0xf]
    %v4690 = vld [vmem:[%s0 + $0x28] sm:$0xf]
    %v4691 = vld [vmem:[%s0 + $0x2c] sm:$0xf]
    %v4692 = vld [vmem:[%s0 + $0x30] sm:$0xf]
    %v4693 = vld [vmem:[%s0 + $0x34] sm:$0xf]
    %v4694 = vld [vmem:[%s0 + $0x38] sm:$0xf]
    %v4695 = vld [vmem:[%s0 + $0x3c] sm:$0xf]
    %v4696 = vld [vmem:[%s0 + $0x40] sm:$0xf]
    %v4697 = vld [vmem:[%s0 + $0x44] sm:$0xf]
    %v4698 = vld [vmem:[%s0 + $0x48] sm:$0xf]
    %v4699 = vld [vmem:[%s0 + $0x4c] sm:$0xf]
    %v4700 = vld [vmem:[%s0 + $0x50] sm:$0xf]
    %v4701 = vld [vmem:[%s0 + $0x54] sm:$0xf]
    %v4702 = vld [vmem:[%s0 + $0x58] sm:$0xf]
    %v4703 = vld [vmem:[%s0 + $0x5c] sm:$0xf]
    %v4704 = vld [vmem:[%s0 + $0x60] sm:$0xf]
    %v4705 = vld [vmem:[%s0 + $0x64] sm:$0xf]
    %v4706 = vld [vmem:[%s0 + $0x68] sm:$0xf]
    %v4707 = vld [vmem:[%s0 + $0x6c] sm:$0xf]
    %v4708 = vld [vmem:[%s0 + $0x70] sm:$0xf]
    %v4709 = vld [vmem:[%s0 + $0x74] sm:$0xf]
    %v4710 = vld [vmem:[%s0 + $0x78] sm:$0x1]
    %v4711 = vld [vmem:[%s0 + $0x90] sm:$0xe]
    %v4712 = vld [vmem:[%s0 + $0x94] sm:$0xf]
    %v4713 = vld [vmem:[%s0 + $0x98] sm:$0xf]
    %v4714 = vld [vmem:[%s0 + $0x9c] sm:$0xf]
    %v4715 = vld [vmem:[%s0 + $0xa0] sm:$0xf]
    %v4716 = vld [vmem:[%s0 + $0xa4] sm:$0xf]
    %v4717 = vld [vmem:[%s0 + $0xa8] sm:$0xf]
    %v4718 = vld [vmem:[%s0 + $0xac] sm:$0xf]
    %v4719 = vld [vmem:[%s0 + $0xb0] sm:$0xf]
    %v4720 = vld [vmem:[%s0 + $0xb4] sm:$0xf]
    %v4721 = vld [vmem:[%s0 + $0xb8] sm:$0xf]
    %v4722 = vld [vmem:[%s0 + $0xbc] sm:$0xf]
    %v4723 = vld [vmem:[%s0 + $0xc0] sm:$0xf]
    %v4724 = vld [vmem:[%s0 + $0xc4] sm:$0xf]
    %v4725 = vld [vmem:[%s0 + $0xc8] sm:$0xf]
    %v4726 = vld [vmem:[%s0 + $0xcc] sm:$0xf]
    %v4727 = vld [vmem:[%s0 + $0xd0] sm:$0xf]
    %v4728 = vld [vmem:[%s0 + $0xd4] sm:$0xf]
    %v4729 = vld [vmem:[%s0 + $0xd8] sm:$0xf]
    %v4730 = vld [vmem:[%s0 + $0xdc] sm:$0xf]
    %v4731 = vld [vmem:[%s0 + $0xe0] sm:$0xf]
    %v4732 = vld [vmem:[%s0 + $0xe4] sm:$0xf]
    %v4733 = vld [vmem:[%s0 + $0xe8] sm:$0xf]
    %v4734 = vld [vmem:[%s0 + $0xec] sm:$0xf]
    %v4735 = vld [vmem:[%s0 + $0xf0] sm:$0xf]
    %v4736 = vld [vmem:[%s0 + $0xf4] sm:$0xf]
    %v4737 = vld [vmem:[%s0 + $0xf8] sm:$0xf]
    %v4738 = vld [vmem:[%s0 + $0xfc] sm:$0xf]
    %v4739 = vld [vmem:[%s0 + $0x100] sm:$0x1]
    %v4798 = vrot.slane %v4682, 5
    %v4799 = vrot.slane %v4798, 4
    %v4800 = vrot.slane %v4683, 5
    %v4801 = vsel %vm1979, %v4799, %v4800
    %v4802 = vrot.slane %v4800, 4
    %v4803 = vrot.slane %v4684, 5
    %v4804 = vsel %vm1979, %v4802, %v4803
    %v4805 = vrot.slane %v4803, 4
    %v4806 = vrot.slane %v4685, 5
    %v4807 = vsel %vm1979, %v4805, %v4806
    %v4808 = vrot.slane %v4806, 4
    %v4809 = vrot.slane %v4686, 5
    %v4810 = vsel %vm1979, %v4808, %v4809
    %v4811 = vrot.slane %v4809, 4
    %v4812 = vrot.slane %v4687, 5
    %v4813 = vsel %vm1979, %v4811, %v4812
    %v4814 = vrot.slane %v4812, 4
    %v4815 = vrot.slane %v4688, 5
    %v4816 = vsel %vm1979, %v4814, %v4815
    %v4817 = vrot.slane %v4815, 4
    %v4818 = vrot.slane %v4689, 5
    %v4819 = vsel %vm1979, %v4817, %v4818
    %v4820 = vrot.slane %v4818, 4
    %v4821 = vrot.slane %v4690, 5
    %v4822 = vsel %vm1979, %v4820, %v4821
    %v4823 = vrot.slane %v4821, 4
    %v4824 = vrot.slane %v4691, 5
    %v4825 = vsel %vm1979, %v4823, %v4824
    %v4826 = vrot.slane %v4824, 4
    %v4827 = vrot.slane %v4692, 5
    %v4828 = vsel %vm1979, %v4826, %v4827
    %v4829 = vrot.slane %v4827, 4
    %v4830 = vrot.slane %v4693, 5
    %v4831 = vsel %vm1979, %v4829, %v4830
    %v4832 = vrot.slane %v4830, 4
    %v4833 = vrot.slane %v4694, 5
    %v4834 = vsel %vm1979, %v4832, %v4833
    %v4835 = vrot.slane %v4833, 4
    %v4836 = vrot.slane %v4695, 5
    %v4837 = vsel %vm1979, %v4835, %v4836
    %v4838 = vrot.slane %v4836, 4
    %v4839 = vrot.slane %v4696, 5
    %v4840 = vsel %vm1979, %v4838, %v4839
    %v4841 = vrot.slane %v4839, 4
    %v4842 = vrot.slane %v4697, 5
    %v4843 = vsel %vm1979, %v4841, %v4842
    %v4844 = vrot.slane %v4842, 4
    %v4845 = vrot.slane %v4698, 5
    %v4846 = vsel %vm1979, %v4844, %v4845
    %v4847 = vrot.slane %v4845, 4
    %v4848 = vrot.slane %v4699, 5
    %v4849 = vsel %vm1979, %v4847, %v4848
    %v4850 = vrot.slane %v4848, 4
    %v4851 = vrot.slane %v4700, 5
    %v4852 = vsel %vm1979, %v4850, %v4851
    %v4853 = vrot.slane %v4851, 4
    %v4854 = vrot.slane %v4701, 5
    %v4855 = vsel %vm1979, %v4853, %v4854
    %v4856 = vrot.slane %v4854, 4
    %v4857 = vrot.slane %v4702, 5
    %v4858 = vsel %vm1979, %v4856, %v4857
    %v4859 = vrot.slane %v4857, 4
    %v4860 = vrot.slane %v4703, 5
    %v4861 = vsel %vm1979, %v4859, %v4860
    %v4862 = vrot.slane %v4860, 4
    %v4863 = vrot.slane %v4704, 5
    %v4864 = vsel %vm1979, %v4862, %v4863
    %v4865 = vrot.slane %v4863, 4
    %v4866 = vrot.slane %v4705, 5
    %v4867 = vsel %vm1979, %v4865, %v4866
    %v4868 = vrot.slane %v4866, 4
    %v4869 = vrot.slane %v4706, 5
    %v4870 = vsel %vm1979, %v4868, %v4869
    %v4871 = vrot.slane %v4869, 4
    %v4872 = vrot.slane %v4707, 5
    %v4873 = vsel %vm1979, %v4871, %v4872
    %v4874 = vrot.slane %v4872, 4
    %v4875 = vrot.slane %v4708, 5
    %v4876 = vsel %vm1979, %v4874, %v4875
    %v4877 = vrot.slane %v4875, 4
    %v4878 = vrot.slane %v4709, 5
    %v4879 = vsel %vm1979, %v4877, %v4878
    %v4880 = vrot.slane %v4878, 4
    %v4881 = vrot.slane %v4710, 5
    %v4882 = vsel %vm1979, %v4880, %v4881
    %v4883 = vrot.slane %v4711, 5
    %v4884 = vrot.slane %v4883, 4
    %v4885 = vrot.slane %v4712, 5
    %v4886 = vsel %vm1979, %v4884, %v4885
    %v4887 = vrot.slane %v4885, 4
    %v4888 = vrot.slane %v4713, 5
    %v4889 = vsel %vm1979, %v4887, %v4888
    %v4890 = vrot.slane %v4888, 4
    %v4891 = vrot.slane %v4714, 5
    %v4892 = vsel %vm1979, %v4890, %v4891
    %v4893 = vrot.slane %v4891, 4
    %v4894 = vrot.slane %v4715, 5
    %v4895 = vsel %vm1979, %v4893, %v4894
    %v4896 = vrot.slane %v4894, 4
    %v4897 = vrot.slane %v4716, 5
    %v4898 = vsel %vm1979, %v4896, %v4897
    %v4899 = vrot.slane %v4897, 4
    %v4900 = vrot.slane %v4717, 5
    %v4901 = vsel %vm1979, %v4899, %v4900
    %v4902 = vrot.slane %v4900, 4
    %v4903 = vrot.slane %v4718, 5
    %v4904 = vsel %vm1979, %v4902, %v4903
    %v4905 = vrot.slane %v4903, 4
    %v4906 = vrot.slane %v4719, 5
    %v4907 = vsel %vm1979, %v4905, %v4906
    %v4908 = vrot.slane %v4906, 4
    %v4909 = vrot.slane %v4720, 5
    %v4910 = vsel %vm1979, %v4908, %v4909
    %v4911 = vrot.slane %v4909, 4
    %v4912 = vrot.slane %v4721, 5
    %v4913 = vsel %vm1979, %v4911, %v4912
    %v4914 = vrot.slane %v4912, 4
    %v4915 = vrot.slane %v4722, 5
    %v4916 = vsel %vm1979, %v4914, %v4915
    %v4917 = vrot.slane %v4915, 4
    %v4918 = vrot.slane %v4723, 5
    %v4919 = vsel %vm1979, %v4917, %v4918
    %v4920 = vrot.slane %v4918, 4
    %v4921 = vrot.slane %v4724, 5
    %v4922 = vsel %vm1979, %v4920, %v4921
    %v4923 = vrot.slane %v4921, 4
    %v4924 = vrot.slane %v4725, 5
    %v4925 = vsel %vm1979, %v4923, %v4924
    %v4926 = vrot.slane %v4924, 4
    %v4927 = vrot.slane %v4726, 5
    %v4928 = vsel %vm1979, %v4926, %v4927
    %v4929 = vrot.slane %v4927, 4
    %v4930 = vrot.slane %v4727, 5
    %v4931 = vsel %vm1979, %v4929, %v4930
    %v4932 = vrot.slane %v4930, 4
    %v4933 = vrot.slane %v4728, 5
    %v4934 = vsel %vm1979, %v4932, %v4933
    %v4935 = vrot.slane %v4933, 4
    %v4936 = vrot.slane %v4729, 5
    %v4937 = vsel %vm1979, %v4935, %v4936
    %v4938 = vrot.slane %v4936, 4
    %v4939 = vrot.slane %v4730, 5
    %v4940 = vsel %vm1979, %v4938, %v4939
    %v4941 = vrot.slane %v4939, 4
    %v4942 = vrot.slane %v4731, 5
    %v4943 = vsel %vm1979, %v4941, %v4942
    %v4944 = vrot.slane %v4942, 4
    %v4945 = vrot.slane %v4732, 5
    %v4946 = vsel %vm1979, %v4944, %v4945
    %v4947 = vrot.slane %v4945, 4
    %v4948 = vrot.slane %v4733, 5
    %v4949 = vsel %vm1979, %v4947, %v4948
    %v4950 = vrot.slane %v4948, 4
    %v4951 = vrot.slane %v4734, 5
    %v4952 = vsel %vm1979, %v4950, %v4951
    %v4953 = vrot.slane %v4951, 4
    %v4954 = vrot.slane %v4735, 5
    %v4955 = vsel %vm1979, %v4953, %v4954
    %v4956 = vrot.slane %v4954, 4
    %v4957 = vrot.slane %v4736, 5
    %v4958 = vsel %vm1979, %v4956, %v4957
    %v4959 = vrot.slane %v4957, 4
    %v4960 = vrot.slane %v4737, 5
    %v4961 = vsel %vm1979, %v4959, %v4960
    %v4962 = vrot.slane %v4960, 4
    %v4963 = vrot.slane %v4738, 5
    %v4964 = vsel %vm1979, %v4962, %v4963
    %v4965 = vrot.slane %v4963, 4
    %v4966 = vrot.slane %v4739, 5
    %v4967 = vsel %vm1979, %v4965, %v4966
    %s4968 = scalar_lea.vmem %s1, 10
    %v4969 = vld [vmem:[%s4968] sm:$0x3]
    %v4970 = vunpack.c.l.b16 %v4801
    %v4971 = vunpack.c.l.b16 %v4804
    %v4972 = vunpack.c.l.b16 %v4807
    %v4973 = vunpack.c.l.b16 %v4810
    %v4974 = vunpack.c.l.b16 %v4813
    %v4975 = vunpack.c.l.b16 %v4816
    %v4976 = vunpack.c.l.b16 %v4819
    %v4977 = vunpack.c.l.b16 %v4822
    %v4978 = vunpack.c.l.b16 %v4825
    %v4979 = vunpack.c.l.b16 %v4828
    %v4980 = vunpack.c.l.b16 %v4831
    %v4981 = vunpack.c.l.b16 %v4834
    %v4982 = vunpack.c.l.b16 %v4837
    %v4983 = vunpack.c.l.b16 %v4840
    %v4984 = vunpack.c.l.b16 %v4843
    %v4985 = vunpack.c.l.b16 %v4846
    %v4986 = vunpack.c.l.b16 %v4849
    %v4987 = vunpack.c.l.b16 %v4852
    %v4988 = vunpack.c.l.b16 %v4855
    %v4989 = vunpack.c.l.b16 %v4858
    %v4990 = vunpack.c.l.b16 %v4861
    %v4991 = vunpack.c.l.b16 %v4864
    %v4992 = vunpack.c.l.b16 %v4867
    %v4993 = vunpack.c.l.b16 %v4870
    %v4994 = vunpack.c.l.b16 %v4873
    %v4995 = vunpack.c.l.b16 %v4876
    %v4996 = vunpack.c.l.b16 %v4879
    %v4997 = vunpack.c.l.b16 %v4882
    %v4998 = vunpack.c.l.b16 %v4886
    %v4999 = vunpack.c.l.b16 %v4889
    %v5000 = vunpack.c.l.b16 %v4892
    %v5001 = vunpack.c.l.b16 %v4895
    %v5002 = vunpack.c.l.b16 %v4898
    %v5003 = vunpack.c.l.b16 %v4901
    %v5004 = vunpack.c.l.b16 %v4904
    %v5005 = vunpack.c.l.b16 %v4907
    %v5006 = vunpack.c.l.b16 %v4910
    %v5007 = vunpack.c.l.b16 %v4913
    %v5008 = vunpack.c.l.b16 %v4916
    %v5009 = vunpack.c.l.b16 %v4919
    %v5010 = vunpack.c.l.b16 %v4922
    %v5011 = vunpack.c.l.b16 %v4925
    %v5012 = vunpack.c.l.b16 %v4928
    %v5013 = vunpack.c.l.b16 %v4931
    %v5014 = vunpack.c.l.b16 %v4934
    %v5015 = vunpack.c.l.b16 %v4937
    %v5016 = vunpack.c.l.b16 %v4940
    %v5017 = vunpack.c.l.b16 %v4943
    %v5018 = vunpack.c.l.b16 %v4946
    %v5019 = vunpack.c.l.b16 %v4949
    %v5020 = vunpack.c.l.b16 %v4952
    %v5021 = vunpack.c.l.b16 %v4955
    %v5022 = vunpack.c.l.b16 %v4958
    %v5023 = vunpack.c.l.b16 %v4961
    %v5024 = vunpack.c.l.b16 %v4964
    %v5025 = vunpack.c.l.b16 %v4967
    %v5026 = vpack.c.b16 %v4971, %v4970
    %v5027 = vpack.c.b16 %v4973, %v4972
    %v5028 = vpack.c.b16 %v4975, %v4974
    %v5029 = vpack.c.b16 %v4977, %v4976
    %v5030 = vpack.c.b16 %v4979, %v4978
    %v5031 = vpack.c.b16 %v4981, %v4980
    %v5032 = vpack.c.b16 %v4983, %v4982
    %v5033 = vpack.c.b16 %v4985, %v4984
    %v5034 = vpack.c.b16 %v4987, %v4986
    %v5035 = vpack.c.b16 %v4989, %v4988
    %v5036 = vpack.c.b16 %v4991, %v4990
    %v5037 = vpack.c.b16 %v4993, %v4992
    %v5038 = vpack.c.b16 %v4995, %v4994
    %v5039 = vpack.c.b16 %v4997, %v4996
    %v5040 = vpack.c.b16 %v4999, %v4998
    %v5041 = vpack.c.b16 %v5001, %v5000
    %v5042 = vpack.c.b16 %v5003, %v5002
    %v5043 = vpack.c.b16 %v5005, %v5004
    %v5044 = vpack.c.b16 %v5007, %v5006
    %v5045 = vpack.c.b16 %v5009, %v5008
    %v5046 = vpack.c.b16 %v5011, %v5010
    %v5047 = vpack.c.b16 %v5013, %v5012
    %v5048 = vpack.c.b16 %v5015, %v5014
    %v5049 = vpack.c.b16 %v5017, %v5016
    %v5050 = vpack.c.b16 %v5019, %v5018
    %v5051 = vpack.c.b16 %v5021, %v5020
    %v5052 = vpack.c.b16 %v5023, %v5022
    %v5053 = vpack.c.b16 %v5025, %v5024
    %v5055 = vsel %vm231, %v5026, 0
    %v5058 = vsel %vm231, %v5027, 0
    %v5061 = vsel %vm231, %v5028, 0
    %v5064 = vsel %vm231, %v5029, 0
    %v5067 = vsel %vm231, %v5030, 0
    %v5070 = vsel %vm231, %v5031, 0
    %v5073 = vsel %vm231, %v5032, 0
    %v5076 = vsel %vm231, %v5033, 0
    %v5079 = vsel %vm231, %v5034, 0
    %v5082 = vsel %vm231, %v5035, 0
    %v5085 = vsel %vm231, %v5036, 0
    %v5088 = vsel %vm231, %v5037, 0
    %v5091 = vsel %vm231, %v5038, 0
    %v5094 = vsel %vm231, %v5039, 0
    %v5097 = vsel %vm231, %v5040, 0
    %v5100 = vsel %vm231, %v5041, 0
    %v5103 = vsel %vm231, %v5042, 0
    %v5106 = vsel %vm231, %v5043, 0
    %v5109 = vsel %vm231, %v5044, 0
    %v5112 = vsel %vm231, %v5045, 0
    %v5115 = vsel %vm231, %v5046, 0
    %v5118 = vsel %vm231, %v5047, 0
    %v5121 = vsel %vm231, %v5048, 0
    %v5124 = vsel %vm231, %v5049, 0
    %v5127 = vsel %vm231, %v5050, 0
    %v5130 = vsel %vm231, %v5051, 0
    %v5133 = vsel %vm231, %v5052, 0
    %v5136 = vsel %vm231, %v5053, 0
    %v5139 = vsel %vm316, %v4969, 0
    %5141 = vmatprep.subr.bf16.mxu0 0
    %5142 = vmatpush1.bf16.msra.mxu0 %v5139
    %5143 = vmatprep.subr.bf16.mxu0 0
    %5144 = vmatpush1.bf16.msra.mxu0 0
    %5145 = vmatprep.subr.bf16.mxu0 0
    %5146 = vmatpush1.bf16.msra.mxu0 0
    %5147 = vmatprep.subr.bf16.mxu0 0
    %5148 = vmatpush1.bf16.msra.mxu0 0
    %5149 = vmatprep.subr.bf16.mxu0 0
    %5150 = vmatpush1.bf16.msra.mxu0 0
    %5151 = vmatprep.subr.bf16.mxu0 0
    %5152 = vmatpush1.bf16.msra.mxu0 0
    %5153 = vmatprep.subr.bf16.mxu0 0
    %5154 = vmatpush1.bf16.msra.mxu0 0
    %5155 = vmatprep.subr.bf16.mxu0 0
    %5156 = vmatpush1.bf16.msra.mxu0 0
    %5157 = vmatprep.subr.bf16.mxu0 0
    %5158 = vmatpush1.bf16.msra.mxu0 0
    %5159 = vmatprep.subr.bf16.mxu0 0
    %5160 = vmatpush1.bf16.msra.mxu0 0
    %5161 = vmatprep.subr.bf16.mxu0 0
    %5162 = vmatpush1.bf16.msra.mxu0 0
    %5163 = vmatprep.subr.bf16.mxu0 0
    %5164 = vmatpush1.bf16.msra.mxu0 0
    %5165 = vmatprep.subr.bf16.mxu0 0
    %5166 = vmatpush1.bf16.msra.mxu0 0
    %5167 = vmatprep.subr.bf16.mxu0 0
    %5168 = vmatpush1.bf16.msra.mxu0 0
    %5169 = vmatprep.subr.bf16.mxu0 0
    %5170 = vmatpush1.bf16.msra.mxu0 0
    %5171 = vmatprep.subr.bf16.mxu0 0
    %5172 = vmatpush1.bf16.msra.mxu0 0
    %5173 = vmatprep.mubr.bf16.mxu0 0
    %5174 = vmatmul.mubr.bf16.gmra.mrb[0].mxu0 %v5055
    %v5175 = vpop.f32.mrb[0].mxu0
    %v5176 = vadd.f32 0.0, %v5175
    %v5177 = vpop.f32.mrb[0].mxu0
    %v5178 = vpop.f32.mrb[0].mxu0
    %v5179 = vadd.f32 0.0, %v5178
    %v5180 = vpop.f32.mrb[0].mxu0
    %5181 = vmatprep.mubr.bf16.mxu0 0
    %5182 = vmatmul.mubr.bf16.gmra.mrb[0].mxu0 %v5058
    %v5183 = vpop.f32.mrb[0].mxu0
    %v5184 = vadd.f32 0.0, %v5183
    %v5185 = vpop.f32.mrb[0].mxu0
    %v5186 = vpop.f32.mrb[0].mxu0
    %v5187 = vadd.f32 0.0, %v5186
    %v5188 = vpop.f32.mrb[0].mxu0
    %5189 = vmatprep.mubr.bf16.mxu0 0
    %5190 = vmatmul.mubr.bf16.gmra.mrb[0].mxu0 %v5061
    %v5191 = vpop.f32.mrb[0].mxu0
    %v5192 = vadd.f32 0.0, %v5191
    %v5193 = vpop.f32.mrb[0].mxu0
    %v5194 = vpop.f32.mrb[0].mxu0
    %v5195 = vadd.f32 0.0, %v5194
    %v5196 = vpop.f32.mrb[0].mxu0
    %5197 = vmatprep.mubr.bf16.mxu0 0
    %5198 = vmatmul.mubr.bf16.gmra.mrb[0].mxu0 %v5064
    %v5199 = vpop.f32.mrb[0].mxu0
    %v5200 = vadd.f32 0.0, %v5199
    %v5201 = vpop.f32.mrb[0].mxu0
    %v5202 = vpop.f32.mrb[0].mxu0
    %v5203 = vadd.f32 0.0, %v5202
    %v5204 = vpop.f32.mrb[0].mxu0
    %5205 = vmatprep.mubr.bf16.mxu0 0
    %5206 = vmatmul.mubr.bf16.gmra.mrb[0].mxu0 %v5067
    %v5207 = vpop.f32.mrb[0].mxu0
    %v5208 = vadd.f32 0.0, %v5207
    %v5209 = vpop.f32.mrb[0].mxu0
    %v5210 = vpop.f32.mrb[0].mxu0
    %v5211 = vadd.f32 0.0, %v5210
    %v5212 = vpop.f32.mrb[0].mxu0
    %5213 = vmatprep.mubr.bf16.mxu0 0
    %5214 = vmatmul.mubr.bf16.gmra.mrb[0].mxu0 %v5070
    %v5215 = vpop.f32.mrb[0].mxu0
    %v5216 = vadd.f32 0.0, %v5215
    %v5217 = vpop.f32.mrb[0].mxu0
    %v5218 = vpop.f32.mrb[0].mxu0
    %v5219 = vadd.f32 0.0, %v5218
    %v5220 = vpop.f32.mrb[0].mxu0
    %5221 = vmatprep.mubr.bf16.mxu0 0
    %5222 = vmatmul.mubr.bf16.gmra.mrb[0].mxu0 %v5073
    %v5223 = vpop.f32.mrb[0].mxu0
    %v5224 = vadd.f32 0.0, %v5223
    %v5225 = vpop.f32.mrb[0].mxu0
    %v5226 = vpop.f32.mrb[0].mxu0
    %v5227 = vadd.f32 0.0, %v5226
    %v5228 = vpop.f32.mrb[0].mxu0
    %5229 = vmatprep.mubr.bf16.mxu0 0
    %5230 = vmatmul.mubr.bf16.gmra.mrb[0].mxu0 %v5076
    %v5231 = vpop.f32.mrb[0].mxu0
    %v5232 = vadd.f32 0.0, %v5231
    %v5233 = vpop.f32.mrb[0].mxu0
    %v5234 = vpop.f32.mrb[0].mxu0
    %v5235 = vadd.f32 0.0, %v5234
    %v5236 = vpop.f32.mrb[0].mxu0
    %5237 = vmatprep.mubr.bf16.mxu0 0
    %5238 = vmatmul.mubr.bf16.gmra.mrb[0].mxu0 %v5079
    %v5239 = vpop.f32.mrb[0].mxu0
    %v5240 = vadd.f32 0.0, %v5239
    %v5241 = vpop.f32.mrb[0].mxu0
    %v5242 = vpop.f32.mrb[0].mxu0
    %v5243 = vadd.f32 0.0, %v5242
    %v5244 = vpop.f32.mrb[0].mxu0
    %5245 = vmatprep.mubr.bf16.mxu0 0
    %5246 = vmatmul.mubr.bf16.gmra.mrb[0].mxu0 %v5082
    %v5247 = vpop.f32.mrb[0].mxu0
    %v5248 = vadd.f32 0.0, %v5247
    %v5249 = vpop.f32.mrb[0].mxu0
    %v5250 = vpop.f32.mrb[0].mxu0
    %v5251 = vadd.f32 0.0, %v5250
    %v5252 = vpop.f32.mrb[0].mxu0
    %5253 = vmatprep.mubr.bf16.mxu0 0
    %5254 = vmatmul.mubr.bf16.gmra.mrb[0].mxu0 %v5085
    %v5255 = vpop.f32.mrb[0].mxu0
    %v5256 = vadd.f32 0.0, %v5255
    %v5257 = vpop.f32.mrb[0].mxu0
    %v5258 = vpop.f32.mrb[0].mxu0
    %v5259 = vadd.f32 0.0, %v5258
    %v5260 = vpop.f32.mrb[0].mxu0
    %5261 = vmatprep.mubr.bf16.mxu0 0
    %5262 = vmatmul.mubr.bf16.gmra.mrb[0].mxu0 %v5088
    %v5263 = vpop.f32.mrb[0].mxu0
    %v5264 = vadd.f32 0.0, %v5263
    %v5265 = vpop.f32.mrb[0].mxu0
    %v5266 = vpop.f32.mrb[0].mxu0
    %v5267 = vadd.f32 0.0, %v5266
    %v5268 = vpop.f32.mrb[0].mxu0
    %5269 = vmatprep.mubr.bf16.mxu0 0
    %5270 = vmatmul.mubr.bf16.gmra.mrb[0].mxu0 %v5091
    %v5271 = vpop.f32.mrb[0].mxu0
    %v5272 = vadd.f32 0.0, %v5271
    %v5273 = vpop.f32.mrb[0].mxu0
    %v5274 = vpop.f32.mrb[0].mxu0
    %v5275 = vadd.f32 0.0, %v5274
    %v5276 = vpop.f32.mrb[0].mxu0
    %5277 = vmatprep.mubr.bf16.mxu0 0
    %5278 = vmatmul.mubr.bf16.gmra.mrb[0].mxu0 %v5094
    %v5279 = vpop.f32.mrb[0].mxu0
    %v5280 = vadd.f32 0.0, %v5279
    %v5281 = vpop.f32.mrb[0].mxu0
    %v5282 = vpop.f32.mrb[0].mxu0
    %v5283 = vadd.f32 0.0, %v5282
    %v5284 = vpop.f32.mrb[0].mxu0
    %5285 = vmatprep.mubr.bf16.mxu0 0
    %5286 = vmatmul.mubr.bf16.gmra.mrb[0].mxu0 %v5097
    %v5287 = vpop.f32.mrb[0].mxu0
    %v5288 = vadd.f32 0.0, %v5287
    %v5289 = vpop.f32.mrb[0].mxu0
    %v5290 = vpop.f32.mrb[0].mxu0
    %v5291 = vadd.f32 0.0, %v5290
    %v5292 = vpop.f32.mrb[0].mxu0
    %5293 = vmatprep.mubr.bf16.mxu0 0
    %5294 = vmatmul.mubr.bf16.gmra.mrb[0].mxu0 %v5100
    %v5295 = vpop.f32.mrb[0].mxu0
    %v5296 = vadd.f32 0.0, %v5295
    %v5297 = vpop.f32.mrb[0].mxu0
    %v5298 = vpop.f32.mrb[0].mxu0
    %v5299 = vadd.f32 0.0, %v5298
    %v5300 = vpop.f32.mrb[0].mxu0
    %5301 = vmatprep.mubr.bf16.mxu0 0
    %5302 = vmatmul.mubr.bf16.gmra.mrb[0].mxu0 %v5103
    %v5303 = vpop.f32.mrb[0].mxu0
    %v5304 = vadd.f32 0.0, %v5303
    %v5305 = vpop.f32.mrb[0].mxu0
    %v5306 = vpop.f32.mrb[0].mxu0
    %v5307 = vadd.f32 0.0, %v5306
    %v5308 = vpop.f32.mrb[0].mxu0
    %5309 = vmatprep.mubr.bf16.mxu0 0
    %5310 = vmatmul.mubr.bf16.gmra.mrb[0].mxu0 %v5106
    %v5311 = vpop.f32.mrb[0].mxu0
    %v5312 = vadd.f32 0.0, %v5311
    %v5313 = vpop.f32.mrb[0].mxu0
    %v5314 = vpop.f32.mrb[0].mxu0
    %v5315 = vadd.f32 0.0, %v5314
    %v5316 = vpop.f32.mrb[0].mxu0
    %5317 = vmatprep.mubr.bf16.mxu0 0
    %5318 = vmatmul.mubr.bf16.gmra.mrb[0].mxu0 %v5109
    %v5319 = vpop.f32.mrb[0].mxu0
    %v5320 = vadd.f32 0.0, %v5319
    %v5321 = vpop.f32.mrb[0].mxu0
    %v5322 = vpop.f32.mrb[0].mxu0
    %v5323 = vadd.f32 0.0, %v5322
    %v5324 = vpop.f32.mrb[0].mxu0
    %5325 = vmatprep.mubr.bf16.mxu0 0
    %5326 = vmatmul.mubr.bf16.gmra.mrb[0].mxu0 %v5112
    %v5327 = vpop.f32.mrb[0].mxu0
    %v5328 = vadd.f32 0.0, %v5327
    %v5329 = vpop.f32.mrb[0].mxu0
    %v5330 = vpop.f32.mrb[0].mxu0
    %v5331 = vadd.f32 0.0, %v5330
    %v5332 = vpop.f32.mrb[0].mxu0
    %5333 = vmatprep.mubr.bf16.mxu0 0
    %5334 = vmatmul.mubr.bf16.gmra.mrb[0].mxu0 %v5115
    %v5335 = vpop.f32.mrb[0].mxu0
    %v5336 = vadd.f32 0.0, %v5335
    %v5337 = vpop.f32.mrb[0].mxu0
    %v5338 = vpop.f32.mrb[0].mxu0
    %v5339 = vadd.f32 0.0, %v5338
    %v5340 = vpop.f32.mrb[0].mxu0
    %5341 = vmatprep.mubr.bf16.mxu0 0
    %5342 = vmatmul.mubr.bf16.gmra.mrb[0].mxu0 %v5118
    %v5343 = vpop.f32.mrb[0].mxu0
    %v5344 = vadd.f32 0.0, %v5343
    %v5345 = vpop.f32.mrb[0].mxu0
    %v5346 = vpop.f32.mrb[0].mxu0
    %v5347 = vadd.f32 0.0, %v5346
    %v5348 = vpop.f32.mrb[0].mxu0
    %5349 = vmatprep.mubr.bf16.mxu0 0
    %5350 = vmatmul.mubr.bf16.gmra.mrb[0].mxu0 %v5121
    %v5351 = vpop.f32.mrb[0].mxu0
    %v5352 = vadd.f32 0.0, %v5351
    %v5353 = vpop.f32.mrb[0].mxu0
    %v5354 = vpop.f32.mrb[0].mxu0
    %v5355 = vadd.f32 0.0, %v5354
    %v5356 = vpop.f32.mrb[0].mxu0
    %5357 = vmatprep.mubr.bf16.mxu0 0
    %5358 = vmatmul.mubr.bf16.gmra.mrb[0].mxu0 %v5124
    %v5359 = vpop.f32.mrb[0].mxu0
    %v5360 = vadd.f32 0.0, %v5359
    %v5361 = vpop.f32.mrb[0].mxu0
    %v5362 = vpop.f32.mrb[0].mxu0
    %v5363 = vadd.f32 0.0, %v5362
    %v5364 = vpop.f32.mrb[0].mxu0
    %5365 = vmatprep.mubr.bf16.mxu0 0
    %5366 = vmatmul.mubr.bf16.gmra.mrb[0].mxu0 %v5127
    %v5367 = vpop.f32.mrb[0].mxu0
    %v5368 = vadd.f32 0.0, %v5367
    %v5369 = vpop.f32.mrb[0].mxu0
    %v5370 = vpop.f32.mrb[0].mxu0
    %v5371 = vadd.f32 0.0, %v5370
    %v5372 = vpop.f32.mrb[0].mxu0
    %5373 = vmatprep.mubr.bf16.mxu0 0
    %5374 = vmatmul.mubr.bf16.gmra.mrb[0].mxu0 %v5130
    %v5375 = vpop.f32.mrb[0].mxu0
    %v5376 = vadd.f32 0.0, %v5375
    %v5377 = vpop.f32.mrb[0].mxu0
    %v5378 = vpop.f32.mrb[0].mxu0
    %v5379 = vadd.f32 0.0, %v5378
    %v5380 = vpop.f32.mrb[0].mxu0
    %5381 = vmatprep.mubr.bf16.mxu0 0
    %5382 = vmatmul.mubr.bf16.gmra.mrb[0].mxu0 %v5133
    %v5383 = vpop.f32.mrb[0].mxu0
    %v5384 = vadd.f32 0.0, %v5383
    %v5385 = vpop.f32.mrb[0].mxu0
    %v5386 = vpop.f32.mrb[0].mxu0
    %v5387 = vadd.f32 0.0, %v5386
    %v5388 = vpop.f32.mrb[0].mxu0
    %5389 = vmatprep.mubr.bf16.mxu0 0
    %5390 = vmatmul.mubr.bf16.gmra.mrb[0].mxu0 %v5136
    %v5391 = vpop.f32.mrb[0].mxu0
    %v5392 = vadd.f32 0.0, %v5391
    %v5393 = vpop.f32.mrb[0].mxu0
    %v5394 = vpop.f32.mrb[0].mxu0
    %v5395 = vadd.f32 0.0, %v5394
    %v5396 = vpop.f32.mrb[0].mxu0
    %5397 = vdwg.mxu0
    %v5398 = vld [vmem:[#allocation2] sm:$0xff]
    %v5399 = vld [vmem:[#allocation2 + $0x8] sm:$0xff]
    %v5400 = vld [vmem:[#allocation2 + $0x10] sm:$0xff]
    %v5401 = vld [vmem:[#allocation2 + $0x18] sm:$0xff]
    %v5402 = vld [vmem:[#allocation2 + $0x20] sm:$0xff]
    %v5403 = vld [vmem:[#allocation2 + $0x28] sm:$0xff]
    %v5404 = vld [vmem:[#allocation2 + $0x30] sm:$0xff]
    %v5405 = vld [vmem:[#allocation2 + $0x38] sm:$0xff]
    %v5406 = vld [vmem:[#allocation2 + $0x40] sm:$0xff]
    %v5407 = vld [vmem:[#allocation2 + $0x48] sm:$0xff]
    %v5408 = vld [vmem:[#allocation2 + $0x50] sm:$0xff]
    %v5409 = vld [vmem:[#allocation2 + $0x58] sm:$0xff]
    %v5410 = vld [vmem:[#allocation2 + $0x60] sm:$0xff]
    %v5411 = vld [vmem:[#allocation2 + $0x68] sm:$0xff]
    %v5412 = vld [vmem:[#allocation2 + $0x70] sm:$0xff]
    %v5413 = vld [vmem:[#allocation2 + $0x78] sm:$0xff]
    %v5414 = vld [vmem:[#allocation2 + $0x80] sm:$0xff]
    %v5415 = vld [vmem:[#allocation2 + $0x88] sm:$0xff]
    %v5416 = vld [vmem:[#allocation2 + $0x90] sm:$0xff]
    %v5417 = vld [vmem:[#allocation2 + $0x98] sm:$0xff]
    %v5418 = vld [vmem:[#allocation2 + $0xa0] sm:$0xff]
    %v5419 = vld [vmem:[#allocation2 + $0xa8] sm:$0xff]
    %v5420 = vld [vmem:[#allocation2 + $0xb0] sm:$0xff]
    %v5421 = vld [vmem:[#allocation2 + $0xb8] sm:$0xff]
    %v5422 = vld [vmem:[#allocation2 + $0xc0] sm:$0xff]
    %v5423 = vld [vmem:[#allocation2 + $0xc8] sm:$0xff]
    %v5424 = vld [vmem:[#allocation2 + $0xd0] sm:$0xff]
    %v5425 = vld [vmem:[#allocation2 + $0xd8] sm:$0xff]
    %v5426 = vld [vmem:[#allocation2 + $0xe0] sm:$0xff]
    %v5427 = vld [vmem:[#allocation2 + $0xe8] sm:$0xff]
    %v5428 = vld [vmem:[#allocation2 + $0xf0] sm:$0xff]
    %v5429 = vld [vmem:[#allocation2 + $0xf8] sm:$0xff]
    %v5430 = vld [vmem:[#allocation2 + $0x100] sm:$0xff]
    %v5431 = vld [vmem:[#allocation2 + $0x108] sm:$0xff]
    %v5432 = vld [vmem:[#allocation2 + $0x110] sm:$0xff]
    %v5433 = vld [vmem:[#allocation2 + $0x118] sm:$0xff]
    %v5434 = vld [vmem:[#allocation2 + $0x120] sm:$0xff]
    %v5435 = vld [vmem:[#allocation2 + $0x128] sm:$0xff]
    %v5436 = vld [vmem:[#allocation2 + $0x130] sm:$0xff]
    %v5437 = vld [vmem:[#allocation2 + $0x138] sm:$0xff]
    %v5438 = vld [vmem:[#allocation2 + $0x140] sm:$0xff]
    %v5439 = vld [vmem:[#allocation2 + $0x148] sm:$0xff]
    %v5440 = vld [vmem:[#allocation2 + $0x150] sm:$0xff]
    %v5441 = vld [vmem:[#allocation2 + $0x158] sm:$0xff]
    %v5442 = vld [vmem:[#allocation2 + $0x160] sm:$0xff]
    %v5443 = vld [vmem:[#allocation2 + $0x168] sm:$0xff]
    %v5444 = vld [vmem:[#allocation2 + $0x170] sm:$0xff]
    %v5445 = vld [vmem:[#allocation2 + $0x178] sm:$0xff]
    %v5446 = vld [vmem:[#allocation2 + $0x180] sm:$0xff]
    %v5447 = vld [vmem:[#allocation2 + $0x188] sm:$0xff]
    %v5448 = vld [vmem:[#allocation2 + $0x190] sm:$0xff]
    %v5449 = vld [vmem:[#allocation2 + $0x198] sm:$0xff]
    %v5450 = vld [vmem:[#allocation2 + $0x1a0] sm:$0xff]
    %v5451 = vld [vmem:[#allocation2 + $0x1a8] sm:$0xff]
    %v5452 = vld [vmem:[#allocation2 + $0x1b0] sm:$0xff]
    %v5453 = vld [vmem:[#allocation2 + $0x1b8] sm:$0xff]
    %v5454 = vadd.f32 %v5398, %v5176
    %v5455 = vadd.f32 %v5399, %v5179
    %v5456 = vadd.f32 %v5400, %v5184
    %v5457 = vadd.f32 %v5401, %v5187
    %v5458 = vadd.f32 %v5402, %v5192
    %v5459 = vadd.f32 %v5403, %v5195
    %v5460 = vadd.f32 %v5404, %v5200
    %v5461 = vadd.f32 %v5405, %v5203
    %v5462 = vadd.f32 %v5406, %v5208
    %v5463 = vadd.f32 %v5407, %v5211
    %v5464 = vadd.f32 %v5408, %v5216
    %v5465 = vadd.f32 %v5409, %v5219
    %v5466 = vadd.f32 %v5410, %v5224
    %v5467 = vadd.f32 %v5411, %v5227
    %v5468 = vadd.f32 %v5412, %v5232
    %v5469 = vadd.f32 %v5413, %v5235
    %v5470 = vadd.f32 %v5414, %v5240
    %v5471 = vadd.f32 %v5415, %v5243
    %v5472 = vadd.f32 %v5416, %v5248
    %v5473 = vadd.f32 %v5417, %v5251
    %v5474 = vadd.f32 %v5418, %v5256
    %v5475 = vadd.f32 %v5419, %v5259
    %v5476 = vadd.f32 %v5420, %v5264
    %v5477 = vadd.f32 %v5421, %v5267
    %v5478 = vadd.f32 %v5422, %v5272
    %v5479 = vadd.f32 %v5423, %v5275
    %v5480 = vadd.f32 %v5424, %v5280
    %v5481 = vadd.f32 %v5425, %v5283
    %v5482 = vadd.f32 %v5426, %v5288
    %v5483 = vadd.f32 %v5427, %v5291
    %v5484 = vadd.f32 %v5428, %v5296
    %v5485 = vadd.f32 %v5429, %v5299
    %v5486 = vadd.f32 %v5430, %v5304
    %v5487 = vadd.f32 %v5431, %v5307
    %v5488 = vadd.f32 %v5432, %v5312
    %v5489 = vadd.f32 %v5433, %v5315
    %v5490 = vadd.f32 %v5434, %v5320
    %v5491 = vadd.f32 %v5435, %v5323
    %v5492 = vadd.f32 %v5436, %v5328
    %v5493 = vadd.f32 %v5437, %v5331
    %v5494 = vadd.f32 %v5438, %v5336
    %v5495 = vadd.f32 %v5439, %v5339
    %v5496 = vadd.f32 %v5440, %v5344
    %v5497 = vadd.f32 %v5441, %v5347
    %v5498 = vadd.f32 %v5442, %v5352
    %v5499 = vadd.f32 %v5443, %v5355
    %v5500 = vadd.f32 %v5444, %v5360
    %v5501 = vadd.f32 %v5445, %v5363
    %v5502 = vadd.f32 %v5446, %v5368
    %v5503 = vadd.f32 %v5447, %v5371
    %v5504 = vadd.f32 %v5448, %v5376
    %v5505 = vadd.f32 %v5449, %v5379
    %v5506 = vadd.f32 %v5450, %v5384
    %v5507 = vadd.f32 %v5451, %v5387
    %v5508 = vadd.f32 %v5452, %v5392
    %v5509 = vadd.f32 %v5453, %v5395
    %5510 = vst.msk [vmem:[#allocation2] sm:$0xff] %vm577, %v5454
    %5511 = vst.msk [vmem:[#allocation2 + $0x8] sm:$0xff] %vm577, %v5455
    %5512 = vst.msk [vmem:[#allocation2 + $0x10] sm:$0xff] %vm577, %v5456
    %5513 = vst.msk [vmem:[#allocation2 + $0x18] sm:$0xff] %vm577, %v5457
    %5514 = vst.msk [vmem:[#allocation2 + $0x20] sm:$0xff] %vm577, %v5458
    %5515 = vst.msk [vmem:[#allocation2 + $0x28] sm:$0xff] %vm577, %v5459
    %5516 = vst.msk [vmem:[#allocation2 + $0x30] sm:$0xff] %vm577, %v5460
    %5517 = vst.msk [vmem:[#allocation2 + $0x38] sm:$0xff] %vm577, %v5461
    %5518 = vst.msk [vmem:[#allocation2 + $0x40] sm:$0xff] %vm577, %v5462
    %5519 = vst.msk [vmem:[#allocation2 + $0x48] sm:$0xff] %vm577, %v5463
    %5520 = vst.msk [vmem:[#allocation2 + $0x50] sm:$0xff] %vm577, %v5464
    %5521 = vst.msk [vmem:[#allocation2 + $0x58] sm:$0xff] %vm577, %v5465
    %5522 = vst.msk [vmem:[#allocation2 + $0x60] sm:$0xff] %vm577, %v5466
    %5523 = vst.msk [vmem:[#allocation2 + $0x68] sm:$0xff] %vm577, %v5467
    %5524 = vst.msk [vmem:[#allocation2 + $0x70] sm:$0xff] %vm577, %v5468
    %5525 = vst.msk [vmem:[#allocation2 + $0x78] sm:$0xff] %vm577, %v5469
    %5526 = vst.msk [vmem:[#allocation2 + $0x80] sm:$0xff] %vm577, %v5470
    %5527 = vst.msk [vmem:[#allocation2 + $0x88] sm:$0xff] %vm577, %v5471
    %5528 = vst.msk [vmem:[#allocation2 + $0x90] sm:$0xff] %vm577, %v5472
    %5529 = vst.msk [vmem:[#allocation2 + $0x98] sm:$0xff] %vm577, %v5473
    %5530 = vst.msk [vmem:[#allocation2 + $0xa0] sm:$0xff] %vm577, %v5474
    %5531 = vst.msk [vmem:[#allocation2 + $0xa8] sm:$0xff] %vm577, %v5475
    %5532 = vst.msk [vmem:[#allocation2 + $0xb0] sm:$0xff] %vm577, %v5476
    %5533 = vst.msk [vmem:[#allocation2 + $0xb8] sm:$0xff] %vm577, %v5477
    %5534 = vst.msk [vmem:[#allocation2 + $0xc0] sm:$0xff] %vm577, %v5478
    %5535 = vst.msk [vmem:[#allocation2 + $0xc8] sm:$0xff] %vm577, %v5479
    %5536 = vst.msk [vmem:[#allocation2 + $0xd0] sm:$0xff] %vm577, %v5480
    %5537 = vst.msk [vmem:[#allocation2 + $0xd8] sm:$0xff] %vm577, %v5481
    %5538 = vst.msk [vmem:[#allocation2 + $0xe0] sm:$0xff] %vm577, %v5482
    %5539 = vst.msk [vmem:[#allocation2 + $0xe8] sm:$0xff] %vm577, %v5483
    %5540 = vst.msk [vmem:[#allocation2 + $0xf0] sm:$0xff] %vm577, %v5484
    %5541 = vst.msk [vmem:[#allocation2 + $0xf8] sm:$0xff] %vm577, %v5485
    %5542 = vst.msk [vmem:[#allocation2 + $0x100] sm:$0xff] %vm577, %v5486
    %5543 = vst.msk [vmem:[#allocation2 + $0x108] sm:$0xff] %vm577, %v5487
    %5544 = vst.msk [vmem:[#allocation2 + $0x110] sm:$0xff] %vm577, %v5488
    %5545 = vst.msk [vmem:[#allocation2 + $0x118] sm:$0xff] %vm577, %v5489
    %5546 = vst.msk [vmem:[#allocation2 + $0x120] sm:$0xff] %vm577, %v5490
    %5547 = vst.msk [vmem:[#allocation2 + $0x128] sm:$0xff] %vm577, %v5491
    %5548 = vst.msk [vmem:[#allocation2 + $0x130] sm:$0xff] %vm577, %v5492
    %5549 = vst.msk [vmem:[#allocation2 + $0x138] sm:$0xff] %vm577, %v5493
    %5550 = vst.msk [vmem:[#allocation2 + $0x140] sm:$0xff] %vm577, %v5494
    %5551 = vst.msk [vmem:[#allocation2 + $0x148] sm:$0xff] %vm577, %v5495
    %5552 = vst.msk [vmem:[#allocation2 + $0x150] sm:$0xff] %vm577, %v5496
    %5553 = vst.msk [vmem:[#allocation2 + $0x158] sm:$0xff] %vm577, %v5497
    %5554 = vst.msk [vmem:[#allocation2 + $0x160] sm:$0xff] %vm577, %v5498
    %5555 = vst.msk [vmem:[#allocation2 + $0x168] sm:$0xff] %vm577, %v5499
    %5556 = vst.msk [vmem:[#allocation2 + $0x170] sm:$0xff] %vm577, %v5500
    %5557 = vst.msk [vmem:[#allocation2 + $0x178] sm:$0xff] %vm577, %v5501
    %5558 = vst.msk [vmem:[#allocation2 + $0x180] sm:$0xff] %vm577, %v5502
    %5559 = vst.msk [vmem:[#allocation2 + $0x188] sm:$0xff] %vm577, %v5503
    %5560 = vst.msk [vmem:[#allocation2 + $0x190] sm:$0xff] %vm577, %v5504
    %5561 = vst.msk [vmem:[#allocation2 + $0x198] sm:$0xff] %vm577, %v5505
    %5562 = vst.msk [vmem:[#allocation2 + $0x1a0] sm:$0xff] %vm577, %v5506
    %5563 = vst.msk [vmem:[#allocation2 + $0x1a8] sm:$0xff] %vm577, %v5507
    %5564 = vst.msk [vmem:[#allocation2 + $0x1b0] sm:$0xff] %vm577, %v5508
    %5565 = vst.msk [vmem:[#allocation2 + $0x1b8] sm:$0xff] %vm577, %v5509
    %v5566 = vld [vmem:[%s0 + $0x10] sm:$0xf]
    %v5567 = vld [vmem:[%s0 + $0x14] sm:$0xf]
    %v5568 = vld [vmem:[%s0 + $0x18] sm:$0xf]
    %v5569 = vld [vmem:[%s0 + $0x1c] sm:$0xf]
    %v5570 = vld [vmem:[%s0 + $0x20] sm:$0xf]
    %v5571 = vld [vmem:[%s0 + $0x24] sm:$0xf]
    %v5572 = vld [vmem:[%s0 + $0x28] sm:$0xf]
    %v5573 = vld [vmem:[%s0 + $0x2c] sm:$0xf]
    %v5574 = vld [vmem:[%s0 + $0x30] sm:$0xf]
    %v5575 = vld [vmem:[%s0 + $0x34] sm:$0xf]
    %v5576 = vld [vmem:[%s0 + $0x38] sm:$0xf]
    %v5577 = vld [vmem:[%s0 + $0x3c] sm:$0xf]
    %v5578 = vld [vmem:[%s0 + $0x40] sm:$0xf]
    %v5579 = vld [vmem:[%s0 + $0x44] sm:$0xf]
    %v5580 = vld [vmem:[%s0 + $0x48] sm:$0xf]
    %v5581 = vld [vmem:[%s0 + $0x4c] sm:$0xf]
    %v5582 = vld [vmem:[%s0 + $0x50] sm:$0xf]
    %v5583 = vld [vmem:[%s0 + $0x54] sm:$0xf]
    %v5584 = vld [vmem:[%s0 + $0x58] sm:$0xf]
    %v5585 = vld [vmem:[%s0 + $0x5c] sm:$0xf]
    %v5586 = vld [vmem:[%s0 + $0x60] sm:$0xf]
    %v5587 = vld [vmem:[%s0 + $0x64] sm:$0xf]
    %v5588 = vld [vmem:[%s0 + $0x68] sm:$0xf]
    %v5589 = vld [vmem:[%s0 + $0x6c] sm:$0xf]
    %v5590 = vld [vmem:[%s0 + $0x70] sm:$0xf]
    %v5591 = vld [vmem:[%s0 + $0x74] sm:$0xf]
    %v5592 = vld [vmem:[%s0 + $0x78] sm:$0xf]
    %v5593 = vld [vmem:[%s0 + $0x7c] sm:$0xf]
    %v5594 = vld [vmem:[%s0 + $0x98] sm:$0xf]
    %v5595 = vld [vmem:[%s0 + $0x9c] sm:$0xf]
    %v5596 = vld [vmem:[%s0 + $0xa0] sm:$0xf]
    %v5597 = vld [vmem:[%s0 + $0xa4] sm:$0xf]
    %v5598 = vld [vmem:[%s0 + $0xa8] sm:$0xf]
    %v5599 = vld [vmem:[%s0 + $0xac] sm:$0xf]
    %v5600 = vld [vmem:[%s0 + $0xb0] sm:$0xf]
    %v5601 = vld [vmem:[%s0 + $0xb4] sm:$0xf]
    %v5602 = vld [vmem:[%s0 + $0xb8] sm:$0xf]
    %v5603 = vld [vmem:[%s0 + $0xbc] sm:$0xf]
    %v5604 = vld [vmem:[%s0 + $0xc0] sm:$0xf]
    %v5605 = vld [vmem:[%s0 + $0xc4] sm:$0xf]
    %v5606 = vld [vmem:[%s0 + $0xc8] sm:$0xf]
    %v5607 = vld [vmem:[%s0 + $0xcc] sm:$0xf]
    %v5608 = vld [vmem:[%s0 + $0xd0] sm:$0xf]
    %v5609 = vld [vmem:[%s0 + $0xd4] sm:$0xf]
    %v5610 = vld [vmem:[%s0 + $0xd8] sm:$0xf]
    %v5611 = vld [vmem:[%s0 + $0xdc] sm:$0xf]
    %v5612 = vld [vmem:[%s0 + $0xe0] sm:$0xf]
    %v5613 = vld [vmem:[%s0 + $0xe4] sm:$0xf]
    %v5614 = vld [vmem:[%s0 + $0xe8] sm:$0xf]
    %v5615 = vld [vmem:[%s0 + $0xec] sm:$0xf]
    %v5616 = vld [vmem:[%s0 + $0xf0] sm:$0xf]
    %v5617 = vld [vmem:[%s0 + $0xf4] sm:$0xf]
    %v5618 = vld [vmem:[%s0 + $0xf8] sm:$0xf]
    %v5619 = vld [vmem:[%s0 + $0xfc] sm:$0xf]
    %v5620 = vld [vmem:[%s0 + $0x100] sm:$0xf]
    %v5621 = vld [vmem:[%s0 + $0x104] sm:$0xf]
    %s5622 = scalar_lea.vmem %s1, 12
    %v5623 = vld [vmem:[%s5622] sm:$0x3]
    %v5680 = vunpack.c.l.b16 %v5566
    %v5681 = vunpack.c.l.b16 %v5567
    %v5682 = vunpack.c.l.b16 %v5568
    %v5683 = vunpack.c.l.b16 %v5569
    %v5684 = vunpack.c.l.b16 %v5570
    %v5685 = vunpack.c.l.b16 %v5571
    %v5686 = vunpack.c.l.b16 %v5572
    %v5687 = vunpack.c.l.b16 %v5573
    %v5688 = vunpack.c.l.b16 %v5574
    %v5689 = vunpack.c.l.b16 %v5575
    %v5690 = vunpack.c.l.b16 %v5576
    %v5691 = vunpack.c.l.b16 %v5577
    %v5692 = vunpack.c.l.b16 %v5578
    %v5693 = vunpack.c.l.b16 %v5579
    %v5694 = vunpack.c.l.b16 %v5580
    %v5695 = vunpack.c.l.b16 %v5581
    %v5696 = vunpack.c.l.b16 %v5582
    %v5697 = vunpack.c.l.b16 %v5583
    %v5698 = vunpack.c.l.b16 %v5584
    %v5699 = vunpack.c.l.b16 %v5585
    %v5700 = vunpack.c.l.b16 %v5586
    %v5701 = vunpack.c.l.b16 %v5587
    %v5702 = vunpack.c.l.b16 %v5588
    %v5703 = vunpack.c.l.b16 %v5589
    %v5704 = vunpack.c.l.b16 %v5590
    %v5705 = vunpack.c.l.b16 %v5591
    %v5706 = vunpack.c.l.b16 %v5592
    %v5707 = vunpack.c.l.b16 %v5593
    %v5708 = vunpack.c.l.b16 %v5594
    %v5709 = vunpack.c.l.b16 %v5595
    %v5710 = vunpack.c.l.b16 %v5596
    %v5711 = vunpack.c.l.b16 %v5597
    %v5712 = vunpack.c.l.b16 %v5598
    %v5713 = vunpack.c.l.b16 %v5599
    %v5714 = vunpack.c.l.b16 %v5600
    %v5715 = vunpack.c.l.b16 %v5601
    %v5716 = vunpack.c.l.b16 %v5602
    %v5717 = vunpack.c.l.b16 %v5603
    %v5718 = vunpack.c.l.b16 %v5604
    %v5719 = vunpack.c.l.b16 %v5605
    %v5720 = vunpack.c.l.b16 %v5606
    %v5721 = vunpack.c.l.b16 %v5607
    %v5722 = vunpack.c.l.b16 %v5608
    %v5723 = vunpack.c.l.b16 %v5609
    %v5724 = vunpack.c.l.b16 %v5610
    %v5725 = vunpack.c.l.b16 %v5611
    %v5726 = vunpack.c.l.b16 %v5612
    %v5727 = vunpack.c.l.b16 %v5613
    %v5728 = vunpack.c.l.b16 %v5614
    %v5729 = vunpack.c.l.b16 %v5615
    %v5730 = vunpack.c.l.b16 %v5616
    %v5731 = vunpack.c.l.b16 %v5617
    %v5732 = vunpack.c.l.b16 %v5618
    %v5733 = vunpack.c.l.b16 %v5619
    %v5734 = vunpack.c.l.b16 %v5620
    %v5735 = vunpack.c.l.b16 %v5621
    %v5736 = vpack.c.b16 %v5681, %v5680
    %v5737 = vpack.c.b16 %v5683, %v5682
    %v5738 = vpack.c.b16 %v5685, %v5684
    %v5739 = vpack.c.b16 %v5687, %v5686
    %v5740 = vpack.c.b16 %v5689, %v5688
    %v5741 = vpack.c.b16 %v5691, %v5690
    %v5742 = vpack.c.b16 %v5693, %v5692
    %v5743 = vpack.c.b16 %v5695, %v5694
    %v5744 = vpack.c.b16 %v5697, %v5696
    %v5745 = vpack.c.b16 %v5699, %v5698
    %v5746 = vpack.c.b16 %v5701, %v5700
    %v5747 = vpack.c.b16 %v5703, %v5702
    %v5748 = vpack.c.b16 %v5705, %v5704
    %v5749 = vpack.c.b16 %v5707, %v5706
    %v5750 = vpack.c.b16 %v5709, %v5708
    %v5751 = vpack.c.b16 %v5711, %v5710
    %v5752 = vpack.c.b16 %v5713, %v5712
    %v5753 = vpack.c.b16 %v5715, %v5714
    %v5754 = vpack.c.b16 %v5717, %v5716
    %v5755 = vpack.c.b16 %v5719, %v5718
    %v5756 = vpack.c.b16 %v5721, %v5720
    %v5757 = vpack.c.b16 %v5723, %v5722
    %v5758 = vpack.c.b16 %v5725, %v5724
    %v5759 = vpack.c.b16 %v5727, %v5726
    %v5760 = vpack.c.b16 %v5729, %v5728
    %v5761 = vpack.c.b16 %v5731, %v5730
    %v5762 = vpack.c.b16 %v5733, %v5732
    %v5763 = vpack.c.b16 %v5735, %v5734
    %v5765 = vsel %vm231, %v5736, 0
    %v5768 = vsel %vm231, %v5737, 0
    %v5771 = vsel %vm231, %v5738, 0
    %v5774 = vsel %vm231, %v5739, 0
    %v5777 = vsel %vm231, %v5740, 0
    %v5780 = vsel %vm231, %v5741, 0
    %v5783 = vsel %vm231, %v5742, 0
    %v5786 = vsel %vm231, %v5743, 0
    %v5789 = vsel %vm231, %v5744, 0
    %v5792 = vsel %vm231, %v5745, 0
    %v5795 = vsel %vm231, %v5746, 0
    %v5798 = vsel %vm231, %v5747, 0
    %v5801 = vsel %vm231, %v5748, 0
    %v5804 = vsel %vm231, %v5749, 0
    %v5807 = vsel %vm231, %v5750, 0
    %v5810 = vsel %vm231, %v5751, 0
    %v5813 = vsel %vm231, %v5752, 0
    %v5816 = vsel %vm231, %v5753, 0
    %v5819 = vsel %vm231, %v5754, 0
    %v5822 = vsel %vm231, %v5755, 0
    %v5825 = vsel %vm231, %v5756, 0
    %v5828 = vsel %vm231, %v5757, 0
    %v5831 = vsel %vm231, %v5758, 0
    %v5834 = vsel %vm231, %v5759, 0
    %v5837 = vsel %vm231, %v5760, 0
    %v5840 = vsel %vm231, %v5761, 0
    %v5843 = vsel %vm231, %v5762, 0
    %v5846 = vsel %vm231, %v5763, 0
    %v5849 = vsel %vm316, %v5623, 0
    %5851 = vmatprep.subr.bf16.mxu0 0
    %5852 = vmatpush1.bf16.msra.mxu0 %v5849
    %5853 = vmatprep.subr.bf16.mxu0 0
    %5854 = vmatpush1.bf16.msra.mxu0 0
    %5855 = vmatprep.subr.bf16.mxu0 0
    %5856 = vmatpush1.bf16.msra.mxu0 0
    %5857 = vmatprep.subr.bf16.mxu0 0
    %5858 = vmatpush1.bf16.msra.mxu0 0
    %5859 = vmatprep.subr.bf16.mxu0 0
    %5860 = vmatpush1.bf16.msra.mxu0 0
    %5861 = vmatprep.subr.bf16.mxu0 0
    %5862 = vmatpush1.bf16.msra.mxu0 0
    %5863 = vmatprep.subr.bf16.mxu0 0
    %5864 = vmatpush1.bf16.msra.mxu0 0
    %5865 = vmatprep.subr.bf16.mxu0 0
    %5866 = vmatpush1.bf16.msra.mxu0 0
    %5867 = vmatprep.subr.bf16.mxu0 0
    %5868 = vmatpush1.bf16.msra.mxu0 0
    %5869 = vmatprep.subr.bf16.mxu0 0
    %5870 = vmatpush1.bf16.msra.mxu0 0
    %5871 = vmatprep.subr.bf16.mxu0 0
    %5872 = vmatpush1.bf16.msra.mxu0 0
    %5873 = vmatprep.subr.bf16.mxu0 0
    %5874 = vmatpush1.bf16.msra.mxu0 0
    %5875 = vmatprep.subr.bf16.mxu0 0
    %5876 = vmatpush1.bf16.msra.mxu0 0
    %5877 = vmatprep.subr.bf16.mxu0 0
    %5878 = vmatpush1.bf16.msra.mxu0 0
    %5879 = vmatprep.subr.bf16.mxu0 0
    %5880 = vmatpush1.bf16.msra.mxu0 0
    %5881 = vmatprep.subr.bf16.mxu0 0
    %5882 = vmatpush1.bf16.msra.mxu0 0
    %5883 = vmatprep.mubr.bf16.mxu0 0
    %5884 = vmatmul.mubr.bf16.gmra.mrb[0].mxu0 %v5765
    %v5885 = vpop.f32.mrb[0].mxu0
    %v5886 = vadd.f32 0.0, %v5885
    %v5887 = vpop.f32.mrb[0].mxu0
    %v5888 = vpop.f32.mrb[0].mxu0
    %v5889 = vadd.f32 0.0, %v5888
    %v5890 = vpop.f32.mrb[0].mxu0
    %5891 = vmatprep.mubr.bf16.mxu0 0
    %5892 = vmatmul.mubr.bf16.gmra.mrb[0].mxu0 %v5768
    %v5893 = vpop.f32.mrb[0].mxu0
    %v5894 = vadd.f32 0.0, %v5893
    %v5895 = vpop.f32.mrb[0].mxu0
    %v5896 = vpop.f32.mrb[0].mxu0
    %v5897 = vadd.f32 0.0, %v5896
    %v5898 = vpop.f32.mrb[0].mxu0
    %5899 = vmatprep.mubr.bf16.mxu0 0
    %5900 = vmatmul.mubr.bf16.gmra.mrb[0].mxu0 %v5771
    %v5901 = vpop.f32.mrb[0].mxu0
    %v5902 = vadd.f32 0.0, %v5901
    %v5903 = vpop.f32.mrb[0].mxu0
    %v5904 = vpop.f32.mrb[0].mxu0
    %v5905 = vadd.f32 0.0, %v5904
    %v5906 = vpop.f32.mrb[0].mxu0
    %5907 = vmatprep.mubr.bf16.mxu0 0
    %5908 = vmatmul.mubr.bf16.gmra.mrb[0].mxu0 %v5774
    %v5909 = vpop.f32.mrb[0].mxu0
    %v5910 = vadd.f32 0.0, %v5909
    %v5911 = vpop.f32.mrb[0].mxu0
    %v5912 = vpop.f32.mrb[0].mxu0
    %v5913 = vadd.f32 0.0, %v5912
    %v5914 = vpop.f32.mrb[0].mxu0
    %5915 = vmatprep.mubr.bf16.mxu0 0
    %5916 = vmatmul.mubr.bf16.gmra.mrb[0].mxu0 %v5777
    %v5917 = vpop.f32.mrb[0].mxu0
    %v5918 = vadd.f32 0.0, %v5917
    %v5919 = vpop.f32.mrb[0].mxu0
    %v5920 = vpop.f32.mrb[0].mxu0
    %v5921 = vadd.f32 0.0, %v5920
    %v5922 = vpop.f32.mrb[0].mxu0
    %5923 = vmatprep.mubr.bf16.mxu0 0
    %5924 = vmatmul.mubr.bf16.gmra.mrb[0].mxu0 %v5780
    %v5925 = vpop.f32.mrb[0].mxu0
    %v5926 = vadd.f32 0.0, %v5925
    %v5927 = vpop.f32.mrb[0].mxu0
    %v5928 = vpop.f32.mrb[0].mxu0
    %v5929 = vadd.f32 0.0, %v5928
    %v5930 = vpop.f32.mrb[0].mxu0
    %5931 = vmatprep.mubr.bf16.mxu0 0
    %5932 = vmatmul.mubr.bf16.gmra.mrb[0].mxu0 %v5783
    %v5933 = vpop.f32.mrb[0].mxu0
    %v5934 = vadd.f32 0.0, %v5933
    %v5935 = vpop.f32.mrb[0].mxu0
    %v5936 = vpop.f32.mrb[0].mxu0
    %v5937 = vadd.f32 0.0, %v5936
    %v5938 = vpop.f32.mrb[0].mxu0
    %5939 = vmatprep.mubr.bf16.mxu0 0
    %5940 = vmatmul.mubr.bf16.gmra.mrb[0].mxu0 %v5786
    %v5941 = vpop.f32.mrb[0].mxu0
    %v5942 = vadd.f32 0.0, %v5941
    %v5943 = vpop.f32.mrb[0].mxu0
    %v5944 = vpop.f32.mrb[0].mxu0
    %v5945 = vadd.f32 0.0, %v5944
    %v5946 = vpop.f32.mrb[0].mxu0
    %5947 = vmatprep.mubr.bf16.mxu0 0
    %5948 = vmatmul.mubr.bf16.gmra.mrb[0].mxu0 %v5789
    %v5949 = vpop.f32.mrb[0].mxu0
    %v5950 = vadd.f32 0.0, %v5949
    %v5951 = vpop.f32.mrb[0].mxu0
    %v5952 = vpop.f32.mrb[0].mxu0
    %v5953 = vadd.f32 0.0, %v5952
    %v5954 = vpop.f32.mrb[0].mxu0
    %5955 = vmatprep.mubr.bf16.mxu0 0
    %5956 = vmatmul.mubr.bf16.gmra.mrb[0].mxu0 %v5792
    %v5957 = vpop.f32.mrb[0].mxu0
    %v5958 = vadd.f32 0.0, %v5957
    %v5959 = vpop.f32.mrb[0].mxu0
    %v5960 = vpop.f32.mrb[0].mxu0
    %v5961 = vadd.f32 0.0, %v5960
    %v5962 = vpop.f32.mrb[0].mxu0
    %5963 = vmatprep.mubr.bf16.mxu0 0
    %5964 = vmatmul.mubr.bf16.gmra.mrb[0].mxu0 %v5795
    %v5965 = vpop.f32.mrb[0].mxu0
    %v5966 = vadd.f32 0.0, %v5965
    %v5967 = vpop.f32.mrb[0].mxu0
    %v5968 = vpop.f32.mrb[0].mxu0
    %v5969 = vadd.f32 0.0, %v5968
    %v5970 = vpop.f32.mrb[0].mxu0
    %5971 = vmatprep.mubr.bf16.mxu0 0
    %5972 = vmatmul.mubr.bf16.gmra.mrb[0].mxu0 %v5798
    %v5973 = vpop.f32.mrb[0].mxu0
    %v5974 = vadd.f32 0.0, %v5973
    %v5975 = vpop.f32.mrb[0].mxu0
    %v5976 = vpop.f32.mrb[0].mxu0
    %v5977 = vadd.f32 0.0, %v5976
    %v5978 = vpop.f32.mrb[0].mxu0
    %5979 = vmatprep.mubr.bf16.mxu0 0
    %5980 = vmatmul.mubr.bf16.gmra.mrb[0].mxu0 %v5801
    %v5981 = vpop.f32.mrb[0].mxu0
    %v5982 = vadd.f32 0.0, %v5981
    %v5983 = vpop.f32.mrb[0].mxu0
    %v5984 = vpop.f32.mrb[0].mxu0
    %v5985 = vadd.f32 0.0, %v5984
    %v5986 = vpop.f32.mrb[0].mxu0
    %5987 = vmatprep.mubr.bf16.mxu0 0
    %5988 = vmatmul.mubr.bf16.gmra.mrb[0].mxu0 %v5804
    %v5989 = vpop.f32.mrb[0].mxu0
    %v5990 = vadd.f32 0.0, %v5989
    %v5991 = vpop.f32.mrb[0].mxu0
    %v5992 = vpop.f32.mrb[0].mxu0
    %v5993 = vadd.f32 0.0, %v5992
    %v5994 = vpop.f32.mrb[0].mxu0
    %5995 = vmatprep.mubr.bf16.mxu0 0
    %5996 = vmatmul.mubr.bf16.gmra.mrb[0].mxu0 %v5807
    %v5997 = vpop.f32.mrb[0].mxu0
    %v5998 = vadd.f32 0.0, %v5997
    %v5999 = vpop.f32.mrb[0].mxu0
    %v6000 = vpop.f32.mrb[0].mxu0
    %v6001 = vadd.f32 0.0, %v6000
    %v6002 = vpop.f32.mrb[0].mxu0
    %6003 = vmatprep.mubr.bf16.mxu0 0
    %6004 = vmatmul.mubr.bf16.gmra.mrb[0].mxu0 %v5810
    %v6005 = vpop.f32.mrb[0].mxu0
    %v6006 = vadd.f32 0.0, %v6005
    %v6007 = vpop.f32.mrb[0].mxu0
    %v6008 = vpop.f32.mrb[0].mxu0
    %v6009 = vadd.f32 0.0, %v6008
    %v6010 = vpop.f32.mrb[0].mxu0
    %6011 = vmatprep.mubr.bf16.mxu0 0
    %6012 = vmatmul.mubr.bf16.gmra.mrb[0].mxu0 %v5813
    %v6013 = vpop.f32.mrb[0].mxu0
    %v6014 = vadd.f32 0.0, %v6013
    %v6015 = vpop.f32.mrb[0].mxu0
    %v6016 = vpop.f32.mrb[0].mxu0
    %v6017 = vadd.f32 0.0, %v6016
    %v6018 = vpop.f32.mrb[0].mxu0
    %6019 = vmatprep.mubr.bf16.mxu0 0
    %6020 = vmatmul.mubr.bf16.gmra.mrb[0].mxu0 %v5816
    %v6021 = vpop.f32.mrb[0].mxu0
    %v6022 = vadd.f32 0.0, %v6021
    %v6023 = vpop.f32.mrb[0].mxu0
    %v6024 = vpop.f32.mrb[0].mxu0
    %v6025 = vadd.f32 0.0, %v6024
    %v6026 = vpop.f32.mrb[0].mxu0
    %6027 = vmatprep.mubr.bf16.mxu0 0
    %6028 = vmatmul.mubr.bf16.gmra.mrb[0].mxu0 %v5819
    %v6029 = vpop.f32.mrb[0].mxu0
    %v6030 = vadd.f32 0.0, %v6029
    %v6031 = vpop.f32.mrb[0].mxu0
    %v6032 = vpop.f32.mrb[0].mxu0
    %v6033 = vadd.f32 0.0, %v6032
    %v6034 = vpop.f32.mrb[0].mxu0
    %6035 = vmatprep.mubr.bf16.mxu0 0
    %6036 = vmatmul.mubr.bf16.gmra.mrb[0].mxu0 %v5822
    %v6037 = vpop.f32.mrb[0].mxu0
    %v6038 = vadd.f32 0.0, %v6037
    %v6039 = vpop.f32.mrb[0].mxu0
    %v6040 = vpop.f32.mrb[0].mxu0
    %v6041 = vadd.f32 0.0, %v6040
    %v6042 = vpop.f32.mrb[0].mxu0
    %6043 = vmatprep.mubr.bf16.mxu0 0
    %6044 = vmatmul.mubr.bf16.gmra.mrb[0].mxu0 %v5825
    %v6045 = vpop.f32.mrb[0].mxu0
    %v6046 = vadd.f32 0.0, %v6045
    %v6047 = vpop.f32.mrb[0].mxu0
    %v6048 = vpop.f32.mrb[0].mxu0
    %v6049 = vadd.f32 0.0, %v6048
    %v6050 = vpop.f32.mrb[0].mxu0
    %6051 = vmatprep.mubr.bf16.mxu0 0
    %6052 = vmatmul.mubr.bf16.gmra.mrb[0].mxu0 %v5828
    %v6053 = vpop.f32.mrb[0].mxu0
    %v6054 = vadd.f32 0.0, %v6053
    %v6055 = vpop.f32.mrb[0].mxu0
    %v6056 = vpop.f32.mrb[0].mxu0
    %v6057 = vadd.f32 0.0, %v6056
    %v6058 = vpop.f32.mrb[0].mxu0
    %6059 = vmatprep.mubr.bf16.mxu0 0
    %6060 = vmatmul.mubr.bf16.gmra.mrb[0].mxu0 %v5831
    %v6061 = vpop.f32.mrb[0].mxu0
    %v6062 = vadd.f32 0.0, %v6061
    %v6063 = vpop.f32.mrb[0].mxu0
    %v6064 = vpop.f32.mrb[0].mxu0
    %v6065 = vadd.f32 0.0, %v6064
    %v6066 = vpop.f32.mrb[0].mxu0
    %6067 = vmatprep.mubr.bf16.mxu0 0
    %6068 = vmatmul.mubr.bf16.gmra.mrb[0].mxu0 %v5834
    %v6069 = vpop.f32.mrb[0].mxu0
    %v6070 = vadd.f32 0.0, %v6069
    %v6071 = vpop.f32.mrb[0].mxu0
    %v6072 = vpop.f32.mrb[0].mxu0
    %v6073 = vadd.f32 0.0, %v6072
    %v6074 = vpop.f32.mrb[0].mxu0
    %6075 = vmatprep.mubr.bf16.mxu0 0
    %6076 = vmatmul.mubr.bf16.gmra.mrb[0].mxu0 %v5837
    %v6077 = vpop.f32.mrb[0].mxu0
    %v6078 = vadd.f32 0.0, %v6077
    %v6079 = vpop.f32.mrb[0].mxu0
    %v6080 = vpop.f32.mrb[0].mxu0
    %v6081 = vadd.f32 0.0, %v6080
    %v6082 = vpop.f32.mrb[0].mxu0
    %6083 = vmatprep.mubr.bf16.mxu0 0
    %6084 = vmatmul.mubr.bf16.gmra.mrb[0].mxu0 %v5840
    %v6085 = vpop.f32.mrb[0].mxu0
    %v6086 = vadd.f32 0.0, %v6085
    %v6087 = vpop.f32.mrb[0].mxu0
    %v6088 = vpop.f32.mrb[0].mxu0
    %v6089 = vadd.f32 0.0, %v6088
    %v6090 = vpop.f32.mrb[0].mxu0
    %6091 = vmatprep.mubr.bf16.mxu0 0
    %6092 = vmatmul.mubr.bf16.gmra.mrb[0].mxu0 %v5843
    %v6093 = vpop.f32.mrb[0].mxu0
    %v6094 = vadd.f32 0.0, %v6093
    %v6095 = vpop.f32.mrb[0].mxu0
    %v6096 = vpop.f32.mrb[0].mxu0
    %v6097 = vadd.f32 0.0, %v6096
    %v6098 = vpop.f32.mrb[0].mxu0
    %6099 = vmatprep.mubr.bf16.mxu0 0
    %6100 = vmatmul.mubr.bf16.gmra.mrb[0].mxu0 %v5846
    %v6101 = vpop.f32.mrb[0].mxu0
    %v6102 = vadd.f32 0.0, %v6101
    %v6103 = vpop.f32.mrb[0].mxu0
    %v6104 = vpop.f32.mrb[0].mxu0
    %v6105 = vadd.f32 0.0, %v6104
    %v6106 = vpop.f32.mrb[0].mxu0
    %6107 = vdwg.mxu0
    %v6108 = vld [vmem:[#allocation2] sm:$0xff]
    %v6109 = vld [vmem:[#allocation2 + $0x8] sm:$0xff]
    %v6110 = vld [vmem:[#allocation2 + $0x10] sm:$0xff]
    %v6111 = vld [vmem:[#allocation2 + $0x18] sm:$0xff]
    %v6112 = vld [vmem:[#allocation2 + $0x20] sm:$0xff]
    %v6113 = vld [vmem:[#allocation2 + $0x28] sm:$0xff]
    %v6114 = vld [vmem:[#allocation2 + $0x30] sm:$0xff]
    %v6115 = vld [vmem:[#allocation2 + $0x38] sm:$0xff]
    %v6116 = vld [vmem:[#allocation2 + $0x40] sm:$0xff]
    %v6117 = vld [vmem:[#allocation2 + $0x48] sm:$0xff]
    %v6118 = vld [vmem:[#allocation2 + $0x50] sm:$0xff]
    %v6119 = vld [vmem:[#allocation2 + $0x58] sm:$0xff]
    %v6120 = vld [vmem:[#allocation2 + $0x60] sm:$0xff]
    %v6121 = vld [vmem:[#allocation2 + $0x68] sm:$0xff]
    %v6122 = vld [vmem:[#allocation2 + $0x70] sm:$0xff]
    %v6123 = vld [vmem:[#allocation2 + $0x78] sm:$0xff]
    %v6124 = vld [vmem:[#allocation2 + $0x80] sm:$0xff]
    %v6125 = vld [vmem:[#allocation2 + $0x88] sm:$0xff]
    %v6126 = vld [vmem:[#allocation2 + $0x90] sm:$0xff]
    %v6127 = vld [vmem:[#allocation2 + $0x98] sm:$0xff]
    %v6128 = vld [vmem:[#allocation2 + $0xa0] sm:$0xff]
    %v6129 = vld [vmem:[#allocation2 + $0xa8] sm:$0xff]
    %v6130 = vld [vmem:[#allocation2 + $0xb0] sm:$0xff]
    %v6131 = vld [vmem:[#allocation2 + $0xb8] sm:$0xff]
    %v6132 = vld [vmem:[#allocation2 + $0xc0] sm:$0xff]
    %v6133 = vld [vmem:[#allocation2 + $0xc8] sm:$0xff]
    %v6134 = vld [vmem:[#allocation2 + $0xd0] sm:$0xff]
    %v6135 = vld [vmem:[#allocation2 + $0xd8] sm:$0xff]
    %v6136 = vld [vmem:[#allocation2 + $0xe0] sm:$0xff]
    %v6137 = vld [vmem:[#allocation2 + $0xe8] sm:$0xff]
    %v6138 = vld [vmem:[#allocation2 + $0xf0] sm:$0xff]
    %v6139 = vld [vmem:[#allocation2 + $0xf8] sm:$0xff]
    %v6140 = vld [vmem:[#allocation2 + $0x100] sm:$0xff]
    %v6141 = vld [vmem:[#allocation2 + $0x108] sm:$0xff]
    %v6142 = vld [vmem:[#allocation2 + $0x110] sm:$0xff]
    %v6143 = vld [vmem:[#allocation2 + $0x118] sm:$0xff]
    %v6144 = vld [vmem:[#allocation2 + $0x120] sm:$0xff]
    %v6145 = vld [vmem:[#allocation2 + $0x128] sm:$0xff]
    %v6146 = vld [vmem:[#allocation2 + $0x130] sm:$0xff]
    %v6147 = vld [vmem:[#allocation2 + $0x138] sm:$0xff]
    %v6148 = vld [vmem:[#allocation2 + $0x140] sm:$0xff]
    %v6149 = vld [vmem:[#allocation2 + $0x148] sm:$0xff]
    %v6150 = vld [vmem:[#allocation2 + $0x150] sm:$0xff]
    %v6151 = vld [vmem:[#allocation2 + $0x158] sm:$0xff]
    %v6152 = vld [vmem:[#allocation2 + $0x160] sm:$0xff]
    %v6153 = vld [vmem:[#allocation2 + $0x168] sm:$0xff]
    %v6154 = vld [vmem:[#allocation2 + $0x170] sm:$0xff]
    %v6155 = vld [vmem:[#allocation2 + $0x178] sm:$0xff]
    %v6156 = vld [vmem:[#allocation2 + $0x180] sm:$0xff]
    %v6157 = vld [vmem:[#allocation2 + $0x188] sm:$0xff]
    %v6158 = vld [vmem:[#allocation2 + $0x190] sm:$0xff]
    %v6159 = vld [vmem:[#allocation2 + $0x198] sm:$0xff]
    %v6160 = vld [vmem:[#allocation2 + $0x1a0] sm:$0xff]
    %v6161 = vld [vmem:[#allocation2 + $0x1a8] sm:$0xff]
    %v6162 = vld [vmem:[#allocation2 + $0x1b0] sm:$0xff]
    %v6163 = vld [vmem:[#allocation2 + $0x1b8] sm:$0xff]
    %v6164 = vadd.f32 %v6108, %v5886
    %v6165 = vadd.f32 %v6109, %v5889
    %v6166 = vadd.f32 %v6110, %v5894
    %v6167 = vadd.f32 %v6111, %v5897
    %v6168 = vadd.f32 %v6112, %v5902
    %v6169 = vadd.f32 %v6113, %v5905
    %v6170 = vadd.f32 %v6114, %v5910
    %v6171 = vadd.f32 %v6115, %v5913
    %v6172 = vadd.f32 %v6116, %v5918
    %v6173 = vadd.f32 %v6117, %v5921
    %v6174 = vadd.f32 %v6118, %v5926
    %v6175 = vadd.f32 %v6119, %v5929
    %v6176 = vadd.f32 %v6120, %v5934
    %v6177 = vadd.f32 %v6121, %v5937
    %v6178 = vadd.f32 %v6122, %v5942
    %v6179 = vadd.f32 %v6123, %v5945
    %v6180 = vadd.f32 %v6124, %v5950
    %v6181 = vadd.f32 %v6125, %v5953
    %v6182 = vadd.f32 %v6126, %v5958
    %v6183 = vadd.f32 %v6127, %v5961
    %v6184 = vadd.f32 %v6128, %v5966
    %v6185 = vadd.f32 %v6129, %v5969
    %v6186 = vadd.f32 %v6130, %v5974
    %v6187 = vadd.f32 %v6131, %v5977
    %v6188 = vadd.f32 %v6132, %v5982
    %v6189 = vadd.f32 %v6133, %v5985
    %v6190 = vadd.f32 %v6134, %v5990
    %v6191 = vadd.f32 %v6135, %v5993
    %v6192 = vadd.f32 %v6136, %v5998
    %v6193 = vadd.f32 %v6137, %v6001
    %v6194 = vadd.f32 %v6138, %v6006
    %v6195 = vadd.f32 %v6139, %v6009
    %v6196 = vadd.f32 %v6140, %v6014
    %v6197 = vadd.f32 %v6141, %v6017
    %v6198 = vadd.f32 %v6142, %v6022
    %v6199 = vadd.f32 %v6143, %v6025
    %v6200 = vadd.f32 %v6144, %v6030
    %v6201 = vadd.f32 %v6145, %v6033
    %v6202 = vadd.f32 %v6146, %v6038
    %v6203 = vadd.f32 %v6147, %v6041
    %v6204 = vadd.f32 %v6148, %v6046
    %v6205 = vadd.f32 %v6149, %v6049
    %v6206 = vadd.f32 %v6150, %v6054
    %v6207 = vadd.f32 %v6151, %v6057
    %v6208 = vadd.f32 %v6152, %v6062
    %v6209 = vadd.f32 %v6153, %v6065
    %v6210 = vadd.f32 %v6154, %v6070
    %v6211 = vadd.f32 %v6155, %v6073
    %v6212 = vadd.f32 %v6156, %v6078
    %v6213 = vadd.f32 %v6157, %v6081
    %v6214 = vadd.f32 %v6158, %v6086
    %v6215 = vadd.f32 %v6159, %v6089
    %v6216 = vadd.f32 %v6160, %v6094
    %v6217 = vadd.f32 %v6161, %v6097
    %v6218 = vadd.f32 %v6162, %v6102
    %v6219 = vadd.f32 %v6163, %v6105
    %6220 = vst.msk [vmem:[#allocation2] sm:$0xff] %vm577, %v6164
    %6221 = vst.msk [vmem:[#allocation2 + $0x8] sm:$0xff] %vm577, %v6165
    %6222 = vst.msk [vmem:[#allocation2 + $0x10] sm:$0xff] %vm577, %v6166
    %6223 = vst.msk [vmem:[#allocation2 + $0x18] sm:$0xff] %vm577, %v6167
    %6224 = vst.msk [vmem:[#allocation2 + $0x20] sm:$0xff] %vm577, %v6168
    %6225 = vst.msk [vmem:[#allocation2 + $0x28] sm:$0xff] %vm577, %v6169
    %6226 = vst.msk [vmem:[#allocation2 + $0x30] sm:$0xff] %vm577, %v6170
    %6227 = vst.msk [vmem:[#allocation2 + $0x38] sm:$0xff] %vm577, %v6171
    %6228 = vst.msk [vmem:[#allocation2 + $0x40] sm:$0xff] %vm577, %v6172
    %6229 = vst.msk [vmem:[#allocation2 + $0x48] sm:$0xff] %vm577, %v6173
    %6230 = vst.msk [vmem:[#allocation2 + $0x50] sm:$0xff] %vm577, %v6174
    %6231 = vst.msk [vmem:[#allocation2 + $0x58] sm:$0xff] %vm577, %v6175
    %6232 = vst.msk [vmem:[#allocation2 + $0x60] sm:$0xff] %vm577, %v6176
    %6233 = vst.msk [vmem:[#allocation2 + $0x68] sm:$0xff] %vm577, %v6177
    %6234 = vst.msk [vmem:[#allocation2 + $0x70] sm:$0xff] %vm577, %v6178
    %6235 = vst.msk [vmem:[#allocation2 + $0x78] sm:$0xff] %vm577, %v6179
    %6236 = vst.msk [vmem:[#allocation2 + $0x80] sm:$0xff] %vm577, %v6180
    %6237 = vst.msk [vmem:[#allocation2 + $0x88] sm:$0xff] %vm577, %v6181
    %6238 = vst.msk [vmem:[#allocation2 + $0x90] sm:$0xff] %vm577, %v6182
    %6239 = vst.msk [vmem:[#allocation2 + $0x98] sm:$0xff] %vm577, %v6183
    %6240 = vst.msk [vmem:[#allocation2 + $0xa0] sm:$0xff] %vm577, %v6184
    %6241 = vst.msk [vmem:[#allocation2 + $0xa8] sm:$0xff] %vm577, %v6185
    %6242 = vst.msk [vmem:[#allocation2 + $0xb0] sm:$0xff] %vm577, %v6186
    %6243 = vst.msk [vmem:[#allocation2 + $0xb8] sm:$0xff] %vm577, %v6187
    %6244 = vst.msk [vmem:[#allocation2 + $0xc0] sm:$0xff] %vm577, %v6188
    %6245 = vst.msk [vmem:[#allocation2 + $0xc8] sm:$0xff] %vm577, %v6189
    %6246 = vst.msk [vmem:[#allocation2 + $0xd0] sm:$0xff] %vm577, %v6190
    %6247 = vst.msk [vmem:[#allocation2 + $0xd8] sm:$0xff] %vm577, %v6191
    %6248 = vst.msk [vmem:[#allocation2 + $0xe0] sm:$0xff] %vm577, %v6192
    %6249 = vst.msk [vmem:[#allocation2 + $0xe8] sm:$0xff] %vm577, %v6193
    %6250 = vst.msk [vmem:[#allocation2 + $0xf0] sm:$0xff] %vm577, %v6194
    %6251 = vst.msk [vmem:[#allocation2 + $0xf8] sm:$0xff] %vm577, %v6195
    %6252 = vst.msk [vmem:[#allocation2 + $0x100] sm:$0xff] %vm577, %v6196
    %6253 = vst.msk [vmem:[#allocation2 + $0x108] sm:$0xff] %vm577, %v6197
    %6254 = vst.msk [vmem:[#allocation2 + $0x110] sm:$0xff] %vm577, %v6198
    %6255 = vst.msk [vmem:[#allocation2 + $0x118] sm:$0xff] %vm577, %v6199
    %6256 = vst.msk [vmem:[#allocation2 + $0x120] sm:$0xff] %vm577, %v6200
    %6257 = vst.msk [vmem:[#allocation2 + $0x128] sm:$0xff] %vm577, %v6201
    %6258 = vst.msk [vmem:[#allocation2 + $0x130] sm:$0xff] %vm577, %v6202
    %6259 = vst.msk [vmem:[#allocation2 + $0x138] sm:$0xff] %vm577, %v6203
    %6260 = vst.msk [vmem:[#allocation2 + $0x140] sm:$0xff] %vm577, %v6204
    %6261 = vst.msk [vmem:[#allocation2 + $0x148] sm:$0xff] %vm577, %v6205
    %6262 = vst.msk [vmem:[#allocation2 + $0x150] sm:$0xff] %vm577, %v6206
    %6263 = vst.msk [vmem:[#allocation2 + $0x158] sm:$0xff] %vm577, %v6207
    %6264 = vst.msk [vmem:[#allocation2 + $0x160] sm:$0xff] %vm577, %v6208
    %6265 = vst.msk [vmem:[#allocation2 + $0x168] sm:$0xff] %vm577, %v6209
    %6266 = vst.msk [vmem:[#allocation2 + $0x170] sm:$0xff] %vm577, %v6210
    %6267 = vst.msk [vmem:[#allocation2 + $0x178] sm:$0xff] %vm577, %v6211
    %6268 = vst.msk [vmem:[#allocation2 + $0x180] sm:$0xff] %vm577, %v6212
    %6269 = vst.msk [vmem:[#allocation2 + $0x188] sm:$0xff] %vm577, %v6213
    %6270 = vst.msk [vmem:[#allocation2 + $0x190] sm:$0xff] %vm577, %v6214
    %6271 = vst.msk [vmem:[#allocation2 + $0x198] sm:$0xff] %vm577, %v6215
    %6272 = vst.msk [vmem:[#allocation2 + $0x1a0] sm:$0xff] %vm577, %v6216
    %6273 = vst.msk [vmem:[#allocation2 + $0x1a8] sm:$0xff] %vm577, %v6217
    %6274 = vst.msk [vmem:[#allocation2 + $0x1b0] sm:$0xff] %vm577, %v6218
    %6275 = vst.msk [vmem:[#allocation2 + $0x1b8] sm:$0xff] %vm577, %v6219
    %v6276 = vld [vmem:[%s0 + $0x10] sm:$0xf]
    %v6277 = vld [vmem:[%s0 + $0x14] sm:$0xf]
    %v6278 = vld [vmem:[%s0 + $0x18] sm:$0xf]
    %v6279 = vld [vmem:[%s0 + $0x1c] sm:$0xf]
    %v6280 = vld [vmem:[%s0 + $0x20] sm:$0xf]
    %v6281 = vld [vmem:[%s0 + $0x24] sm:$0xf]
    %v6282 = vld [vmem:[%s0 + $0x28] sm:$0xf]
    %v6283 = vld [vmem:[%s0 + $0x2c] sm:$0xf]
    %v6284 = vld [vmem:[%s0 + $0x30] sm:$0xf]
    %v6285 = vld [vmem:[%s0 + $0x34] sm:$0xf]
    %v6286 = vld [vmem:[%s0 + $0x38] sm:$0xf]
    %v6287 = vld [vmem:[%s0 + $0x3c] sm:$0xf]
    %v6288 = vld [vmem:[%s0 + $0x40] sm:$0xf]
    %v6289 = vld [vmem:[%s0 + $0x44] sm:$0xf]
    %v6290 = vld [vmem:[%s0 + $0x48] sm:$0xf]
    %v6291 = vld [vmem:[%s0 + $0x4c] sm:$0xf]
    %v6292 = vld [vmem:[%s0 + $0x50] sm:$0xf]
    %v6293 = vld [vmem:[%s0 + $0x54] sm:$0xf]
    %v6294 = vld [vmem:[%s0 + $0x58] sm:$0xf]
    %v6295 = vld [vmem:[%s0 + $0x5c] sm:$0xf]
    %v6296 = vld [vmem:[%s0 + $0x60] sm:$0xf]
    %v6297 = vld [vmem:[%s0 + $0x64] sm:$0xf]
    %v6298 = vld [vmem:[%s0 + $0x68] sm:$0xf]
    %v6299 = vld [vmem:[%s0 + $0x6c] sm:$0xf]
    %v6300 = vld [vmem:[%s0 + $0x70] sm:$0xf]
    %v6301 = vld [vmem:[%s0 + $0x74] sm:$0xf]
    %v6302 = vld [vmem:[%s0 + $0x78] sm:$0xf]
    %v6303 = vld [vmem:[%s0 + $0x7c] sm:$0xf]
    %v6304 = vld [vmem:[%s0 + $0x80] sm:$0x1]
    %v6305 = vld [vmem:[%s0 + $0x98] sm:$0xf]
    %v6306 = vld [vmem:[%s0 + $0x9c] sm:$0xf]
    %v6307 = vld [vmem:[%s0 + $0xa0] sm:$0xf]
    %v6308 = vld [vmem:[%s0 + $0xa4] sm:$0xf]
    %v6309 = vld [vmem:[%s0 + $0xa8] sm:$0xf]
    %v6310 = vld [vmem:[%s0 + $0xac] sm:$0xf]
    %v6311 = vld [vmem:[%s0 + $0xb0] sm:$0xf]
    %v6312 = vld [vmem:[%s0 + $0xb4] sm:$0xf]
    %v6313 = vld [vmem:[%s0 + $0xb8] sm:$0xf]
    %v6314 = vld [vmem:[%s0 + $0xbc] sm:$0xf]
    %v6315 = vld [vmem:[%s0 + $0xc0] sm:$0xf]
    %v6316 = vld [vmem:[%s0 + $0xc4] sm:$0xf]
    %v6317 = vld [vmem:[%s0 + $0xc8] sm:$0xf]
    %v6318 = vld [vmem:[%s0 + $0xcc] sm:$0xf]
    %v6319 = vld [vmem:[%s0 + $0xd0] sm:$0xf]
    %v6320 = vld [vmem:[%s0 + $0xd4] sm:$0xf]
    %v6321 = vld [vmem:[%s0 + $0xd8] sm:$0xf]
    %v6322 = vld [vmem:[%s0 + $0xdc] sm:$0xf]
    %v6323 = vld [vmem:[%s0 + $0xe0] sm:$0xf]
    %v6324 = vld [vmem:[%s0 + $0xe4] sm:$0xf]
    %v6325 = vld [vmem:[%s0 + $0xe8] sm:$0xf]
    %v6326 = vld [vmem:[%s0 + $0xec] sm:$0xf]
    %v6327 = vld [vmem:[%s0 + $0xf0] sm:$0xf]
    %v6328 = vld [vmem:[%s0 + $0xf4] sm:$0xf]
    %v6329 = vld [vmem:[%s0 + $0xf8] sm:$0xf]
    %v6330 = vld [vmem:[%s0 + $0xfc] sm:$0xf]
    %v6331 = vld [vmem:[%s0 + $0x100] sm:$0xf]
    %v6332 = vld [vmem:[%s0 + $0x104] sm:$0xf]
    %v6333 = vld [vmem:[%s0 + $0x108] sm:$0x1]
    %v6335 = vshrl.u32 %v6276, 16
    %v6337 = vrot.slane %v6335, 4
    %v6338 = vshll.u32 %v6276, 16
    %v6340 = vrot.slane %v6338, 5
    %v6341 = vor.u32 %v6337, %v6340
    %v6342 = vrot.slane %v6341, 4
    %v6344 = vshll.u32 %v6277, 16
    %v6346 = vrot.slane %v6344, 5
    %v6347 = vsel %vm694, %v6342, %v6346
    %v6348 = vshrl.u32 %v6277, 16
    %v6350 = vrot.slane %v6348, 4
    %v6351 = vor.u32 %v6350, %v6346
    %v6352 = vrot.slane %v6351, 4
    %v6354 = vshll.u32 %v6278, 16
    %v6356 = vrot.slane %v6354, 5
    %v6357 = vsel %vm694, %v6352, %v6356
    %v6358 = vshrl.u32 %v6278, 16
    %v6360 = vrot.slane %v6358, 4
    %v6361 = vor.u32 %v6360, %v6356
    %v6362 = vrot.slane %v6361, 4
    %v6364 = vshll.u32 %v6279, 16
    %v6366 = vrot.slane %v6364, 5
    %v6367 = vsel %vm694, %v6362, %v6366
    %v6368 = vshrl.u32 %v6279, 16
    %v6370 = vrot.slane %v6368, 4
    %v6371 = vor.u32 %v6370, %v6366
    %v6372 = vrot.slane %v6371, 4
    %v6374 = vshll.u32 %v6280, 16
    %v6376 = vrot.slane %v6374, 5
    %v6377 = vsel %vm694, %v6372, %v6376
    %v6378 = vshrl.u32 %v6280, 16
    %v6380 = vrot.slane %v6378, 4
    %v6381 = vor.u32 %v6380, %v6376
    %v6382 = vrot.slane %v6381, 4
    %v6384 = vshll.u32 %v6281, 16
    %v6386 = vrot.slane %v6384, 5
    %v6387 = vsel %vm694, %v6382, %v6386
    %v6388 = vshrl.u32 %v6281, 16
    %v6390 = vrot.slane %v6388, 4
    %v6391 = vor.u32 %v6390, %v6386
    %v6392 = vrot.slane %v6391, 4
    %v6394 = vshll.u32 %v6282, 16
    %v6396 = vrot.slane %v6394, 5
    %v6397 = vsel %vm694, %v6392, %v6396
    %v6398 = vshrl.u32 %v6282, 16
    %v6400 = vrot.slane %v6398, 4
    %v6401 = vor.u32 %v6400, %v6396
    %v6402 = vrot.slane %v6401, 4
    %v6404 = vshll.u32 %v6283, 16
    %v6406 = vrot.slane %v6404, 5
    %v6407 = vsel %vm694, %v6402, %v6406
    %v6408 = vshrl.u32 %v6283, 16
    %v6410 = vrot.slane %v6408, 4
    %v6411 = vor.u32 %v6410, %v6406
    %v6412 = vrot.slane %v6411, 4
    %v6414 = vshll.u32 %v6284, 16
    %v6416 = vrot.slane %v6414, 5
    %v6417 = vsel %vm694, %v6412, %v6416
    %v6418 = vshrl.u32 %v6284, 16
    %v6420 = vrot.slane %v6418, 4
    %v6421 = vor.u32 %v6420, %v6416
    %v6422 = vrot.slane %v6421, 4
    %v6424 = vshll.u32 %v6285, 16
    %v6426 = vrot.slane %v6424, 5
    %v6427 = vsel %vm694, %v6422, %v6426
    %v6428 = vshrl.u32 %v6285, 16
    %v6430 = vrot.slane %v6428, 4
    %v6431 = vor.u32 %v6430, %v6426
    %v6432 = vrot.slane %v6431, 4
    %v6434 = vshll.u32 %v6286, 16
    %v6436 = vrot.slane %v6434, 5
    %v6437 = vsel %vm694, %v6432, %v6436
    %v6438 = vshrl.u32 %v6286, 16
    %v6440 = vrot.slane %v6438, 4
    %v6441 = vor.u32 %v6440, %v6436
    %v6442 = vrot.slane %v6441, 4
    %v6444 = vshll.u32 %v6287, 16
    %v6446 = vrot.slane %v6444, 5
    %v6447 = vsel %vm694, %v6442, %v6446
    %v6448 = vshrl.u32 %v6287, 16
    %v6450 = vrot.slane %v6448, 4
    %v6451 = vor.u32 %v6450, %v6446
    %v6452 = vrot.slane %v6451, 4
    %v6454 = vshll.u32 %v6288, 16
    %v6456 = vrot.slane %v6454, 5
    %v6457 = vsel %vm694, %v6452, %v6456
    %v6458 = vshrl.u32 %v6288, 16
    %v6460 = vrot.slane %v6458, 4
    %v6461 = vor.u32 %v6460, %v6456
    %v6462 = vrot.slane %v6461, 4
    %v6464 = vshll.u32 %v6289, 16
    %v6466 = vrot.slane %v6464, 5
    %v6467 = vsel %vm694, %v6462, %v6466
    %v6468 = vshrl.u32 %v6289, 16
    %v6470 = vrot.slane %v6468, 4
    %v6471 = vor.u32 %v6470, %v6466
    %v6472 = vrot.slane %v6471, 4
    %v6474 = vshll.u32 %v6290, 16
    %v6476 = vrot.slane %v6474, 5
    %v6477 = vsel %vm694, %v6472, %v6476
    %v6478 = vshrl.u32 %v6290, 16
    %v6480 = vrot.slane %v6478, 4
    %v6481 = vor.u32 %v6480, %v6476
    %v6482 = vrot.slane %v6481, 4
    %v6484 = vshll.u32 %v6291, 16
    %v6486 = vrot.slane %v6484, 5
    %v6487 = vsel %vm694, %v6482, %v6486
    %v6488 = vshrl.u32 %v6291, 16
    %v6490 = vrot.slane %v6488, 4
    %v6491 = vor.u32 %v6490, %v6486
    %v6492 = vrot.slane %v6491, 4
    %v6494 = vshll.u32 %v6292, 16
    %v6496 = vrot.slane %v6494, 5
    %v6497 = vsel %vm694, %v6492, %v6496
    %v6498 = vshrl.u32 %v6292, 16
    %v6500 = vrot.slane %v6498, 4
    %v6501 = vor.u32 %v6500, %v6496
    %v6502 = vrot.slane %v6501, 4
    %v6504 = vshll.u32 %v6293, 16
    %v6506 = vrot.slane %v6504, 5
    %v6507 = vsel %vm694, %v6502, %v6506
    %v6508 = vshrl.u32 %v6293, 16
    %v6510 = vrot.slane %v6508, 4
    %v6511 = vor.u32 %v6510, %v6506
    %v6512 = vrot.slane %v6511, 4
    %v6514 = vshll.u32 %v6294, 16
    %v6516 = vrot.slane %v6514, 5
    %v6517 = vsel %vm694, %v6512, %v6516
    %v6518 = vshrl.u32 %v6294, 16
    %v6520 = vrot.slane %v6518, 4
    %v6521 = vor.u32 %v6520, %v6516
    %v6522 = vrot.slane %v6521, 4
    %v6524 = vshll.u32 %v6295, 16
    %v6526 = vrot.slane %v6524, 5
    %v6527 = vsel %vm694, %v6522, %v6526
    %v6528 = vshrl.u32 %v6295, 16
    %v6530 = vrot.slane %v6528, 4
    %v6531 = vor.u32 %v6530, %v6526
    %v6532 = vrot.slane %v6531, 4
    %v6534 = vshll.u32 %v6296, 16
    %v6536 = vrot.slane %v6534, 5
    %v6537 = vsel %vm694, %v6532, %v6536
    %v6538 = vshrl.u32 %v6296, 16
    %v6540 = vrot.slane %v6538, 4
    %v6541 = vor.u32 %v6540, %v6536
    %v6542 = vrot.slane %v6541, 4
    %v6544 = vshll.u32 %v6297, 16
    %v6546 = vrot.slane %v6544, 5
    %v6547 = vsel %vm694, %v6542, %v6546
    %v6548 = vshrl.u32 %v6297, 16
    %v6550 = vrot.slane %v6548, 4
    %v6551 = vor.u32 %v6550, %v6546
    %v6552 = vrot.slane %v6551, 4
    %v6554 = vshll.u32 %v6298, 16
    %v6556 = vrot.slane %v6554, 5
    %v6557 = vsel %vm694, %v6552, %v6556
    %v6558 = vshrl.u32 %v6298, 16
    %v6560 = vrot.slane %v6558, 4
    %v6561 = vor.u32 %v6560, %v6556
    %v6562 = vrot.slane %v6561, 4
    %v6564 = vshll.u32 %v6299, 16
    %v6566 = vrot.slane %v6564, 5
    %v6567 = vsel %vm694, %v6562, %v6566
    %v6568 = vshrl.u32 %v6299, 16
    %v6570 = vrot.slane %v6568, 4
    %v6571 = vor.u32 %v6570, %v6566
    %v6572 = vrot.slane %v6571, 4
    %v6574 = vshll.u32 %v6300, 16
    %v6576 = vrot.slane %v6574, 5
    %v6577 = vsel %vm694, %v6572, %v6576
    %v6578 = vshrl.u32 %v6300, 16
    %v6580 = vrot.slane %v6578, 4
    %v6581 = vor.u32 %v6580, %v6576
    %v6582 = vrot.slane %v6581, 4
    %v6584 = vshll.u32 %v6301, 16
    %v6586 = vrot.slane %v6584, 5
    %v6587 = vsel %vm694, %v6582, %v6586
    %v6588 = vshrl.u32 %v6301, 16
    %v6590 = vrot.slane %v6588, 4
    %v6591 = vor.u32 %v6590, %v6586
    %v6592 = vrot.slane %v6591, 4
    %v6594 = vshll.u32 %v6302, 16
    %v6596 = vrot.slane %v6594, 5
    %v6597 = vsel %vm694, %v6592, %v6596
    %v6598 = vshrl.u32 %v6302, 16
    %v6600 = vrot.slane %v6598, 4
    %v6601 = vor.u32 %v6600, %v6596
    %v6602 = vrot.slane %v6601, 4
    %v6604 = vshll.u32 %v6303, 16
    %v6606 = vrot.slane %v6604, 5
    %v6607 = vsel %vm694, %v6602, %v6606
    %v6608 = vshrl.u32 %v6303, 16
    %v6610 = vrot.slane %v6608, 4
    %v6611 = vor.u32 %v6610, %v6606
    %v6612 = vrot.slane %v6611, 4
    %v6614 = vshll.u32 %v6304, 16
    %v6616 = vrot.slane %v6614, 5
    %v6617 = vsel %vm694, %v6612, %v6616
    %v6619 = vshrl.u32 %v6305, 16
    %v6621 = vrot.slane %v6619, 4
    %v6622 = vshll.u32 %v6305, 16
    %v6624 = vrot.slane %v6622, 5
    %v6625 = vor.u32 %v6621, %v6624
    %v6626 = vrot.slane %v6625, 4
    %v6628 = vshll.u32 %v6306, 16
    %v6630 = vrot.slane %v6628, 5
    %v6631 = vsel %vm694, %v6626, %v6630
    %v6632 = vshrl.u32 %v6306, 16
    %v6634 = vrot.slane %v6632, 4
    %v6635 = vor.u32 %v6634, %v6630
    %v6636 = vrot.slane %v6635, 4
    %v6638 = vshll.u32 %v6307, 16
    %v6640 = vrot.slane %v6638, 5
    %v6641 = vsel %vm694, %v6636, %v6640
    %v6642 = vshrl.u32 %v6307, 16
    %v6644 = vrot.slane %v6642, 4
    %v6645 = vor.u32 %v6644, %v6640
    %v6646 = vrot.slane %v6645, 4
    %v6648 = vshll.u32 %v6308, 16
    %v6650 = vrot.slane %v6648, 5
    %v6651 = vsel %vm694, %v6646, %v6650
    %v6652 = vshrl.u32 %v6308, 16
    %v6654 = vrot.slane %v6652, 4
    %v6655 = vor.u32 %v6654, %v6650
    %v6656 = vrot.slane %v6655, 4
    %v6658 = vshll.u32 %v6309, 16
    %v6660 = vrot.slane %v6658, 5
    %v6661 = vsel %vm694, %v6656, %v6660
    %v6662 = vshrl.u32 %v6309, 16
    %v6664 = vrot.slane %v6662, 4
    %v6665 = vor.u32 %v6664, %v6660
    %v6666 = vrot.slane %v6665, 4
    %v6668 = vshll.u32 %v6310, 16
    %v6670 = vrot.slane %v6668, 5
    %v6671 = vsel %vm694, %v6666, %v6670
    %v6672 = vshrl.u32 %v6310, 16
    %v6674 = vrot.slane %v6672, 4
    %v6675 = vor.u32 %v6674, %v6670
    %v6676 = vrot.slane %v6675, 4
    %v6678 = vshll.u32 %v6311, 16
    %v6680 = vrot.slane %v6678, 5
    %v6681 = vsel %vm694, %v6676, %v6680
    %v6682 = vshrl.u32 %v6311, 16
    %v6684 = vrot.slane %v6682, 4
    %v6685 = vor.u32 %v6684, %v6680
    %v6686 = vrot.slane %v6685, 4
    %v6688 = vshll.u32 %v6312, 16
    %v6690 = vrot.slane %v6688, 5
    %v6691 = vsel %vm694, %v6686, %v6690
    %v6692 = vshrl.u32 %v6312, 16
    %v6694 = vrot.slane %v6692, 4
    %v6695 = vor.u32 %v6694, %v6690
    %v6696 = vrot.slane %v6695, 4
    %v6698 = vshll.u32 %v6313, 16
    %v6700 = vrot.slane %v6698, 5
    %v6701 = vsel %vm694, %v6696, %v6700
    %v6702 = vshrl.u32 %v6313, 16
    %v6704 = vrot.slane %v6702, 4
    %v6705 = vor.u32 %v6704, %v6700
    %v6706 = vrot.slane %v6705, 4
    %v6708 = vshll.u32 %v6314, 16
    %v6710 = vrot.slane %v6708, 5
    %v6711 = vsel %vm694, %v6706, %v6710
    %v6712 = vshrl.u32 %v6314, 16
    %v6714 = vrot.slane %v6712, 4
    %v6715 = vor.u32 %v6714, %v6710
    %v6716 = vrot.slane %v6715, 4
    %v6718 = vshll.u32 %v6315, 16
    %v6720 = vrot.slane %v6718, 5
    %v6721 = vsel %vm694, %v6716, %v6720
    %v6722 = vshrl.u32 %v6315, 16
    %v6724 = vrot.slane %v6722, 4
    %v6725 = vor.u32 %v6724, %v6720
    %v6726 = vrot.slane %v6725, 4
    %v6728 = vshll.u32 %v6316, 16
    %v6730 = vrot.slane %v6728, 5
    %v6731 = vsel %vm694, %v6726, %v6730
    %v6732 = vshrl.u32 %v6316, 16
    %v6734 = vrot.slane %v6732, 4
    %v6735 = vor.u32 %v6734, %v6730
    %v6736 = vrot.slane %v6735, 4
    %v6738 = vshll.u32 %v6317, 16
    %v6740 = vrot.slane %v6738, 5
    %v6741 = vsel %vm694, %v6736, %v6740
    %v6742 = vshrl.u32 %v6317, 16
    %v6744 = vrot.slane %v6742, 4
    %v6745 = vor.u32 %v6744, %v6740
    %v6746 = vrot.slane %v6745, 4
    %v6748 = vshll.u32 %v6318, 16
    %v6750 = vrot.slane %v6748, 5
    %v6751 = vsel %vm694, %v6746, %v6750
    %v6752 = vshrl.u32 %v6318, 16
    %v6754 = vrot.slane %v6752, 4
    %v6755 = vor.u32 %v6754, %v6750
    %v6756 = vrot.slane %v6755, 4
    %v6758 = vshll.u32 %v6319, 16
    %v6760 = vrot.slane %v6758, 5
    %v6761 = vsel %vm694, %v6756, %v6760
    %v6762 = vshrl.u32 %v6319, 16
    %v6764 = vrot.slane %v6762, 4
    %v6765 = vor.u32 %v6764, %v6760
    %v6766 = vrot.slane %v6765, 4
    %v6768 = vshll.u32 %v6320, 16
    %v6770 = vrot.slane %v6768, 5
    %v6771 = vsel %vm694, %v6766, %v6770
    %v6772 = vshrl.u32 %v6320, 16
    %v6774 = vrot.slane %v6772, 4
    %v6775 = vor.u32 %v6774, %v6770
    %v6776 = vrot.slane %v6775, 4
    %v6778 = vshll.u32 %v6321, 16
    %v6780 = vrot.slane %v6778, 5
    %v6781 = vsel %vm694, %v6776, %v6780
    %v6782 = vshrl.u32 %v6321, 16
    %v6784 = vrot.slane %v6782, 4
    %v6785 = vor.u32 %v6784, %v6780
    %v6786 = vrot.slane %v6785, 4
    %v6788 = vshll.u32 %v6322, 16
    %v6790 = vrot.slane %v6788, 5
    %v6791 = vsel %vm694, %v6786, %v6790
    %v6792 = vshrl.u32 %v6322, 16
    %v6794 = vrot.slane %v6792, 4
    %v6795 = vor.u32 %v6794, %v6790
    %v6796 = vrot.slane %v6795, 4
    %v6798 = vshll.u32 %v6323, 16
    %v6800 = vrot.slane %v6798, 5
    %v6801 = vsel %vm694, %v6796, %v6800
    %v6802 = vshrl.u32 %v6323, 16
    %v6804 = vrot.slane %v6802, 4
    %v6805 = vor.u32 %v6804, %v6800
    %v6806 = vrot.slane %v6805, 4
    %v6808 = vshll.u32 %v6324, 16
    %v6810 = vrot.slane %v6808, 5
    %v6811 = vsel %vm694, %v6806, %v6810
    %v6812 = vshrl.u32 %v6324, 16
    %v6814 = vrot.slane %v6812, 4
    %v6815 = vor.u32 %v6814, %v6810
    %v6816 = vrot.slane %v6815, 4
    %v6818 = vshll.u32 %v6325, 16
    %v6820 = vrot.slane %v6818, 5
    %v6821 = vsel %vm694, %v6816, %v6820
    %v6822 = vshrl.u32 %v6325, 16
    %v6824 = vrot.slane %v6822, 4
    %v6825 = vor.u32 %v6824, %v6820
    %v6826 = vrot.slane %v6825, 4
    %v6828 = vshll.u32 %v6326, 16
    %v6830 = vrot.slane %v6828, 5
    %v6831 = vsel %vm694, %v6826, %v6830
    %v6832 = vshrl.u32 %v6326, 16
    %v6834 = vrot.slane %v6832, 4
    %v6835 = vor.u32 %v6834, %v6830
    %v6836 = vrot.slane %v6835, 4
    %v6838 = vshll.u32 %v6327, 16
    %v6840 = vrot.slane %v6838, 5
    %v6841 = vsel %vm694, %v6836, %v6840
    %v6842 = vshrl.u32 %v6327, 16
    %v6844 = vrot.slane %v6842, 4
    %v6845 = vor.u32 %v6844, %v6840
    %v6846 = vrot.slane %v6845, 4
    %v6848 = vshll.u32 %v6328, 16
    %v6850 = vrot.slane %v6848, 5
    %v6851 = vsel %vm694, %v6846, %v6850
    %v6852 = vshrl.u32 %v6328, 16
    %v6854 = vrot.slane %v6852, 4
    %v6855 = vor.u32 %v6854, %v6850
    %v6856 = vrot.slane %v6855, 4
    %v6858 = vshll.u32 %v6329, 16
    %v6860 = vrot.slane %v6858, 5
    %v6861 = vsel %vm694, %v6856, %v6860
    %v6862 = vshrl.u32 %v6329, 16
    %v6864 = vrot.slane %v6862, 4
    %v6865 = vor.u32 %v6864, %v6860
    %v6866 = vrot.slane %v6865, 4
    %v6868 = vshll.u32 %v6330, 16
    %v6870 = vrot.slane %v6868, 5
    %v6871 = vsel %vm694, %v6866, %v6870
    %v6872 = vshrl.u32 %v6330, 16
    %v6874 = vrot.slane %v6872, 4
    %v6875 = vor.u32 %v6874, %v6870
    %v6876 = vrot.slane %v6875, 4
    %v6878 = vshll.u32 %v6331, 16
    %v6880 = vrot.slane %v6878, 5
    %v6881 = vsel %vm694, %v6876, %v6880
    %v6882 = vshrl.u32 %v6331, 16
    %v6884 = vrot.slane %v6882, 4
    %v6885 = vor.u32 %v6884, %v6880
    %v6886 = vrot.slane %v6885, 4
    %v6888 = vshll.u32 %v6332, 16
    %v6890 = vrot.slane %v6888, 5
    %v6891 = vsel %vm694, %v6886, %v6890
    %v6892 = vshrl.u32 %v6332, 16
    %v6894 = vrot.slane %v6892, 4
    %v6895 = vor.u32 %v6894, %v6890
    %v6896 = vrot.slane %v6895, 4
    %v6898 = vshll.u32 %v6333, 16
    %v6900 = vrot.slane %v6898, 5
    %v6901 = vsel %vm694, %v6896, %v6900
    %s6902 = scalar_lea.vmem %s1, 14
    %v6903 = vld [vmem:[%s6902] sm:$0x3]
    %v6904 = vunpack.c.l.b16 %v6347
    %v6905 = vunpack.c.l.b16 %v6357
    %v6906 = vunpack.c.l.b16 %v6367
    %v6907 = vunpack.c.l.b16 %v6377
    %v6908 = vunpack.c.l.b16 %v6387
    %v6909 = vunpack.c.l.b16 %v6397
    %v6910 = vunpack.c.l.b16 %v6407
    %v6911 = vunpack.c.l.b16 %v6417
    %v6912 = vunpack.c.l.b16 %v6427
    %v6913 = vunpack.c.l.b16 %v6437
    %v6914 = vunpack.c.l.b16 %v6447
    %v6915 = vunpack.c.l.b16 %v6457
    %v6916 = vunpack.c.l.b16 %v6467
    %v6917 = vunpack.c.l.b16 %v6477
    %v6918 = vunpack.c.l.b16 %v6487
    %v6919 = vunpack.c.l.b16 %v6497
    %v6920 = vunpack.c.l.b16 %v6507
    %v6921 = vunpack.c.l.b16 %v6517
    %v6922 = vunpack.c.l.b16 %v6527
    %v6923 = vunpack.c.l.b16 %v6537
    %v6924 = vunpack.c.l.b16 %v6547
    %v6925 = vunpack.c.l.b16 %v6557
    %v6926 = vunpack.c.l.b16 %v6567
    %v6927 = vunpack.c.l.b16 %v6577
    %v6928 = vunpack.c.l.b16 %v6587
    %v6929 = vunpack.c.l.b16 %v6597
    %v6930 = vunpack.c.l.b16 %v6607
    %v6931 = vunpack.c.l.b16 %v6617
    %v6932 = vunpack.c.l.b16 %v6631
    %v6933 = vunpack.c.l.b16 %v6641
    %v6934 = vunpack.c.l.b16 %v6651
    %v6935 = vunpack.c.l.b16 %v6661
    %v6936 = vunpack.c.l.b16 %v6671
    %v6937 = vunpack.c.l.b16 %v6681
    %v6938 = vunpack.c.l.b16 %v6691
    %v6939 = vunpack.c.l.b16 %v6701
    %v6940 = vunpack.c.l.b16 %v6711
    %v6941 = vunpack.c.l.b16 %v6721
    %v6942 = vunpack.c.l.b16 %v6731
    %v6943 = vunpack.c.l.b16 %v6741
    %v6944 = vunpack.c.l.b16 %v6751
    %v6945 = vunpack.c.l.b16 %v6761
    %v6946 = vunpack.c.l.b16 %v6771
    %v6947 = vunpack.c.l.b16 %v6781
    %v6948 = vunpack.c.l.b16 %v6791
    %v6949 = vunpack.c.l.b16 %v6801
    %v6950 = vunpack.c.l.b16 %v6811
    %v6951 = vunpack.c.l.b16 %v6821
    %v6952 = vunpack.c.l.b16 %v6831
    %v6953 = vunpack.c.l.b16 %v6841
    %v6954 = vunpack.c.l.b16 %v6851
    %v6955 = vunpack.c.l.b16 %v6861
    %v6956 = vunpack.c.l.b16 %v6871
    %v6957 = vunpack.c.l.b16 %v6881
    %v6958 = vunpack.c.l.b16 %v6891
    %v6959 = vunpack.c.l.b16 %v6901
    %v6960 = vpack.c.b16 %v6905, %v6904
    %v6961 = vpack.c.b16 %v6907, %v6906
    %v6962 = vpack.c.b16 %v6909, %v6908
    %v6963 = vpack.c.b16 %v6911, %v6910
    %v6964 = vpack.c.b16 %v6913, %v6912
    %v6965 = vpack.c.b16 %v6915, %v6914
    %v6966 = vpack.c.b16 %v6917, %v6916
    %v6967 = vpack.c.b16 %v6919, %v6918
    %v6968 = vpack.c.b16 %v6921, %v6920
    %v6969 = vpack.c.b16 %v6923, %v6922
    %v6970 = vpack.c.b16 %v6925, %v6924
    %v6971 = vpack.c.b16 %v6927, %v6926
    %v6972 = vpack.c.b16 %v6929, %v6928
    %v6973 = vpack.c.b16 %v6931, %v6930
    %v6974 = vpack.c.b16 %v6933, %v6932
    %v6975 = vpack.c.b16 %v6935, %v6934
    %v6976 = vpack.c.b16 %v6937, %v6936
    %v6977 = vpack.c.b16 %v6939, %v6938
    %v6978 = vpack.c.b16 %v6941, %v6940
    %v6979 = vpack.c.b16 %v6943, %v6942
    %v6980 = vpack.c.b16 %v6945, %v6944
    %v6981 = vpack.c.b16 %v6947, %v6946
    %v6982 = vpack.c.b16 %v6949, %v6948
    %v6983 = vpack.c.b16 %v6951, %v6950
    %v6984 = vpack.c.b16 %v6953, %v6952
    %v6985 = vpack.c.b16 %v6955, %v6954
    %v6986 = vpack.c.b16 %v6957, %v6956
    %v6987 = vpack.c.b16 %v6959, %v6958
    %v6989 = vsel %vm231, %v6960, 0
    %v6992 = vsel %vm231, %v6961, 0
    %v6995 = vsel %vm231, %v6962, 0
    %v6998 = vsel %vm231, %v6963, 0
    %v7001 = vsel %vm231, %v6964, 0
    %v7004 = vsel %vm231, %v6965, 0
    %v7007 = vsel %vm231, %v6966, 0
    %v7010 = vsel %vm231, %v6967, 0
    %v7013 = vsel %vm231, %v6968, 0
    %v7016 = vsel %vm231, %v6969, 0
    %v7019 = vsel %vm231, %v6970, 0
    %v7022 = vsel %vm231, %v6971, 0
    %v7025 = vsel %vm231, %v6972, 0
    %v7028 = vsel %vm231, %v6973, 0
    %v7031 = vsel %vm231, %v6974, 0
    %v7034 = vsel %vm231, %v6975, 0
    %v7037 = vsel %vm231, %v6976, 0
    %v7040 = vsel %vm231, %v6977, 0
    %v7043 = vsel %vm231, %v6978, 0
    %v7046 = vsel %vm231, %v6979, 0
    %v7049 = vsel %vm231, %v6980, 0
    %v7052 = vsel %vm231, %v6981, 0
    %v7055 = vsel %vm231, %v6982, 0
    %v7058 = vsel %vm231, %v6983, 0
    %v7061 = vsel %vm231, %v6984, 0
    %v7064 = vsel %vm231, %v6985, 0
    %v7067 = vsel %vm231, %v6986, 0
    %v7070 = vsel %vm231, %v6987, 0
    %v7073 = vsel %vm316, %v6903, 0
    %7075 = vmatprep.subr.bf16.mxu0 0
    %7076 = vmatpush1.bf16.msra.mxu0 %v7073
    %7077 = vmatprep.subr.bf16.mxu0 0
    %7078 = vmatpush1.bf16.msra.mxu0 0
    %7079 = vmatprep.subr.bf16.mxu0 0
    %7080 = vmatpush1.bf16.msra.mxu0 0
    %7081 = vmatprep.subr.bf16.mxu0 0
    %7082 = vmatpush1.bf16.msra.mxu0 0
    %7083 = vmatprep.subr.bf16.mxu0 0
    %7084 = vmatpush1.bf16.msra.mxu0 0
    %7085 = vmatprep.subr.bf16.mxu0 0
    %7086 = vmatpush1.bf16.msra.mxu0 0
    %7087 = vmatprep.subr.bf16.mxu0 0
    %7088 = vmatpush1.bf16.msra.mxu0 0
    %7089 = vmatprep.subr.bf16.mxu0 0
    %7090 = vmatpush1.bf16.msra.mxu0 0
    %7091 = vmatprep.subr.bf16.mxu0 0
    %7092 = vmatpush1.bf16.msra.mxu0 0
    %7093 = vmatprep.subr.bf16.mxu0 0
    %7094 = vmatpush1.bf16.msra.mxu0 0
    %7095 = vmatprep.subr.bf16.mxu0 0
    %7096 = vmatpush1.bf16.msra.mxu0 0
    %7097 = vmatprep.subr.bf16.mxu0 0
    %7098 = vmatpush1.bf16.msra.mxu0 0
    %7099 = vmatprep.subr.bf16.mxu0 0
    %7100 = vmatpush1.bf16.msra.mxu0 0
    %7101 = vmatprep.subr.bf16.mxu0 0
    %7102 = vmatpush1.bf16.msra.mxu0 0
    %7103 = vmatprep.subr.bf16.mxu0 0
    %7104 = vmatpush1.bf16.msra.mxu0 0
    %7105 = vmatprep.subr.bf16.mxu0 0
    %7106 = vmatpush1.bf16.msra.mxu0 0
    %7107 = vmatprep.mubr.bf16.mxu0 0
    %7108 = vmatmul.mubr.bf16.gmra.mrb[0].mxu0 %v6989
    %v7109 = vpop.f32.mrb[0].mxu0
    %v7110 = vadd.f32 0.0, %v7109
    %v7111 = vpop.f32.mrb[0].mxu0
    %v7112 = vpop.f32.mrb[0].mxu0
    %v7113 = vadd.f32 0.0, %v7112
    %v7114 = vpop.f32.mrb[0].mxu0
    %7115 = vmatprep.mubr.bf16.mxu0 0
    %7116 = vmatmul.mubr.bf16.gmra.mrb[0].mxu0 %v6992
    %v7117 = vpop.f32.mrb[0].mxu0
    %v7118 = vadd.f32 0.0, %v7117
    %v7119 = vpop.f32.mrb[0].mxu0
    %v7120 = vpop.f32.mrb[0].mxu0
    %v7121 = vadd.f32 0.0, %v7120
    %v7122 = vpop.f32.mrb[0].mxu0
    %7123 = vmatprep.mubr.bf16.mxu0 0
    %7124 = vmatmul.mubr.bf16.gmra.mrb[0].mxu0 %v6995
    %v7125 = vpop.f32.mrb[0].mxu0
    %v7126 = vadd.f32 0.0, %v7125
    %v7127 = vpop.f32.mrb[0].mxu0
    %v7128 = vpop.f32.mrb[0].mxu0
    %v7129 = vadd.f32 0.0, %v7128
    %v7130 = vpop.f32.mrb[0].mxu0
    %7131 = vmatprep.mubr.bf16.mxu0 0
    %7132 = vmatmul.mubr.bf16.gmra.mrb[0].mxu0 %v6998
    %v7133 = vpop.f32.mrb[0].mxu0
    %v7134 = vadd.f32 0.0, %v7133
    %v7135 = vpop.f32.mrb[0].mxu0
    %v7136 = vpop.f32.mrb[0].mxu0
    %v7137 = vadd.f32 0.0, %v7136
    %v7138 = vpop.f32.mrb[0].mxu0
    %7139 = vmatprep.mubr.bf16.mxu0 0
    %7140 = vmatmul.mubr.bf16.gmra.mrb[0].mxu0 %v7001
    %v7141 = vpop.f32.mrb[0].mxu0
    %v7142 = vadd.f32 0.0, %v7141
    %v7143 = vpop.f32.mrb[0].mxu0
    %v7144 = vpop.f32.mrb[0].mxu0
    %v7145 = vadd.f32 0.0, %v7144
    %v7146 = vpop.f32.mrb[0].mxu0
    %7147 = vmatprep.mubr.bf16.mxu0 0
    %7148 = vmatmul.mubr.bf16.gmra.mrb[0].mxu0 %v7004
    %v7149 = vpop.f32.mrb[0].mxu0
    %v7150 = vadd.f32 0.0, %v7149
    %v7151 = vpop.f32.mrb[0].mxu0
    %v7152 = vpop.f32.mrb[0].mxu0
    %v7153 = vadd.f32 0.0, %v7152
    %v7154 = vpop.f32.mrb[0].mxu0
    %7155 = vmatprep.mubr.bf16.mxu0 0
    %7156 = vmatmul.mubr.bf16.gmra.mrb[0].mxu0 %v7007
    %v7157 = vpop.f32.mrb[0].mxu0
    %v7158 = vadd.f32 0.0, %v7157
    %v7159 = vpop.f32.mrb[0].mxu0
    %v7160 = vpop.f32.mrb[0].mxu0
    %v7161 = vadd.f32 0.0, %v7160
    %v7162 = vpop.f32.mrb[0].mxu0
    %7163 = vmatprep.mubr.bf16.mxu0 0
    %7164 = vmatmul.mubr.bf16.gmra.mrb[0].mxu0 %v7010
    %v7165 = vpop.f32.mrb[0].mxu0
    %v7166 = vadd.f32 0.0, %v7165
    %v7167 = vpop.f32.mrb[0].mxu0
    %v7168 = vpop.f32.mrb[0].mxu0
    %v7169 = vadd.f32 0.0, %v7168
    %v7170 = vpop.f32.mrb[0].mxu0
    %7171 = vmatprep.mubr.bf16.mxu0 0
    %7172 = vmatmul.mubr.bf16.gmra.mrb[0].mxu0 %v7013
    %v7173 = vpop.f32.mrb[0].mxu0
    %v7174 = vadd.f32 0.0, %v7173
    %v7175 = vpop.f32.mrb[0].mxu0
    %v7176 = vpop.f32.mrb[0].mxu0
    %v7177 = vadd.f32 0.0, %v7176
    %v7178 = vpop.f32.mrb[0].mxu0
    %7179 = vmatprep.mubr.bf16.mxu0 0
    %7180 = vmatmul.mubr.bf16.gmra.mrb[0].mxu0 %v7016
    %v7181 = vpop.f32.mrb[0].mxu0
    %v7182 = vadd.f32 0.0, %v7181
    %v7183 = vpop.f32.mrb[0].mxu0
    %v7184 = vpop.f32.mrb[0].mxu0
    %v7185 = vadd.f32 0.0, %v7184
    %v7186 = vpop.f32.mrb[0].mxu0
    %7187 = vmatprep.mubr.bf16.mxu0 0
    %7188 = vmatmul.mubr.bf16.gmra.mrb[0].mxu0 %v7019
    %v7189 = vpop.f32.mrb[0].mxu0
    %v7190 = vadd.f32 0.0, %v7189
    %v7191 = vpop.f32.mrb[0].mxu0
    %v7192 = vpop.f32.mrb[0].mxu0
    %v7193 = vadd.f32 0.0, %v7192
    %v7194 = vpop.f32.mrb[0].mxu0
    %7195 = vmatprep.mubr.bf16.mxu0 0
    %7196 = vmatmul.mubr.bf16.gmra.mrb[0].mxu0 %v7022
    %v7197 = vpop.f32.mrb[0].mxu0
    %v7198 = vadd.f32 0.0, %v7197
    %v7199 = vpop.f32.mrb[0].mxu0
    %v7200 = vpop.f32.mrb[0].mxu0
    %v7201 = vadd.f32 0.0, %v7200
    %v7202 = vpop.f32.mrb[0].mxu0
    %7203 = vmatprep.mubr.bf16.mxu0 0
    %7204 = vmatmul.mubr.bf16.gmra.mrb[0].mxu0 %v7025
    %v7205 = vpop.f32.mrb[0].mxu0
    %v7206 = vadd.f32 0.0, %v7205
    %v7207 = vpop.f32.mrb[0].mxu0
    %v7208 = vpop.f32.mrb[0].mxu0
    %v7209 = vadd.f32 0.0, %v7208
    %v7210 = vpop.f32.mrb[0].mxu0
    %7211 = vmatprep.mubr.bf16.mxu0 0
    %7212 = vmatmul.mubr.bf16.gmra.mrb[0].mxu0 %v7028
    %v7213 = vpop.f32.mrb[0].mxu0
    %v7214 = vadd.f32 0.0, %v7213
    %v7215 = vpop.f32.mrb[0].mxu0
    %v7216 = vpop.f32.mrb[0].mxu0
    %v7217 = vadd.f32 0.0, %v7216
    %v7218 = vpop.f32.mrb[0].mxu0
    %7219 = vmatprep.mubr.bf16.mxu0 0
    %7220 = vmatmul.mubr.bf16.gmra.mrb[0].mxu0 %v7031
    %v7221 = vpop.f32.mrb[0].mxu0
    %v7222 = vadd.f32 0.0, %v7221
    %v7223 = vpop.f32.mrb[0].mxu0
    %v7224 = vpop.f32.mrb[0].mxu0
    %v7225 = vadd.f32 0.0, %v7224
    %v7226 = vpop.f32.mrb[0].mxu0
    %7227 = vmatprep.mubr.bf16.mxu0 0
    %7228 = vmatmul.mubr.bf16.gmra.mrb[0].mxu0 %v7034
    %v7229 = vpop.f32.mrb[0].mxu0
    %v7230 = vadd.f32 0.0, %v7229
    %v7231 = vpop.f32.mrb[0].mxu0
    %v7232 = vpop.f32.mrb[0].mxu0
    %v7233 = vadd.f32 0.0, %v7232
    %v7234 = vpop.f32.mrb[0].mxu0
    %7235 = vmatprep.mubr.bf16.mxu0 0
    %7236 = vmatmul.mubr.bf16.gmra.mrb[0].mxu0 %v7037
    %v7237 = vpop.f32.mrb[0].mxu0
    %v7238 = vadd.f32 0.0, %v7237
    %v7239 = vpop.f32.mrb[0].mxu0
    %v7240 = vpop.f32.mrb[0].mxu0
    %v7241 = vadd.f32 0.0, %v7240
    %v7242 = vpop.f32.mrb[0].mxu0
    %7243 = vmatprep.mubr.bf16.mxu0 0
    %7244 = vmatmul.mubr.bf16.gmra.mrb[0].mxu0 %v7040
    %v7245 = vpop.f32.mrb[0].mxu0
    %v7246 = vadd.f32 0.0, %v7245
    %v7247 = vpop.f32.mrb[0].mxu0
    %v7248 = vpop.f32.mrb[0].mxu0
    %v7249 = vadd.f32 0.0, %v7248
    %v7250 = vpop.f32.mrb[0].mxu0
    %7251 = vmatprep.mubr.bf16.mxu0 0
    %7252 = vmatmul.mubr.bf16.gmra.mrb[0].mxu0 %v7043
    %v7253 = vpop.f32.mrb[0].mxu0
    %v7254 = vadd.f32 0.0, %v7253
    %v7255 = vpop.f32.mrb[0].mxu0
    %v7256 = vpop.f32.mrb[0].mxu0
    %v7257 = vadd.f32 0.0, %v7256
    %v7258 = vpop.f32.mrb[0].mxu0
    %7259 = vmatprep.mubr.bf16.mxu0 0
    %7260 = vmatmul.mubr.bf16.gmra.mrb[0].mxu0 %v7046
    %v7261 = vpop.f32.mrb[0].mxu0
    %v7262 = vadd.f32 0.0, %v7261
    %v7263 = vpop.f32.mrb[0].mxu0
    %v7264 = vpop.f32.mrb[0].mxu0
    %v7265 = vadd.f32 0.0, %v7264
    %v7266 = vpop.f32.mrb[0].mxu0
    %7267 = vmatprep.mubr.bf16.mxu0 0
    %7268 = vmatmul.mubr.bf16.gmra.mrb[0].mxu0 %v7049
    %v7269 = vpop.f32.mrb[0].mxu0
    %v7270 = vadd.f32 0.0, %v7269
    %v7271 = vpop.f32.mrb[0].mxu0
    %v7272 = vpop.f32.mrb[0].mxu0
    %v7273 = vadd.f32 0.0, %v7272
    %v7274 = vpop.f32.mrb[0].mxu0
    %7275 = vmatprep.mubr.bf16.mxu0 0
    %7276 = vmatmul.mubr.bf16.gmra.mrb[0].mxu0 %v7052
    %v7277 = vpop.f32.mrb[0].mxu0
    %v7278 = vadd.f32 0.0, %v7277
    %v7279 = vpop.f32.mrb[0].mxu0
    %v7280 = vpop.f32.mrb[0].mxu0
    %v7281 = vadd.f32 0.0, %v7280
    %v7282 = vpop.f32.mrb[0].mxu0
    %7283 = vmatprep.mubr.bf16.mxu0 0
    %7284 = vmatmul.mubr.bf16.gmra.mrb[0].mxu0 %v7055
    %v7285 = vpop.f32.mrb[0].mxu0
    %v7286 = vadd.f32 0.0, %v7285
    %v7287 = vpop.f32.mrb[0].mxu0
    %v7288 = vpop.f32.mrb[0].mxu0
    %v7289 = vadd.f32 0.0, %v7288
    %v7290 = vpop.f32.mrb[0].mxu0
    %7291 = vmatprep.mubr.bf16.mxu0 0
    %7292 = vmatmul.mubr.bf16.gmra.mrb[0].mxu0 %v7058
    %v7293 = vpop.f32.mrb[0].mxu0
    %v7294 = vadd.f32 0.0, %v7293
    %v7295 = vpop.f32.mrb[0].mxu0
    %v7296 = vpop.f32.mrb[0].mxu0
    %v7297 = vadd.f32 0.0, %v7296
    %v7298 = vpop.f32.mrb[0].mxu0
    %7299 = vmatprep.mubr.bf16.mxu0 0
    %7300 = vmatmul.mubr.bf16.gmra.mrb[0].mxu0 %v7061
    %v7301 = vpop.f32.mrb[0].mxu0
    %v7302 = vadd.f32 0.0, %v7301
    %v7303 = vpop.f32.mrb[0].mxu0
    %v7304 = vpop.f32.mrb[0].mxu0
    %v7305 = vadd.f32 0.0, %v7304
    %v7306 = vpop.f32.mrb[0].mxu0
    %7307 = vmatprep.mubr.bf16.mxu0 0
    %7308 = vmatmul.mubr.bf16.gmra.mrb[0].mxu0 %v7064
    %v7309 = vpop.f32.mrb[0].mxu0
    %v7310 = vadd.f32 0.0, %v7309
    %v7311 = vpop.f32.mrb[0].mxu0
    %v7312 = vpop.f32.mrb[0].mxu0
    %v7313 = vadd.f32 0.0, %v7312
    %v7314 = vpop.f32.mrb[0].mxu0
    %7315 = vmatprep.mubr.bf16.mxu0 0
    %7316 = vmatmul.mubr.bf16.gmra.mrb[0].mxu0 %v7067
    %v7317 = vpop.f32.mrb[0].mxu0
    %v7318 = vadd.f32 0.0, %v7317
    %v7319 = vpop.f32.mrb[0].mxu0
    %v7320 = vpop.f32.mrb[0].mxu0
    %v7321 = vadd.f32 0.0, %v7320
    %v7322 = vpop.f32.mrb[0].mxu0
    %7323 = vmatprep.mubr.bf16.mxu0 0
    %7324 = vmatmul.mubr.bf16.gmra.mrb[0].mxu0 %v7070
    %v7325 = vpop.f32.mrb[0].mxu0
    %v7326 = vadd.f32 0.0, %v7325
    %v7327 = vpop.f32.mrb[0].mxu0
    %v7328 = vpop.f32.mrb[0].mxu0
    %v7329 = vadd.f32 0.0, %v7328
    %v7330 = vpop.f32.mrb[0].mxu0
    %7331 = vdwg.mxu0
    %v7332 = vld [vmem:[#allocation2] sm:$0xff]
    %v7333 = vld [vmem:[#allocation2 + $0x8] sm:$0xff]
    %v7334 = vld [vmem:[#allocation2 + $0x10] sm:$0xff]
    %v7335 = vld [vmem:[#allocation2 + $0x18] sm:$0xff]
    %v7336 = vld [vmem:[#allocation2 + $0x20] sm:$0xff]
    %v7337 = vld [vmem:[#allocation2 + $0x28] sm:$0xff]
    %v7338 = vld [vmem:[#allocation2 + $0x30] sm:$0xff]
    %v7339 = vld [vmem:[#allocation2 + $0x38] sm:$0xff]
    %v7340 = vld [vmem:[#allocation2 + $0x40] sm:$0xff]
    %v7341 = vld [vmem:[#allocation2 + $0x48] sm:$0xff]
    %v7342 = vld [vmem:[#allocation2 + $0x50] sm:$0xff]
    %v7343 = vld [vmem:[#allocation2 + $0x58] sm:$0xff]
    %v7344 = vld [vmem:[#allocation2 + $0x60] sm:$0xff]
    %v7345 = vld [vmem:[#allocation2 + $0x68] sm:$0xff]
    %v7346 = vld [vmem:[#allocation2 + $0x70] sm:$0xff]
    %v7347 = vld [vmem:[#allocation2 + $0x78] sm:$0xff]
    %v7348 = vld [vmem:[#allocation2 + $0x80] sm:$0xff]
    %v7349 = vld [vmem:[#allocation2 + $0x88] sm:$0xff]
    %v7350 = vld [vmem:[#allocation2 + $0x90] sm:$0xff]
    %v7351 = vld [vmem:[#allocation2 + $0x98] sm:$0xff]
    %v7352 = vld [vmem:[#allocation2 + $0xa0] sm:$0xff]
    %v7353 = vld [vmem:[#allocation2 + $0xa8] sm:$0xff]
    %v7354 = vld [vmem:[#allocation2 + $0xb0] sm:$0xff]
    %v7355 = vld [vmem:[#allocation2 + $0xb8] sm:$0xff]
    %v7356 = vld [vmem:[#allocation2 + $0xc0] sm:$0xff]
    %v7357 = vld [vmem:[#allocation2 + $0xc8] sm:$0xff]
    %v7358 = vld [vmem:[#allocation2 + $0xd0] sm:$0xff]
    %v7359 = vld [vmem:[#allocation2 + $0xd8] sm:$0xff]
    %v7360 = vld [vmem:[#allocation2 + $0xe0] sm:$0xff]
    %v7361 = vld [vmem:[#allocation2 + $0xe8] sm:$0xff]
    %v7362 = vld [vmem:[#allocation2 + $0xf0] sm:$0xff]
    %v7363 = vld [vmem:[#allocation2 + $0xf8] sm:$0xff]
    %v7364 = vld [vmem:[#allocation2 + $0x100] sm:$0xff]
    %v7365 = vld [vmem:[#allocation2 + $0x108] sm:$0xff]
    %v7366 = vld [vmem:[#allocation2 + $0x110] sm:$0xff]
    %v7367 = vld [vmem:[#allocation2 + $0x118] sm:$0xff]
    %v7368 = vld [vmem:[#allocation2 + $0x120] sm:$0xff]
    %v7369 = vld [vmem:[#allocation2 + $0x128] sm:$0xff]
    %v7370 = vld [vmem:[#allocation2 + $0x130] sm:$0xff]
    %v7371 = vld [vmem:[#allocation2 + $0x138] sm:$0xff]
    %v7372 = vld [vmem:[#allocation2 + $0x140] sm:$0xff]
    %v7373 = vld [vmem:[#allocation2 + $0x148] sm:$0xff]
    %v7374 = vld [vmem:[#allocation2 + $0x150] sm:$0xff]
    %v7375 = vld [vmem:[#allocation2 + $0x158] sm:$0xff]
    %v7376 = vld [vmem:[#allocation2 + $0x160] sm:$0xff]
    %v7377 = vld [vmem:[#allocation2 + $0x168] sm:$0xff]
    %v7378 = vld [vmem:[#allocation2 + $0x170] sm:$0xff]
    %v7379 = vld [vmem:[#allocation2 + $0x178] sm:$0xff]
    %v7380 = vld [vmem:[#allocation2 + $0x180] sm:$0xff]
    %v7381 = vld [vmem:[#allocation2 + $0x188] sm:$0xff]
    %v7382 = vld [vmem:[#allocation2 + $0x190] sm:$0xff]
    %v7383 = vld [vmem:[#allocation2 + $0x198] sm:$0xff]
    %v7384 = vld [vmem:[#allocation2 + $0x1a0] sm:$0xff]
    %v7385 = vld [vmem:[#allocation2 + $0x1a8] sm:$0xff]
    %v7386 = vld [vmem:[#allocation2 + $0x1b0] sm:$0xff]
    %v7387 = vld [vmem:[#allocation2 + $0x1b8] sm:$0xff]
    %v7388 = vadd.f32 %v7332, %v7110
    %v7389 = vadd.f32 %v7333, %v7113
    %v7390 = vadd.f32 %v7334, %v7118
    %v7391 = vadd.f32 %v7335, %v7121
    %v7392 = vadd.f32 %v7336, %v7126
    %v7393 = vadd.f32 %v7337, %v7129
    %v7394 = vadd.f32 %v7338, %v7134
    %v7395 = vadd.f32 %v7339, %v7137
    %v7396 = vadd.f32 %v7340, %v7142
    %v7397 = vadd.f32 %v7341, %v7145
    %v7398 = vadd.f32 %v7342, %v7150
    %v7399 = vadd.f32 %v7343, %v7153
    %v7400 = vadd.f32 %v7344, %v7158
    %v7401 = vadd.f32 %v7345, %v7161
    %v7402 = vadd.f32 %v7346, %v7166
    %v7403 = vadd.f32 %v7347, %v7169
    %v7404 = vadd.f32 %v7348, %v7174
    %v7405 = vadd.f32 %v7349, %v7177
    %v7406 = vadd.f32 %v7350, %v7182
    %v7407 = vadd.f32 %v7351, %v7185
    %v7408 = vadd.f32 %v7352, %v7190
    %v7409 = vadd.f32 %v7353, %v7193
    %v7410 = vadd.f32 %v7354, %v7198
    %v7411 = vadd.f32 %v7355, %v7201
    %v7412 = vadd.f32 %v7356, %v7206
    %v7413 = vadd.f32 %v7357, %v7209
    %v7414 = vadd.f32 %v7358, %v7214
    %v7415 = vadd.f32 %v7359, %v7217
    %v7416 = vadd.f32 %v7360, %v7222
    %v7417 = vadd.f32 %v7361, %v7225
    %v7418 = vadd.f32 %v7362, %v7230
    %v7419 = vadd.f32 %v7363, %v7233
    %v7420 = vadd.f32 %v7364, %v7238
    %v7421 = vadd.f32 %v7365, %v7241
    %v7422 = vadd.f32 %v7366, %v7246
    %v7423 = vadd.f32 %v7367, %v7249
    %v7424 = vadd.f32 %v7368, %v7254
    %v7425 = vadd.f32 %v7369, %v7257
    %v7426 = vadd.f32 %v7370, %v7262
    %v7427 = vadd.f32 %v7371, %v7265
    %v7428 = vadd.f32 %v7372, %v7270
    %v7429 = vadd.f32 %v7373, %v7273
    %v7430 = vadd.f32 %v7374, %v7278
    %v7431 = vadd.f32 %v7375, %v7281
    %v7432 = vadd.f32 %v7376, %v7286
    %v7433 = vadd.f32 %v7377, %v7289
    %v7434 = vadd.f32 %v7378, %v7294
    %v7435 = vadd.f32 %v7379, %v7297
    %v7436 = vadd.f32 %v7380, %v7302
    %v7437 = vadd.f32 %v7381, %v7305
    %v7438 = vadd.f32 %v7382, %v7310
    %v7439 = vadd.f32 %v7383, %v7313
    %v7440 = vadd.f32 %v7384, %v7318
    %v7441 = vadd.f32 %v7385, %v7321
    %v7442 = vadd.f32 %v7386, %v7326
    %v7443 = vadd.f32 %v7387, %v7329
    %7444 = vst.msk [vmem:[#allocation2] sm:$0xff] %vm577, %v7388
    %7445 = vst.msk [vmem:[#allocation2 + $0x8] sm:$0xff] %vm577, %v7389
    %7446 = vst.msk [vmem:[#allocation2 + $0x10] sm:$0xff] %vm577, %v7390
    %7447 = vst.msk [vmem:[#allocation2 + $0x18] sm:$0xff] %vm577, %v7391
    %7448 = vst.msk [vmem:[#allocation2 + $0x20] sm:$0xff] %vm577, %v7392
    %7449 = vst.msk [vmem:[#allocation2 + $0x28] sm:$0xff] %vm577, %v7393
    %7450 = vst.msk [vmem:[#allocation2 + $0x30] sm:$0xff] %vm577, %v7394
    %7451 = vst.msk [vmem:[#allocation2 + $0x38] sm:$0xff] %vm577, %v7395
    %7452 = vst.msk [vmem:[#allocation2 + $0x40] sm:$0xff] %vm577, %v7396
    %7453 = vst.msk [vmem:[#allocation2 + $0x48] sm:$0xff] %vm577, %v7397
    %7454 = vst.msk [vmem:[#allocation2 + $0x50] sm:$0xff] %vm577, %v7398
    %7455 = vst.msk [vmem:[#allocation2 + $0x58] sm:$0xff] %vm577, %v7399
    %7456 = vst.msk [vmem:[#allocation2 + $0x60] sm:$0xff] %vm577, %v7400
    %7457 = vst.msk [vmem:[#allocation2 + $0x68] sm:$0xff] %vm577, %v7401
    %7458 = vst.msk [vmem:[#allocation2 + $0x70] sm:$0xff] %vm577, %v7402
    %7459 = vst.msk [vmem:[#allocation2 + $0x78] sm:$0xff] %vm577, %v7403
    %7460 = vst.msk [vmem:[#allocation2 + $0x80] sm:$0xff] %vm577, %v7404
    %7461 = vst.msk [vmem:[#allocation2 + $0x88] sm:$0xff] %vm577, %v7405
    %7462 = vst.msk [vmem:[#allocation2 + $0x90] sm:$0xff] %vm577, %v7406
    %7463 = vst.msk [vmem:[#allocation2 + $0x98] sm:$0xff] %vm577, %v7407
    %7464 = vst.msk [vmem:[#allocation2 + $0xa0] sm:$0xff] %vm577, %v7408
    %7465 = vst.msk [vmem:[#allocation2 + $0xa8] sm:$0xff] %vm577, %v7409
    %7466 = vst.msk [vmem:[#allocation2 + $0xb0] sm:$0xff] %vm577, %v7410
    %7467 = vst.msk [vmem:[#allocation2 + $0xb8] sm:$0xff] %vm577, %v7411
    %7468 = vst.msk [vmem:[#allocation2 + $0xc0] sm:$0xff] %vm577, %v7412
    %7469 = vst.msk [vmem:[#allocation2 + $0xc8] sm:$0xff] %vm577, %v7413
    %7470 = vst.msk [vmem:[#allocation2 + $0xd0] sm:$0xff] %vm577, %v7414
    %7471 = vst.msk [vmem:[#allocation2 + $0xd8] sm:$0xff] %vm577, %v7415
    %7472 = vst.msk [vmem:[#allocation2 + $0xe0] sm:$0xff] %vm577, %v7416
    %7473 = vst.msk [vmem:[#allocation2 + $0xe8] sm:$0xff] %vm577, %v7417
    %7474 = vst.msk [vmem:[#allocation2 + $0xf0] sm:$0xff] %vm577, %v7418
    %7475 = vst.msk [vmem:[#allocation2 + $0xf8] sm:$0xff] %vm577, %v7419
    %7476 = vst.msk [vmem:[#allocation2 + $0x100] sm:$0xff] %vm577, %v7420
    %7477 = vst.msk [vmem:[#allocation2 + $0x108] sm:$0xff] %vm577, %v7421
    %7478 = vst.msk [vmem:[#allocation2 + $0x110] sm:$0xff] %vm577, %v7422
    %7479 = vst.msk [vmem:[#allocation2 + $0x118] sm:$0xff] %vm577, %v7423
    %7480 = vst.msk [vmem:[#allocation2 + $0x120] sm:$0xff] %vm577, %v7424
    %7481 = vst.msk [vmem:[#allocation2 + $0x128] sm:$0xff] %vm577, %v7425
    %7482 = vst.msk [vmem:[#allocation2 + $0x130] sm:$0xff] %vm577, %v7426
    %7483 = vst.msk [vmem:[#allocation2 + $0x138] sm:$0xff] %vm577, %v7427
    %7484 = vst.msk [vmem:[#allocation2 + $0x140] sm:$0xff] %vm577, %v7428
    %7485 = vst.msk [vmem:[#allocation2 + $0x148] sm:$0xff] %vm577, %v7429
    %7486 = vst.msk [vmem:[#allocation2 + $0x150] sm:$0xff] %vm577, %v7430
    %7487 = vst.msk [vmem:[#allocation2 + $0x158] sm:$0xff] %vm577, %v7431
    %7488 = vst.msk [vmem:[#allocation2 + $0x160] sm:$0xff] %vm577, %v7432
    %7489 = vst.msk [vmem:[#allocation2 + $0x168] sm:$0xff] %vm577, %v7433
    %7490 = vst.msk [vmem:[#allocation2 + $0x170] sm:$0xff] %vm577, %v7434
    %7491 = vst.msk [vmem:[#allocation2 + $0x178] sm:$0xff] %vm577, %v7435
    %7492 = vst.msk [vmem:[#allocation2 + $0x180] sm:$0xff] %vm577, %v7436
    %7493 = vst.msk [vmem:[#allocation2 + $0x188] sm:$0xff] %vm577, %v7437
    %7494 = vst.msk [vmem:[#allocation2 + $0x190] sm:$0xff] %vm577, %v7438
    %7495 = vst.msk [vmem:[#allocation2 + $0x198] sm:$0xff] %vm577, %v7439
    %7496 = vst.msk [vmem:[#allocation2 + $0x1a0] sm:$0xff] %vm577, %v7440
    %7497 = vst.msk [vmem:[#allocation2 + $0x1a8] sm:$0xff] %vm577, %v7441
    %7498 = vst.msk [vmem:[#allocation2 + $0x1b0] sm:$0xff] %vm577, %v7442
    %7499 = vst.msk [vmem:[#allocation2 + $0x1b8] sm:$0xff] %vm577, %v7443
    %v7500 = vld [vmem:[%s0 + $0x10] sm:$0xe]
    %v7501 = vld [vmem:[%s0 + $0x14] sm:$0xf]
    %v7502 = vld [vmem:[%s0 + $0x18] sm:$0xf]
    %v7503 = vld [vmem:[%s0 + $0x1c] sm:$0xf]
    %v7504 = vld [vmem:[%s0 + $0x20] sm:$0xf]
    %v7505 = vld [vmem:[%s0 + $0x24] sm:$0xf]
    %v7506 = vld [vmem:[%s0 + $0x28] sm:$0xf]
    %v7507 = vld [vmem:[%s0 + $0x2c] sm:$0xf]
    %v7508 = vld [vmem:[%s0 + $0x30] sm:$0xf]
    %v7509 = vld [vmem:[%s0 + $0x34] sm:$0xf]
    %v7510 = vld [vmem:[%s0 + $0x38] sm:$0xf]
    %v7511 = vld [vmem:[%s0 + $0x3c] sm:$0xf]
    %v7512 = vld [vmem:[%s0 + $0x40] sm:$0xf]
    %v7513 = vld [vmem:[%s0 + $0x44] sm:$0xf]
    %v7514 = vld [vmem:[%s0 + $0x48] sm:$0xf]
    %v7515 = vld [vmem:[%s0 + $0x4c] sm:$0xf]
    %v7516 = vld [vmem:[%s0 + $0x50] sm:$0xf]
    %v7517 = vld [vmem:[%s0 + $0x54] sm:$0xf]
    %v7518 = vld [vmem:[%s0 + $0x58] sm:$0xf]
    %v7519 = vld [vmem:[%s0 + $0x5c] sm:$0xf]
    %v7520 = vld [vmem:[%s0 + $0x60] sm:$0xf]
    %v7521 = vld [vmem:[%s0 + $0x64] sm:$0xf]
    %v7522 = vld [vmem:[%s0 + $0x68] sm:$0xf]
    %v7523 = vld [vmem:[%s0 + $0x6c] sm:$0xf]
    %v7524 = vld [vmem:[%s0 + $0x70] sm:$0xf]
    %v7525 = vld [vmem:[%s0 + $0x74] sm:$0xf]
    %v7526 = vld [vmem:[%s0 + $0x78] sm:$0xf]
    %v7527 = vld [vmem:[%s0 + $0x7c] sm:$0xf]
    %v7528 = vld [vmem:[%s0 + $0x80] sm:$0x1]
    %v7529 = vld [vmem:[%s0 + $0x98] sm:$0xe]
    %v7530 = vld [vmem:[%s0 + $0x9c] sm:$0xf]
    %v7531 = vld [vmem:[%s0 + $0xa0] sm:$0xf]
    %v7532 = vld [vmem:[%s0 + $0xa4] sm:$0xf]
    %v7533 = vld [vmem:[%s0 + $0xa8] sm:$0xf]
    %v7534 = vld [vmem:[%s0 + $0xac] sm:$0xf]
    %v7535 = vld [vmem:[%s0 + $0xb0] sm:$0xf]
    %v7536 = vld [vmem:[%s0 + $0xb4] sm:$0xf]
    %v7537 = vld [vmem:[%s0 + $0xb8] sm:$0xf]
    %v7538 = vld [vmem:[%s0 + $0xbc] sm:$0xf]
    %v7539 = vld [vmem:[%s0 + $0xc0] sm:$0xf]
    %v7540 = vld [vmem:[%s0 + $0xc4] sm:$0xf]
    %v7541 = vld [vmem:[%s0 + $0xc8] sm:$0xf]
    %v7542 = vld [vmem:[%s0 + $0xcc] sm:$0xf]
    %v7543 = vld [vmem:[%s0 + $0xd0] sm:$0xf]
    %v7544 = vld [vmem:[%s0 + $0xd4] sm:$0xf]
    %v7545 = vld [vmem:[%s0 + $0xd8] sm:$0xf]
    %v7546 = vld [vmem:[%s0 + $0xdc] sm:$0xf]
    %v7547 = vld [vmem:[%s0 + $0xe0] sm:$0xf]
    %v7548 = vld [vmem:[%s0 + $0xe4] sm:$0xf]
    %v7549 = vld [vmem:[%s0 + $0xe8] sm:$0xf]
    %v7550 = vld [vmem:[%s0 + $0xec] sm:$0xf]
    %v7551 = vld [vmem:[%s0 + $0xf0] sm:$0xf]
    %v7552 = vld [vmem:[%s0 + $0xf4] sm:$0xf]
    %v7553 = vld [vmem:[%s0 + $0xf8] sm:$0xf]
    %v7554 = vld [vmem:[%s0 + $0xfc] sm:$0xf]
    %v7555 = vld [vmem:[%s0 + $0x100] sm:$0xf]
    %v7556 = vld [vmem:[%s0 + $0x104] sm:$0xf]
    %v7557 = vld [vmem:[%s0 + $0x108] sm:$0x1]
    %v7616 = vrot.slane %v7500, 5
    %v7617 = vrot.slane %v7616, 4
    %v7618 = vrot.slane %v7501, 5
    %v7619 = vsel %vm1979, %v7617, %v7618
    %v7620 = vrot.slane %v7618, 4
    %v7621 = vrot.slane %v7502, 5
    %v7622 = vsel %vm1979, %v7620, %v7621
    %v7623 = vrot.slane %v7621, 4
    %v7624 = vrot.slane %v7503, 5
    %v7625 = vsel %vm1979, %v7623, %v7624
    %v7626 = vrot.slane %v7624, 4
    %v7627 = vrot.slane %v7504, 5
    %v7628 = vsel %vm1979, %v7626, %v7627
    %v7629 = vrot.slane %v7627, 4
    %v7630 = vrot.slane %v7505, 5
    %v7631 = vsel %vm1979, %v7629, %v7630
    %v7632 = vrot.slane %v7630, 4
    %v7633 = vrot.slane %v7506, 5
    %v7634 = vsel %vm1979, %v7632, %v7633
    %v7635 = vrot.slane %v7633, 4
    %v7636 = vrot.slane %v7507, 5
    %v7637 = vsel %vm1979, %v7635, %v7636
    %v7638 = vrot.slane %v7636, 4
    %v7639 = vrot.slane %v7508, 5
    %v7640 = vsel %vm1979, %v7638, %v7639
    %v7641 = vrot.slane %v7639, 4
    %v7642 = vrot.slane %v7509, 5
    %v7643 = vsel %vm1979, %v7641, %v7642
    %v7644 = vrot.slane %v7642, 4
    %v7645 = vrot.slane %v7510, 5
    %v7646 = vsel %vm1979, %v7644, %v7645
    %v7647 = vrot.slane %v7645, 4
    %v7648 = vrot.slane %v7511, 5
    %v7649 = vsel %vm1979, %v7647, %v7648
    %v7650 = vrot.slane %v7648, 4
    %v7651 = vrot.slane %v7512, 5
    %v7652 = vsel %vm1979, %v7650, %v7651
    %v7653 = vrot.slane %v7651, 4
    %v7654 = vrot.slane %v7513, 5
    %v7655 = vsel %vm1979, %v7653, %v7654
    %v7656 = vrot.slane %v7654, 4
    %v7657 = vrot.slane %v7514, 5
    %v7658 = vsel %vm1979, %v7656, %v7657
    %v7659 = vrot.slane %v7657, 4
    %v7660 = vrot.slane %v7515, 5
    %v7661 = vsel %vm1979, %v7659, %v7660
    %v7662 = vrot.slane %v7660, 4
    %v7663 = vrot.slane %v7516, 5
    %v7664 = vsel %vm1979, %v7662, %v7663
    %v7665 = vrot.slane %v7663, 4
    %v7666 = vrot.slane %v7517, 5
    %v7667 = vsel %vm1979, %v7665, %v7666
    %v7668 = vrot.slane %v7666, 4
    %v7669 = vrot.slane %v7518, 5
    %v7670 = vsel %vm1979, %v7668, %v7669
    %v7671 = vrot.slane %v7669, 4
    %v7672 = vrot.slane %v7519, 5
    %v7673 = vsel %vm1979, %v7671, %v7672
    %v7674 = vrot.slane %v7672, 4
    %v7675 = vrot.slane %v7520, 5
    %v7676 = vsel %vm1979, %v7674, %v7675
    %v7677 = vrot.slane %v7675, 4
    %v7678 = vrot.slane %v7521, 5
    %v7679 = vsel %vm1979, %v7677, %v7678
    %v7680 = vrot.slane %v7678, 4
    %v7681 = vrot.slane %v7522, 5
    %v7682 = vsel %vm1979, %v7680, %v7681
    %v7683 = vrot.slane %v7681, 4
    %v7684 = vrot.slane %v7523, 5
    %v7685 = vsel %vm1979, %v7683, %v7684
    %v7686 = vrot.slane %v7684, 4
    %v7687 = vrot.slane %v7524, 5
    %v7688 = vsel %vm1979, %v7686, %v7687
    %v7689 = vrot.slane %v7687, 4
    %v7690 = vrot.slane %v7525, 5
    %v7691 = vsel %vm1979, %v7689, %v7690
    %v7692 = vrot.slane %v7690, 4
    %v7693 = vrot.slane %v7526, 5
    %v7694 = vsel %vm1979, %v7692, %v7693
    %v7695 = vrot.slane %v7693, 4
    %v7696 = vrot.slane %v7527, 5
    %v7697 = vsel %vm1979, %v7695, %v7696
    %v7698 = vrot.slane %v7696, 4
    %v7699 = vrot.slane %v7528, 5
    %v7700 = vsel %vm1979, %v7698, %v7699
    %v7701 = vrot.slane %v7529, 5
    %v7702 = vrot.slane %v7701, 4
    %v7703 = vrot.slane %v7530, 5
    %v7704 = vsel %vm1979, %v7702, %v7703
    %v7705 = vrot.slane %v7703, 4
    %v7706 = vrot.slane %v7531, 5
    %v7707 = vsel %vm1979, %v7705, %v7706
    %v7708 = vrot.slane %v7706, 4
    %v7709 = vrot.slane %v7532, 5
    %v7710 = vsel %vm1979, %v7708, %v7709
    %v7711 = vrot.slane %v7709, 4
    %v7712 = vrot.slane %v7533, 5
    %v7713 = vsel %vm1979, %v7711, %v7712
    %v7714 = vrot.slane %v7712, 4
    %v7715 = vrot.slane %v7534, 5
    %v7716 = vsel %vm1979, %v7714, %v7715
    %v7717 = vrot.slane %v7715, 4
    %v7718 = vrot.slane %v7535, 5
    %v7719 = vsel %vm1979, %v7717, %v7718
    %v7720 = vrot.slane %v7718, 4
    %v7721 = vrot.slane %v7536, 5
    %v7722 = vsel %vm1979, %v7720, %v7721
    %v7723 = vrot.slane %v7721, 4
    %v7724 = vrot.slane %v7537, 5
    %v7725 = vsel %vm1979, %v7723, %v7724
    %v7726 = vrot.slane %v7724, 4
    %v7727 = vrot.slane %v7538, 5
    %v7728 = vsel %vm1979, %v7726, %v7727
    %v7729 = vrot.slane %v7727, 4
    %v7730 = vrot.slane %v7539, 5
    %v7731 = vsel %vm1979, %v7729, %v7730
    %v7732 = vrot.slane %v7730, 4
    %v7733 = vrot.slane %v7540, 5
    %v7734 = vsel %vm1979, %v7732, %v7733
    %v7735 = vrot.slane %v7733, 4
    %v7736 = vrot.slane %v7541, 5
    %v7737 = vsel %vm1979, %v7735, %v7736
    %v7738 = vrot.slane %v7736, 4
    %v7739 = vrot.slane %v7542, 5
    %v7740 = vsel %vm1979, %v7738, %v7739
    %v7741 = vrot.slane %v7739, 4
    %v7742 = vrot.slane %v7543, 5
    %v7743 = vsel %vm1979, %v7741, %v7742
    %v7744 = vrot.slane %v7742, 4
    %v7745 = vrot.slane %v7544, 5
    %v7746 = vsel %vm1979, %v7744, %v7745
    %v7747 = vrot.slane %v7745, 4
    %v7748 = vrot.slane %v7545, 5
    %v7749 = vsel %vm1979, %v7747, %v7748
    %v7750 = vrot.slane %v7748, 4
    %v7751 = vrot.slane %v7546, 5
    %v7752 = vsel %vm1979, %v7750, %v7751
    %v7753 = vrot.slane %v7751, 4
    %v7754 = vrot.slane %v7547, 5
    %v7755 = vsel %vm1979, %v7753, %v7754
    %v7756 = vrot.slane %v7754, 4
    %v7757 = vrot.slane %v7548, 5
    %v7758 = vsel %vm1979, %v7756, %v7757
    %v7759 = vrot.slane %v7757, 4
    %v7760 = vrot.slane %v7549, 5
    %v7761 = vsel %vm1979, %v7759, %v7760
    %v7762 = vrot.slane %v7760, 4
    %v7763 = vrot.slane %v7550, 5
    %v7764 = vsel %vm1979, %v7762, %v7763
    %v7765 = vrot.slane %v7763, 4
    %v7766 = vrot.slane %v7551, 5
    %v7767 = vsel %vm1979, %v7765, %v7766
    %v7768 = vrot.slane %v7766, 4
    %v7769 = vrot.slane %v7552, 5
    %v7770 = vsel %vm1979, %v7768, %v7769
    %v7771 = vrot.slane %v7769, 4
    %v7772 = vrot.slane %v7553, 5
    %v7773 = vsel %vm1979, %v7771, %v7772
    %v7774 = vrot.slane %v7772, 4
    %v7775 = vrot.slane %v7554, 5
    %v7776 = vsel %vm1979, %v7774, %v7775
    %v7777 = vrot.slane %v7775, 4
    %v7778 = vrot.slane %v7555, 5
    %v7779 = vsel %vm1979, %v7777, %v7778
    %v7780 = vrot.slane %v7778, 4
    %v7781 = vrot.slane %v7556, 5
    %v7782 = vsel %vm1979, %v7780, %v7781
    %v7783 = vrot.slane %v7781, 4
    %v7784 = vrot.slane %v7557, 5
    %v7785 = vsel %vm1979, %v7783, %v7784
    %s7786 = scalar_lea.vmem %s1, 16
    %v7787 = vld [vmem:[%s7786] sm:$0x3]
    %v7788 = vunpack.c.l.b16 %v7619
    %v7789 = vunpack.c.l.b16 %v7622
    %v7790 = vunpack.c.l.b16 %v7625
    %v7791 = vunpack.c.l.b16 %v7628
    %v7792 = vunpack.c.l.b16 %v7631
    %v7793 = vunpack.c.l.b16 %v7634
    %v7794 = vunpack.c.l.b16 %v7637
    %v7795 = vunpack.c.l.b16 %v7640
    %v7796 = vunpack.c.l.b16 %v7643
    %v7797 = vunpack.c.l.b16 %v7646
    %v7798 = vunpack.c.l.b16 %v7649
    %v7799 = vunpack.c.l.b16 %v7652
    %v7800 = vunpack.c.l.b16 %v7655
    %v7801 = vunpack.c.l.b16 %v7658
    %v7802 = vunpack.c.l.b16 %v7661
    %v7803 = vunpack.c.l.b16 %v7664
    %v7804 = vunpack.c.l.b16 %v7667
    %v7805 = vunpack.c.l.b16 %v7670
    %v7806 = vunpack.c.l.b16 %v7673
    %v7807 = vunpack.c.l.b16 %v7676
    %v7808 = vunpack.c.l.b16 %v7679
    %v7809 = vunpack.c.l.b16 %v7682
    %v7810 = vunpack.c.l.b16 %v7685
    %v7811 = vunpack.c.l.b16 %v7688
    %v7812 = vunpack.c.l.b16 %v7691
    %v7813 = vunpack.c.l.b16 %v7694
    %v7814 = vunpack.c.l.b16 %v7697
    %v7815 = vunpack.c.l.b16 %v7700
    %v7816 = vunpack.c.l.b16 %v7704
    %v7817 = vunpack.c.l.b16 %v7707
    %v7818 = vunpack.c.l.b16 %v7710
    %v7819 = vunpack.c.l.b16 %v7713
    %v7820 = vunpack.c.l.b16 %v7716
    %v7821 = vunpack.c.l.b16 %v7719
    %v7822 = vunpack.c.l.b16 %v7722
    %v7823 = vunpack.c.l.b16 %v7725
    %v7824 = vunpack.c.l.b16 %v7728
    %v7825 = vunpack.c.l.b16 %v7731
    %v7826 = vunpack.c.l.b16 %v7734
    %v7827 = vunpack.c.l.b16 %v7737
    %v7828 = vunpack.c.l.b16 %v7740
    %v7829 = vunpack.c.l.b16 %v7743
    %v7830 = vunpack.c.l.b16 %v7746
    %v7831 = vunpack.c.l.b16 %v7749
    %v7832 = vunpack.c.l.b16 %v7752
    %v7833 = vunpack.c.l.b16 %v7755
    %v7834 = vunpack.c.l.b16 %v7758
    %v7835 = vunpack.c.l.b16 %v7761
    %v7836 = vunpack.c.l.b16 %v7764
    %v7837 = vunpack.c.l.b16 %v7767
    %v7838 = vunpack.c.l.b16 %v7770
    %v7839 = vunpack.c.l.b16 %v7773
    %v7840 = vunpack.c.l.b16 %v7776
    %v7841 = vunpack.c.l.b16 %v7779
    %v7842 = vunpack.c.l.b16 %v7782
    %v7843 = vunpack.c.l.b16 %v7785
    %v7844 = vpack.c.b16 %v7789, %v7788
    %v7845 = vpack.c.b16 %v7791, %v7790
    %v7846 = vpack.c.b16 %v7793, %v7792
    %v7847 = vpack.c.b16 %v7795, %v7794
    %v7848 = vpack.c.b16 %v7797, %v7796
    %v7849 = vpack.c.b16 %v7799, %v7798
    %v7850 = vpack.c.b16 %v7801, %v7800
    %v7851 = vpack.c.b16 %v7803, %v7802
    %v7852 = vpack.c.b16 %v7805, %v7804
    %v7853 = vpack.c.b16 %v7807, %v7806
    %v7854 = vpack.c.b16 %v7809, %v7808
    %v7855 = vpack.c.b16 %v7811, %v7810
    %v7856 = vpack.c.b16 %v7813, %v7812
    %v7857 = vpack.c.b16 %v7815, %v7814
    %v7858 = vpack.c.b16 %v7817, %v7816
    %v7859 = vpack.c.b16 %v7819, %v7818
    %v7860 = vpack.c.b16 %v7821, %v7820
    %v7861 = vpack.c.b16 %v7823, %v7822
    %v7862 = vpack.c.b16 %v7825, %v7824
    %v7863 = vpack.c.b16 %v7827, %v7826
    %v7864 = vpack.c.b16 %v7829, %v7828
    %v7865 = vpack.c.b16 %v7831, %v7830
    %v7866 = vpack.c.b16 %v7833, %v7832
    %v7867 = vpack.c.b16 %v7835, %v7834
    %v7868 = vpack.c.b16 %v7837, %v7836
    %v7869 = vpack.c.b16 %v7839, %v7838
    %v7870 = vpack.c.b16 %v7841, %v7840
    %v7871 = vpack.c.b16 %v7843, %v7842
    %v7873 = vsel %vm231, %v7844, 0
    %v7876 = vsel %vm231, %v7845, 0
    %v7879 = vsel %vm231, %v7846, 0
    %v7882 = vsel %vm231, %v7847, 0
    %v7885 = vsel %vm231, %v7848, 0
    %v7888 = vsel %vm231, %v7849, 0
    %v7891 = vsel %vm231, %v7850, 0
    %v7894 = vsel %vm231, %v7851, 0
    %v7897 = vsel %vm231, %v7852, 0
    %v7900 = vsel %vm231, %v7853, 0
    %v7903 = vsel %vm231, %v7854, 0
    %v7906 = vsel %vm231, %v7855, 0
    %v7909 = vsel %vm231, %v7856, 0
    %v7912 = vsel %vm231, %v7857, 0
    %v7915 = vsel %vm231, %v7858, 0
    %v7918 = vsel %vm231, %v7859, 0
    %v7921 = vsel %vm231, %v7860, 0
    %v7924 = vsel %vm231, %v7861, 0
    %v7927 = vsel %vm231, %v7862, 0
    %v7930 = vsel %vm231, %v7863, 0
    %v7933 = vsel %vm231, %v7864, 0
    %v7936 = vsel %vm231, %v7865, 0
    %v7939 = vsel %vm231, %v7866, 0
    %v7942 = vsel %vm231, %v7867, 0
    %v7945 = vsel %vm231, %v7868, 0
    %v7948 = vsel %vm231, %v7869, 0
    %v7951 = vsel %vm231, %v7870, 0
    %v7954 = vsel %vm231, %v7871, 0
    %v7957 = vsel %vm316, %v7787, 0
    %7959 = vmatprep.subr.bf16.mxu0 0
    %7960 = vmatpush1.bf16.msra.mxu0 %v7957
    %7961 = vmatprep.subr.bf16.mxu0 0
    %7962 = vmatpush1.bf16.msra.mxu0 0
    %7963 = vmatprep.subr.bf16.mxu0 0
    %7964 = vmatpush1.bf16.msra.mxu0 0
    %7965 = vmatprep.subr.bf16.mxu0 0
    %7966 = vmatpush1.bf16.msra.mxu0 0
    %7967 = vmatprep.subr.bf16.mxu0 0
    %7968 = vmatpush1.bf16.msra.mxu0 0
    %7969 = vmatprep.subr.bf16.mxu0 0
    %7970 = vmatpush1.bf16.msra.mxu0 0
    %7971 = vmatprep.subr.bf16.mxu0 0
    %7972 = vmatpush1.bf16.msra.mxu0 0
    %7973 = vmatprep.subr.bf16.mxu0 0
    %7974 = vmatpush1.bf16.msra.mxu0 0
    %7975 = vmatprep.subr.bf16.mxu0 0
    %7976 = vmatpush1.bf16.msra.mxu0 0
    %7977 = vmatprep.subr.bf16.mxu0 0
    %7978 = vmatpush1.bf16.msra.mxu0 0
    %7979 = vmatprep.subr.bf16.mxu0 0
    %7980 = vmatpush1.bf16.msra.mxu0 0
    %7981 = vmatprep.subr.bf16.mxu0 0
    %7982 = vmatpush1.bf16.msra.mxu0 0
    %7983 = vmatprep.subr.bf16.mxu0 0
    %7984 = vmatpush1.bf16.msra.mxu0 0
    %7985 = vmatprep.subr.bf16.mxu0 0
    %7986 = vmatpush1.bf16.msra.mxu0 0
    %7987 = vmatprep.subr.bf16.mxu0 0
    %7988 = vmatpush1.bf16.msra.mxu0 0
    %7989 = vmatprep.subr.bf16.mxu0 0
    %7990 = vmatpush1.bf16.msra.mxu0 0
    %7991 = vmatprep.mubr.bf16.mxu0 0
    %7992 = vmatmul.mubr.bf16.gmra.mrb[0].mxu0 %v7873
    %v7993 = vpop.f32.mrb[0].mxu0
    %v7994 = vadd.f32 0.0, %v7993
    %v7995 = vpop.f32.mrb[0].mxu0
    %v7996 = vpop.f32.mrb[0].mxu0
    %v7997 = vadd.f32 0.0, %v7996
    %v7998 = vpop.f32.mrb[0].mxu0
    %7999 = vmatprep.mubr.bf16.mxu0 0
    %8000 = vmatmul.mubr.bf16.gmra.mrb[0].mxu0 %v7876
    %v8001 = vpop.f32.mrb[0].mxu0
    %v8002 = vadd.f32 0.0, %v8001
    %v8003 = vpop.f32.mrb[0].mxu0
    %v8004 = vpop.f32.mrb[0].mxu0
    %v8005 = vadd.f32 0.0, %v8004
    %v8006 = vpop.f32.mrb[0].mxu0
    %8007 = vmatprep.mubr.bf16.mxu0 0
    %8008 = vmatmul.mubr.bf16.gmra.mrb[0].mxu0 %v7879
    %v8009 = vpop.f32.mrb[0].mxu0
    %v8010 = vadd.f32 0.0, %v8009
    %v8011 = vpop.f32.mrb[0].mxu0
    %v8012 = vpop.f32.mrb[0].mxu0
    %v8013 = vadd.f32 0.0, %v8012
    %v8014 = vpop.f32.mrb[0].mxu0
    %8015 = vmatprep.mubr.bf16.mxu0 0
    %8016 = vmatmul.mubr.bf16.gmra.mrb[0].mxu0 %v7882
    %v8017 = vpop.f32.mrb[0].mxu0
    %v8018 = vadd.f32 0.0, %v8017
    %v8019 = vpop.f32.mrb[0].mxu0
    %v8020 = vpop.f32.mrb[0].mxu0
    %v8021 = vadd.f32 0.0, %v8020
    %v8022 = vpop.f32.mrb[0].mxu0
    %8023 = vmatprep.mubr.bf16.mxu0 0
    %8024 = vmatmul.mubr.bf16.gmra.mrb[0].mxu0 %v7885
    %v8025 = vpop.f32.mrb[0].mxu0
    %v8026 = vadd.f32 0.0, %v8025
    %v8027 = vpop.f32.mrb[0].mxu0
    %v8028 = vpop.f32.mrb[0].mxu0
    %v8029 = vadd.f32 0.0, %v8028
    %v8030 = vpop.f32.mrb[0].mxu0
    %8031 = vmatprep.mubr.bf16.mxu0 0
    %8032 = vmatmul.mubr.bf16.gmra.mrb[0].mxu0 %v7888
    %v8033 = vpop.f32.mrb[0].mxu0
    %v8034 = vadd.f32 0.0, %v8033
    %v8035 = vpop.f32.mrb[0].mxu0
    %v8036 = vpop.f32.mrb[0].mxu0
    %v8037 = vadd.f32 0.0, %v8036
    %v8038 = vpop.f32.mrb[0].mxu0
    %8039 = vmatprep.mubr.bf16.mxu0 0
    %8040 = vmatmul.mubr.bf16.gmra.mrb[0].mxu0 %v7891
    %v8041 = vpop.f32.mrb[0].mxu0
    %v8042 = vadd.f32 0.0, %v8041
    %v8043 = vpop.f32.mrb[0].mxu0
    %v8044 = vpop.f32.mrb[0].mxu0
    %v8045 = vadd.f32 0.0, %v8044
    %v8046 = vpop.f32.mrb[0].mxu0
    %8047 = vmatprep.mubr.bf16.mxu0 0
    %8048 = vmatmul.mubr.bf16.gmra.mrb[0].mxu0 %v7894
    %v8049 = vpop.f32.mrb[0].mxu0
    %v8050 = vadd.f32 0.0, %v8049
    %v8051 = vpop.f32.mrb[0].mxu0
    %v8052 = vpop.f32.mrb[0].mxu0
    %v8053 = vadd.f32 0.0, %v8052
    %v8054 = vpop.f32.mrb[0].mxu0
    %8055 = vmatprep.mubr.bf16.mxu0 0
    %8056 = vmatmul.mubr.bf16.gmra.mrb[0].mxu0 %v7897
    %v8057 = vpop.f32.mrb[0].mxu0
    %v8058 = vadd.f32 0.0, %v8057
    %v8059 = vpop.f32.mrb[0].mxu0
    %v8060 = vpop.f32.mrb[0].mxu0
    %v8061 = vadd.f32 0.0, %v8060
    %v8062 = vpop.f32.mrb[0].mxu0
    %8063 = vmatprep.mubr.bf16.mxu0 0
    %8064 = vmatmul.mubr.bf16.gmra.mrb[0].mxu0 %v7900
    %v8065 = vpop.f32.mrb[0].mxu0
    %v8066 = vadd.f32 0.0, %v8065
    %v8067 = vpop.f32.mrb[0].mxu0
    %v8068 = vpop.f32.mrb[0].mxu0
    %v8069 = vadd.f32 0.0, %v8068
    %v8070 = vpop.f32.mrb[0].mxu0
    %8071 = vmatprep.mubr.bf16.mxu0 0
    %8072 = vmatmul.mubr.bf16.gmra.mrb[0].mxu0 %v7903
    %v8073 = vpop.f32.mrb[0].mxu0
    %v8074 = vadd.f32 0.0, %v8073
    %v8075 = vpop.f32.mrb[0].mxu0
    %v8076 = vpop.f32.mrb[0].mxu0
    %v8077 = vadd.f32 0.0, %v8076
    %v8078 = vpop.f32.mrb[0].mxu0
    %8079 = vmatprep.mubr.bf16.mxu0 0
    %8080 = vmatmul.mubr.bf16.gmra.mrb[0].mxu0 %v7906
    %v8081 = vpop.f32.mrb[0].mxu0
    %v8082 = vadd.f32 0.0, %v8081
    %v8083 = vpop.f32.mrb[0].mxu0
    %v8084 = vpop.f32.mrb[0].mxu0
    %v8085 = vadd.f32 0.0, %v8084
    %v8086 = vpop.f32.mrb[0].mxu0
    %8087 = vmatprep.mubr.bf16.mxu0 0
    %8088 = vmatmul.mubr.bf16.gmra.mrb[0].mxu0 %v7909
    %v8089 = vpop.f32.mrb[0].mxu0
    %v8090 = vadd.f32 0.0, %v8089
    %v8091 = vpop.f32.mrb[0].mxu0
    %v8092 = vpop.f32.mrb[0].mxu0
    %v8093 = vadd.f32 0.0, %v8092
    %v8094 = vpop.f32.mrb[0].mxu0
    %8095 = vmatprep.mubr.bf16.mxu0 0
    %8096 = vmatmul.mubr.bf16.gmra.mrb[0].mxu0 %v7912
    %v8097 = vpop.f32.mrb[0].mxu0
    %v8098 = vadd.f32 0.0, %v8097
    %v8099 = vpop.f32.mrb[0].mxu0
    %v8100 = vpop.f32.mrb[0].mxu0
    %v8101 = vadd.f32 0.0, %v8100
    %v8102 = vpop.f32.mrb[0].mxu0
    %8103 = vmatprep.mubr.bf16.mxu0 0
    %8104 = vmatmul.mubr.bf16.gmra.mrb[0].mxu0 %v7915
    %v8105 = vpop.f32.mrb[0].mxu0
    %v8106 = vadd.f32 0.0, %v8105
    %v8107 = vpop.f32.mrb[0].mxu0
    %v8108 = vpop.f32.mrb[0].mxu0
    %v8109 = vadd.f32 0.0, %v8108
    %v8110 = vpop.f32.mrb[0].mxu0
    %8111 = vmatprep.mubr.bf16.mxu0 0
    %8112 = vmatmul.mubr.bf16.gmra.mrb[0].mxu0 %v7918
    %v8113 = vpop.f32.mrb[0].mxu0
    %v8114 = vadd.f32 0.0, %v8113
    %v8115 = vpop.f32.mrb[0].mxu0
    %v8116 = vpop.f32.mrb[0].mxu0
    %v8117 = vadd.f32 0.0, %v8116
    %v8118 = vpop.f32.mrb[0].mxu0
    %8119 = vmatprep.mubr.bf16.mxu0 0
    %8120 = vmatmul.mubr.bf16.gmra.mrb[0].mxu0 %v7921
    %v8121 = vpop.f32.mrb[0].mxu0
    %v8122 = vadd.f32 0.0, %v8121
    %v8123 = vpop.f32.mrb[0].mxu0
    %v8124 = vpop.f32.mrb[0].mxu0
    %v8125 = vadd.f32 0.0, %v8124
    %v8126 = vpop.f32.mrb[0].mxu0
    %8127 = vmatprep.mubr.bf16.mxu0 0
    %8128 = vmatmul.mubr.bf16.gmra.mrb[0].mxu0 %v7924
    %v8129 = vpop.f32.mrb[0].mxu0
    %v8130 = vadd.f32 0.0, %v8129
    %v8131 = vpop.f32.mrb[0].mxu0
    %v8132 = vpop.f32.mrb[0].mxu0
    %v8133 = vadd.f32 0.0, %v8132
    %v8134 = vpop.f32.mrb[0].mxu0
    %8135 = vmatprep.mubr.bf16.mxu0 0
    %8136 = vmatmul.mubr.bf16.gmra.mrb[0].mxu0 %v7927
    %v8137 = vpop.f32.mrb[0].mxu0
    %v8138 = vadd.f32 0.0, %v8137
    %v8139 = vpop.f32.mrb[0].mxu0
    %v8140 = vpop.f32.mrb[0].mxu0
    %v8141 = vadd.f32 0.0, %v8140
    %v8142 = vpop.f32.mrb[0].mxu0
    %8143 = vmatprep.mubr.bf16.mxu0 0
    %8144 = vmatmul.mubr.bf16.gmra.mrb[0].mxu0 %v7930
    %v8145 = vpop.f32.mrb[0].mxu0
    %v8146 = vadd.f32 0.0, %v8145
    %v8147 = vpop.f32.mrb[0].mxu0
    %v8148 = vpop.f32.mrb[0].mxu0
    %v8149 = vadd.f32 0.0, %v8148
    %v8150 = vpop.f32.mrb[0].mxu0
    %8151 = vmatprep.mubr.bf16.mxu0 0
    %8152 = vmatmul.mubr.bf16.gmra.mrb[0].mxu0 %v7933
    %v8153 = vpop.f32.mrb[0].mxu0
    %v8154 = vadd.f32 0.0, %v8153
    %v8155 = vpop.f32.mrb[0].mxu0
    %v8156 = vpop.f32.mrb[0].mxu0
    %v8157 = vadd.f32 0.0, %v8156
    %v8158 = vpop.f32.mrb[0].mxu0
    %8159 = vmatprep.mubr.bf16.mxu0 0
    %8160 = vmatmul.mubr.bf16.gmra.mrb[0].mxu0 %v7936
    %v8161 = vpop.f32.mrb[0].mxu0
    %v8162 = vadd.f32 0.0, %v8161
    %v8163 = vpop.f32.mrb[0].mxu0
    %v8164 = vpop.f32.mrb[0].mxu0
    %v8165 = vadd.f32 0.0, %v8164
    %v8166 = vpop.f32.mrb[0].mxu0
    %8167 = vmatprep.mubr.bf16.mxu0 0
    %8168 = vmatmul.mubr.bf16.gmra.mrb[0].mxu0 %v7939
    %v8169 = vpop.f32.mrb[0].mxu0
    %v8170 = vadd.f32 0.0, %v8169
    %v8171 = vpop.f32.mrb[0].mxu0
    %v8172 = vpop.f32.mrb[0].mxu0
    %v8173 = vadd.f32 0.0, %v8172
    %v8174 = vpop.f32.mrb[0].mxu0
    %8175 = vmatprep.mubr.bf16.mxu0 0
    %8176 = vmatmul.mubr.bf16.gmra.mrb[0].mxu0 %v7942
    %v8177 = vpop.f32.mrb[0].mxu0
    %v8178 = vadd.f32 0.0, %v8177
    %v8179 = vpop.f32.mrb[0].mxu0
    %v8180 = vpop.f32.mrb[0].mxu0
    %v8181 = vadd.f32 0.0, %v8180
    %v8182 = vpop.f32.mrb[0].mxu0
    %8183 = vmatprep.mubr.bf16.mxu0 0
    %8184 = vmatmul.mubr.bf16.gmra.mrb[0].mxu0 %v7945
    %v8185 = vpop.f32.mrb[0].mxu0
    %v8186 = vadd.f32 0.0, %v8185
    %v8187 = vpop.f32.mrb[0].mxu0
    %v8188 = vpop.f32.mrb[0].mxu0
    %v8189 = vadd.f32 0.0, %v8188
    %v8190 = vpop.f32.mrb[0].mxu0
    %8191 = vmatprep.mubr.bf16.mxu0 0
    %8192 = vmatmul.mubr.bf16.gmra.mrb[0].mxu0 %v7948
    %v8193 = vpop.f32.mrb[0].mxu0
    %v8194 = vadd.f32 0.0, %v8193
    %v8195 = vpop.f32.mrb[0].mxu0
    %v8196 = vpop.f32.mrb[0].mxu0
    %v8197 = vadd.f32 0.0, %v8196
    %v8198 = vpop.f32.mrb[0].mxu0
    %8199 = vmatprep.mubr.bf16.mxu0 0
    %8200 = vmatmul.mubr.bf16.gmra.mrb[0].mxu0 %v7951
    %v8201 = vpop.f32.mrb[0].mxu0
    %v8202 = vadd.f32 0.0, %v8201
    %v8203 = vpop.f32.mrb[0].mxu0
    %v8204 = vpop.f32.mrb[0].mxu0
    %v8205 = vadd.f32 0.0, %v8204
    %v8206 = vpop.f32.mrb[0].mxu0
    %8207 = vmatprep.mubr.bf16.mxu0 0
    %8208 = vmatmul.mubr.bf16.gmra.mrb[0].mxu0 %v7954
    %v8209 = vpop.f32.mrb[0].mxu0
    %v8210 = vadd.f32 0.0, %v8209
    %v8211 = vpop.f32.mrb[0].mxu0
    %v8212 = vpop.f32.mrb[0].mxu0
    %v8213 = vadd.f32 0.0, %v8212
    %v8214 = vpop.f32.mrb[0].mxu0
    %8215 = vdwg.mxu0
    %v8216 = vld [vmem:[#allocation2] sm:$0xff]
    %v8217 = vld [vmem:[#allocation2 + $0x8] sm:$0xff]
    %v8218 = vld [vmem:[#allocation2 + $0x10] sm:$0xff]
    %v8219 = vld [vmem:[#allocation2 + $0x18] sm:$0xff]
    %v8220 = vld [vmem:[#allocation2 + $0x20] sm:$0xff]
    %v8221 = vld [vmem:[#allocation2 + $0x28] sm:$0xff]
    %v8222 = vld [vmem:[#allocation2 + $0x30] sm:$0xff]
    %v8223 = vld [vmem:[#allocation2 + $0x38] sm:$0xff]
    %v8224 = vld [vmem:[#allocation2 + $0x40] sm:$0xff]
    %v8225 = vld [vmem:[#allocation2 + $0x48] sm:$0xff]
    %v8226 = vld [vmem:[#allocation2 + $0x50] sm:$0xff]
    %v8227 = vld [vmem:[#allocation2 + $0x58] sm:$0xff]
    %v8228 = vld [vmem:[#allocation2 + $0x60] sm:$0xff]
    %v8229 = vld [vmem:[#allocation2 + $0x68] sm:$0xff]
    %v8230 = vld [vmem:[#allocation2 + $0x70] sm:$0xff]
    %v8231 = vld [vmem:[#allocation2 + $0x78] sm:$0xff]
    %v8232 = vld [vmem:[#allocation2 + $0x80] sm:$0xff]
    %v8233 = vld [vmem:[#allocation2 + $0x88] sm:$0xff]
    %v8234 = vld [vmem:[#allocation2 + $0x90] sm:$0xff]
    %v8235 = vld [vmem:[#allocation2 + $0x98] sm:$0xff]
    %v8236 = vld [vmem:[#allocation2 + $0xa0] sm:$0xff]
    %v8237 = vld [vmem:[#allocation2 + $0xa8] sm:$0xff]
    %v8238 = vld [vmem:[#allocation2 + $0xb0] sm:$0xff]
    %v8239 = vld [vmem:[#allocation2 + $0xb8] sm:$0xff]
    %v8240 = vld [vmem:[#allocation2 + $0xc0] sm:$0xff]
    %v8241 = vld [vmem:[#allocation2 + $0xc8] sm:$0xff]
    %v8242 = vld [vmem:[#allocation2 + $0xd0] sm:$0xff]
    %v8243 = vld [vmem:[#allocation2 + $0xd8] sm:$0xff]
    %v8244 = vld [vmem:[#allocation2 + $0xe0] sm:$0xff]
    %v8245 = vld [vmem:[#allocation2 + $0xe8] sm:$0xff]
    %v8246 = vld [vmem:[#allocation2 + $0xf0] sm:$0xff]
    %v8247 = vld [vmem:[#allocation2 + $0xf8] sm:$0xff]
    %v8248 = vld [vmem:[#allocation2 + $0x100] sm:$0xff]
    %v8249 = vld [vmem:[#allocation2 + $0x108] sm:$0xff]
    %v8250 = vld [vmem:[#allocation2 + $0x110] sm:$0xff]
    %v8251 = vld [vmem:[#allocation2 + $0x118] sm:$0xff]
    %v8252 = vld [vmem:[#allocation2 + $0x120] sm:$0xff]
    %v8253 = vld [vmem:[#allocation2 + $0x128] sm:$0xff]
    %v8254 = vld [vmem:[#allocation2 + $0x130] sm:$0xff]
    %v8255 = vld [vmem:[#allocation2 + $0x138] sm:$0xff]
    %v8256 = vld [vmem:[#allocation2 + $0x140] sm:$0xff]
    %v8257 = vld [vmem:[#allocation2 + $0x148] sm:$0xff]
    %v8258 = vld [vmem:[#allocation2 + $0x150] sm:$0xff]
    %v8259 = vld [vmem:[#allocation2 + $0x158] sm:$0xff]
    %v8260 = vld [vmem:[#allocation2 + $0x160] sm:$0xff]
    %v8261 = vld [vmem:[#allocation2 + $0x168] sm:$0xff]
    %v8262 = vld [vmem:[#allocation2 + $0x170] sm:$0xff]
    %v8263 = vld [vmem:[#allocation2 + $0x178] sm:$0xff]
    %v8264 = vld [vmem:[#allocation2 + $0x180] sm:$0xff]
    %v8265 = vld [vmem:[#allocation2 + $0x188] sm:$0xff]
    %v8266 = vld [vmem:[#allocation2 + $0x190] sm:$0xff]
    %v8267 = vld [vmem:[#allocation2 + $0x198] sm:$0xff]
    %v8268 = vld [vmem:[#allocation2 + $0x1a0] sm:$0xff]
    %v8269 = vld [vmem:[#allocation2 + $0x1a8] sm:$0xff]
    %v8270 = vld [vmem:[#allocation2 + $0x1b0] sm:$0xff]
    %v8271 = vld [vmem:[#allocation2 + $0x1b8] sm:$0xff]
    %v8272 = vadd.f32 %v8216, %v7994
    %v8273 = vadd.f32 %v8217, %v7997
    %v8274 = vadd.f32 %v8218, %v8002
    %v8275 = vadd.f32 %v8219, %v8005
    %v8276 = vadd.f32 %v8220, %v8010
    %v8277 = vadd.f32 %v8221, %v8013
    %v8278 = vadd.f32 %v8222, %v8018
    %v8279 = vadd.f32 %v8223, %v8021
    %v8280 = vadd.f32 %v8224, %v8026
    %v8281 = vadd.f32 %v8225, %v8029
    %v8282 = vadd.f32 %v8226, %v8034
    %v8283 = vadd.f32 %v8227, %v8037
    %v8284 = vadd.f32 %v8228, %v8042
    %v8285 = vadd.f32 %v8229, %v8045
    %v8286 = vadd.f32 %v8230, %v8050
    %v8287 = vadd.f32 %v8231, %v8053
    %v8288 = vadd.f32 %v8232, %v8058
    %v8289 = vadd.f32 %v8233, %v8061
    %v8290 = vadd.f32 %v8234, %v8066
    %v8291 = vadd.f32 %v8235, %v8069
    %v8292 = vadd.f32 %v8236, %v8074
    %v8293 = vadd.f32 %v8237, %v8077
    %v8294 = vadd.f32 %v8238, %v8082
    %v8295 = vadd.f32 %v8239, %v8085
    %v8296 = vadd.f32 %v8240, %v8090
    %v8297 = vadd.f32 %v8241, %v8093
    %v8298 = vadd.f32 %v8242, %v8098
    %v8299 = vadd.f32 %v8243, %v8101
    %v8300 = vadd.f32 %v8244, %v8106
    %v8301 = vadd.f32 %v8245, %v8109
    %v8302 = vadd.f32 %v8246, %v8114
    %v8303 = vadd.f32 %v8247, %v8117
    %v8304 = vadd.f32 %v8248, %v8122
    %v8305 = vadd.f32 %v8249, %v8125
    %v8306 = vadd.f32 %v8250, %v8130
    %v8307 = vadd.f32 %v8251, %v8133
    %v8308 = vadd.f32 %v8252, %v8138
    %v8309 = vadd.f32 %v8253, %v8141
    %v8310 = vadd.f32 %v8254, %v8146
    %v8311 = vadd.f32 %v8255, %v8149
    %v8312 = vadd.f32 %v8256, %v8154
    %v8313 = vadd.f32 %v8257, %v8157
    %v8314 = vadd.f32 %v8258, %v8162
    %v8315 = vadd.f32 %v8259, %v8165
    %v8316 = vadd.f32 %v8260, %v8170
    %v8317 = vadd.f32 %v8261, %v8173
    %v8318 = vadd.f32 %v8262, %v8178
    %v8319 = vadd.f32 %v8263, %v8181
    %v8320 = vadd.f32 %v8264, %v8186
    %v8321 = vadd.f32 %v8265, %v8189
    %v8322 = vadd.f32 %v8266, %v8194
    %v8323 = vadd.f32 %v8267, %v8197
    %v8324 = vadd.f32 %v8268, %v8202
    %v8325 = vadd.f32 %v8269, %v8205
    %v8326 = vadd.f32 %v8270, %v8210
    %v8327 = vadd.f32 %v8271, %v8213
    %8328 = vst.msk [vmem:[#allocation2] sm:$0xff] %vm577, %v8272
    %8329 = vst.msk [vmem:[#allocation2 + $0x8] sm:$0xff] %vm577, %v8273
    %8330 = vst.msk [vmem:[#allocation2 + $0x10] sm:$0xff] %vm577, %v8274
    %8331 = vst.msk [vmem:[#allocation2 + $0x18] sm:$0xff] %vm577, %v8275
    %8332 = vst.msk [vmem:[#allocation2 + $0x20] sm:$0xff] %vm577, %v8276
    %8333 = vst.msk [vmem:[#allocation2 + $0x28] sm:$0xff] %vm577, %v8277
    %8334 = vst.msk [vmem:[#allocation2 + $0x30] sm:$0xff] %vm577, %v8278
    %8335 = vst.msk [vmem:[#allocation2 + $0x38] sm:$0xff] %vm577, %v8279
    %8336 = vst.msk [vmem:[#allocation2 + $0x40] sm:$0xff] %vm577, %v8280
    %8337 = vst.msk [vmem:[#allocation2 + $0x48] sm:$0xff] %vm577, %v8281
    %8338 = vst.msk [vmem:[#allocation2 + $0x50] sm:$0xff] %vm577, %v8282
    %8339 = vst.msk [vmem:[#allocation2 + $0x58] sm:$0xff] %vm577, %v8283
    %8340 = vst.msk [vmem:[#allocation2 + $0x60] sm:$0xff] %vm577, %v8284
    %8341 = vst.msk [vmem:[#allocation2 + $0x68] sm:$0xff] %vm577, %v8285
    %8342 = vst.msk [vmem:[#allocation2 + $0x70] sm:$0xff] %vm577, %v8286
    %8343 = vst.msk [vmem:[#allocation2 + $0x78] sm:$0xff] %vm577, %v8287
    %8344 = vst.msk [vmem:[#allocation2 + $0x80] sm:$0xff] %vm577, %v8288
    %8345 = vst.msk [vmem:[#allocation2 + $0x88] sm:$0xff] %vm577, %v8289
    %8346 = vst.msk [vmem:[#allocation2 + $0x90] sm:$0xff] %vm577, %v8290
    %8347 = vst.msk [vmem:[#allocation2 + $0x98] sm:$0xff] %vm577, %v8291
    %8348 = vst.msk [vmem:[#allocation2 + $0xa0] sm:$0xff] %vm577, %v8292
    %8349 = vst.msk [vmem:[#allocation2 + $0xa8] sm:$0xff] %vm577, %v8293
    %8350 = vst.msk [vmem:[#allocation2 + $0xb0] sm:$0xff] %vm577, %v8294
    %8351 = vst.msk [vmem:[#allocation2 + $0xb8] sm:$0xff] %vm577, %v8295
    %8352 = vst.msk [vmem:[#allocation2 + $0xc0] sm:$0xff] %vm577, %v8296
    %8353 = vst.msk [vmem:[#allocation2 + $0xc8] sm:$0xff] %vm577, %v8297
    %8354 = vst.msk [vmem:[#allocation2 + $0xd0] sm:$0xff] %vm577, %v8298
    %8355 = vst.msk [vmem:[#allocation2 + $0xd8] sm:$0xff] %vm577, %v8299
    %8356 = vst.msk [vmem:[#allocation2 + $0xe0] sm:$0xff] %vm577, %v8300
    %8357 = vst.msk [vmem:[#allocation2 + $0xe8] sm:$0xff] %vm577, %v8301
    %8358 = vst.msk [vmem:[#allocation2 + $0xf0] sm:$0xff] %vm577, %v8302
    %8359 = vst.msk [vmem:[#allocation2 + $0xf8] sm:$0xff] %vm577, %v8303
    %8360 = vst.msk [vmem:[#allocation2 + $0x100] sm:$0xff] %vm577, %v8304
    %8361 = vst.msk [vmem:[#allocation2 + $0x108] sm:$0xff] %vm577, %v8305
    %8362 = vst.msk [vmem:[#allocation2 + $0x110] sm:$0xff] %vm577, %v8306
    %8363 = vst.msk [vmem:[#allocation2 + $0x118] sm:$0xff] %vm577, %v8307
    %8364 = vst.msk [vmem:[#allocation2 + $0x120] sm:$0xff] %vm577, %v8308
    %8365 = vst.msk [vmem:[#allocation2 + $0x128] sm:$0xff] %vm577, %v8309
    %8366 = vst.msk [vmem:[#allocation2 + $0x130] sm:$0xff] %vm577, %v8310
    %8367 = vst.msk [vmem:[#allocation2 + $0x138] sm:$0xff] %vm577, %v8311
    %8368 = vst.msk [vmem:[#allocation2 + $0x140] sm:$0xff] %vm577, %v8312
    %8369 = vst.msk [vmem:[#allocation2 + $0x148] sm:$0xff] %vm577, %v8313
    %8370 = vst.msk [vmem:[#allocation2 + $0x150] sm:$0xff] %vm577, %v8314
    %8371 = vst.msk [vmem:[#allocation2 + $0x158] sm:$0xff] %vm577, %v8315
    %8372 = vst.msk [vmem:[#allocation2 + $0x160] sm:$0xff] %vm577, %v8316
    %8373 = vst.msk [vmem:[#allocation2 + $0x168] sm:$0xff] %vm577, %v8317
    %8374 = vst.msk [vmem:[#allocation2 + $0x170] sm:$0xff] %vm577, %v8318
    %8375 = vst.msk [vmem:[#allocation2 + $0x178] sm:$0xff] %vm577, %v8319
    %8376 = vst.msk [vmem:[#allocation2 + $0x180] sm:$0xff] %vm577, %v8320
    %8377 = vst.msk [vmem:[#allocation2 + $0x188] sm:$0xff] %vm577, %v8321
    %8378 = vst.msk [vmem:[#allocation2 + $0x190] sm:$0xff] %vm577, %v8322
    %8379 = vst.msk [vmem:[#allocation2 + $0x198] sm:$0xff] %vm577, %v8323
    %8380 = vst.msk [vmem:[#allocation2 + $0x1a0] sm:$0xff] %vm577, %v8324
    %8381 = vst.msk [vmem:[#allocation2 + $0x1a8] sm:$0xff] %vm577, %v8325
    %8382 = vst.msk [vmem:[#allocation2 + $0x1b0] sm:$0xff] %vm577, %v8326
    %8383 = vst.msk [vmem:[#allocation2 + $0x1b8] sm:$0xff] %vm577, %v8327
    %8384 = vst.msk [vmem:[#allocation3] sm:$0xff] %vm577, 0
    %8385 = vst.msk [vmem:[#allocation3 + $0x8] sm:$0xff] %vm577, 0
    %8386 = vst.msk [vmem:[#allocation3 + $0x10] sm:$0xff] %vm577, 0
    %8387 = vst.msk [vmem:[#allocation3 + $0x18] sm:$0xff] %vm577, 0
    %8388 = vst.msk [vmem:[#allocation3 + $0x20] sm:$0xff] %vm577, 0
    %8389 = vst.msk [vmem:[#allocation3 + $0x28] sm:$0xff] %vm577, 0
    %8390 = vst.msk [vmem:[#allocation3 + $0x30] sm:$0xff] %vm577, 0
    %8391 = vst.msk [vmem:[#allocation3 + $0x38] sm:$0xff] %vm577, 0
    %8392 = vst.msk [vmem:[#allocation3 + $0x40] sm:$0xff] %vm577, 0
    %8393 = vst.msk [vmem:[#allocation3 + $0x48] sm:$0xff] %vm577, 0
    %8394 = vst.msk [vmem:[#allocation3 + $0x50] sm:$0xff] %vm577, 0
    %8395 = vst.msk [vmem:[#allocation3 + $0x58] sm:$0xff] %vm577, 0
    %8396 = vst.msk [vmem:[#allocation3 + $0x60] sm:$0xff] %vm577, 0
    %8397 = vst.msk [vmem:[#allocation3 + $0x68] sm:$0xff] %vm577, 0
    %8398 = vst.msk [vmem:[#allocation3 + $0x70] sm:$0xff] %vm577, 0
    %8399 = vst.msk [vmem:[#allocation3 + $0x78] sm:$0xff] %vm577, 0
    %v8400 = vld [vmem:[#allocation2] ss:$2 sm:$0x7f]
    %s8401 = scalar_lea.vmem [#allocation2], 224
    %v8402 = vld [vmem:[%s8401] ss:$2 sm:$0x7f]
    %s8403 = scalar_lea.vmem [#allocation2], 1
    %v8404 = vld [vmem:[%s8403] ss:$2 sm:$0x7f]
    %s8405 = scalar_lea.vmem [#allocation2], 225
    %v8406 = vld [vmem:[%s8405] ss:$2 sm:$0x7f]
    %v8407 = vmax.f32 %v8400, %v8404
    %v8408 = vmax.f32 %v8402, %v8406
    %s8409 = scalar_lea.vmem [#allocation2], 16
    %v8410 = vld [vmem:[%s8409] ss:$2 sm:$0x7f]
    %s8411 = scalar_lea.vmem [#allocation2], 240
    %v8412 = vld [vmem:[%s8411] ss:$2 sm:$0x7f]
    %v8413 = vmax.f32 %v8407, %v8410
    %v8414 = vmax.f32 %v8408, %v8412
    %s8415 = scalar_lea.vmem [#allocation2], 17
    %v8416 = vld [vmem:[%s8415] ss:$2 sm:$0x7f]
    %s8417 = scalar_lea.vmem [#allocation2], 241
    %v8418 = vld [vmem:[%s8417] ss:$2 sm:$0x7f]
    %v8419 = vmax.f32 %v8413, %v8416
    %v8420 = vmax.f32 %v8414, %v8418
    %v8421 = vld [vmem:[%s2] sm:$0x1]
    %v8423 = vlaneseq
    %v8424 = vshrl.u32 %v8423, 7
    %v8425 = vsub.s32 0, %v8424
    %v8426 = vrot.slane %v8421, %v8425
    %v8428 = vadd.f32 %v8419, %v8426
    %v8429 = vadd.f32 %v8420, %v8426
    %v8430 = vmax.f32 %v8428, 0.0
    %v8431 = vmax.f32 %v8429, 0.0
    %v8432 = vpack.c.bf16 %v8430, %v8430
    %v8433 = vpack.c.bf16 %v8431, %v8431
    %vm8434 = vcmask 257024
    %vm8435 = vmand %vm8434, %vm692
    %v8436 = vld [vmem:[#allocation3] sm:$0xf]
    %v8437 = vsel %vm8435, %v8432, %v8436
    %8438 = vst [vmem:[#allocation3] sm:$0xf] %v8437
    %v8439 = vld [vmem:[#allocation3 + $0x40] sm:$0xf]
    %v8440 = vsel %vm8435, %v8433, %v8439
    %8441 = vst [vmem:[#allocation3 + $0x40] sm:$0xf] %v8440
    %s8442 = scalar_lea.vmem [#allocation2], 32
    %v8443 = vld [vmem:[%s8442] ss:$2 sm:$0x7f]
    %s8444 = scalar_lea.vmem [#allocation2], 256
    %v8445 = vld [vmem:[%s8444] ss:$2 sm:$0x7f]
    %s8446 = scalar_lea.vmem [#allocation2], 33
    %v8447 = vld [vmem:[%s8446] ss:$2 sm:$0x7f]
    %s8448 = scalar_lea.vmem [#allocation2], 257
    %v8449 = vld [vmem:[%s8448] ss:$2 sm:$0x7f]
    %v8450 = vmax.f32 %v8443, %v8447
    %v8451 = vmax.f32 %v8445, %v8449
    %s8452 = scalar_lea.vmem [#allocation2], 48
    %v8453 = vld [vmem:[%s8452] ss:$2 sm:$0x7f]
    %s8454 = scalar_lea.vmem [#allocation2], 272
    %v8455 = vld [vmem:[%s8454] ss:$2 sm:$0x7f]
    %v8456 = vmax.f32 %v8450, %v8453
    %v8457 = vmax.f32 %v8451, %v8455
    %s8458 = scalar_lea.vmem [#allocation2], 49
    %v8459 = vld [vmem:[%s8458] ss:$2 sm:$0x7f]
    %s8460 = scalar_lea.vmem [#allocation2], 273
    %v8461 = vld [vmem:[%s8460] ss:$2 sm:$0x7f]
    %v8462 = vmax.f32 %v8456, %v8459
    %v8463 = vmax.f32 %v8457, %v8461
    %v8464 = vld [vmem:[%s2] sm:$0x1]
    %v8466 = vlaneseq
    %v8467 = vshrl.u32 %v8466, 7
    %v8468 = vsub.s32 0, %v8467
    %v8469 = vrot.slane %v8464, %v8468
    %v8471 = vadd.f32 %v8462, %v8469
    %v8472 = vadd.f32 %v8463, %v8469
    %v8473 = vmax.f32 %v8471, 0.0
    %v8474 = vmax.f32 %v8472, 0.0
    %v8475 = vpack.c.bf16 %v8473, %v8473
    %v8476 = vpack.c.bf16 %v8474, %v8474
    %v8477 = vld [vmem:[#allocation3 + $0x8] sm:$0xf]
    %v8478 = vsel %vm8435, %v8475, %v8477
    %8479 = vst [vmem:[#allocation3 + $0x8] sm:$0xf] %v8478
    %v8480 = vld [vmem:[#allocation3 + $0x48] sm:$0xf]
    %v8481 = vsel %vm8435, %v8476, %v8480
    %8482 = vst [vmem:[#allocation3 + $0x48] sm:$0xf] %v8481
    %s8483 = scalar_lea.vmem [#allocation2], 64
    %v8484 = vld [vmem:[%s8483] ss:$2 sm:$0x7f]
    %s8485 = scalar_lea.vmem [#allocation2], 288
    %v8486 = vld [vmem:[%s8485] ss:$2 sm:$0x7f]
    %s8487 = scalar_lea.vmem [#allocation2], 65
    %v8488 = vld [vmem:[%s8487] ss:$2 sm:$0x7f]
    %s8489 = scalar_lea.vmem [#allocation2], 289
    %v8490 = vld [vmem:[%s8489] ss:$2 sm:$0x7f]
    %v8491 = vmax.f32 %v8484, %v8488
    %v8492 = vmax.f32 %v8486, %v8490
    %s8493 = scalar_lea.vmem [#allocation2], 80
    %v8494 = vld [vmem:[%s8493] ss:$2 sm:$0x7f]
    %s8495 = scalar_lea.vmem [#allocation2], 304
    %v8496 = vld [vmem:[%s8495] ss:$2 sm:$0x7f]
    %v8497 = vmax.f32 %v8491, %v8494
    %v8498 = vmax.f32 %v8492, %v8496
    %s8499 = scalar_lea.vmem [#allocation2], 81
    %v8500 = vld [vmem:[%s8499] ss:$2 sm:$0x7f]
    %s8501 = scalar_lea.vmem [#allocation2], 305
    %v8502 = vld [vmem:[%s8501] ss:$2 sm:$0x7f]
    %v8503 = vmax.f32 %v8497, %v8500
    %v8504 = vmax.f32 %v8498, %v8502
    %v8505 = vld [vmem:[%s2] sm:$0x1]
    %v8507 = vlaneseq
    %v8508 = vshrl.u32 %v8507, 7
    %v8509 = vsub.s32 0, %v8508
    %v8510 = vrot.slane %v8505, %v8509
    %v8512 = vadd.f32 %v8503, %v8510
    %v8513 = vadd.f32 %v8504, %v8510
    %v8514 = vmax.f32 %v8512, 0.0
    %v8515 = vmax.f32 %v8513, 0.0
    %v8516 = vpack.c.bf16 %v8514, %v8514
    %v8517 = vpack.c.bf16 %v8515, %v8515
    %v8518 = vld [vmem:[#allocation3 + $0x10] sm:$0xf]
    %v8519 = vsel %vm8435, %v8516, %v8518
    %8520 = vst [vmem:[#allocation3 + $0x10] sm:$0xf] %v8519
    %v8521 = vld [vmem:[#allocation3 + $0x50] sm:$0xf]
    %v8522 = vsel %vm8435, %v8517, %v8521
    %8523 = vst [vmem:[#allocation3 + $0x50] sm:$0xf] %v8522
    %s8524 = scalar_lea.vmem [#allocation2], 96
    %v8525 = vld [vmem:[%s8524] ss:$2 sm:$0x7f]
    %s8526 = scalar_lea.vmem [#allocation2], 320
    %v8527 = vld [vmem:[%s8526] ss:$2 sm:$0x7f]
    %s8528 = scalar_lea.vmem [#allocation2], 97
    %v8529 = vld [vmem:[%s8528] ss:$2 sm:$0x7f]
    %s8530 = scalar_lea.vmem [#allocation2], 321
    %v8531 = vld [vmem:[%s8530] ss:$2 sm:$0x7f]
    %v8532 = vmax.f32 %v8525, %v8529
    %v8533 = vmax.f32 %v8527, %v8531
    %s8534 = scalar_lea.vmem [#allocation2], 112
    %v8535 = vld [vmem:[%s8534] ss:$2 sm:$0x7f]
    %s8536 = scalar_lea.vmem [#allocation2], 336
    %v8537 = vld [vmem:[%s8536] ss:$2 sm:$0x7f]
    %v8538 = vmax.f32 %v8532, %v8535
    %v8539 = vmax.f32 %v8533, %v8537
    %s8540 = scalar_lea.vmem [#allocation2], 113
    %v8541 = vld [vmem:[%s8540] ss:$2 sm:$0x7f]
    %s8542 = scalar_lea.vmem [#allocation2], 337
    %v8543 = vld [vmem:[%s8542] ss:$2 sm:$0x7f]
    %v8544 = vmax.f32 %v8538, %v8541
    %v8545 = vmax.f32 %v8539, %v8543
    %v8546 = vld [vmem:[%s2] sm:$0x1]
    %v8548 = vlaneseq
    %v8549 = vshrl.u32 %v8548, 7
    %v8550 = vsub.s32 0, %v8549
    %v8551 = vrot.slane %v8546, %v8550
    %v8553 = vadd.f32 %v8544, %v8551
    %v8554 = vadd.f32 %v8545, %v8551
    %v8555 = vmax.f32 %v8553, 0.0
    %v8556 = vmax.f32 %v8554, 0.0
    %v8557 = vpack.c.bf16 %v8555, %v8555
    %v8558 = vpack.c.bf16 %v8556, %v8556
    %v8559 = vld [vmem:[#allocation3 + $0x18] sm:$0xf]
    %v8560 = vsel %vm8435, %v8557, %v8559
    %8561 = vst [vmem:[#allocation3 + $0x18] sm:$0xf] %v8560
    %v8562 = vld [vmem:[#allocation3 + $0x58] sm:$0xf]
    %v8563 = vsel %vm8435, %v8558, %v8562
    %8564 = vst [vmem:[#allocation3 + $0x58] sm:$0xf] %v8563
    %s8565 = scalar_lea.vmem [#allocation2], 128
    %v8566 = vld [vmem:[%s8565] ss:$2 sm:$0x7f]
    %s8567 = scalar_lea.vmem [#allocation2], 352
    %v8568 = vld [vmem:[%s8567] ss:$2 sm:$0x7f]
    %s8569 = scalar_lea.vmem [#allocation2], 129
    %v8570 = vld [vmem:[%s8569] ss:$2 sm:$0x7f]
    %s8571 = scalar_lea.vmem [#allocation2], 353
    %v8572 = vld [vmem:[%s8571] ss:$2 sm:$0x7f]
    %v8573 = vmax.f32 %v8566, %v8570
    %v8574 = vmax.f32 %v8568, %v8572
    %s8575 = scalar_lea.vmem [#allocation2], 144
    %v8576 = vld [vmem:[%s8575] ss:$2 sm:$0x7f]
    %s8577 = scalar_lea.vmem [#allocation2], 368
    %v8578 = vld [vmem:[%s8577] ss:$2 sm:$0x7f]
    %v8579 = vmax.f32 %v8573, %v8576
    %v8580 = vmax.f32 %v8574, %v8578
    %s8581 = scalar_lea.vmem [#allocation2], 145
    %v8582 = vld [vmem:[%s8581] ss:$2 sm:$0x7f]
    %s8583 = scalar_lea.vmem [#allocation2], 369
    %v8584 = vld [vmem:[%s8583] ss:$2 sm:$0x7f]
    %v8585 = vmax.f32 %v8579, %v8582
    %v8586 = vmax.f32 %v8580, %v8584
    %v8587 = vld [vmem:[%s2] sm:$0x1]
    %v8589 = vlaneseq
    %v8590 = vshrl.u32 %v8589, 7
    %v8591 = vsub.s32 0, %v8590
    %v8592 = vrot.slane %v8587, %v8591
    %v8594 = vadd.f32 %v8585, %v8592
    %v8595 = vadd.f32 %v8586, %v8592
    %v8596 = vmax.f32 %v8594, 0.0
    %v8597 = vmax.f32 %v8595, 0.0
    %v8598 = vpack.c.bf16 %v8596, %v8596
    %v8599 = vpack.c.bf16 %v8597, %v8597
    %v8600 = vld [vmem:[#allocation3 + $0x20] sm:$0xf]
    %v8601 = vsel %vm8435, %v8598, %v8600
    %8602 = vst [vmem:[#allocation3 + $0x20] sm:$0xf] %v8601
    %v8603 = vld [vmem:[#allocation3 + $0x60] sm:$0xf]
    %v8604 = vsel %vm8435, %v8599, %v8603
    %8605 = vst [vmem:[#allocation3 + $0x60] sm:$0xf] %v8604
    %s8606 = scalar_lea.vmem [#allocation2], 160
    %v8607 = vld [vmem:[%s8606] ss:$2 sm:$0x7f]
    %s8608 = scalar_lea.vmem [#allocation2], 384
    %v8609 = vld [vmem:[%s8608] ss:$2 sm:$0x7f]
    %s8610 = scalar_lea.vmem [#allocation2], 161
    %v8611 = vld [vmem:[%s8610] ss:$2 sm:$0x7f]
    %s8612 = scalar_lea.vmem [#allocation2], 385
    %v8613 = vld [vmem:[%s8612] ss:$2 sm:$0x7f]
    %v8614 = vmax.f32 %v8607, %v8611
    %v8615 = vmax.f32 %v8609, %v8613
    %s8616 = scalar_lea.vmem [#allocation2], 176
    %v8617 = vld [vmem:[%s8616] ss:$2 sm:$0x7f]
    %s8618 = scalar_lea.vmem [#allocation2], 400
    %v8619 = vld [vmem:[%s8618] ss:$2 sm:$0x7f]
    %v8620 = vmax.f32 %v8614, %v8617
    %v8621 = vmax.f32 %v8615, %v8619
    %s8622 = scalar_lea.vmem [#allocation2], 177
    %v8623 = vld [vmem:[%s8622] ss:$2 sm:$0x7f]
    %s8624 = scalar_lea.vmem [#allocation2], 401
    %v8625 = vld [vmem:[%s8624] ss:$2 sm:$0x7f]
    %v8626 = vmax.f32 %v8620, %v8623
    %v8627 = vmax.f32 %v8621, %v8625
    %v8628 = vld [vmem:[%s2] sm:$0x1]
    %v8630 = vlaneseq
    %v8631 = vshrl.u32 %v8630, 7
    %v8632 = vsub.s32 0, %v8631
    %v8633 = vrot.slane %v8628, %v8632
    %v8635 = vadd.f32 %v8626, %v8633
    %v8636 = vadd.f32 %v8627, %v8633
    %v8637 = vmax.f32 %v8635, 0.0
    %v8638 = vmax.f32 %v8636, 0.0
    %v8639 = vpack.c.bf16 %v8637, %v8637
    %v8640 = vpack.c.bf16 %v8638, %v8638
    %v8641 = vld [vmem:[#allocation3 + $0x28] sm:$0xf]
    %v8642 = vsel %vm8435, %v8639, %v8641
    %8643 = vst [vmem:[#allocation3 + $0x28] sm:$0xf] %v8642
    %v8644 = vld [vmem:[#allocation3 + $0x68] sm:$0xf]
    %v8645 = vsel %vm8435, %v8640, %v8644
    %8646 = vst [vmem:[#allocation3 + $0x68] sm:$0xf] %v8645
    %s8647 = scalar_lea.vmem [#allocation2], 192
    %v8648 = vld [vmem:[%s8647] ss:$2 sm:$0x7f]
    %s8649 = scalar_lea.vmem [#allocation2], 416
    %v8650 = vld [vmem:[%s8649] ss:$2 sm:$0x7f]
    %s8651 = scalar_lea.vmem [#allocation2], 193
    %v8652 = vld [vmem:[%s8651] ss:$2 sm:$0x7f]
    %s8653 = scalar_lea.vmem [#allocation2], 417
    %v8654 = vld [vmem:[%s8653] ss:$2 sm:$0x7f]
    %v8655 = vmax.f32 %v8648, %v8652
    %v8656 = vmax.f32 %v8650, %v8654
    %s8657 = scalar_lea.vmem [#allocation2], 208
    %v8658 = vld [vmem:[%s8657] ss:$2 sm:$0x7f]
    %s8659 = scalar_lea.vmem [#allocation2], 432
    %v8660 = vld [vmem:[%s8659] ss:$2 sm:$0x7f]
    %v8661 = vmax.f32 %v8655, %v8658
    %v8662 = vmax.f32 %v8656, %v8660
    %s8663 = scalar_lea.vmem [#allocation2], 209
    %v8664 = vld [vmem:[%s8663] ss:$2 sm:$0x7f]
    %s8665 = scalar_lea.vmem [#allocation2], 433
    %v8666 = vld [vmem:[%s8665] ss:$2 sm:$0x7f]
    %v8667 = vmax.f32 %v8661, %v8664
    %v8668 = vmax.f32 %v8662, %v8666
    %v8669 = vld [vmem:[%s2] sm:$0x1]
    %v8671 = vlaneseq
    %v8672 = vshrl.u32 %v8671, 7
    %v8673 = vsub.s32 0, %v8672
    %v8674 = vrot.slane %v8669, %v8673
    %v8676 = vadd.f32 %v8667, %v8674
    %v8677 = vadd.f32 %v8668, %v8674
    %v8678 = vmax.f32 %v8676, 0.0
    %v8679 = vmax.f32 %v8677, 0.0
    %v8680 = vpack.c.bf16 %v8678, %v8678
    %v8681 = vpack.c.bf16 %v8679, %v8679
    %v8682 = vld [vmem:[#allocation3 + $0x30] sm:$0xf]
    %v8683 = vsel %vm8435, %v8680, %v8682
    %8684 = vst [vmem:[#allocation3 + $0x30] sm:$0xf] %v8683
    %v8685 = vld [vmem:[#allocation3 + $0x70] sm:$0xf]
    %v8686 = vsel %vm8435, %v8681, %v8685
    %8687 = vst [vmem:[#allocation3 + $0x70] sm:$0xf] %v8686
    %v8688 = vld [vmem:[#allocation3] sm:$0xff]
    %v8689 = vld [vmem:[#allocation3 + $0x8] sm:$0xff]
    %v8690 = vld [vmem:[#allocation3 + $0x10] sm:$0xff]
    %v8691 = vld [vmem:[#allocation3 + $0x18] sm:$0xff]
    %v8692 = vld [vmem:[#allocation3 + $0x20] sm:$0xff]
    %v8693 = vld [vmem:[#allocation3 + $0x40] sm:$0xff]
    %v8694 = vld [vmem:[#allocation3 + $0x48] sm:$0xff]
    %v8695 = vld [vmem:[#allocation3 + $0x50] sm:$0xff]
    %v8696 = vld [vmem:[#allocation3 + $0x58] sm:$0xff]
    %v8697 = vld [vmem:[#allocation3 + $0x60] sm:$0xff]
    %v8698 = vld [vmem:[%s3] sm:$0xf]
    %v8699 = vld [vmem:[%s3 + $0x4] sm:$0xf]
    %v8700 = vld [vmem:[%s3 + $0x8] sm:$0xf]
    %v8701 = vld [vmem:[%s3 + $0xc] sm:$0xf]
    %v8706 = vunpack.c.l.b16 %v8698
    %v8707 = vunpack.c.l.b16 %v8699
    %v8708 = vunpack.c.l.b16 %v8700
    %v8709 = vunpack.c.l.b16 %v8701
    %v8710 = vpack.c.b16 %v8707, %v8706
    %v8711 = vpack.c.b16 %v8709, %v8708
    %v8715 = vsel %vm577, %v8688, 0
    %v8718 = vsel %vm577, %v8689, 0
    %v8721 = vsel %vm577, %v8690, 0
    %v8724 = vsel %vm577, %v8691, 0
    %v8727 = vsel %vm577, %v8692, 0
    %v8730 = vsel %vm577, %v8693, 0
    %v8733 = vsel %vm577, %v8694, 0
    %v8736 = vsel %vm577, %v8695, 0
    %v8739 = vsel %vm577, %v8696, 0
    %v8742 = vsel %vm577, %v8697, 0
    %8744 = vmatprep.subr.bf16.mxu0 0
    %8745 = vmatpush1.bf16.msra.mxu0 %v8710
    %8746 = vmatprep.subr.bf16.mxu0 0
    %8747 = vmatpush1.bf16.msra.mxu0 %v8711
    %8748 = vmatprep.subr.bf16.mxu0 0
    %8749 = vmatpush1.bf16.msra.mxu0 0
    %8750 = vmatprep.subr.bf16.mxu0 0
    %8751 = vmatpush1.bf16.msra.mxu0 0
    %8752 = vmatprep.subr.bf16.mxu0 0
    %8753 = vmatpush1.bf16.msra.mxu0 0
    %8754 = vmatprep.subr.bf16.mxu0 0
    %8755 = vmatpush1.bf16.msra.mxu0 0
    %8756 = vmatprep.subr.bf16.mxu0 0
    %8757 = vmatpush1.bf16.msra.mxu0 0
    %8758 = vmatprep.subr.bf16.mxu0 0
    %8759 = vmatpush1.bf16.msra.mxu0 0
    %8760 = vmatprep.subr.bf16.mxu0 0
    %8761 = vmatpush1.bf16.msra.mxu0 0
    %8762 = vmatprep.subr.bf16.mxu0 0
    %8763 = vmatpush1.bf16.msra.mxu0 0
    %8764 = vmatprep.subr.bf16.mxu0 0
    %8765 = vmatpush1.bf16.msra.mxu0 0
    %8766 = vmatprep.subr.bf16.mxu0 0
    %8767 = vmatpush1.bf16.msra.mxu0 0
    %8768 = vmatprep.subr.bf16.mxu0 0
    %8769 = vmatpush1.bf16.msra.mxu0 0
    %8770 = vmatprep.subr.bf16.mxu0 0
    %8771 = vmatpush1.bf16.msra.mxu0 0
    %8772 = vmatprep.subr.bf16.mxu0 0
    %8773 = vmatpush1.bf16.msra.mxu0 0
    %8774 = vmatprep.subr.bf16.mxu0 0
    %8775 = vmatpush1.bf16.msra.mxu0 0
    %8776 = vmatprep.mubr.bf16.mxu0 0
    %8777 = vmatmul.mubr.bf16.gmra.mrb[0].mxu0 %v8715
    %v8778 = vpop.f32.mrb[0].mxu0
    %v8779 = vadd.f32 0.0, %v8778
    %v8780 = vpop.f32.mrb[0].mxu0
    %v8781 = vpop.f32.mrb[0].mxu0
    %v8782 = vadd.f32 0.0, %v8781
    %v8783 = vpop.f32.mrb[0].mxu0
    %8784 = vmatprep.mubr.bf16.mxu0 0
    %8785 = vmatmul.mubr.bf16.gmra.mrb[0].mxu0 %v8718
    %v8786 = vpop.f32.mrb[0].mxu0
    %v8787 = vadd.f32 0.0, %v8786
    %v8788 = vpop.f32.mrb[0].mxu0
    %v8789 = vpop.f32.mrb[0].mxu0
    %v8790 = vadd.f32 0.0, %v8789
    %v8791 = vpop.f32.mrb[0].mxu0
    %8792 = vmatprep.mubr.bf16.mxu0 0
    %8793 = vmatmul.mubr.bf16.gmra.mrb[0].mxu0 %v8721
    %v8794 = vpop.f32.mrb[0].mxu0
    %v8795 = vadd.f32 0.0, %v8794
    %v8796 = vpop.f32.mrb[0].mxu0
    %v8797 = vpop.f32.mrb[0].mxu0
    %v8798 = vadd.f32 0.0, %v8797
    %v8799 = vpop.f32.mrb[0].mxu0
    %8800 = vmatprep.mubr.bf16.mxu0 0
    %8801 = vmatmul.mubr.bf16.gmra.mrb[0].mxu0 %v8724
    %v8802 = vpop.f32.mrb[0].mxu0
    %v8803 = vadd.f32 0.0, %v8802
    %v8804 = vpop.f32.mrb[0].mxu0
    %v8805 = vpop.f32.mrb[0].mxu0
    %v8806 = vadd.f32 0.0, %v8805
    %v8807 = vpop.f32.mrb[0].mxu0
    %8808 = vmatprep.mubr.bf16.mxu0 0
    %8809 = vmatmul.mubr.bf16.gmra.mrb[0].mxu0 %v8727
    %v8810 = vpop.f32.mrb[0].mxu0
    %v8811 = vadd.f32 0.0, %v8810
    %v8812 = vpop.f32.mrb[0].mxu0
    %v8813 = vpop.f32.mrb[0].mxu0
    %v8814 = vadd.f32 0.0, %v8813
    %v8815 = vpop.f32.mrb[0].mxu0
    %8816 = vmatprep.mubr.bf16.mxu0 0
    %8817 = vmatmul.mubr.bf16.gmra.mrb[0].mxu0 %v8730
    %v8818 = vpop.f32.mrb[0].mxu0
    %v8819 = vadd.f32 0.0, %v8818
    %v8820 = vpop.f32.mrb[0].mxu0
    %v8821 = vpop.f32.mrb[0].mxu0
    %v8822 = vadd.f32 0.0, %v8821
    %v8823 = vpop.f32.mrb[0].mxu0
    %8824 = vmatprep.mubr.bf16.mxu0 0
    %8825 = vmatmul.mubr.bf16.gmra.mrb[0].mxu0 %v8733
    %v8826 = vpop.f32.mrb[0].mxu0
    %v8827 = vadd.f32 0.0, %v8826
    %v8828 = vpop.f32.mrb[0].mxu0
    %v8829 = vpop.f32.mrb[0].mxu0
    %v8830 = vadd.f32 0.0, %v8829
    %v8831 = vpop.f32.mrb[0].mxu0
    %8832 = vmatprep.mubr.bf16.mxu0 0
    %8833 = vmatmul.mubr.bf16.gmra.mrb[0].mxu0 %v8736
    %v8834 = vpop.f32.mrb[0].mxu0
    %v8835 = vadd.f32 0.0, %v8834
    %v8836 = vpop.f32.mrb[0].mxu0
    %v8837 = vpop.f32.mrb[0].mxu0
    %v8838 = vadd.f32 0.0, %v8837
    %v8839 = vpop.f32.mrb[0].mxu0
    %8840 = vmatprep.mubr.bf16.mxu0 0
    %8841 = vmatmul.mubr.bf16.gmra.mrb[0].mxu0 %v8739
    %v8842 = vpop.f32.mrb[0].mxu0
    %v8843 = vadd.f32 0.0, %v8842
    %v8844 = vpop.f32.mrb[0].mxu0
    %v8845 = vpop.f32.mrb[0].mxu0
    %v8846 = vadd.f32 0.0, %v8845
    %v8847 = vpop.f32.mrb[0].mxu0
    %8848 = vmatprep.mubr.bf16.mxu0 0
    %8849 = vmatmul.mubr.bf16.gmra.mrb[0].mxu0 %v8742
    %v8850 = vpop.f32.mrb[0].mxu0
    %v8851 = vadd.f32 0.0, %v8850
    %v8852 = vpop.f32.mrb[0].mxu0
    %v8853 = vpop.f32.mrb[0].mxu0
    %v8854 = vadd.f32 0.0, %v8853
    %v8855 = vpop.f32.mrb[0].mxu0
    %8856 = vdwg.mxu0
    %vm8857 = vcmask 523264
    %8858 = vst.msk [vmem:[#allocation4] sm:$0xff] %vm8857, %v8779
    %8859 = vst.msk [vmem:[#allocation4 + $0x8] sm:$0xff] %vm8857, %v8782
    %8860 = vst.msk [vmem:[#allocation4 + $0x10] sm:$0xff] %vm8857, %v8787
    %8861 = vst.msk [vmem:[#allocation4 + $0x18] sm:$0xff] %vm8857, %v8790
    %8862 = vst.msk [vmem:[#allocation4 + $0x20] sm:$0xff] %vm8857, %v8795
    %8863 = vst.msk [vmem:[#allocation4 + $0x28] sm:$0xff] %vm8857, %v8798
    %8864 = vst.msk [vmem:[#allocation4 + $0x30] sm:$0xff] %vm8857, %v8803
    %8865 = vst.msk [vmem:[#allocation4 + $0x38] sm:$0xff] %vm8857, %v8806
    %8866 = vst.msk [vmem:[#allocation4 + $0x40] sm:$0xff] %vm8857, %v8811
    %8867 = vst.msk [vmem:[#allocation4 + $0x48] sm:$0xff] %vm8857, %v8814
    %8868 = vst.msk [vmem:[#allocation4 + $0x50] sm:$0xff] %vm8857, %v8819
    %8869 = vst.msk [vmem:[#allocation4 + $0x58] sm:$0xff] %vm8857, %v8822
    %8870 = vst.msk [vmem:[#allocation4 + $0x60] sm:$0xff] %vm8857, %v8827
    %8871 = vst.msk [vmem:[#allocation4 + $0x68] sm:$0xff] %vm8857, %v8830
    %8872 = vst.msk [vmem:[#allocation4 + $0x70] sm:$0xff] %vm8857, %v8835
    %8873 = vst.msk [vmem:[#allocation4 + $0x78] sm:$0xff] %vm8857, %v8838
    %8874 = vst.msk [vmem:[#allocation4 + $0x80] sm:$0xff] %vm8857, %v8843
    %8875 = vst.msk [vmem:[#allocation4 + $0x88] sm:$0xff] %vm8857, %v8846
    %8876 = vst.msk [vmem:[#allocation4 + $0x90] sm:$0xff] %vm8857, %v8851
    %8877 = vst.msk [vmem:[#allocation4 + $0x98] sm:$0xff] %vm8857, %v8854
    %v8878 = vld [vmem:[#allocation3] sm:$0xff]
    %v8879 = vld [vmem:[#allocation3 + $0x8] sm:$0xff]
    %v8880 = vld [vmem:[#allocation3 + $0x10] sm:$0xff]
    %v8881 = vld [vmem:[#allocation3 + $0x18] sm:$0xff]
    %v8882 = vld [vmem:[#allocation3 + $0x20] sm:$0xff]
    %v8883 = vld [vmem:[#allocation3 + $0x28] sm:$0x1]
    %v8884 = vld [vmem:[#allocation3 + $0x40] sm:$0xff]
    %v8885 = vld [vmem:[#allocation3 + $0x48] sm:$0xff]
    %v8886 = vld [vmem:[#allocation3 + $0x50] sm:$0xff]
    %v8887 = vld [vmem:[#allocation3 + $0x58] sm:$0xff]
    %v8888 = vld [vmem:[#allocation3 + $0x60] sm:$0xff]
    %v8889 = vld [vmem:[#allocation3 + $0x68] sm:$0x1]
    %vm8890 = vsmask.f32 7424
    %v8892 = vshrl.u32 %v8878, 16
    %v8894 = vshll.u32 %v8878, 16
    %v8896 = vrot.slane %v8894, 1
    %v8897 = vor.u32 %v8892, %v8896
    %v8899 = vshll.u32 %v8879, 16
    %v8901 = vrot.slane %v8899, 1
    %v8902 = vsel %vm8890, %v8897, %v8901
    %v8903 = vshrl.u32 %v8879, 16
    %v8905 = vor.u32 %v8903, %v8901
    %v8907 = vshll.u32 %v8880, 16
    %v8909 = vrot.slane %v8907, 1
    %v8910 = vsel %vm8890, %v8905, %v8909
    %v8911 = vshrl.u32 %v8880, 16
    %v8913 = vor.u32 %v8911, %v8909
    %v8915 = vshll.u32 %v8881, 16
    %v8917 = vrot.slane %v8915, 1
    %v8918 = vsel %vm8890, %v8913, %v8917
    %v8919 = vshrl.u32 %v8881, 16
    %v8921 = vor.u32 %v8919, %v8917
    %v8923 = vshll.u32 %v8882, 16
    %v8925 = vrot.slane %v8923, 1
    %v8926 = vsel %vm8890, %v8921, %v8925
    %v8927 = vshrl.u32 %v8882, 16
    %v8929 = vor.u32 %v8927, %v8925
    %v8931 = vshll.u32 %v8883, 16
    %v8933 = vrot.slane %v8931, 1
    %v8934 = vsel %vm8890, %v8929, %v8933
    %v8936 = vshrl.u32 %v8884, 16
    %v8938 = vshll.u32 %v8884, 16
    %v8940 = vrot.slane %v8938, 1
    %v8941 = vor.u32 %v8936, %v8940
    %v8943 = vshll.u32 %v8885, 16
    %v8945 = vrot.slane %v8943, 1
    %v8946 = vsel %vm8890, %v8941, %v8945
    %v8947 = vshrl.u32 %v8885, 16
    %v8949 = vor.u32 %v8947, %v8945
    %v8951 = vshll.u32 %v8886, 16
    %v8953 = vrot.slane %v8951, 1
    %v8954 = vsel %vm8890, %v8949, %v8953
    %v8955 = vshrl.u32 %v8886, 16
    %v8957 = vor.u32 %v8955, %v8953
    %v8959 = vshll.u32 %v8887, 16
    %v8961 = vrot.slane %v8959, 1
    %v8962 = vsel %vm8890, %v8957, %v8961
    %v8963 = vshrl.u32 %v8887, 16
    %v8965 = vor.u32 %v8963, %v8961
    %v8967 = vshll.u32 %v8888, 16
    %v8969 = vrot.slane %v8967, 1
    %v8970 = vsel %vm8890, %v8965, %v8969
    %v8971 = vshrl.u32 %v8888, 16
    %v8973 = vor.u32 %v8971, %v8969
    %v8975 = vshll.u32 %v8889, 16
    %v8977 = vrot.slane %v8975, 1
    %v8978 = vsel %vm8890, %v8973, %v8977
    %s8979 = scalar_lea.vmem %s3, 16
    %v8980 = vld [vmem:[%s8979] sm:$0xf]
    %v8981 = vld [vmem:[%s8979 + $0x4] sm:$0xf]
    %v8982 = vld [vmem:[%s8979 + $0x8] sm:$0xf]
    %v8983 = vld [vmem:[%s8979 + $0xc] sm:$0xf]
    %v8988 = vunpack.c.l.b16 %v8980
    %v8989 = vunpack.c.l.b16 %v8981
    %v8990 = vunpack.c.l.b16 %v8982
    %v8991 = vunpack.c.l.b16 %v8983
    %v8992 = vpack.c.b16 %v8989, %v8988
    %v8993 = vpack.c.b16 %v8991, %v8990
    %v8997 = vsel %vm577, %v8902, 0
    %v9000 = vsel %vm577, %v8910, 0
    %v9003 = vsel %vm577, %v8918, 0
    %v9006 = vsel %vm577, %v8926, 0
    %v9009 = vsel %vm577, %v8934, 0
    %v9012 = vsel %vm577, %v8946, 0
    %v9015 = vsel %vm577, %v8954, 0
    %v9018 = vsel %vm577, %v8962, 0
    %v9021 = vsel %vm577, %v8970, 0
    %v9024 = vsel %vm577, %v8978, 0
    %9026 = vmatprep.subr.bf16.mxu0 0
    %9027 = vmatpush1.bf16.msra.mxu0 %v8992
    %9028 = vmatprep.subr.bf16.mxu0 0
    %9029 = vmatpush1.bf16.msra.mxu0 %v8993
    %9030 = vmatprep.subr.bf16.mxu0 0
    %9031 = vmatpush1.bf16.msra.mxu0 0
    %9032 = vmatprep.subr.bf16.mxu0 0
    %9033 = vmatpush1.bf16.msra.mxu0 0
    %9034 = vmatprep.subr.bf16.mxu0 0
    %9035 = vmatpush1.bf16.msra.mxu0 0
    %9036 = vmatprep.subr.bf16.mxu0 0
    %9037 = vmatpush1.bf16.msra.mxu0 0
    %9038 = vmatprep.subr.bf16.mxu0 0
    %9039 = vmatpush1.bf16.msra.mxu0 0
    %9040 = vmatprep.subr.bf16.mxu0 0
    %9041 = vmatpush1.bf16.msra.mxu0 0
    %9042 = vmatprep.subr.bf16.mxu0 0
    %9043 = vmatpush1.bf16.msra.mxu0 0
    %9044 = vmatprep.subr.bf16.mxu0 0
    %9045 = vmatpush1.bf16.msra.mxu0 0
    %9046 = vmatprep.subr.bf16.mxu0 0
    %9047 = vmatpush1.bf16.msra.mxu0 0
    %9048 = vmatprep.subr.bf16.mxu0 0
    %9049 = vmatpush1.bf16.msra.mxu0 0
    %9050 = vmatprep.subr.bf16.mxu0 0
    %9051 = vmatpush1.bf16.msra.mxu0 0
    %9052 = vmatprep.subr.bf16.mxu0 0
    %9053 = vmatpush1.bf16.msra.mxu0 0
    %9054 = vmatprep.subr.bf16.mxu0 0
    %9055 = vmatpush1.bf16.msra.mxu0 0
    %9056 = vmatprep.subr.bf16.mxu0 0
    %9057 = vmatpush1.bf16.msra.mxu0 0
    %9058 = vmatprep.mubr.bf16.mxu0 0
    %9059 = vmatmul.mubr.bf16.gmra.mrb[0].mxu0 %v8997
    %v9060 = vpop.f32.mrb[0].mxu0
    %v9061 = vadd.f32 0.0, %v9060
    %v9062 = vpop.f32.mrb[0].mxu0
    %v9063 = vpop.f32.mrb[0].mxu0
    %v9064 = vadd.f32 0.0, %v9063
    %v9065 = vpop.f32.mrb[0].mxu0
    %9066 = vmatprep.mubr.bf16.mxu0 0
    %9067 = vmatmul.mubr.bf16.gmra.mrb[0].mxu0 %v9000
    %v9068 = vpop.f32.mrb[0].mxu0
    %v9069 = vadd.f32 0.0, %v9068
    %v9070 = vpop.f32.mrb[0].mxu0
    %v9071 = vpop.f32.mrb[0].mxu0
    %v9072 = vadd.f32 0.0, %v9071
    %v9073 = vpop.f32.mrb[0].mxu0
    %9074 = vmatprep.mubr.bf16.mxu0 0
    %9075 = vmatmul.mubr.bf16.gmra.mrb[0].mxu0 %v9003
    %v9076 = vpop.f32.mrb[0].mxu0
    %v9077 = vadd.f32 0.0, %v9076
    %v9078 = vpop.f32.mrb[0].mxu0
    %v9079 = vpop.f32.mrb[0].mxu0
    %v9080 = vadd.f32 0.0, %v9079
    %v9081 = vpop.f32.mrb[0].mxu0
    %9082 = vmatprep.mubr.bf16.mxu0 0
    %9083 = vmatmul.mubr.bf16.gmra.mrb[0].mxu0 %v9006
    %v9084 = vpop.f32.mrb[0].mxu0
    %v9085 = vadd.f32 0.0, %v9084
    %v9086 = vpop.f32.mrb[0].mxu0
    %v9087 = vpop.f32.mrb[0].mxu0
    %v9088 = vadd.f32 0.0, %v9087
    %v9089 = vpop.f32.mrb[0].mxu0
    %9090 = vmatprep.mubr.bf16.mxu0 0
    %9091 = vmatmul.mubr.bf16.gmra.mrb[0].mxu0 %v9009
    %v9092 = vpop.f32.mrb[0].mxu0
    %v9093 = vadd.f32 0.0, %v9092
    %v9094 = vpop.f32.mrb[0].mxu0
    %v9095 = vpop.f32.mrb[0].mxu0
    %v9096 = vadd.f32 0.0, %v9095
    %v9097 = vpop.f32.mrb[0].mxu0
    %9098 = vmatprep.mubr.bf16.mxu0 0
    %9099 = vmatmul.mubr.bf16.gmra.mrb[0].mxu0 %v9012
    %v9100 = vpop.f32.mrb[0].mxu0
    %v9101 = vadd.f32 0.0, %v9100
    %v9102 = vpop.f32.mrb[0].mxu0
    %v9103 = vpop.f32.mrb[0].mxu0
    %v9104 = vadd.f32 0.0, %v9103
    %v9105 = vpop.f32.mrb[0].mxu0
    %9106 = vmatprep.mubr.bf16.mxu0 0
    %9107 = vmatmul.mubr.bf16.gmra.mrb[0].mxu0 %v9015
    %v9108 = vpop.f32.mrb[0].mxu0
    %v9109 = vadd.f32 0.0, %v9108
    %v9110 = vpop.f32.mrb[0].mxu0
    %v9111 = vpop.f32.mrb[0].mxu0
    %v9112 = vadd.f32 0.0, %v9111
    %v9113 = vpop.f32.mrb[0].mxu0
    %9114 = vmatprep.mubr.bf16.mxu0 0
    %9115 = vmatmul.mubr.bf16.gmra.mrb[0].mxu0 %v9018
    %v9116 = vpop.f32.mrb[0].mxu0
    %v9117 = vadd.f32 0.0, %v9116
    %v9118 = vpop.f32.mrb[0].mxu0
    %v9119 = vpop.f32.mrb[0].mxu0
    %v9120 = vadd.f32 0.0, %v9119
    %v9121 = vpop.f32.mrb[0].mxu0
    %9122 = vmatprep.mubr.bf16.mxu0 0
    %9123 = vmatmul.mubr.bf16.gmra.mrb[0].mxu0 %v9021
    %v9124 = vpop.f32.mrb[0].mxu0
    %v9125 = vadd.f32 0.0, %v9124
    %v9126 = vpop.f32.mrb[0].mxu0
    %v9127 = vpop.f32.mrb[0].mxu0
    %v9128 = vadd.f32 0.0, %v9127
    %v9129 = vpop.f32.mrb[0].mxu0
    %9130 = vmatprep.mubr.bf16.mxu0 0
    %9131 = vmatmul.mubr.bf16.gmra.mrb[0].mxu0 %v9024
    %v9132 = vpop.f32.mrb[0].mxu0
    %v9133 = vadd.f32 0.0, %v9132
    %v9134 = vpop.f32.mrb[0].mxu0
    %v9135 = vpop.f32.mrb[0].mxu0
    %v9136 = vadd.f32 0.0, %v9135
    %v9137 = vpop.f32.mrb[0].mxu0
    %9138 = vdwg.mxu0
    %v9139 = vld [vmem:[#allocation4] sm:$0xff]
    %v9140 = vld [vmem:[#allocation4 + $0x8] sm:$0xff]
    %v9141 = vld [vmem:[#allocation4 + $0x10] sm:$0xff]
    %v9142 = vld [vmem:[#allocation4 + $0x18] sm:$0xff]
    %v9143 = vld [vmem:[#allocation4 + $0x20] sm:$0xff]
    %v9144 = vld [vmem:[#allocation4 + $0x28] sm:$0xff]
    %v9145 = vld [vmem:[#allocation4 + $0x30] sm:$0xff]
    %v9146 = vld [vmem:[#allocation4 + $0x38] sm:$0xff]
    %v9147 = vld [vmem:[#allocation4 + $0x40] sm:$0xff]
    %v9148 = vld [vmem:[#allocation4 + $0x48] sm:$0xff]
    %v9149 = vld [vmem:[#allocation4 + $0x50] sm:$0xff]
    %v9150 = vld [vmem:[#allocation4 + $0x58] sm:$0xff]
    %v9151 = vld [vmem:[#allocation4 + $0x60] sm:$0xff]
    %v9152 = vld [vmem:[#allocation4 + $0x68] sm:$0xff]
    %v9153 = vld [vmem:[#allocation4 + $0x70] sm:$0xff]
    %v9154 = vld [vmem:[#allocation4 + $0x78] sm:$0xff]
    %v9155 = vld [vmem:[#allocation4 + $0x80] sm:$0xff]
    %v9156 = vld [vmem:[#allocation4 + $0x88] sm:$0xff]
    %v9157 = vld [vmem:[#allocation4 + $0x90] sm:$0xff]
    %v9158 = vld [vmem:[#allocation4 + $0x98] sm:$0xff]
    %v9159 = vadd.f32 %v9139, %v9061
    %v9160 = vadd.f32 %v9140, %v9064
    %v9161 = vadd.f32 %v9141, %v9069
    %v9162 = vadd.f32 %v9142, %v9072
    %v9163 = vadd.f32 %v9143, %v9077
    %v9164 = vadd.f32 %v9144, %v9080
    %v9165 = vadd.f32 %v9145, %v9085
    %v9166 = vadd.f32 %v9146, %v9088
    %v9167 = vadd.f32 %v9147, %v9093
    %v9168 = vadd.f32 %v9148, %v9096
    %v9169 = vadd.f32 %v9149, %v9101
    %v9170 = vadd.f32 %v9150, %v9104
    %v9171 = vadd.f32 %v9151, %v9109
    %v9172 = vadd.f32 %v9152, %v9112
    %v9173 = vadd.f32 %v9153, %v9117
    %v9174 = vadd.f32 %v9154, %v9120
    %v9175 = vadd.f32 %v9155, %v9125
    %v9176 = vadd.f32 %v9156, %v9128
    %v9177 = vadd.f32 %v9157, %v9133
    %v9178 = vadd.f32 %v9158, %v9136
    %9179 = vst.msk [vmem:[#allocation4] sm:$0xff] %vm8857, %v9159
    %9180 = vst.msk [vmem:[#allocation4 + $0x8] sm:$0xff] %vm8857, %v9160
    %9181 = vst.msk [vmem:[#allocation4 + $0x10] sm:$0xff] %vm8857, %v9161
    %9182 = vst.msk [vmem:[#allocation4 + $0x18] sm:$0xff] %vm8857, %v9162
    %9183 = vst.msk [vmem:[#allocation4 + $0x20] sm:$0xff] %vm8857, %v9163
    %9184 = vst.msk [vmem:[#allocation4 + $0x28] sm:$0xff] %vm8857, %v9164
    %9185 = vst.msk [vmem:[#allocation4 + $0x30] sm:$0xff] %vm8857, %v9165
    %9186 = vst.msk [vmem:[#allocation4 + $0x38] sm:$0xff] %vm8857, %v9166
    %9187 = vst.msk [vmem:[#allocation4 + $0x40] sm:$0xff] %vm8857, %v9167
    %9188 = vst.msk [vmem:[#allocation4 + $0x48] sm:$0xff] %vm8857, %v9168
    %9189 = vst.msk [vmem:[#allocation4 + $0x50] sm:$0xff] %vm8857, %v9169
    %9190 = vst.msk [vmem:[#allocation4 + $0x58] sm:$0xff] %vm8857, %v9170
    %9191 = vst.msk [vmem:[#allocation4 + $0x60] sm:$0xff] %vm8857, %v9171
    %9192 = vst.msk [vmem:[#allocation4 + $0x68] sm:$0xff] %vm8857, %v9172
    %9193 = vst.msk [vmem:[#allocation4 + $0x70] sm:$0xff] %vm8857, %v9173
    %9194 = vst.msk [vmem:[#allocation4 + $0x78] sm:$0xff] %vm8857, %v9174
    %9195 = vst.msk [vmem:[#allocation4 + $0x80] sm:$0xff] %vm8857, %v9175
    %9196 = vst.msk [vmem:[#allocation4 + $0x88] sm:$0xff] %vm8857, %v9176
    %9197 = vst.msk [vmem:[#allocation4 + $0x90] sm:$0xff] %vm8857, %v9177
    %9198 = vst.msk [vmem:[#allocation4 + $0x98] sm:$0xff] %vm8857, %v9178
    %v9199 = vld [vmem:[#allocation3] sm:$0xfe]
    %v9200 = vld [vmem:[#allocation3 + $0x8] sm:$0xff]
    %v9201 = vld [vmem:[#allocation3 + $0x10] sm:$0xff]
    %v9202 = vld [vmem:[#allocation3 + $0x18] sm:$0xff]
    %v9203 = vld [vmem:[#allocation3 + $0x20] sm:$0xff]
    %v9204 = vld [vmem:[#allocation3 + $0x28] sm:$0x1]
    %v9205 = vld [vmem:[#allocation3 + $0x40] sm:$0xfe]
    %v9206 = vld [vmem:[#allocation3 + $0x48] sm:$0xff]
    %v9207 = vld [vmem:[#allocation3 + $0x50] sm:$0xff]
    %v9208 = vld [vmem:[#allocation3 + $0x58] sm:$0xff]
    %v9209 = vld [vmem:[#allocation3 + $0x60] sm:$0xff]
    %v9210 = vld [vmem:[#allocation3 + $0x68] sm:$0x1]
    %vm9223 = vcmask 1046528
    %v9224 = vrot.slane %v9199, 1
    %v9225 = vrot.slane %v9200, 1
    %v9226 = vsel %vm9223, %v9224, %v9225
    %v9227 = vrot.slane %v9201, 1
    %v9228 = vsel %vm9223, %v9225, %v9227
    %v9229 = vrot.slane %v9202, 1
    %v9230 = vsel %vm9223, %v9227, %v9229
    %v9231 = vrot.slane %v9203, 1
    %v9232 = vsel %vm9223, %v9229, %v9231
    %v9233 = vrot.slane %v9204, 1
    %v9234 = vsel %vm9223, %v9231, %v9233
    %v9235 = vrot.slane %v9205, 1
    %v9236 = vrot.slane %v9206, 1
    %v9237 = vsel %vm9223, %v9235, %v9236
    %v9238 = vrot.slane %v9207, 1
    %v9239 = vsel %vm9223, %v9236, %v9238
    %v9240 = vrot.slane %v9208, 1
    %v9241 = vsel %vm9223, %v9238, %v9240
    %v9242 = vrot.slane %v9209, 1
    %v9243 = vsel %vm9223, %v9240, %v9242
    %v9244 = vrot.slane %v9210, 1
    %v9245 = vsel %vm9223, %v9242, %v9244
    %s9246 = scalar_lea.vmem %s3, 32
    %v9247 = vld [vmem:[%s9246] sm:$0xf]
    %v9248 = vld [vmem:[%s9246 + $0x4] sm:$0xf]
    %v9249 = vld [vmem:[%s9246 + $0x8] sm:$0xf]
    %v9250 = vld [vmem:[%s9246 + $0xc] sm:$0xf]
    %v9255 = vunpack.c.l.b16 %v9247
    %v9256 = vunpack.c.l.b16 %v9248
    %v9257 = vunpack.c.l.b16 %v9249
    %v9258 = vunpack.c.l.b16 %v9250
    %v9259 = vpack.c.b16 %v9256, %v9255
    %v9260 = vpack.c.b16 %v9258, %v9257
    %v9264 = vsel %vm577, %v9226, 0
    %v9267 = vsel %vm577, %v9228, 0
    %v9270 = vsel %vm577, %v9230, 0
    %v9273 = vsel %vm577, %v9232, 0
    %v9276 = vsel %vm577, %v9234, 0
    %v9279 = vsel %vm577, %v9237, 0
    %v9282 = vsel %vm577, %v9239, 0
    %v9285 = vsel %vm577, %v9241, 0
    %v9288 = vsel %vm577, %v9243, 0
    %v9291 = vsel %vm577, %v9245, 0
    %9293 = vmatprep.subr.bf16.mxu0 0
    %9294 = vmatpush1.bf16.msra.mxu0 %v9259
    %9295 = vmatprep.subr.bf16.mxu0 0
    %9296 = vmatpush1.bf16.msra.mxu0 %v9260
    %9297 = vmatprep.subr.bf16.mxu0 0
    %9298 = vmatpush1.bf16.msra.mxu0 0
    %9299 = vmatprep.subr.bf16.mxu0 0
    %9300 = vmatpush1.bf16.msra.mxu0 0
    %9301 = vmatprep.subr.bf16.mxu0 0
    %9302 = vmatpush1.bf16.msra.mxu0 0
    %9303 = vmatprep.subr.bf16.mxu0 0
    %9304 = vmatpush1.bf16.msra.mxu0 0
    %9305 = vmatprep.subr.bf16.mxu0 0
    %9306 = vmatpush1.bf16.msra.mxu0 0
    %9307 = vmatprep.subr.bf16.mxu0 0
    %9308 = vmatpush1.bf16.msra.mxu0 0
    %9309 = vmatprep.subr.bf16.mxu0 0
    %9310 = vmatpush1.bf16.msra.mxu0 0
    %9311 = vmatprep.subr.bf16.mxu0 0
    %9312 = vmatpush1.bf16.msra.mxu0 0
    %9313 = vmatprep.subr.bf16.mxu0 0
    %9314 = vmatpush1.bf16.msra.mxu0 0
    %9315 = vmatprep.subr.bf16.mxu0 0
    %9316 = vmatpush1.bf16.msra.mxu0 0
    %9317 = vmatprep.subr.bf16.mxu0 0
    %9318 = vmatpush1.bf16.msra.mxu0 0
    %9319 = vmatprep.subr.bf16.mxu0 0
    %9320 = vmatpush1.bf16.msra.mxu0 0
    %9321 = vmatprep.subr.bf16.mxu0 0
    %9322 = vmatpush1.bf16.msra.mxu0 0
    %9323 = vmatprep.subr.bf16.mxu0 0
    %9324 = vmatpush1.bf16.msra.mxu0 0
    %9325 = vmatprep.mubr.bf16.mxu0 0
    %9326 = vmatmul.mubr.bf16.gmra.mrb[0].mxu0 %v9264
    %v9327 = vpop.f32.mrb[0].mxu0
    %v9328 = vadd.f32 0.0, %v9327
    %v9329 = vpop.f32.mrb[0].mxu0
    %v9330 = vpop.f32.mrb[0].mxu0
    %v9331 = vadd.f32 0.0, %v9330
    %v9332 = vpop.f32.mrb[0].mxu0
    %9333 = vmatprep.mubr.bf16.mxu0 0
    %9334 = vmatmul.mubr.bf16.gmra.mrb[0].mxu0 %v9267
    %v9335 = vpop.f32.mrb[0].mxu0
    %v9336 = vadd.f32 0.0, %v9335
    %v9337 = vpop.f32.mrb[0].mxu0
    %v9338 = vpop.f32.mrb[0].mxu0
    %v9339 = vadd.f32 0.0, %v9338
    %v9340 = vpop.f32.mrb[0].mxu0
    %9341 = vmatprep.mubr.bf16.mxu0 0
    %9342 = vmatmul.mubr.bf16.gmra.mrb[0].mxu0 %v9270
    %v9343 = vpop.f32.mrb[0].mxu0
    %v9344 = vadd.f32 0.0, %v9343
    %v9345 = vpop.f32.mrb[0].mxu0
    %v9346 = vpop.f32.mrb[0].mxu0
    %v9347 = vadd.f32 0.0, %v9346
    %v9348 = vpop.f32.mrb[0].mxu0
    %9349 = vmatprep.mubr.bf16.mxu0 0
    %9350 = vmatmul.mubr.bf16.gmra.mrb[0].mxu0 %v9273
    %v9351 = vpop.f32.mrb[0].mxu0
    %v9352 = vadd.f32 0.0, %v9351
    %v9353 = vpop.f32.mrb[0].mxu0
    %v9354 = vpop.f32.mrb[0].mxu0
    %v9355 = vadd.f32 0.0, %v9354
    %v9356 = vpop.f32.mrb[0].mxu0
    %9357 = vmatprep.mubr.bf16.mxu0 0
    %9358 = vmatmul.mubr.bf16.gmra.mrb[0].mxu0 %v9276
    %v9359 = vpop.f32.mrb[0].mxu0
    %v9360 = vadd.f32 0.0, %v9359
    %v9361 = vpop.f32.mrb[0].mxu0
    %v9362 = vpop.f32.mrb[0].mxu0
    %v9363 = vadd.f32 0.0, %v9362
    %v9364 = vpop.f32.mrb[0].mxu0
    %9365 = vmatprep.mubr.bf16.mxu0 0
    %9366 = vmatmul.mubr.bf16.gmra.mrb[0].mxu0 %v9279
    %v9367 = vpop.f32.mrb[0].mxu0
    %v9368 = vadd.f32 0.0, %v9367
    %v9369 = vpop.f32.mrb[0].mxu0
    %v9370 = vpop.f32.mrb[0].mxu0
    %v9371 = vadd.f32 0.0, %v9370
    %v9372 = vpop.f32.mrb[0].mxu0
    %9373 = vmatprep.mubr.bf16.mxu0 0
    %9374 = vmatmul.mubr.bf16.gmra.mrb[0].mxu0 %v9282
    %v9375 = vpop.f32.mrb[0].mxu0
    %v9376 = vadd.f32 0.0, %v9375
    %v9377 = vpop.f32.mrb[0].mxu0
    %v9378 = vpop.f32.mrb[0].mxu0
    %v9379 = vadd.f32 0.0, %v9378
    %v9380 = vpop.f32.mrb[0].mxu0
    %9381 = vmatprep.mubr.bf16.mxu0 0
    %9382 = vmatmul.mubr.bf16.gmra.mrb[0].mxu0 %v9285
    %v9383 = vpop.f32.mrb[0].mxu0
    %v9384 = vadd.f32 0.0, %v9383
    %v9385 = vpop.f32.mrb[0].mxu0
    %v9386 = vpop.f32.mrb[0].mxu0
    %v9387 = vadd.f32 0.0, %v9386
    %v9388 = vpop.f32.mrb[0].mxu0
    %9389 = vmatprep.mubr.bf16.mxu0 0
    %9390 = vmatmul.mubr.bf16.gmra.mrb[0].mxu0 %v9288
    %v9391 = vpop.f32.mrb[0].mxu0
    %v9392 = vadd.f32 0.0, %v9391
    %v9393 = vpop.f32.mrb[0].mxu0
    %v9394 = vpop.f32.mrb[0].mxu0
    %v9395 = vadd.f32 0.0, %v9394
    %v9396 = vpop.f32.mrb[0].mxu0
    %9397 = vmatprep.mubr.bf16.mxu0 0
    %9398 = vmatmul.mubr.bf16.gmra.mrb[0].mxu0 %v9291
    %v9399 = vpop.f32.mrb[0].mxu0
    %v9400 = vadd.f32 0.0, %v9399
    %v9401 = vpop.f32.mrb[0].mxu0
    %v9402 = vpop.f32.mrb[0].mxu0
    %v9403 = vadd.f32 0.0, %v9402
    %v9404 = vpop.f32.mrb[0].mxu0
    %9405 = vdwg.mxu0
    %v9406 = vld [vmem:[#allocation4] sm:$0xff]
    %v9407 = vld [vmem:[#allocation4 + $0x8] sm:$0xff]
    %v9408 = vld [vmem:[#allocation4 + $0x10] sm:$0xff]
    %v9409 = vld [vmem:[#allocation4 + $0x18] sm:$0xff]
    %v9410 = vld [vmem:[#allocation4 + $0x20] sm:$0xff]
    %v9411 = vld [vmem:[#allocation4 + $0x28] sm:$0xff]
    %v9412 = vld [vmem:[#allocation4 + $0x30] sm:$0xff]
    %v9413 = vld [vmem:[#allocation4 + $0x38] sm:$0xff]
    %v9414 = vld [vmem:[#allocation4 + $0x40] sm:$0xff]
    %v9415 = vld [vmem:[#allocation4 + $0x48] sm:$0xff]
    %v9416 = vld [vmem:[#allocation4 + $0x50] sm:$0xff]
    %v9417 = vld [vmem:[#allocation4 + $0x58] sm:$0xff]
    %v9418 = vld [vmem:[#allocation4 + $0x60] sm:$0xff]
    %v9419 = vld [vmem:[#allocation4 + $0x68] sm:$0xff]
    %v9420 = vld [vmem:[#allocation4 + $0x70] sm:$0xff]
    %v9421 = vld [vmem:[#allocation4 + $0x78] sm:$0xff]
    %v9422 = vld [vmem:[#allocation4 + $0x80] sm:$0xff]
    %v9423 = vld [vmem:[#allocation4 + $0x88] sm:$0xff]
    %v9424 = vld [vmem:[#allocation4 + $0x90] sm:$0xff]
    %v9425 = vld [vmem:[#allocation4 + $0x98] sm:$0xff]
    %v9426 = vadd.f32 %v9406, %v9328
    %v9427 = vadd.f32 %v9407, %v9331
    %v9428 = vadd.f32 %v9408, %v9336
    %v9429 = vadd.f32 %v9409, %v9339
    %v9430 = vadd.f32 %v9410, %v9344
    %v9431 = vadd.f32 %v9411, %v9347
    %v9432 = vadd.f32 %v9412, %v9352
    %v9433 = vadd.f32 %v9413, %v9355
    %v9434 = vadd.f32 %v9414, %v9360
    %v9435 = vadd.f32 %v9415, %v9363
    %v9436 = vadd.f32 %v9416, %v9368
    %v9437 = vadd.f32 %v9417, %v9371
    %v9438 = vadd.f32 %v9418, %v9376
    %v9439 = vadd.f32 %v9419, %v9379
    %v9440 = vadd.f32 %v9420, %v9384
    %v9441 = vadd.f32 %v9421, %v9387
    %v9442 = vadd.f32 %v9422, %v9392
    %v9443 = vadd.f32 %v9423, %v9395
    %v9444 = vadd.f32 %v9424, %v9400
    %v9445 = vadd.f32 %v9425, %v9403
    %9446 = vst.msk [vmem:[#allocation4] sm:$0xff] %vm8857, %v9426
    %9447 = vst.msk [vmem:[#allocation4 + $0x8] sm:$0xff] %vm8857, %v9427
    %9448 = vst.msk [vmem:[#allocation4 + $0x10] sm:$0xff] %vm8857, %v9428
    %9449 = vst.msk [vmem:[#allocation4 + $0x18] sm:$0xff] %vm8857, %v9429
    %9450 = vst.msk [vmem:[#allocation4 + $0x20] sm:$0xff] %vm8857, %v9430
    %9451 = vst.msk [vmem:[#allocation4 + $0x28] sm:$0xff] %vm8857, %v9431
    %9452 = vst.msk [vmem:[#allocation4 + $0x30] sm:$0xff] %vm8857, %v9432
    %9453 = vst.msk [vmem:[#allocation4 + $0x38] sm:$0xff] %vm8857, %v9433
    %9454 = vst.msk [vmem:[#allocation4 + $0x40] sm:$0xff] %vm8857, %v9434
    %9455 = vst.msk [vmem:[#allocation4 + $0x48] sm:$0xff] %vm8857, %v9435
    %9456 = vst.msk [vmem:[#allocation4 + $0x50] sm:$0xff] %vm8857, %v9436
    %9457 = vst.msk [vmem:[#allocation4 + $0x58] sm:$0xff] %vm8857, %v9437
    %9458 = vst.msk [vmem:[#allocation4 + $0x60] sm:$0xff] %vm8857, %v9438
    %9459 = vst.msk [vmem:[#allocation4 + $0x68] sm:$0xff] %vm8857, %v9439
    %9460 = vst.msk [vmem:[#allocation4 + $0x70] sm:$0xff] %vm8857, %v9440
    %9461 = vst.msk [vmem:[#allocation4 + $0x78] sm:$0xff] %vm8857, %v9441
    %9462 = vst.msk [vmem:[#allocation4 + $0x80] sm:$0xff] %vm8857, %v9442
    %9463 = vst.msk [vmem:[#allocation4 + $0x88] sm:$0xff] %vm8857, %v9443
    %9464 = vst.msk [vmem:[#allocation4 + $0x90] sm:$0xff] %vm8857, %v9444
    %9465 = vst.msk [vmem:[#allocation4 + $0x98] sm:$0xff] %vm8857, %v9445
    %v9466 = vld [vmem:[#allocation3 + $0x8] sm:$0xff]
    %v9467 = vld [vmem:[#allocation3 + $0x10] sm:$0xff]
    %v9468 = vld [vmem:[#allocation3 + $0x18] sm:$0xff]
    %v9469 = vld [vmem:[#allocation3 + $0x20] sm:$0xff]
    %v9470 = vld [vmem:[#allocation3 + $0x28] sm:$0xff]
    %v9471 = vld [vmem:[#allocation3 + $0x48] sm:$0xff]
    %v9472 = vld [vmem:[#allocation3 + $0x50] sm:$0xff]
    %v9473 = vld [vmem:[#allocation3 + $0x58] sm:$0xff]
    %v9474 = vld [vmem:[#allocation3 + $0x60] sm:$0xff]
    %v9475 = vld [vmem:[#allocation3 + $0x68] sm:$0xff]
    %s9476 = scalar_lea.vmem %s3, 48
    %v9477 = vld [vmem:[%s9476] sm:$0xf]
    %v9478 = vld [vmem:[%s9476 + $0x4] sm:$0xf]
    %v9479 = vld [vmem:[%s9476 + $0x8] sm:$0xf]
    %v9480 = vld [vmem:[%s9476 + $0xc] sm:$0xf]
    %v9485 = vunpack.c.l.b16 %v9477
    %v9486 = vunpack.c.l.b16 %v9478
    %v9487 = vunpack.c.l.b16 %v9479
    %v9488 = vunpack.c.l.b16 %v9480
    %v9489 = vpack.c.b16 %v9486, %v9485
    %v9490 = vpack.c.b16 %v9488, %v9487
    %v9494 = vsel %vm577, %v9466, 0
    %v9497 = vsel %vm577, %v9467, 0
    %v9500 = vsel %vm577, %v9468, 0
    %v9503 = vsel %vm577, %v9469, 0
    %v9506 = vsel %vm577, %v9470, 0
    %v9509 = vsel %vm577, %v9471, 0
    %v9512 = vsel %vm577, %v9472, 0
    %v9515 = vsel %vm577, %v9473, 0
    %v9518 = vsel %vm577, %v9474, 0
    %v9521 = vsel %vm577, %v9475, 0
    %9523 = vmatprep.subr.bf16.mxu0 0
    %9524 = vmatpush1.bf16.msra.mxu0 %v9489
    %9525 = vmatprep.subr.bf16.mxu0 0
    %9526 = vmatpush1.bf16.msra.mxu0 %v9490
    %9527 = vmatprep.subr.bf16.mxu0 0
    %9528 = vmatpush1.bf16.msra.mxu0 0
    %9529 = vmatprep.subr.bf16.mxu0 0
    %9530 = vmatpush1.bf16.msra.mxu0 0
    %9531 = vmatprep.subr.bf16.mxu0 0
    %9532 = vmatpush1.bf16.msra.mxu0 0
    %9533 = vmatprep.subr.bf16.mxu0 0
    %9534 = vmatpush1.bf16.msra.mxu0 0
    %9535 = vmatprep.subr.bf16.mxu0 0
    %9536 = vmatpush1.bf16.msra.mxu0 0
    %9537 = vmatprep.subr.bf16.mxu0 0
    %9538 = vmatpush1.bf16.msra.mxu0 0
    %9539 = vmatprep.subr.bf16.mxu0 0
    %9540 = vmatpush1.bf16.msra.mxu0 0
    %9541 = vmatprep.subr.bf16.mxu0 0
    %9542 = vmatpush1.bf16.msra.mxu0 0
    %9543 = vmatprep.subr.bf16.mxu0 0
    %9544 = vmatpush1.bf16.msra.mxu0 0
    %9545 = vmatprep.subr.bf16.mxu0 0
    %9546 = vmatpush1.bf16.msra.mxu0 0
    %9547 = vmatprep.subr.bf16.mxu0 0
    %9548 = vmatpush1.bf16.msra.mxu0 0
    %9549 = vmatprep.subr.bf16.mxu0 0
    %9550 = vmatpush1.bf16.msra.mxu0 0
    %9551 = vmatprep.subr.bf16.mxu0 0
    %9552 = vmatpush1.bf16.msra.mxu0 0
    %9553 = vmatprep.subr.bf16.mxu0 0
    %9554 = vmatpush1.bf16.msra.mxu0 0
    %9555 = vmatprep.mubr.bf16.mxu0 0
    %9556 = vmatmul.mubr.bf16.gmra.mrb[0].mxu0 %v9494
    %v9557 = vpop.f32.mrb[0].mxu0
    %v9558 = vadd.f32 0.0, %v9557
    %v9559 = vpop.f32.mrb[0].mxu0
    %v9560 = vpop.f32.mrb[0].mxu0
    %v9561 = vadd.f32 0.0, %v9560
    %v9562 = vpop.f32.mrb[0].mxu0
    %9563 = vmatprep.mubr.bf16.mxu0 0
    %9564 = vmatmul.mubr.bf16.gmra.mrb[0].mxu0 %v9497
    %v9565 = vpop.f32.mrb[0].mxu0
    %v9566 = vadd.f32 0.0, %v9565
    %v9567 = vpop.f32.mrb[0].mxu0
    %v9568 = vpop.f32.mrb[0].mxu0
    %v9569 = vadd.f32 0.0, %v9568
    %v9570 = vpop.f32.mrb[0].mxu0
    %9571 = vmatprep.mubr.bf16.mxu0 0
    %9572 = vmatmul.mubr.bf16.gmra.mrb[0].mxu0 %v9500
    %v9573 = vpop.f32.mrb[0].mxu0
    %v9574 = vadd.f32 0.0, %v9573
    %v9575 = vpop.f32.mrb[0].mxu0
    %v9576 = vpop.f32.mrb[0].mxu0
    %v9577 = vadd.f32 0.0, %v9576
    %v9578 = vpop.f32.mrb[0].mxu0
    %9579 = vmatprep.mubr.bf16.mxu0 0
    %9580 = vmatmul.mubr.bf16.gmra.mrb[0].mxu0 %v9503
    %v9581 = vpop.f32.mrb[0].mxu0
    %v9582 = vadd.f32 0.0, %v9581
    %v9583 = vpop.f32.mrb[0].mxu0
    %v9584 = vpop.f32.mrb[0].mxu0
    %v9585 = vadd.f32 0.0, %v9584
    %v9586 = vpop.f32.mrb[0].mxu0
    %9587 = vmatprep.mubr.bf16.mxu0 0
    %9588 = vmatmul.mubr.bf16.gmra.mrb[0].mxu0 %v9506
    %v9589 = vpop.f32.mrb[0].mxu0
    %v9590 = vadd.f32 0.0, %v9589
    %v9591 = vpop.f32.mrb[0].mxu0
    %v9592 = vpop.f32.mrb[0].mxu0
    %v9593 = vadd.f32 0.0, %v9592
    %v9594 = vpop.f32.mrb[0].mxu0
    %9595 = vmatprep.mubr.bf16.mxu0 0
    %9596 = vmatmul.mubr.bf16.gmra.mrb[0].mxu0 %v9509
    %v9597 = vpop.f32.mrb[0].mxu0
    %v9598 = vadd.f32 0.0, %v9597
    %v9599 = vpop.f32.mrb[0].mxu0
    %v9600 = vpop.f32.mrb[0].mxu0
    %v9601 = vadd.f32 0.0, %v9600
    %v9602 = vpop.f32.mrb[0].mxu0
    %9603 = vmatprep.mubr.bf16.mxu0 0
    %9604 = vmatmul.mubr.bf16.gmra.mrb[0].mxu0 %v9512
    %v9605 = vpop.f32.mrb[0].mxu0
    %v9606 = vadd.f32 0.0, %v9605
    %v9607 = vpop.f32.mrb[0].mxu0
    %v9608 = vpop.f32.mrb[0].mxu0
    %v9609 = vadd.f32 0.0, %v9608
    %v9610 = vpop.f32.mrb[0].mxu0
    %9611 = vmatprep.mubr.bf16.mxu0 0
    %9612 = vmatmul.mubr.bf16.gmra.mrb[0].mxu0 %v9515
    %v9613 = vpop.f32.mrb[0].mxu0
    %v9614 = vadd.f32 0.0, %v9613
    %v9615 = vpop.f32.mrb[0].mxu0
    %v9616 = vpop.f32.mrb[0].mxu0
    %v9617 = vadd.f32 0.0, %v9616
    %v9618 = vpop.f32.mrb[0].mxu0
    %9619 = vmatprep.mubr.bf16.mxu0 0
    %9620 = vmatmul.mubr.bf16.gmra.mrb[0].mxu0 %v9518
    %v9621 = vpop.f32.mrb[0].mxu0
    %v9622 = vadd.f32 0.0, %v9621
    %v9623 = vpop.f32.mrb[0].mxu0
    %v9624 = vpop.f32.mrb[0].mxu0
    %v9625 = vadd.f32 0.0, %v9624
    %v9626 = vpop.f32.mrb[0].mxu0
    %9627 = vmatprep.mubr.bf16.mxu0 0
    %9628 = vmatmul.mubr.bf16.gmra.mrb[0].mxu0 %v9521
    %v9629 = vpop.f32.mrb[0].mxu0
    %v9630 = vadd.f32 0.0, %v9629
    %v9631 = vpop.f32.mrb[0].mxu0
    %v9632 = vpop.f32.mrb[0].mxu0
    %v9633 = vadd.f32 0.0, %v9632
    %v9634 = vpop.f32.mrb[0].mxu0
    %9635 = vdwg.mxu0
    %v9636 = vld [vmem:[#allocation4] sm:$0xff]
    %v9637 = vld [vmem:[#allocation4 + $0x8] sm:$0xff]
    %v9638 = vld [vmem:[#allocation4 + $0x10] sm:$0xff]
    %v9639 = vld [vmem:[#allocation4 + $0x18] sm:$0xff]
    %v9640 = vld [vmem:[#allocation4 + $0x20] sm:$0xff]
    %v9641 = vld [vmem:[#allocation4 + $0x28] sm:$0xff]
    %v9642 = vld [vmem:[#allocation4 + $0x30] sm:$0xff]
    %v9643 = vld [vmem:[#allocation4 + $0x38] sm:$0xff]
    %v9644 = vld [vmem:[#allocation4 + $0x40] sm:$0xff]
    %v9645 = vld [vmem:[#allocation4 + $0x48] sm:$0xff]
    %v9646 = vld [vmem:[#allocation4 + $0x50] sm:$0xff]
    %v9647 = vld [vmem:[#allocation4 + $0x58] sm:$0xff]
    %v9648 = vld [vmem:[#allocation4 + $0x60] sm:$0xff]
    %v9649 = vld [vmem:[#allocation4 + $0x68] sm:$0xff]
    %v9650 = vld [vmem:[#allocation4 + $0x70] sm:$0xff]
    %v9651 = vld [vmem:[#allocation4 + $0x78] sm:$0xff]
    %v9652 = vld [vmem:[#allocation4 + $0x80] sm:$0xff]
    %v9653 = vld [vmem:[#allocation4 + $0x88] sm:$0xff]
    %v9654 = vld [vmem:[#allocation4 + $0x90] sm:$0xff]
    %v9655 = vld [vmem:[#allocation4 + $0x98] sm:$0xff]
    %v9656 = vadd.f32 %v9636, %v9558
    %v9657 = vadd.f32 %v9637, %v9561
    %v9658 = vadd.f32 %v9638, %v9566
    %v9659 = vadd.f32 %v9639, %v9569
    %v9660 = vadd.f32 %v9640, %v9574
    %v9661 = vadd.f32 %v9641, %v9577
    %v9662 = vadd.f32 %v9642, %v9582
    %v9663 = vadd.f32 %v9643, %v9585
    %v9664 = vadd.f32 %v9644, %v9590
    %v9665 = vadd.f32 %v9645, %v9593
    %v9666 = vadd.f32 %v9646, %v9598
    %v9667 = vadd.f32 %v9647, %v9601
    %v9668 = vadd.f32 %v9648, %v9606
    %v9669 = vadd.f32 %v9649, %v9609
    %v9670 = vadd.f32 %v9650, %v9614
    %v9671 = vadd.f32 %v9651, %v9617
    %v9672 = vadd.f32 %v9652, %v9622
    %v9673 = vadd.f32 %v9653, %v9625
    %v9674 = vadd.f32 %v9654, %v9630
    %v9675 = vadd.f32 %v9655, %v9633
    %9676 = vst.msk [vmem:[#allocation4] sm:$0xff] %vm8857, %v9656
    %9677 = vst.msk [vmem:[#allocation4 + $0x8] sm:$0xff] %vm8857, %v9657
    %9678 = vst.msk [vmem:[#allocation4 + $0x10] sm:$0xff] %vm8857, %v9658
    %9679 = vst.msk [vmem:[#allocation4 + $0x18] sm:$0xff] %vm8857, %v9659
    %9680 = vst.msk [vmem:[#allocation4 + $0x20] sm:$0xff] %vm8857, %v9660
    %9681 = vst.msk [vmem:[#allocation4 + $0x28] sm:$0xff] %vm8857, %v9661
    %9682 = vst.msk [vmem:[#allocation4 + $0x30] sm:$0xff] %vm8857, %v9662
    %9683 = vst.msk [vmem:[#allocation4 + $0x38] sm:$0xff] %vm8857, %v9663
    %9684 = vst.msk [vmem:[#allocation4 + $0x40] sm:$0xff] %vm8857, %v9664
    %9685 = vst.msk [vmem:[#allocation4 + $0x48] sm:$0xff] %vm8857, %v9665
    %9686 = vst.msk [vmem:[#allocation4 + $0x50] sm:$0xff] %vm8857, %v9666
    %9687 = vst.msk [vmem:[#allocation4 + $0x58] sm:$0xff] %vm8857, %v9667
    %9688 = vst.msk [vmem:[#allocation4 + $0x60] sm:$0xff] %vm8857, %v9668
    %9689 = vst.msk [vmem:[#allocation4 + $0x68] sm:$0xff] %vm8857, %v9669
    %9690 = vst.msk [vmem:[#allocation4 + $0x70] sm:$0xff] %vm8857, %v9670
    %9691 = vst.msk [vmem:[#allocation4 + $0x78] sm:$0xff] %vm8857, %v9671
    %9692 = vst.msk [vmem:[#allocation4 + $0x80] sm:$0xff] %vm8857, %v9672
    %9693 = vst.msk [vmem:[#allocation4 + $0x88] sm:$0xff] %vm8857, %v9673
    %9694 = vst.msk [vmem:[#allocation4 + $0x90] sm:$0xff] %vm8857, %v9674
    %9695 = vst.msk [vmem:[#allocation4 + $0x98] sm:$0xff] %vm8857, %v9675
    %v9696 = vld [vmem:[#allocation3 + $0x8] sm:$0xff]
    %v9697 = vld [vmem:[#allocation3 + $0x10] sm:$0xff]
    %v9698 = vld [vmem:[#allocation3 + $0x18] sm:$0xff]
    %v9699 = vld [vmem:[#allocation3 + $0x20] sm:$0xff]
    %v9700 = vld [vmem:[#allocation3 + $0x28] sm:$0xff]
    %v9701 = vld [vmem:[#allocation3 + $0x30] sm:$0x1]
    %v9702 = vld [vmem:[#allocation3 + $0x48] sm:$0xff]
    %v9703 = vld [vmem:[#allocation3 + $0x50] sm:$0xff]
    %v9704 = vld [vmem:[#allocation3 + $0x58] sm:$0xff]
    %v9705 = vld [vmem:[#allocation3 + $0x60] sm:$0xff]
    %v9706 = vld [vmem:[#allocation3 + $0x68] sm:$0xff]
    %v9707 = vld [vmem:[#allocation3 + $0x70] sm:$0x1]
    %v9709 = vshrl.u32 %v9696, 16
    %v9711 = vshll.u32 %v9696, 16
    %v9713 = vrot.slane %v9711, 1
    %v9714 = vor.u32 %v9709, %v9713
    %v9716 = vshll.u32 %v9697, 16
    %v9718 = vrot.slane %v9716, 1
    %v9719 = vsel %vm8890, %v9714, %v9718
    %v9720 = vshrl.u32 %v9697, 16
    %v9722 = vor.u32 %v9720, %v9718
    %v9724 = vshll.u32 %v9698, 16
    %v9726 = vrot.slane %v9724, 1
    %v9727 = vsel %vm8890, %v9722, %v9726
    %v9728 = vshrl.u32 %v9698, 16
    %v9730 = vor.u32 %v9728, %v9726
    %v9732 = vshll.u32 %v9699, 16
    %v9734 = vrot.slane %v9732, 1
    %v9735 = vsel %vm8890, %v9730, %v9734
    %v9736 = vshrl.u32 %v9699, 16
    %v9738 = vor.u32 %v9736, %v9734
    %v9740 = vshll.u32 %v9700, 16
    %v9742 = vrot.slane %v9740, 1
    %v9743 = vsel %vm8890, %v9738, %v9742
    %v9744 = vshrl.u32 %v9700, 16
    %v9746 = vor.u32 %v9744, %v9742
    %v9748 = vshll.u32 %v9701, 16
    %v9750 = vrot.slane %v9748, 1
    %v9751 = vsel %vm8890, %v9746, %v9750
    %v9753 = vshrl.u32 %v9702, 16
    %v9755 = vshll.u32 %v9702, 16
    %v9757 = vrot.slane %v9755, 1
    %v9758 = vor.u32 %v9753, %v9757
    %v9760 = vshll.u32 %v9703, 16
    %v9762 = vrot.slane %v9760, 1
    %v9763 = vsel %vm8890, %v9758, %v9762
    %v9764 = vshrl.u32 %v9703, 16
    %v9766 = vor.u32 %v9764, %v9762
    %v9768 = vshll.u32 %v9704, 16
    %v9770 = vrot.slane %v9768, 1
    %v9771 = vsel %vm8890, %v9766, %v9770
    %v9772 = vshrl.u32 %v9704, 16
    %v9774 = vor.u32 %v9772, %v9770
    %v9776 = vshll.u32 %v9705, 16
    %v9778 = vrot.slane %v9776, 1
    %v9779 = vsel %vm8890, %v9774, %v9778
    %v9780 = vshrl.u32 %v9705, 16
    %v9782 = vor.u32 %v9780, %v9778
    %v9784 = vshll.u32 %v9706, 16
    %v9786 = vrot.slane %v9784, 1
    %v9787 = vsel %vm8890, %v9782, %v9786
    %v9788 = vshrl.u32 %v9706, 16
    %v9790 = vor.u32 %v9788, %v9786
    %v9792 = vshll.u32 %v9707, 16
    %v9794 = vrot.slane %v9792, 1
    %v9795 = vsel %vm8890, %v9790, %v9794
    %s9796 = scalar_lea.vmem %s3, 64
    %v9797 = vld [vmem:[%s9796] sm:$0xf]
    %v9798 = vld [vmem:[%s9796 + $0x4] sm:$0xf]
    %v9799 = vld [vmem:[%s9796 + $0x8] sm:$0xf]
    %v9800 = vld [vmem:[%s9796 + $0xc] sm:$0xf]
    %v9805 = vunpack.c.l.b16 %v9797
    %v9806 = vunpack.c.l.b16 %v9798
    %v9807 = vunpack.c.l.b16 %v9799
    %v9808 = vunpack.c.l.b16 %v9800
    %v9809 = vpack.c.b16 %v9806, %v9805
    %v9810 = vpack.c.b16 %v9808, %v9807
    %v9814 = vsel %vm577, %v9719, 0
    %v9817 = vsel %vm577, %v9727, 0
    %v9820 = vsel %vm577, %v9735, 0
    %v9823 = vsel %vm577, %v9743, 0
    %v9826 = vsel %vm577, %v9751, 0
    %v9829 = vsel %vm577, %v9763, 0
    %v9832 = vsel %vm577, %v9771, 0
    %v9835 = vsel %vm577, %v9779, 0
    %v9838 = vsel %vm577, %v9787, 0
    %v9841 = vsel %vm577, %v9795, 0
    %9843 = vmatprep.subr.bf16.mxu0 0
    %9844 = vmatpush1.bf16.msra.mxu0 %v9809
    %9845 = vmatprep.subr.bf16.mxu0 0
    %9846 = vmatpush1.bf16.msra.mxu0 %v9810
    %9847 = vmatprep.subr.bf16.mxu0 0
    %9848 = vmatpush1.bf16.msra.mxu0 0
    %9849 = vmatprep.subr.bf16.mxu0 0
    %9850 = vmatpush1.bf16.msra.mxu0 0
    %9851 = vmatprep.subr.bf16.mxu0 0
    %9852 = vmatpush1.bf16.msra.mxu0 0
    %9853 = vmatprep.subr.bf16.mxu0 0
    %9854 = vmatpush1.bf16.msra.mxu0 0
    %9855 = vmatprep.subr.bf16.mxu0 0
    %9856 = vmatpush1.bf16.msra.mxu0 0
    %9857 = vmatprep.subr.bf16.mxu0 0
    %9858 = vmatpush1.bf16.msra.mxu0 0
    %9859 = vmatprep.subr.bf16.mxu0 0
    %9860 = vmatpush1.bf16.msra.mxu0 0
    %9861 = vmatprep.subr.bf16.mxu0 0
    %9862 = vmatpush1.bf16.msra.mxu0 0
    %9863 = vmatprep.subr.bf16.mxu0 0
    %9864 = vmatpush1.bf16.msra.mxu0 0
    %9865 = vmatprep.subr.bf16.mxu0 0
    %9866 = vmatpush1.bf16.msra.mxu0 0
    %9867 = vmatprep.subr.bf16.mxu0 0
    %9868 = vmatpush1.bf16.msra.mxu0 0
    %9869 = vmatprep.subr.bf16.mxu0 0
    %9870 = vmatpush1.bf16.msra.mxu0 0
    %9871 = vmatprep.subr.bf16.mxu0 0
    %9872 = vmatpush1.bf16.msra.mxu0 0
    %9873 = vmatprep.subr.bf16.mxu0 0
    %9874 = vmatpush1.bf16.msra.mxu0 0
    %9875 = vmatprep.mubr.bf16.mxu0 0
    %9876 = vmatmul.mubr.bf16.gmra.mrb[0].mxu0 %v9814
    %v9877 = vpop.f32.mrb[0].mxu0
    %v9878 = vadd.f32 0.0, %v9877
    %v9879 = vpop.f32.mrb[0].mxu0
    %v9880 = vpop.f32.mrb[0].mxu0
    %v9881 = vadd.f32 0.0, %v9880
    %v9882 = vpop.f32.mrb[0].mxu0
    %9883 = vmatprep.mubr.bf16.mxu0 0
    %9884 = vmatmul.mubr.bf16.gmra.mrb[0].mxu0 %v9817
    %v9885 = vpop.f32.mrb[0].mxu0
    %v9886 = vadd.f32 0.0, %v9885
    %v9887 = vpop.f32.mrb[0].mxu0
    %v9888 = vpop.f32.mrb[0].mxu0
    %v9889 = vadd.f32 0.0, %v9888
    %v9890 = vpop.f32.mrb[0].mxu0
    %9891 = vmatprep.mubr.bf16.mxu0 0
    %9892 = vmatmul.mubr.bf16.gmra.mrb[0].mxu0 %v9820
    %v9893 = vpop.f32.mrb[0].mxu0
    %v9894 = vadd.f32 0.0, %v9893
    %v9895 = vpop.f32.mrb[0].mxu0
    %v9896 = vpop.f32.mrb[0].mxu0
    %v9897 = vadd.f32 0.0, %v9896
    %v9898 = vpop.f32.mrb[0].mxu0
    %9899 = vmatprep.mubr.bf16.mxu0 0
    %9900 = vmatmul.mubr.bf16.gmra.mrb[0].mxu0 %v9823
    %v9901 = vpop.f32.mrb[0].mxu0
    %v9902 = vadd.f32 0.0, %v9901
    %v9903 = vpop.f32.mrb[0].mxu0
    %v9904 = vpop.f32.mrb[0].mxu0
    %v9905 = vadd.f32 0.0, %v9904
    %v9906 = vpop.f32.mrb[0].mxu0
    %9907 = vmatprep.mubr.bf16.mxu0 0
    %9908 = vmatmul.mubr.bf16.gmra.mrb[0].mxu0 %v9826
    %v9909 = vpop.f32.mrb[0].mxu0
    %v9910 = vadd.f32 0.0, %v9909
    %v9911 = vpop.f32.mrb[0].mxu0
    %v9912 = vpop.f32.mrb[0].mxu0
    %v9913 = vadd.f32 0.0, %v9912
    %v9914 = vpop.f32.mrb[0].mxu0
    %9915 = vmatprep.mubr.bf16.mxu0 0
    %9916 = vmatmul.mubr.bf16.gmra.mrb[0].mxu0 %v9829
    %v9917 = vpop.f32.mrb[0].mxu0
    %v9918 = vadd.f32 0.0, %v9917
    %v9919 = vpop.f32.mrb[0].mxu0
    %v9920 = vpop.f32.mrb[0].mxu0
    %v9921 = vadd.f32 0.0, %v9920
    %v9922 = vpop.f32.mrb[0].mxu0
    %9923 = vmatprep.mubr.bf16.mxu0 0
    %9924 = vmatmul.mubr.bf16.gmra.mrb[0].mxu0 %v9832
    %v9925 = vpop.f32.mrb[0].mxu0
    %v9926 = vadd.f32 0.0, %v9925
    %v9927 = vpop.f32.mrb[0].mxu0
    %v9928 = vpop.f32.mrb[0].mxu0
    %v9929 = vadd.f32 0.0, %v9928
    %v9930 = vpop.f32.mrb[0].mxu0
    %9931 = vmatprep.mubr.bf16.mxu0 0
    %9932 = vmatmul.mubr.bf16.gmra.mrb[0].mxu0 %v9835
    %v9933 = vpop.f32.mrb[0].mxu0
    %v9934 = vadd.f32 0.0, %v9933
    %v9935 = vpop.f32.mrb[0].mxu0
    %v9936 = vpop.f32.mrb[0].mxu0
    %v9937 = vadd.f32 0.0, %v9936
    %v9938 = vpop.f32.mrb[0].mxu0
    %9939 = vmatprep.mubr.bf16.mxu0 0
    %9940 = vmatmul.mubr.bf16.gmra.mrb[0].mxu0 %v9838
    %v9941 = vpop.f32.mrb[0].mxu0
    %v9942 = vadd.f32 0.0, %v9941
    %v9943 = vpop.f32.mrb[0].mxu0
    %v9944 = vpop.f32.mrb[0].mxu0
    %v9945 = vadd.f32 0.0, %v9944
    %v9946 = vpop.f32.mrb[0].mxu0
    %9947 = vmatprep.mubr.bf16.mxu0 0
    %9948 = vmatmul.mubr.bf16.gmra.mrb[0].mxu0 %v9841
    %v9949 = vpop.f32.mrb[0].mxu0
    %v9950 = vadd.f32 0.0, %v9949
    %v9951 = vpop.f32.mrb[0].mxu0
    %v9952 = vpop.f32.mrb[0].mxu0
    %v9953 = vadd.f32 0.0, %v9952
    %v9954 = vpop.f32.mrb[0].mxu0
    %9955 = vdwg.mxu0
    %v9956 = vld [vmem:[#allocation4] sm:$0xff]
    %v9957 = vld [vmem:[#allocation4 + $0x8] sm:$0xff]
    %v9958 = vld [vmem:[#allocation4 + $0x10] sm:$0xff]
    %v9959 = vld [vmem:[#allocation4 + $0x18] sm:$0xff]
    %v9960 = vld [vmem:[#allocation4 + $0x20] sm:$0xff]
    %v9961 = vld [vmem:[#allocation4 + $0x28] sm:$0xff]
    %v9962 = vld [vmem:[#allocation4 + $0x30] sm:$0xff]
    %v9963 = vld [vmem:[#allocation4 + $0x38] sm:$0xff]
    %v9964 = vld [vmem:[#allocation4 + $0x40] sm:$0xff]
    %v9965 = vld [vmem:[#allocation4 + $0x48] sm:$0xff]
    %v9966 = vld [vmem:[#allocation4 + $0x50] sm:$0xff]
    %v9967 = vld [vmem:[#allocation4 + $0x58] sm:$0xff]
    %v9968 = vld [vmem:[#allocation4 + $0x60] sm:$0xff]
    %v9969 = vld [vmem:[#allocation4 + $0x68] sm:$0xff]
    %v9970 = vld [vmem:[#allocation4 + $0x70] sm:$0xff]
    %v9971 = vld [vmem:[#allocation4 + $0x78] sm:$0xff]
    %v9972 = vld [vmem:[#allocation4 + $0x80] sm:$0xff]
    %v9973 = vld [vmem:[#allocation4 + $0x88] sm:$0xff]
    %v9974 = vld [vmem:[#allocation4 + $0x90] sm:$0xff]
    %v9975 = vld [vmem:[#allocation4 + $0x98] sm:$0xff]
    %v9976 = vadd.f32 %v9956, %v9878
    %v9977 = vadd.f32 %v9957, %v9881
    %v9978 = vadd.f32 %v9958, %v9886
    %v9979 = vadd.f32 %v9959, %v9889
    %v9980 = vadd.f32 %v9960, %v9894
    %v9981 = vadd.f32 %v9961, %v9897
    %v9982 = vadd.f32 %v9962, %v9902
    %v9983 = vadd.f32 %v9963, %v9905
    %v9984 = vadd.f32 %v9964, %v9910
    %v9985 = vadd.f32 %v9965, %v9913
    %v9986 = vadd.f32 %v9966, %v9918
    %v9987 = vadd.f32 %v9967, %v9921
    %v9988 = vadd.f32 %v9968, %v9926
    %v9989 = vadd.f32 %v9969, %v9929
    %v9990 = vadd.f32 %v9970, %v9934
    %v9991 = vadd.f32 %v9971, %v9937
    %v9992 = vadd.f32 %v9972, %v9942
    %v9993 = vadd.f32 %v9973, %v9945
    %v9994 = vadd.f32 %v9974, %v9950
    %v9995 = vadd.f32 %v9975, %v9953
    %9996 = vst.msk [vmem:[#allocation4] sm:$0xff] %vm8857, %v9976
    %9997 = vst.msk [vmem:[#allocation4 + $0x8] sm:$0xff] %vm8857, %v9977
    %9998 = vst.msk [vmem:[#allocation4 + $0x10] sm:$0xff] %vm8857, %v9978
    %9999 = vst.msk [vmem:[#allocation4 + $0x18] sm:$0xff] %vm8857, %v9979
    %10000 = vst.msk [vmem:[#allocation4 + $0x20] sm:$0xff] %vm8857, %v9980
    %10001 = vst.msk [vmem:[#allocation4 + $0x28] sm:$0xff] %vm8857, %v9981
    %10002 = vst.msk [vmem:[#allocation4 + $0x30] sm:$0xff] %vm8857, %v9982
    %10003 = vst.msk [vmem:[#allocation4 + $0x38] sm:$0xff] %vm8857, %v9983
    %10004 = vst.msk [vmem:[#allocation4 + $0x40] sm:$0xff] %vm8857, %v9984
    %10005 = vst.msk [vmem:[#allocation4 + $0x48] sm:$0xff] %vm8857, %v9985
    %10006 = vst.msk [vmem:[#allocation4 + $0x50] sm:$0xff] %vm8857, %v9986
    %10007 = vst.msk [vmem:[#allocation4 + $0x58] sm:$0xff] %vm8857, %v9987
    %10008 = vst.msk [vmem:[#allocation4 + $0x60] sm:$0xff] %vm8857, %v9988
    %10009 = vst.msk [vmem:[#allocation4 + $0x68] sm:$0xff] %vm8857, %v9989
    %10010 = vst.msk [vmem:[#allocation4 + $0x70] sm:$0xff] %vm8857, %v9990
    %10011 = vst.msk [vmem:[#allocation4 + $0x78] sm:$0xff] %vm8857, %v9991
    %10012 = vst.msk [vmem:[#allocation4 + $0x80] sm:$0xff] %vm8857, %v9992
    %10013 = vst.msk [vmem:[#allocation4 + $0x88] sm:$0xff] %vm8857, %v9993
    %10014 = vst.msk [vmem:[#allocation4 + $0x90] sm:$0xff] %vm8857, %v9994
    %10015 = vst.msk [vmem:[#allocation4 + $0x98] sm:$0xff] %vm8857, %v9995
    %v10016 = vld [vmem:[#allocation3 + $0x8] sm:$0xfe]
    %v10017 = vld [vmem:[#allocation3 + $0x10] sm:$0xff]
    %v10018 = vld [vmem:[#allocation3 + $0x18] sm:$0xff]
    %v10019 = vld [vmem:[#allocation3 + $0x20] sm:$0xff]
    %v10020 = vld [vmem:[#allocation3 + $0x28] sm:$0xff]
    %v10021 = vld [vmem:[#allocation3 + $0x30] sm:$0x1]
    %v10022 = vld [vmem:[#allocation3 + $0x48] sm:$0xfe]
    %v10023 = vld [vmem:[#allocation3 + $0x50] sm:$0xff]
    %v10024 = vld [vmem:[#allocation3 + $0x58] sm:$0xff]
    %v10025 = vld [vmem:[#allocation3 + $0x60] sm:$0xff]
    %v10026 = vld [vmem:[#allocation3 + $0x68] sm:$0xff]
    %v10027 = vld [vmem:[#allocation3 + $0x70] sm:$0x1]
    %v10040 = vrot.slane %v10016, 1
    %v10041 = vrot.slane %v10017, 1
    %v10042 = vsel %vm9223, %v10040, %v10041
    %v10043 = vrot.slane %v10018, 1
    %v10044 = vsel %vm9223, %v10041, %v10043
    %v10045 = vrot.slane %v10019, 1
    %v10046 = vsel %vm9223, %v10043, %v10045
    %v10047 = vrot.slane %v10020, 1
    %v10048 = vsel %vm9223, %v10045, %v10047
    %v10049 = vrot.slane %v10021, 1
    %v10050 = vsel %vm9223, %v10047, %v10049
    %v10051 = vrot.slane %v10022, 1
    %v10052 = vrot.slane %v10023, 1
    %v10053 = vsel %vm9223, %v10051, %v10052
    %v10054 = vrot.slane %v10024, 1
    %v10055 = vsel %vm9223, %v10052, %v10054
    %v10056 = vrot.slane %v10025, 1
    %v10057 = vsel %vm9223, %v10054, %v10056
    %v10058 = vrot.slane %v10026, 1
    %v10059 = vsel %vm9223, %v10056, %v10058
    %v10060 = vrot.slane %v10027, 1
    %v10061 = vsel %vm9223, %v10058, %v10060
    %s10062 = scalar_lea.vmem %s3, 80
    %v10063 = vld [vmem:[%s10062] sm:$0xf]
    %v10064 = vld [vmem:[%s10062 + $0x4] sm:$0xf]
    %v10065 = vld [vmem:[%s10062 + $0x8] sm:$0xf]
    %v10066 = vld [vmem:[%s10062 + $0xc] sm:$0xf]
    %v10071 = vunpack.c.l.b16 %v10063
    %v10072 = vunpack.c.l.b16 %v10064
    %v10073 = vunpack.c.l.b16 %v10065
    %v10074 = vunpack.c.l.b16 %v10066
    %v10075 = vpack.c.b16 %v10072, %v10071
    %v10076 = vpack.c.b16 %v10074, %v10073
    %v10080 = vsel %vm577, %v10042, 0
    %v10083 = vsel %vm577, %v10044, 0
    %v10086 = vsel %vm577, %v10046, 0
    %v10089 = vsel %vm577, %v10048, 0
    %v10092 = vsel %vm577, %v10050, 0
    %v10095 = vsel %vm577, %v10053, 0
    %v10098 = vsel %vm577, %v10055, 0
    %v10101 = vsel %vm577, %v10057, 0
    %v10104 = vsel %vm577, %v10059, 0
    %v10107 = vsel %vm577, %v10061, 0
    %10109 = vmatprep.subr.bf16.mxu0 0
    %10110 = vmatpush1.bf16.msra.mxu0 %v10075
    %10111 = vmatprep.subr.bf16.mxu0 0
    %10112 = vmatpush1.bf16.msra.mxu0 %v10076
    %10113 = vmatprep.subr.bf16.mxu0 0
    %10114 = vmatpush1.bf16.msra.mxu0 0
    %10115 = vmatprep.subr.bf16.mxu0 0
    %10116 = vmatpush1.bf16.msra.mxu0 0
    %10117 = vmatprep.subr.bf16.mxu0 0
    %10118 = vmatpush1.bf16.msra.mxu0 0
    %10119 = vmatprep.subr.bf16.mxu0 0
    %10120 = vmatpush1.bf16.msra.mxu0 0
    %10121 = vmatprep.subr.bf16.mxu0 0
    %10122 = vmatpush1.bf16.msra.mxu0 0
    %10123 = vmatprep.subr.bf16.mxu0 0
    %10124 = vmatpush1.bf16.msra.mxu0 0
    %10125 = vmatprep.subr.bf16.mxu0 0
    %10126 = vmatpush1.bf16.msra.mxu0 0
    %10127 = vmatprep.subr.bf16.mxu0 0
    %10128 = vmatpush1.bf16.msra.mxu0 0
    %10129 = vmatprep.subr.bf16.mxu0 0
    %10130 = vmatpush1.bf16.msra.mxu0 0
    %10131 = vmatprep.subr.bf16.mxu0 0
    %10132 = vmatpush1.bf16.msra.mxu0 0
    %10133 = vmatprep.subr.bf16.mxu0 0
    %10134 = vmatpush1.bf16.msra.mxu0 0
    %10135 = vmatprep.subr.bf16.mxu0 0
    %10136 = vmatpush1.bf16.msra.mxu0 0
    %10137 = vmatprep.subr.bf16.mxu0 0
    %10138 = vmatpush1.bf16.msra.mxu0 0
    %10139 = vmatprep.subr.bf16.mxu0 0
    %10140 = vmatpush1.bf16.msra.mxu0 0
    %10141 = vmatprep.mubr.bf16.mxu0 0
    %10142 = vmatmul.mubr.bf16.gmra.mrb[0].mxu0 %v10080
    %v10143 = vpop.f32.mrb[0].mxu0
    %v10144 = vadd.f32 0.0, %v10143
    %v10145 = vpop.f32.mrb[0].mxu0
    %v10146 = vpop.f32.mrb[0].mxu0
    %v10147 = vadd.f32 0.0, %v10146
    %v10148 = vpop.f32.mrb[0].mxu0
    %10149 = vmatprep.mubr.bf16.mxu0 0
    %10150 = vmatmul.mubr.bf16.gmra.mrb[0].mxu0 %v10083
    %v10151 = vpop.f32.mrb[0].mxu0
    %v10152 = vadd.f32 0.0, %v10151
    %v10153 = vpop.f32.mrb[0].mxu0
    %v10154 = vpop.f32.mrb[0].mxu0
    %v10155 = vadd.f32 0.0, %v10154
    %v10156 = vpop.f32.mrb[0].mxu0
    %10157 = vmatprep.mubr.bf16.mxu0 0
    %10158 = vmatmul.mubr.bf16.gmra.mrb[0].mxu0 %v10086
    %v10159 = vpop.f32.mrb[0].mxu0
    %v10160 = vadd.f32 0.0, %v10159
    %v10161 = vpop.f32.mrb[0].mxu0
    %v10162 = vpop.f32.mrb[0].mxu0
    %v10163 = vadd.f32 0.0, %v10162
    %v10164 = vpop.f32.mrb[0].mxu0
    %10165 = vmatprep.mubr.bf16.mxu0 0
    %10166 = vmatmul.mubr.bf16.gmra.mrb[0].mxu0 %v10089
    %v10167 = vpop.f32.mrb[0].mxu0
    %v10168 = vadd.f32 0.0, %v10167
    %v10169 = vpop.f32.mrb[0].mxu0
    %v10170 = vpop.f32.mrb[0].mxu0
    %v10171 = vadd.f32 0.0, %v10170
    %v10172 = vpop.f32.mrb[0].mxu0
    %10173 = vmatprep.mubr.bf16.mxu0 0
    %10174 = vmatmul.mubr.bf16.gmra.mrb[0].mxu0 %v10092
    %v10175 = vpop.f32.mrb[0].mxu0
    %v10176 = vadd.f32 0.0, %v10175
    %v10177 = vpop.f32.mrb[0].mxu0
    %v10178 = vpop.f32.mrb[0].mxu0
    %v10179 = vadd.f32 0.0, %v10178
    %v10180 = vpop.f32.mrb[0].mxu0
    %10181 = vmatprep.mubr.bf16.mxu0 0
    %10182 = vmatmul.mubr.bf16.gmra.mrb[0].mxu0 %v10095
    %v10183 = vpop.f32.mrb[0].mxu0
    %v10184 = vadd.f32 0.0, %v10183
    %v10185 = vpop.f32.mrb[0].mxu0
    %v10186 = vpop.f32.mrb[0].mxu0
    %v10187 = vadd.f32 0.0, %v10186
    %v10188 = vpop.f32.mrb[0].mxu0
    %10189 = vmatprep.mubr.bf16.mxu0 0
    %10190 = vmatmul.mubr.bf16.gmra.mrb[0].mxu0 %v10098
    %v10191 = vpop.f32.mrb[0].mxu0
    %v10192 = vadd.f32 0.0, %v10191
    %v10193 = vpop.f32.mrb[0].mxu0
    %v10194 = vpop.f32.mrb[0].mxu0
    %v10195 = vadd.f32 0.0, %v10194
    %v10196 = vpop.f32.mrb[0].mxu0
    %10197 = vmatprep.mubr.bf16.mxu0 0
    %10198 = vmatmul.mubr.bf16.gmra.mrb[0].mxu0 %v10101
    %v10199 = vpop.f32.mrb[0].mxu0
    %v10200 = vadd.f32 0.0, %v10199
    %v10201 = vpop.f32.mrb[0].mxu0
    %v10202 = vpop.f32.mrb[0].mxu0
    %v10203 = vadd.f32 0.0, %v10202
    %v10204 = vpop.f32.mrb[0].mxu0
    %10205 = vmatprep.mubr.bf16.mxu0 0
    %10206 = vmatmul.mubr.bf16.gmra.mrb[0].mxu0 %v10104
    %v10207 = vpop.f32.mrb[0].mxu0
    %v10208 = vadd.f32 0.0, %v10207
    %v10209 = vpop.f32.mrb[0].mxu0
    %v10210 = vpop.f32.mrb[0].mxu0
    %v10211 = vadd.f32 0.0, %v10210
    %v10212 = vpop.f32.mrb[0].mxu0
    %10213 = vmatprep.mubr.bf16.mxu0 0
    %10214 = vmatmul.mubr.bf16.gmra.mrb[0].mxu0 %v10107
    %v10215 = vpop.f32.mrb[0].mxu0
    %v10216 = vadd.f32 0.0, %v10215
    %v10217 = vpop.f32.mrb[0].mxu0
    %v10218 = vpop.f32.mrb[0].mxu0
    %v10219 = vadd.f32 0.0, %v10218
    %v10220 = vpop.f32.mrb[0].mxu0
    %10221 = vdwg.mxu0
    %v10222 = vld [vmem:[#allocation4] sm:$0xff]
    %v10223 = vld [vmem:[#allocation4 + $0x8] sm:$0xff]
    %v10224 = vld [vmem:[#allocation4 + $0x10] sm:$0xff]
    %v10225 = vld [vmem:[#allocation4 + $0x18] sm:$0xff]
    %v10226 = vld [vmem:[#allocation4 + $0x20] sm:$0xff]
    %v10227 = vld [vmem:[#allocation4 + $0x28] sm:$0xff]
    %v10228 = vld [vmem:[#allocation4 + $0x30] sm:$0xff]
    %v10229 = vld [vmem:[#allocation4 + $0x38] sm:$0xff]
    %v10230 = vld [vmem:[#allocation4 + $0x40] sm:$0xff]
    %v10231 = vld [vmem:[#allocation4 + $0x48] sm:$0xff]
    %v10232 = vld [vmem:[#allocation4 + $0x50] sm:$0xff]
    %v10233 = vld [vmem:[#allocation4 + $0x58] sm:$0xff]
    %v10234 = vld [vmem:[#allocation4 + $0x60] sm:$0xff]
    %v10235 = vld [vmem:[#allocation4 + $0x68] sm:$0xff]
    %v10236 = vld [vmem:[#allocation4 + $0x70] sm:$0xff]
    %v10237 = vld [vmem:[#allocation4 + $0x78] sm:$0xff]
    %v10238 = vld [vmem:[#allocation4 + $0x80] sm:$0xff]
    %v10239 = vld [vmem:[#allocation4 + $0x88] sm:$0xff]
    %v10240 = vld [vmem:[#allocation4 + $0x90] sm:$0xff]
    %v10241 = vld [vmem:[#allocation4 + $0x98] sm:$0xff]
    %v10242 = vadd.f32 %v10222, %v10144
    %v10243 = vadd.f32 %v10223, %v10147
    %v10244 = vadd.f32 %v10224, %v10152
    %v10245 = vadd.f32 %v10225, %v10155
    %v10246 = vadd.f32 %v10226, %v10160
    %v10247 = vadd.f32 %v10227, %v10163
    %v10248 = vadd.f32 %v10228, %v10168
    %v10249 = vadd.f32 %v10229, %v10171
    %v10250 = vadd.f32 %v10230, %v10176
    %v10251 = vadd.f32 %v10231, %v10179
    %v10252 = vadd.f32 %v10232, %v10184
    %v10253 = vadd.f32 %v10233, %v10187
    %v10254 = vadd.f32 %v10234, %v10192
    %v10255 = vadd.f32 %v10235, %v10195
    %v10256 = vadd.f32 %v10236, %v10200
    %v10257 = vadd.f32 %v10237, %v10203
    %v10258 = vadd.f32 %v10238, %v10208
    %v10259 = vadd.f32 %v10239, %v10211
    %v10260 = vadd.f32 %v10240, %v10216
    %v10261 = vadd.f32 %v10241, %v10219
    %10262 = vst.msk [vmem:[#allocation4] sm:$0xff] %vm8857, %v10242
    %10263 = vst.msk [vmem:[#allocation4 + $0x8] sm:$0xff] %vm8857, %v10243
    %10264 = vst.msk [vmem:[#allocation4 + $0x10] sm:$0xff] %vm8857, %v10244
    %10265 = vst.msk [vmem:[#allocation4 + $0x18] sm:$0xff] %vm8857, %v10245
    %10266 = vst.msk [vmem:[#allocation4 + $0x20] sm:$0xff] %vm8857, %v10246
    %10267 = vst.msk [vmem:[#allocation4 + $0x28] sm:$0xff] %vm8857, %v10247
    %10268 = vst.msk [vmem:[#allocation4 + $0x30] sm:$0xff] %vm8857, %v10248
    %10269 = vst.msk [vmem:[#allocation4 + $0x38] sm:$0xff] %vm8857, %v10249
    %10270 = vst.msk [vmem:[#allocation4 + $0x40] sm:$0xff] %vm8857, %v10250
    %10271 = vst.msk [vmem:[#allocation4 + $0x48] sm:$0xff] %vm8857, %v10251
    %10272 = vst.msk [vmem:[#allocation4 + $0x50] sm:$0xff] %vm8857, %v10252
    %10273 = vst.msk [vmem:[#allocation4 + $0x58] sm:$0xff] %vm8857, %v10253
    %10274 = vst.msk [vmem:[#allocation4 + $0x60] sm:$0xff] %vm8857, %v10254
    %10275 = vst.msk [vmem:[#allocation4 + $0x68] sm:$0xff] %vm8857, %v10255
    %10276 = vst.msk [vmem:[#allocation4 + $0x70] sm:$0xff] %vm8857, %v10256
    %10277 = vst.msk [vmem:[#allocation4 + $0x78] sm:$0xff] %vm8857, %v10257
    %10278 = vst.msk [vmem:[#allocation4 + $0x80] sm:$0xff] %vm8857, %v10258
    %10279 = vst.msk [vmem:[#allocation4 + $0x88] sm:$0xff] %vm8857, %v10259
    %10280 = vst.msk [vmem:[#allocation4 + $0x90] sm:$0xff] %vm8857, %v10260
    %10281 = vst.msk [vmem:[#allocation4 + $0x98] sm:$0xff] %vm8857, %v10261
    %v10282 = vld [vmem:[#allocation3 + $0x10] sm:$0xff]
    %v10283 = vld [vmem:[#allocation3 + $0x18] sm:$0xff]
    %v10284 = vld [vmem:[#allocation3 + $0x20] sm:$0xff]
    %v10285 = vld [vmem:[#allocation3 + $0x28] sm:$0xff]
    %v10286 = vld [vmem:[#allocation3 + $0x30] sm:$0xff]
    %v10287 = vld [vmem:[#allocation3 + $0x50] sm:$0xff]
    %v10288 = vld [vmem:[#allocation3 + $0x58] sm:$0xff]
    %v10289 = vld [vmem:[#allocation3 + $0x60] sm:$0xff]
    %v10290 = vld [vmem:[#allocation3 + $0x68] sm:$0xff]
    %v10291 = vld [vmem:[#allocation3 + $0x70] sm:$0xff]
    %s10292 = scalar_lea.vmem %s3, 96
    %v10293 = vld [vmem:[%s10292] sm:$0xf]
    %v10294 = vld [vmem:[%s10292 + $0x4] sm:$0xf]
    %v10295 = vld [vmem:[%s10292 + $0x8] sm:$0xf]
    %v10296 = vld [vmem:[%s10292 + $0xc] sm:$0xf]
    %v10301 = vunpack.c.l.b16 %v10293
    %v10302 = vunpack.c.l.b16 %v10294
    %v10303 = vunpack.c.l.b16 %v10295
    %v10304 = vunpack.c.l.b16 %v10296
    %v10305 = vpack.c.b16 %v10302, %v10301
    %v10306 = vpack.c.b16 %v10304, %v10303
    %v10310 = vsel %vm577, %v10282, 0
    %v10313 = vsel %vm577, %v10283, 0
    %v10316 = vsel %vm577, %v10284, 0
    %v10319 = vsel %vm577, %v10285, 0
    %v10322 = vsel %vm577, %v10286, 0
    %v10325 = vsel %vm577, %v10287, 0
    %v10328 = vsel %vm577, %v10288, 0
    %v10331 = vsel %vm577, %v10289, 0
    %v10334 = vsel %vm577, %v10290, 0
    %v10337 = vsel %vm577, %v10291, 0
    %10339 = vmatprep.subr.bf16.mxu0 0
    %10340 = vmatpush1.bf16.msra.mxu0 %v10305
    %10341 = vmatprep.subr.bf16.mxu0 0
    %10342 = vmatpush1.bf16.msra.mxu0 %v10306
    %10343 = vmatprep.subr.bf16.mxu0 0
    %10344 = vmatpush1.bf16.msra.mxu0 0
    %10345 = vmatprep.subr.bf16.mxu0 0
    %10346 = vmatpush1.bf16.msra.mxu0 0
    %10347 = vmatprep.subr.bf16.mxu0 0
    %10348 = vmatpush1.bf16.msra.mxu0 0
    %10349 = vmatprep.subr.bf16.mxu0 0
    %10350 = vmatpush1.bf16.msra.mxu0 0
    %10351 = vmatprep.subr.bf16.mxu0 0
    %10352 = vmatpush1.bf16.msra.mxu0 0
    %10353 = vmatprep.subr.bf16.mxu0 0
    %10354 = vmatpush1.bf16.msra.mxu0 0
    %10355 = vmatprep.subr.bf16.mxu0 0
    %10356 = vmatpush1.bf16.msra.mxu0 0
    %10357 = vmatprep.subr.bf16.mxu0 0
    %10358 = vmatpush1.bf16.msra.mxu0 0
    %10359 = vmatprep.subr.bf16.mxu0 0
    %10360 = vmatpush1.bf16.msra.mxu0 0
    %10361 = vmatprep.subr.bf16.mxu0 0
    %10362 = vmatpush1.bf16.msra.mxu0 0
    %10363 = vmatprep.subr.bf16.mxu0 0
    %10364 = vmatpush1.bf16.msra.mxu0 0
    %10365 = vmatprep.subr.bf16.mxu0 0
    %10366 = vmatpush1.bf16.msra.mxu0 0
    %10367 = vmatprep.subr.bf16.mxu0 0
    %10368 = vmatpush1.bf16.msra.mxu0 0
    %10369 = vmatprep.subr.bf16.mxu0 0
    %10370 = vmatpush1.bf16.msra.mxu0 0
    %10371 = vmatprep.mubr.bf16.mxu0 0
    %10372 = vmatmul.mubr.bf16.gmra.mrb[0].mxu0 %v10310
    %v10373 = vpop.f32.mrb[0].mxu0
    %v10374 = vadd.f32 0.0, %v10373
    %v10375 = vpop.f32.mrb[0].mxu0
    %v10376 = vpop.f32.mrb[0].mxu0
    %v10377 = vadd.f32 0.0, %v10376
    %v10378 = vpop.f32.mrb[0].mxu0
    %10379 = vmatprep.mubr.bf16.mxu0 0
    %10380 = vmatmul.mubr.bf16.gmra.mrb[0].mxu0 %v10313
    %v10381 = vpop.f32.mrb[0].mxu0
    %v10382 = vadd.f32 0.0, %v10381
    %v10383 = vpop.f32.mrb[0].mxu0
    %v10384 = vpop.f32.mrb[0].mxu0
    %v10385 = vadd.f32 0.0, %v10384
    %v10386 = vpop.f32.mrb[0].mxu0
    %10387 = vmatprep.mubr.bf16.mxu0 0
    %10388 = vmatmul.mubr.bf16.gmra.mrb[0].mxu0 %v10316
    %v10389 = vpop.f32.mrb[0].mxu0
    %v10390 = vadd.f32 0.0, %v10389
    %v10391 = vpop.f32.mrb[0].mxu0
    %v10392 = vpop.f32.mrb[0].mxu0
    %v10393 = vadd.f32 0.0, %v10392
    %v10394 = vpop.f32.mrb[0].mxu0
    %10395 = vmatprep.mubr.bf16.mxu0 0
    %10396 = vmatmul.mubr.bf16.gmra.mrb[0].mxu0 %v10319
    %v10397 = vpop.f32.mrb[0].mxu0
    %v10398 = vadd.f32 0.0, %v10397
    %v10399 = vpop.f32.mrb[0].mxu0
    %v10400 = vpop.f32.mrb[0].mxu0
    %v10401 = vadd.f32 0.0, %v10400
    %v10402 = vpop.f32.mrb[0].mxu0
    %10403 = vmatprep.mubr.bf16.mxu0 0
    %10404 = vmatmul.mubr.bf16.gmra.mrb[0].mxu0 %v10322
    %v10405 = vpop.f32.mrb[0].mxu0
    %v10406 = vadd.f32 0.0, %v10405
    %v10407 = vpop.f32.mrb[0].mxu0
    %v10408 = vpop.f32.mrb[0].mxu0
    %v10409 = vadd.f32 0.0, %v10408
    %v10410 = vpop.f32.mrb[0].mxu0
    %10411 = vmatprep.mubr.bf16.mxu0 0
    %10412 = vmatmul.mubr.bf16.gmra.mrb[0].mxu0 %v10325
    %v10413 = vpop.f32.mrb[0].mxu0
    %v10414 = vadd.f32 0.0, %v10413
    %v10415 = vpop.f32.mrb[0].mxu0
    %v10416 = vpop.f32.mrb[0].mxu0
    %v10417 = vadd.f32 0.0, %v10416
    %v10418 = vpop.f32.mrb[0].mxu0
    %10419 = vmatprep.mubr.bf16.mxu0 0
    %10420 = vmatmul.mubr.bf16.gmra.mrb[0].mxu0 %v10328
    %v10421 = vpop.f32.mrb[0].mxu0
    %v10422 = vadd.f32 0.0, %v10421
    %v10423 = vpop.f32.mrb[0].mxu0
    %v10424 = vpop.f32.mrb[0].mxu0
    %v10425 = vadd.f32 0.0, %v10424
    %v10426 = vpop.f32.mrb[0].mxu0
    %10427 = vmatprep.mubr.bf16.mxu0 0
    %10428 = vmatmul.mubr.bf16.gmra.mrb[0].mxu0 %v10331
    %v10429 = vpop.f32.mrb[0].mxu0
    %v10430 = vadd.f32 0.0, %v10429
    %v10431 = vpop.f32.mrb[0].mxu0
    %v10432 = vpop.f32.mrb[0].mxu0
    %v10433 = vadd.f32 0.0, %v10432
    %v10434 = vpop.f32.mrb[0].mxu0
    %10435 = vmatprep.mubr.bf16.mxu0 0
    %10436 = vmatmul.mubr.bf16.gmra.mrb[0].mxu0 %v10334
    %v10437 = vpop.f32.mrb[0].mxu0
    %v10438 = vadd.f32 0.0, %v10437
    %v10439 = vpop.f32.mrb[0].mxu0
    %v10440 = vpop.f32.mrb[0].mxu0
    %v10441 = vadd.f32 0.0, %v10440
    %v10442 = vpop.f32.mrb[0].mxu0
    %10443 = vmatprep.mubr.bf16.mxu0 0
    %10444 = vmatmul.mubr.bf16.gmra.mrb[0].mxu0 %v10337
    %v10445 = vpop.f32.mrb[0].mxu0
    %v10446 = vadd.f32 0.0, %v10445
    %v10447 = vpop.f32.mrb[0].mxu0
    %v10448 = vpop.f32.mrb[0].mxu0
    %v10449 = vadd.f32 0.0, %v10448
    %v10450 = vpop.f32.mrb[0].mxu0
    %10451 = vdwg.mxu0
    %v10452 = vld [vmem:[#allocation4] sm:$0xff]
    %v10453 = vld [vmem:[#allocation4 + $0x8] sm:$0xff]
    %v10454 = vld [vmem:[#allocation4 + $0x10] sm:$0xff]
    %v10455 = vld [vmem:[#allocation4 + $0x18] sm:$0xff]
    %v10456 = vld [vmem:[#allocation4 + $0x20] sm:$0xff]
    %v10457 = vld [vmem:[#allocation4 + $0x28] sm:$0xff]
    %v10458 = vld [vmem:[#allocation4 + $0x30] sm:$0xff]
    %v10459 = vld [vmem:[#allocation4 + $0x38] sm:$0xff]
    %v10460 = vld [vmem:[#allocation4 + $0x40] sm:$0xff]
    %v10461 = vld [vmem:[#allocation4 + $0x48] sm:$0xff]
    %v10462 = vld [vmem:[#allocation4 + $0x50] sm:$0xff]
    %v10463 = vld [vmem:[#allocation4 + $0x58] sm:$0xff]
    %v10464 = vld [vmem:[#allocation4 + $0x60] sm:$0xff]
    %v10465 = vld [vmem:[#allocation4 + $0x68] sm:$0xff]
    %v10466 = vld [vmem:[#allocation4 + $0x70] sm:$0xff]
    %v10467 = vld [vmem:[#allocation4 + $0x78] sm:$0xff]
    %v10468 = vld [vmem:[#allocation4 + $0x80] sm:$0xff]
    %v10469 = vld [vmem:[#allocation4 + $0x88] sm:$0xff]
    %v10470 = vld [vmem:[#allocation4 + $0x90] sm:$0xff]
    %v10471 = vld [vmem:[#allocation4 + $0x98] sm:$0xff]
    %v10472 = vadd.f32 %v10452, %v10374
    %v10473 = vadd.f32 %v10453, %v10377
    %v10474 = vadd.f32 %v10454, %v10382
    %v10475 = vadd.f32 %v10455, %v10385
    %v10476 = vadd.f32 %v10456, %v10390
    %v10477 = vadd.f32 %v10457, %v10393
    %v10478 = vadd.f32 %v10458, %v10398
    %v10479 = vadd.f32 %v10459, %v10401
    %v10480 = vadd.f32 %v10460, %v10406
    %v10481 = vadd.f32 %v10461, %v10409
    %v10482 = vadd.f32 %v10462, %v10414
    %v10483 = vadd.f32 %v10463, %v10417
    %v10484 = vadd.f32 %v10464, %v10422
    %v10485 = vadd.f32 %v10465, %v10425
    %v10486 = vadd.f32 %v10466, %v10430
    %v10487 = vadd.f32 %v10467, %v10433
    %v10488 = vadd.f32 %v10468, %v10438
    %v10489 = vadd.f32 %v10469, %v10441
    %v10490 = vadd.f32 %v10470, %v10446
    %v10491 = vadd.f32 %v10471, %v10449
    %10492 = vst.msk [vmem:[#allocation4] sm:$0xff] %vm8857, %v10472
    %10493 = vst.msk [vmem:[#allocation4 + $0x8] sm:$0xff] %vm8857, %v10473
    %10494 = vst.msk [vmem:[#allocation4 + $0x10] sm:$0xff] %vm8857, %v10474
    %10495 = vst.msk [vmem:[#allocation4 + $0x18] sm:$0xff] %vm8857, %v10475
    %10496 = vst.msk [vmem:[#allocation4 + $0x20] sm:$0xff] %vm8857, %v10476
    %10497 = vst.msk [vmem:[#allocation4 + $0x28] sm:$0xff] %vm8857, %v10477
    %10498 = vst.msk [vmem:[#allocation4 + $0x30] sm:$0xff] %vm8857, %v10478
    %10499 = vst.msk [vmem:[#allocation4 + $0x38] sm:$0xff] %vm8857, %v10479
    %10500 = vst.msk [vmem:[#allocation4 + $0x40] sm:$0xff] %vm8857, %v10480
    %10501 = vst.msk [vmem:[#allocation4 + $0x48] sm:$0xff] %vm8857, %v10481
    %10502 = vst.msk [vmem:[#allocation4 + $0x50] sm:$0xff] %vm8857, %v10482
    %10503 = vst.msk [vmem:[#allocation4 + $0x58] sm:$0xff] %vm8857, %v10483
    %10504 = vst.msk [vmem:[#allocation4 + $0x60] sm:$0xff] %vm8857, %v10484
    %10505 = vst.msk [vmem:[#allocation4 + $0x68] sm:$0xff] %vm8857, %v10485
    %10506 = vst.msk [vmem:[#allocation4 + $0x70] sm:$0xff] %vm8857, %v10486
    %10507 = vst.msk [vmem:[#allocation4 + $0x78] sm:$0xff] %vm8857, %v10487
    %10508 = vst.msk [vmem:[#allocation4 + $0x80] sm:$0xff] %vm8857, %v10488
    %10509 = vst.msk [vmem:[#allocation4 + $0x88] sm:$0xff] %vm8857, %v10489
    %10510 = vst.msk [vmem:[#allocation4 + $0x90] sm:$0xff] %vm8857, %v10490
    %10511 = vst.msk [vmem:[#allocation4 + $0x98] sm:$0xff] %vm8857, %v10491
    %v10512 = vld [vmem:[#allocation3 + $0x10] sm:$0xff]
    %v10513 = vld [vmem:[#allocation3 + $0x18] sm:$0xff]
    %v10514 = vld [vmem:[#allocation3 + $0x20] sm:$0xff]
    %v10515 = vld [vmem:[#allocation3 + $0x28] sm:$0xff]
    %v10516 = vld [vmem:[#allocation3 + $0x30] sm:$0xff]
    %v10517 = vld [vmem:[#allocation3 + $0x38] sm:$0x1]
    %v10518 = vld [vmem:[#allocation3 + $0x50] sm:$0xff]
    %v10519 = vld [vmem:[#allocation3 + $0x58] sm:$0xff]
    %v10520 = vld [vmem:[#allocation3 + $0x60] sm:$0xff]
    %v10521 = vld [vmem:[#allocation3 + $0x68] sm:$0xff]
    %v10522 = vld [vmem:[#allocation3 + $0x70] sm:$0xff]
    %v10523 = vld [vmem:[#allocation3 + $0x78] sm:$0x1]
    %v10525 = vshrl.u32 %v10512, 16
    %v10527 = vshll.u32 %v10512, 16
    %v10529 = vrot.slane %v10527, 1
    %v10530 = vor.u32 %v10525, %v10529
    %v10532 = vshll.u32 %v10513, 16
    %v10534 = vrot.slane %v10532, 1
    %v10535 = vsel %vm8890, %v10530, %v10534
    %v10536 = vshrl.u32 %v10513, 16
    %v10538 = vor.u32 %v10536, %v10534
    %v10540 = vshll.u32 %v10514, 16
    %v10542 = vrot.slane %v10540, 1
    %v10543 = vsel %vm8890, %v10538, %v10542
    %v10544 = vshrl.u32 %v10514, 16
    %v10546 = vor.u32 %v10544, %v10542
    %v10548 = vshll.u32 %v10515, 16
    %v10550 = vrot.slane %v10548, 1
    %v10551 = vsel %vm8890, %v10546, %v10550
    %v10552 = vshrl.u32 %v10515, 16
    %v10554 = vor.u32 %v10552, %v10550
    %v10556 = vshll.u32 %v10516, 16
    %v10558 = vrot.slane %v10556, 1
    %v10559 = vsel %vm8890, %v10554, %v10558
    %v10560 = vshrl.u32 %v10516, 16
    %v10562 = vor.u32 %v10560, %v10558
    %v10564 = vshll.u32 %v10517, 16
    %v10566 = vrot.slane %v10564, 1
    %v10567 = vsel %vm8890, %v10562, %v10566
    %v10569 = vshrl.u32 %v10518, 16
    %v10571 = vshll.u32 %v10518, 16
    %v10573 = vrot.slane %v10571, 1
    %v10574 = vor.u32 %v10569, %v10573
    %v10576 = vshll.u32 %v10519, 16
    %v10578 = vrot.slane %v10576, 1
    %v10579 = vsel %vm8890, %v10574, %v10578
    %v10580 = vshrl.u32 %v10519, 16
    %v10582 = vor.u32 %v10580, %v10578
    %v10584 = vshll.u32 %v10520, 16
    %v10586 = vrot.slane %v10584, 1
    %v10587 = vsel %vm8890, %v10582, %v10586
    %v10588 = vshrl.u32 %v10520, 16
    %v10590 = vor.u32 %v10588, %v10586
    %v10592 = vshll.u32 %v10521, 16
    %v10594 = vrot.slane %v10592, 1
    %v10595 = vsel %vm8890, %v10590, %v10594
    %v10596 = vshrl.u32 %v10521, 16
    %v10598 = vor.u32 %v10596, %v10594
    %v10600 = vshll.u32 %v10522, 16
    %v10602 = vrot.slane %v10600, 1
    %v10603 = vsel %vm8890, %v10598, %v10602
    %v10604 = vshrl.u32 %v10522, 16
    %v10606 = vor.u32 %v10604, %v10602
    %v10608 = vshll.u32 %v10523, 16
    %v10610 = vrot.slane %v10608, 1
    %v10611 = vsel %vm8890, %v10606, %v10610
    %s10612 = scalar_lea.vmem %s3, 112
    %v10613 = vld [vmem:[%s10612] sm:$0xf]
    %v10614 = vld [vmem:[%s10612 + $0x4] sm:$0xf]
    %v10615 = vld [vmem:[%s10612 + $0x8] sm:$0xf]
    %v10616 = vld [vmem:[%s10612 + $0xc] sm:$0xf]
    %v10621 = vunpack.c.l.b16 %v10613
    %v10622 = vunpack.c.l.b16 %v10614
    %v10623 = vunpack.c.l.b16 %v10615
    %v10624 = vunpack.c.l.b16 %v10616
    %v10625 = vpack.c.b16 %v10622, %v10621
    %v10626 = vpack.c.b16 %v10624, %v10623
    %v10630 = vsel %vm577, %v10535, 0
    %v10633 = vsel %vm577, %v10543, 0
    %v10636 = vsel %vm577, %v10551, 0
    %v10639 = vsel %vm577, %v10559, 0
    %v10642 = vsel %vm577, %v10567, 0
    %v10645 = vsel %vm577, %v10579, 0
    %v10648 = vsel %vm577, %v10587, 0
    %v10651 = vsel %vm577, %v10595, 0
    %v10654 = vsel %vm577, %v10603, 0
    %v10657 = vsel %vm577, %v10611, 0
    %10659 = vmatprep.subr.bf16.mxu0 0
    %10660 = vmatpush1.bf16.msra.mxu0 %v10625
    %10661 = vmatprep.subr.bf16.mxu0 0
    %10662 = vmatpush1.bf16.msra.mxu0 %v10626
    %10663 = vmatprep.subr.bf16.mxu0 0
    %10664 = vmatpush1.bf16.msra.mxu0 0
    %10665 = vmatprep.subr.bf16.mxu0 0
    %10666 = vmatpush1.bf16.msra.mxu0 0
    %10667 = vmatprep.subr.bf16.mxu0 0
    %10668 = vmatpush1.bf16.msra.mxu0 0
    %10669 = vmatprep.subr.bf16.mxu0 0
    %10670 = vmatpush1.bf16.msra.mxu0 0
    %10671 = vmatprep.subr.bf16.mxu0 0
    %10672 = vmatpush1.bf16.msra.mxu0 0
    %10673 = vmatprep.subr.bf16.mxu0 0
    %10674 = vmatpush1.bf16.msra.mxu0 0
    %10675 = vmatprep.subr.bf16.mxu0 0
    %10676 = vmatpush1.bf16.msra.mxu0 0
    %10677 = vmatprep.subr.bf16.mxu0 0
    %10678 = vmatpush1.bf16.msra.mxu0 0
    %10679 = vmatprep.subr.bf16.mxu0 0
    %10680 = vmatpush1.bf16.msra.mxu0 0
    %10681 = vmatprep.subr.bf16.mxu0 0
    %10682 = vmatpush1.bf16.msra.mxu0 0
    %10683 = vmatprep.subr.bf16.mxu0 0
    %10684 = vmatpush1.bf16.msra.mxu0 0
    %10685 = vmatprep.subr.bf16.mxu0 0
    %10686 = vmatpush1.bf16.msra.mxu0 0
    %10687 = vmatprep.subr.bf16.mxu0 0
    %10688 = vmatpush1.bf16.msra.mxu0 0
    %10689 = vmatprep.subr.bf16.mxu0 0
    %10690 = vmatpush1.bf16.msra.mxu0 0
    %10691 = vmatprep.mubr.bf16.mxu0 0
    %10692 = vmatmul.mubr.bf16.gmra.mrb[0].mxu0 %v10630
    %v10693 = vpop.f32.mrb[0].mxu0
    %v10694 = vadd.f32 0.0, %v10693
    %v10695 = vpop.f32.mrb[0].mxu0
    %v10696 = vpop.f32.mrb[0].mxu0
    %v10697 = vadd.f32 0.0, %v10696
    %v10698 = vpop.f32.mrb[0].mxu0
    %10699 = vmatprep.mubr.bf16.mxu0 0
    %10700 = vmatmul.mubr.bf16.gmra.mrb[0].mxu0 %v10633
    %v10701 = vpop.f32.mrb[0].mxu0
    %v10702 = vadd.f32 0.0, %v10701
    %v10703 = vpop.f32.mrb[0].mxu0
    %v10704 = vpop.f32.mrb[0].mxu0
    %v10705 = vadd.f32 0.0, %v10704
    %v10706 = vpop.f32.mrb[0].mxu0
    %10707 = vmatprep.mubr.bf16.mxu0 0
    %10708 = vmatmul.mubr.bf16.gmra.mrb[0].mxu0 %v10636
    %v10709 = vpop.f32.mrb[0].mxu0
    %v10710 = vadd.f32 0.0, %v10709
    %v10711 = vpop.f32.mrb[0].mxu0
    %v10712 = vpop.f32.mrb[0].mxu0
    %v10713 = vadd.f32 0.0, %v10712
    %v10714 = vpop.f32.mrb[0].mxu0
    %10715 = vmatprep.mubr.bf16.mxu0 0
    %10716 = vmatmul.mubr.bf16.gmra.mrb[0].mxu0 %v10639
    %v10717 = vpop.f32.mrb[0].mxu0
    %v10718 = vadd.f32 0.0, %v10717
    %v10719 = vpop.f32.mrb[0].mxu0
    %v10720 = vpop.f32.mrb[0].mxu0
    %v10721 = vadd.f32 0.0, %v10720
    %v10722 = vpop.f32.mrb[0].mxu0
    %10723 = vmatprep.mubr.bf16.mxu0 0
    %10724 = vmatmul.mubr.bf16.gmra.mrb[0].mxu0 %v10642
    %v10725 = vpop.f32.mrb[0].mxu0
    %v10726 = vadd.f32 0.0, %v10725
    %v10727 = vpop.f32.mrb[0].mxu0
    %v10728 = vpop.f32.mrb[0].mxu0
    %v10729 = vadd.f32 0.0, %v10728
    %v10730 = vpop.f32.mrb[0].mxu0
    %10731 = vmatprep.mubr.bf16.mxu0 0
    %10732 = vmatmul.mubr.bf16.gmra.mrb[0].mxu0 %v10645
    %v10733 = vpop.f32.mrb[0].mxu0
    %v10734 = vadd.f32 0.0, %v10733
    %v10735 = vpop.f32.mrb[0].mxu0
    %v10736 = vpop.f32.mrb[0].mxu0
    %v10737 = vadd.f32 0.0, %v10736
    %v10738 = vpop.f32.mrb[0].mxu0
    %10739 = vmatprep.mubr.bf16.mxu0 0
    %10740 = vmatmul.mubr.bf16.gmra.mrb[0].mxu0 %v10648
    %v10741 = vpop.f32.mrb[0].mxu0
    %v10742 = vadd.f32 0.0, %v10741
    %v10743 = vpop.f32.mrb[0].mxu0
    %v10744 = vpop.f32.mrb[0].mxu0
    %v10745 = vadd.f32 0.0, %v10744
    %v10746 = vpop.f32.mrb[0].mxu0
    %10747 = vmatprep.mubr.bf16.mxu0 0
    %10748 = vmatmul.mubr.bf16.gmra.mrb[0].mxu0 %v10651
    %v10749 = vpop.f32.mrb[0].mxu0
    %v10750 = vadd.f32 0.0, %v10749
    %v10751 = vpop.f32.mrb[0].mxu0
    %v10752 = vpop.f32.mrb[0].mxu0
    %v10753 = vadd.f32 0.0, %v10752
    %v10754 = vpop.f32.mrb[0].mxu0
    %10755 = vmatprep.mubr.bf16.mxu0 0
    %10756 = vmatmul.mubr.bf16.gmra.mrb[0].mxu0 %v10654
    %v10757 = vpop.f32.mrb[0].mxu0
    %v10758 = vadd.f32 0.0, %v10757
    %v10759 = vpop.f32.mrb[0].mxu0
    %v10760 = vpop.f32.mrb[0].mxu0
    %v10761 = vadd.f32 0.0, %v10760
    %v10762 = vpop.f32.mrb[0].mxu0
    %10763 = vmatprep.mubr.bf16.mxu0 0
    %10764 = vmatmul.mubr.bf16.gmra.mrb[0].mxu0 %v10657
    %v10765 = vpop.f32.mrb[0].mxu0
    %v10766 = vadd.f32 0.0, %v10765
    %v10767 = vpop.f32.mrb[0].mxu0
    %v10768 = vpop.f32.mrb[0].mxu0
    %v10769 = vadd.f32 0.0, %v10768
    %v10770 = vpop.f32.mrb[0].mxu0
    %10771 = vdwg.mxu0
    %v10772 = vld [vmem:[#allocation4] sm:$0xff]
    %v10773 = vld [vmem:[#allocation4 + $0x8] sm:$0xff]
    %v10774 = vld [vmem:[#allocation4 + $0x10] sm:$0xff]
    %v10775 = vld [vmem:[#allocation4 + $0x18] sm:$0xff]
    %v10776 = vld [vmem:[#allocation4 + $0x20] sm:$0xff]
    %v10777 = vld [vmem:[#allocation4 + $0x28] sm:$0xff]
    %v10778 = vld [vmem:[#allocation4 + $0x30] sm:$0xff]
    %v10779 = vld [vmem:[#allocation4 + $0x38] sm:$0xff]
    %v10780 = vld [vmem:[#allocation4 + $0x40] sm:$0xff]
    %v10781 = vld [vmem:[#allocation4 + $0x48] sm:$0xff]
    %v10782 = vld [vmem:[#allocation4 + $0x50] sm:$0xff]
    %v10783 = vld [vmem:[#allocation4 + $0x58] sm:$0xff]
    %v10784 = vld [vmem:[#allocation4 + $0x60] sm:$0xff]
    %v10785 = vld [vmem:[#allocation4 + $0x68] sm:$0xff]
    %v10786 = vld [vmem:[#allocation4 + $0x70] sm:$0xff]
    %v10787 = vld [vmem:[#allocation4 + $0x78] sm:$0xff]
    %v10788 = vld [vmem:[#allocation4 + $0x80] sm:$0xff]
    %v10789 = vld [vmem:[#allocation4 + $0x88] sm:$0xff]
    %v10790 = vld [vmem:[#allocation4 + $0x90] sm:$0xff]
    %v10791 = vld [vmem:[#allocation4 + $0x98] sm:$0xff]
    %v10792 = vadd.f32 %v10772, %v10694
    %v10793 = vadd.f32 %v10773, %v10697
    %v10794 = vadd.f32 %v10774, %v10702
    %v10795 = vadd.f32 %v10775, %v10705
    %v10796 = vadd.f32 %v10776, %v10710
    %v10797 = vadd.f32 %v10777, %v10713
    %v10798 = vadd.f32 %v10778, %v10718
    %v10799 = vadd.f32 %v10779, %v10721
    %v10800 = vadd.f32 %v10780, %v10726
    %v10801 = vadd.f32 %v10781, %v10729
    %v10802 = vadd.f32 %v10782, %v10734
    %v10803 = vadd.f32 %v10783, %v10737
    %v10804 = vadd.f32 %v10784, %v10742
    %v10805 = vadd.f32 %v10785, %v10745
    %v10806 = vadd.f32 %v10786, %v10750
    %v10807 = vadd.f32 %v10787, %v10753
    %v10808 = vadd.f32 %v10788, %v10758
    %v10809 = vadd.f32 %v10789, %v10761
    %v10810 = vadd.f32 %v10790, %v10766
    %v10811 = vadd.f32 %v10791, %v10769
    %10812 = vst.msk [vmem:[#allocation4] sm:$0xff] %vm8857, %v10792
    %10813 = vst.msk [vmem:[#allocation4 + $0x8] sm:$0xff] %vm8857, %v10793
    %10814 = vst.msk [vmem:[#allocation4 + $0x10] sm:$0xff] %vm8857, %v10794
    %10815 = vst.msk [vmem:[#allocation4 + $0x18] sm:$0xff] %vm8857, %v10795
    %10816 = vst.msk [vmem:[#allocation4 + $0x20] sm:$0xff] %vm8857, %v10796
    %10817 = vst.msk [vmem:[#allocation4 + $0x28] sm:$0xff] %vm8857, %v10797
    %10818 = vst.msk [vmem:[#allocation4 + $0x30] sm:$0xff] %vm8857, %v10798
    %10819 = vst.msk [vmem:[#allocation4 + $0x38] sm:$0xff] %vm8857, %v10799
    %10820 = vst.msk [vmem:[#allocation4 + $0x40] sm:$0xff] %vm8857, %v10800
    %10821 = vst.msk [vmem:[#allocation4 + $0x48] sm:$0xff] %vm8857, %v10801
    %10822 = vst.msk [vmem:[#allocation4 + $0x50] sm:$0xff] %vm8857, %v10802
    %10823 = vst.msk [vmem:[#allocation4 + $0x58] sm:$0xff] %vm8857, %v10803
    %10824 = vst.msk [vmem:[#allocation4 + $0x60] sm:$0xff] %vm8857, %v10804
    %10825 = vst.msk [vmem:[#allocation4 + $0x68] sm:$0xff] %vm8857, %v10805
    %10826 = vst.msk [vmem:[#allocation4 + $0x70] sm:$0xff] %vm8857, %v10806
    %10827 = vst.msk [vmem:[#allocation4 + $0x78] sm:$0xff] %vm8857, %v10807
    %10828 = vst.msk [vmem:[#allocation4 + $0x80] sm:$0xff] %vm8857, %v10808
    %10829 = vst.msk [vmem:[#allocation4 + $0x88] sm:$0xff] %vm8857, %v10809
    %10830 = vst.msk [vmem:[#allocation4 + $0x90] sm:$0xff] %vm8857, %v10810
    %10831 = vst.msk [vmem:[#allocation4 + $0x98] sm:$0xff] %vm8857, %v10811
    %v10832 = vld [vmem:[#allocation3 + $0x10] sm:$0xfe]
    %v10833 = vld [vmem:[#allocation3 + $0x18] sm:$0xff]
    %v10834 = vld [vmem:[#allocation3 + $0x20] sm:$0xff]
    %v10835 = vld [vmem:[#allocation3 + $0x28] sm:$0xff]
    %v10836 = vld [vmem:[#allocation3 + $0x30] sm:$0xff]
    %v10837 = vld [vmem:[#allocation3 + $0x38] sm:$0x1]
    %v10838 = vld [vmem:[#allocation3 + $0x50] sm:$0xfe]
    %v10839 = vld [vmem:[#allocation3 + $0x58] sm:$0xff]
    %v10840 = vld [vmem:[#allocation3 + $0x60] sm:$0xff]
    %v10841 = vld [vmem:[#allocation3 + $0x68] sm:$0xff]
    %v10842 = vld [vmem:[#allocation3 + $0x70] sm:$0xff]
    %v10843 = vld [vmem:[#allocation3 + $0x78] sm:$0x1]
    %v10856 = vrot.slane %v10832, 1
    %v10857 = vrot.slane %v10833, 1
    %v10858 = vsel %vm9223, %v10856, %v10857
    %v10859 = vrot.slane %v10834, 1
    %v10860 = vsel %vm9223, %v10857, %v10859
    %v10861 = vrot.slane %v10835, 1
    %v10862 = vsel %vm9223, %v10859, %v10861
    %v10863 = vrot.slane %v10836, 1
    %v10864 = vsel %vm9223, %v10861, %v10863
    %v10865 = vrot.slane %v10837, 1
    %v10866 = vsel %vm9223, %v10863, %v10865
    %v10867 = vrot.slane %v10838, 1
    %v10868 = vrot.slane %v10839, 1
    %v10869 = vsel %vm9223, %v10867, %v10868
    %v10870 = vrot.slane %v10840, 1
    %v10871 = vsel %vm9223, %v10868, %v10870
    %v10872 = vrot.slane %v10841, 1
    %v10873 = vsel %vm9223, %v10870, %v10872
    %v10874 = vrot.slane %v10842, 1
    %v10875 = vsel %vm9223, %v10872, %v10874
    %v10876 = vrot.slane %v10843, 1
    %v10877 = vsel %vm9223, %v10874, %v10876
    %s10878 = scalar_lea.vmem %s3, 128
    %v10879 = vld [vmem:[%s10878] sm:$0xf]
    %v10880 = vld [vmem:[%s10878 + $0x4] sm:$0xf]
    %v10881 = vld [vmem:[%s10878 + $0x8] sm:$0xf]
    %v10882 = vld [vmem:[%s10878 + $0xc] sm:$0xf]
    %v10887 = vunpack.c.l.b16 %v10879
    %v10888 = vunpack.c.l.b16 %v10880
    %v10889 = vunpack.c.l.b16 %v10881
    %v10890 = vunpack.c.l.b16 %v10882
    %v10891 = vpack.c.b16 %v10888, %v10887
    %v10892 = vpack.c.b16 %v10890, %v10889
    %v10896 = vsel %vm577, %v10858, 0
    %v10899 = vsel %vm577, %v10860, 0
    %v10902 = vsel %vm577, %v10862, 0
    %v10905 = vsel %vm577, %v10864, 0
    %v10908 = vsel %vm577, %v10866, 0
    %v10911 = vsel %vm577, %v10869, 0
    %v10914 = vsel %vm577, %v10871, 0
    %v10917 = vsel %vm577, %v10873, 0
    %v10920 = vsel %vm577, %v10875, 0
    %v10923 = vsel %vm577, %v10877, 0
    %10925 = vmatprep.subr.bf16.mxu0 0
    %10926 = vmatpush1.bf16.msra.mxu0 %v10891
    %10927 = vmatprep.subr.bf16.mxu0 0
    %10928 = vmatpush1.bf16.msra.mxu0 %v10892
    %10929 = vmatprep.subr.bf16.mxu0 0
    %10930 = vmatpush1.bf16.msra.mxu0 0
    %10931 = vmatprep.subr.bf16.mxu0 0
    %10932 = vmatpush1.bf16.msra.mxu0 0
    %10933 = vmatprep.subr.bf16.mxu0 0
    %10934 = vmatpush1.bf16.msra.mxu0 0
    %10935 = vmatprep.subr.bf16.mxu0 0
    %10936 = vmatpush1.bf16.msra.mxu0 0
    %10937 = vmatprep.subr.bf16.mxu0 0
    %10938 = vmatpush1.bf16.msra.mxu0 0
    %10939 = vmatprep.subr.bf16.mxu0 0
    %10940 = vmatpush1.bf16.msra.mxu0 0
    %10941 = vmatprep.subr.bf16.mxu0 0
    %10942 = vmatpush1.bf16.msra.mxu0 0
    %10943 = vmatprep.subr.bf16.mxu0 0
    %10944 = vmatpush1.bf16.msra.mxu0 0
    %10945 = vmatprep.subr.bf16.mxu0 0
    %10946 = vmatpush1.bf16.msra.mxu0 0
    %10947 = vmatprep.subr.bf16.mxu0 0
    %10948 = vmatpush1.bf16.msra.mxu0 0
    %10949 = vmatprep.subr.bf16.mxu0 0
    %10950 = vmatpush1.bf16.msra.mxu0 0
    %10951 = vmatprep.subr.bf16.mxu0 0
    %10952 = vmatpush1.bf16.msra.mxu0 0
    %10953 = vmatprep.subr.bf16.mxu0 0
    %10954 = vmatpush1.bf16.msra.mxu0 0
    %10955 = vmatprep.subr.bf16.mxu0 0
    %10956 = vmatpush1.bf16.msra.mxu0 0
    %10957 = vmatprep.mubr.bf16.mxu0 0
    %10958 = vmatmul.mubr.bf16.gmra.mrb[0].mxu0 %v10896
    %v10959 = vpop.f32.mrb[0].mxu0
    %v10960 = vadd.f32 0.0, %v10959
    %v10961 = vpop.f32.mrb[0].mxu0
    %v10962 = vpop.f32.mrb[0].mxu0
    %v10963 = vadd.f32 0.0, %v10962
    %v10964 = vpop.f32.mrb[0].mxu0
    %10965 = vmatprep.mubr.bf16.mxu0 0
    %10966 = vmatmul.mubr.bf16.gmra.mrb[0].mxu0 %v10899
    %v10967 = vpop.f32.mrb[0].mxu0
    %v10968 = vadd.f32 0.0, %v10967
    %v10969 = vpop.f32.mrb[0].mxu0
    %v10970 = vpop.f32.mrb[0].mxu0
    %v10971 = vadd.f32 0.0, %v10970
    %v10972 = vpop.f32.mrb[0].mxu0
    %10973 = vmatprep.mubr.bf16.mxu0 0
    %10974 = vmatmul.mubr.bf16.gmra.mrb[0].mxu0 %v10902
    %v10975 = vpop.f32.mrb[0].mxu0
    %v10976 = vadd.f32 0.0, %v10975
    %v10977 = vpop.f32.mrb[0].mxu0
    %v10978 = vpop.f32.mrb[0].mxu0
    %v10979 = vadd.f32 0.0, %v10978
    %v10980 = vpop.f32.mrb[0].mxu0
    %10981 = vmatprep.mubr.bf16.mxu0 0
    %10982 = vmatmul.mubr.bf16.gmra.mrb[0].mxu0 %v10905
    %v10983 = vpop.f32.mrb[0].mxu0
    %v10984 = vadd.f32 0.0, %v10983
    %v10985 = vpop.f32.mrb[0].mxu0
    %v10986 = vpop.f32.mrb[0].mxu0
    %v10987 = vadd.f32 0.0, %v10986
    %v10988 = vpop.f32.mrb[0].mxu0
    %10989 = vmatprep.mubr.bf16.mxu0 0
    %10990 = vmatmul.mubr.bf16.gmra.mrb[0].mxu0 %v10908
    %v10991 = vpop.f32.mrb[0].mxu0
    %v10992 = vadd.f32 0.0, %v10991
    %v10993 = vpop.f32.mrb[0].mxu0
    %v10994 = vpop.f32.mrb[0].mxu0
    %v10995 = vadd.f32 0.0, %v10994
    %v10996 = vpop.f32.mrb[0].mxu0
    %10997 = vmatprep.mubr.bf16.mxu0 0
    %10998 = vmatmul.mubr.bf16.gmra.mrb[0].mxu0 %v10911
    %v10999 = vpop.f32.mrb[0].mxu0
    %v11000 = vadd.f32 0.0, %v10999
    %v11001 = vpop.f32.mrb[0].mxu0
    %v11002 = vpop.f32.mrb[0].mxu0
    %v11003 = vadd.f32 0.0, %v11002
    %v11004 = vpop.f32.mrb[0].mxu0
    %11005 = vmatprep.mubr.bf16.mxu0 0
    %11006 = vmatmul.mubr.bf16.gmra.mrb[0].mxu0 %v10914
    %v11007 = vpop.f32.mrb[0].mxu0
    %v11008 = vadd.f32 0.0, %v11007
    %v11009 = vpop.f32.mrb[0].mxu0
    %v11010 = vpop.f32.mrb[0].mxu0
    %v11011 = vadd.f32 0.0, %v11010
    %v11012 = vpop.f32.mrb[0].mxu0
    %11013 = vmatprep.mubr.bf16.mxu0 0
    %11014 = vmatmul.mubr.bf16.gmra.mrb[0].mxu0 %v10917
    %v11015 = vpop.f32.mrb[0].mxu0
    %v11016 = vadd.f32 0.0, %v11015
    %v11017 = vpop.f32.mrb[0].mxu0
    %v11018 = vpop.f32.mrb[0].mxu0
    %v11019 = vadd.f32 0.0, %v11018
    %v11020 = vpop.f32.mrb[0].mxu0
    %11021 = vmatprep.mubr.bf16.mxu0 0
    %11022 = vmatmul.mubr.bf16.gmra.mrb[0].mxu0 %v10920
    %v11023 = vpop.f32.mrb[0].mxu0
    %v11024 = vadd.f32 0.0, %v11023
    %v11025 = vpop.f32.mrb[0].mxu0
    %v11026 = vpop.f32.mrb[0].mxu0
    %v11027 = vadd.f32 0.0, %v11026
    %v11028 = vpop.f32.mrb[0].mxu0
    %11029 = vmatprep.mubr.bf16.mxu0 0
    %11030 = vmatmul.mubr.bf16.gmra.mrb[0].mxu0 %v10923
    %v11031 = vpop.f32.mrb[0].mxu0
    %v11032 = vadd.f32 0.0, %v11031
    %v11033 = vpop.f32.mrb[0].mxu0
    %v11034 = vpop.f32.mrb[0].mxu0
    %v11035 = vadd.f32 0.0, %v11034
    %v11036 = vpop.f32.mrb[0].mxu0
    %11037 = vdwg.mxu0
    %v11038 = vld [vmem:[#allocation4] sm:$0xff]
    %v11039 = vld [vmem:[#allocation4 + $0x8] sm:$0xff]
    %v11040 = vld [vmem:[#allocation4 + $0x10] sm:$0xff]
    %v11041 = vld [vmem:[#allocation4 + $0x18] sm:$0xff]
    %v11042 = vld [vmem:[#allocation4 + $0x20] sm:$0xff]
    %v11043 = vld [vmem:[#allocation4 + $0x28] sm:$0xff]
    %v11044 = vld [vmem:[#allocation4 + $0x30] sm:$0xff]
    %v11045 = vld [vmem:[#allocation4 + $0x38] sm:$0xff]
    %v11046 = vld [vmem:[#allocation4 + $0x40] sm:$0xff]
    %v11047 = vld [vmem:[#allocation4 + $0x48] sm:$0xff]
    %v11048 = vld [vmem:[#allocation4 + $0x50] sm:$0xff]
    %v11049 = vld [vmem:[#allocation4 + $0x58] sm:$0xff]
    %v11050 = vld [vmem:[#allocation4 + $0x60] sm:$0xff]
    %v11051 = vld [vmem:[#allocation4 + $0x68] sm:$0xff]
    %v11052 = vld [vmem:[#allocation4 + $0x70] sm:$0xff]
    %v11053 = vld [vmem:[#allocation4 + $0x78] sm:$0xff]
    %v11054 = vld [vmem:[#allocation4 + $0x80] sm:$0xff]
    %v11055 = vld [vmem:[#allocation4 + $0x88] sm:$0xff]
    %v11056 = vld [vmem:[#allocation4 + $0x90] sm:$0xff]
    %v11057 = vld [vmem:[#allocation4 + $0x98] sm:$0xff]
    %v11058 = vadd.f32 %v11038, %v10960
    %v11059 = vadd.f32 %v11039, %v10963
    %v11060 = vadd.f32 %v11040, %v10968
    %v11061 = vadd.f32 %v11041, %v10971
    %v11062 = vadd.f32 %v11042, %v10976
    %v11063 = vadd.f32 %v11043, %v10979
    %v11064 = vadd.f32 %v11044, %v10984
    %v11065 = vadd.f32 %v11045, %v10987
    %v11066 = vadd.f32 %v11046, %v10992
    %v11067 = vadd.f32 %v11047, %v10995
    %v11068 = vadd.f32 %v11048, %v11000
    %v11069 = vadd.f32 %v11049, %v11003
    %v11070 = vadd.f32 %v11050, %v11008
    %v11071 = vadd.f32 %v11051, %v11011
    %v11072 = vadd.f32 %v11052, %v11016
    %v11073 = vadd.f32 %v11053, %v11019
    %v11074 = vadd.f32 %v11054, %v11024
    %v11075 = vadd.f32 %v11055, %v11027
    %v11076 = vadd.f32 %v11056, %v11032
    %v11077 = vadd.f32 %v11057, %v11035
    %11078 = vst.msk [vmem:[#allocation4] sm:$0xff] %vm8857, %v11058
    %11079 = vst.msk [vmem:[#allocation4 + $0x8] sm:$0xff] %vm8857, %v11059
    %11080 = vst.msk [vmem:[#allocation4 + $0x10] sm:$0xff] %vm8857, %v11060
    %11081 = vst.msk [vmem:[#allocation4 + $0x18] sm:$0xff] %vm8857, %v11061
    %11082 = vst.msk [vmem:[#allocation4 + $0x20] sm:$0xff] %vm8857, %v11062
    %11083 = vst.msk [vmem:[#allocation4 + $0x28] sm:$0xff] %vm8857, %v11063
    %11084 = vst.msk [vmem:[#allocation4 + $0x30] sm:$0xff] %vm8857, %v11064
    %11085 = vst.msk [vmem:[#allocation4 + $0x38] sm:$0xff] %vm8857, %v11065
    %11086 = vst.msk [vmem:[#allocation4 + $0x40] sm:$0xff] %vm8857, %v11066
    %11087 = vst.msk [vmem:[#allocation4 + $0x48] sm:$0xff] %vm8857, %v11067
    %11088 = vst.msk [vmem:[#allocation4 + $0x50] sm:$0xff] %vm8857, %v11068
    %11089 = vst.msk [vmem:[#allocation4 + $0x58] sm:$0xff] %vm8857, %v11069
    %11090 = vst.msk [vmem:[#allocation4 + $0x60] sm:$0xff] %vm8857, %v11070
    %11091 = vst.msk [vmem:[#allocation4 + $0x68] sm:$0xff] %vm8857, %v11071
    %11092 = vst.msk [vmem:[#allocation4 + $0x70] sm:$0xff] %vm8857, %v11072
    %11093 = vst.msk [vmem:[#allocation4 + $0x78] sm:$0xff] %vm8857, %v11073
    %11094 = vst.msk [vmem:[#allocation4 + $0x80] sm:$0xff] %vm8857, %v11074
    %11095 = vst.msk [vmem:[#allocation4 + $0x88] sm:$0xff] %vm8857, %v11075
    %11096 = vst.msk [vmem:[#allocation4 + $0x90] sm:$0xff] %vm8857, %v11076
    %11097 = vst.msk [vmem:[#allocation4 + $0x98] sm:$0xff] %vm8857, %v11077
    %v11098 = vld [vmem:[#allocation4] sm:$0x1]
    %v11099 = vld [vmem:[#allocation4 + $0x50] sm:$0x1]
    %v11100 = vld [vmem:[#allocation4 + $0x1] sm:$0x1]
    %v11101 = vld [vmem:[#allocation4 + $0x51] sm:$0x1]
    %v11102 = vmax.f32 %v11098, %v11100
    %v11103 = vmax.f32 %v11099, %v11101
    %v11104 = vld [vmem:[#allocation4 + $0x10] sm:$0x1]
    %v11105 = vld [vmem:[#allocation4 + $0x60] sm:$0x1]
    %v11106 = vmax.f32 %v11102, %v11104
    %v11107 = vmax.f32 %v11103, %v11105
    %v11108 = vld [vmem:[#allocation4 + $0x11] sm:$0x1]
    %v11109 = vld [vmem:[#allocation4 + $0x61] sm:$0x1]
    %v11110 = vmax.f32 %v11106, %v11108
    %v11111 = vmax.f32 %v11107, %v11109
    %v11112 = vld [vmem:[%s4] sm:$0x1]
    %v11114 = vlaneseq
    %v11115 = vshrl.u32 %v11114, 7
    %v11116 = vsub.s32 0, %v11115
    %v11117 = vrot.slane %v11112, %v11116
    %v11119 = vadd.f32 %v11110, %v11117
    %v11120 = vadd.f32 %v11111, %v11117
    %v11121 = vmax.f32 %v11119, 0.0
    %v11122 = vmax.f32 %v11120, 0.0
    %v11123 = vpack.c.bf16 %v11121, %v11121
    %v11124 = vpack.c.bf16 %v11122, %v11122
    %v11128 = vunpack.c.l.s4 1966171168
    %v11129 = vunpack.c.0.s8 %v11128
    %v11130 = vlaneseq
    %v11131 = vshrl.u32 %v11130, 7
    %v11132 = vsub.s32 %v11129, %v11131
    %v11133 = vrot.slane %v11123, %v11132
    %v11135 = vunpack.c.l.s4 1966171168
    %v11136 = vunpack.c.0.s8 %v11135
    %v11137 = vlaneseq
    %v11138 = vshrl.u32 %v11137, 7
    %v11139 = vsub.s32 %v11136, %v11138
    %v11140 = vrot.slane %v11133, %v11139
    %v11142 = vunpack.c.l.s4 1966171168
    %v11143 = vunpack.c.0.s8 %v11142
    %v11144 = vlaneseq
    %v11145 = vshrl.u32 %v11144, 7
    %v11146 = vsub.s32 %v11143, %v11145
    %v11147 = vrot.slane %v11124, %v11146
    %v11149 = vunpack.c.l.s4 1966171168
    %v11150 = vunpack.c.0.s8 %v11149
    %v11151 = vlaneseq
    %v11152 = vshrl.u32 %v11151, 7
    %v11153 = vsub.s32 %v11150, %v11152
    %v11154 = vrot.slane %v11147, %v11153
    %v11156 = vunpack.c.l.s4 1935823168
    %v11157 = vunpack.c.0.s8 %v11156
    %v11158 = vlaneseq
    %v11159 = vshrl.u32 %v11158, 7
    %v11160 = vsub.s32 %v11157, %v11159
    %v11161 = vrot.slane %v11140, %v11160
    %v11163 = vunpack.c.l.s4 1935823168
    %v11164 = vunpack.c.0.s8 %v11163
    %v11165 = vlaneseq
    %v11166 = vshrl.u32 %v11165, 7
    %v11167 = vsub.s32 %v11164, %v11166
    %v11168 = vrot.slane %v11161, %v11167
    %v11170 = vunpack.c.l.s4 1935823168
    %v11171 = vunpack.c.0.s8 %v11170
    %v11172 = vlaneseq
    %v11173 = vshrl.u32 %v11172, 7
    %v11174 = vsub.s32 %v11171, %v11173
    %v11175 = vrot.slane %v11154, %v11174
    %v11177 = vunpack.c.l.s4 1935823168
    %v11178 = vunpack.c.0.s8 %v11177
    %v11179 = vlaneseq
    %v11180 = vshrl.u32 %v11179, 7
    %v11181 = vsub.s32 %v11178, %v11180
    %v11182 = vrot.slane %v11175, %v11181
    %v11183 = vunpack.c.l.b16 %v11168
    %v11184 = vunpack.c.l.b16 %v11182
    %v11185 = vrot.slane %v11184, 7
    %vm11186 = vcmask 1041409
    %v11187 = vsel %vm11186, %v11185, %v11183
    %v11188 = vpack.c.b16 %v11187, %v11187
    %v11190 = vunpack.c.l.s4 1966171168
    %v11191 = vunpack.c.0.s8 %v11190
    %v11192 = vlaneseq
    %v11193 = vshrl.u32 %v11192, 7
    %v11194 = vsub.s32 %v11191, %v11193
    %v11195 = vrot.slane %v11188, %v11194
    %v11197 = vunpack.c.l.s4 1966171168
    %v11198 = vunpack.c.0.s8 %v11197
    %v11199 = vlaneseq
    %v11200 = vshrl.u32 %v11199, 7
    %v11201 = vsub.s32 %v11198, %v11200
    %v11202 = vrot.slane %v11195, %v11201
    %vm11204 = vcmask 516096
    %11205 = vst.msk [vmem:[#allocation5] sm:$0x1] %vm11204, %v11202
    %v11206 = vld [vmem:[#allocation4 + $0x2] sm:$0x1]
    %v11207 = vld [vmem:[#allocation4 + $0x52] sm:$0x1]
    %v11208 = vld [vmem:[#allocation4 + $0x3] sm:$0x1]
    %v11209 = vld [vmem:[#allocation4 + $0x53] sm:$0x1]
    %v11210 = vmax.f32 %v11206, %v11208
    %v11211 = vmax.f32 %v11207, %v11209
    %v11212 = vld [vmem:[#allocation4 + $0x12] sm:$0x1]
    %v11213 = vld [vmem:[#allocation4 + $0x62] sm:$0x1]
    %v11214 = vmax.f32 %v11210, %v11212
    %v11215 = vmax.f32 %v11211, %v11213
    %v11216 = vld [vmem:[#allocation4 + $0x13] sm:$0x1]
    %v11217 = vld [vmem:[#allocation4 + $0x63] sm:$0x1]
    %v11218 = vmax.f32 %v11214, %v11216
    %v11219 = vmax.f32 %v11215, %v11217
    %v11220 = vld [vmem:[%s4] sm:$0x1]
    %v11222 = vlaneseq
    %v11223 = vshrl.u32 %v11222, 7
    %v11224 = vsub.s32 0, %v11223
    %v11225 = vrot.slane %v11220, %v11224
    %v11227 = vadd.f32 %v11218, %v11225
    %v11228 = vadd.f32 %v11219, %v11225
    %v11229 = vmax.f32 %v11227, 0.0
    %v11230 = vmax.f32 %v11228, 0.0
    %v11231 = vpack.c.bf16 %v11229, %v11229
    %v11232 = vpack.c.bf16 %v11230, %v11230
    %v11236 = vunpack.c.l.s4 1966171168
    %v11237 = vunpack.c.0.s8 %v11236
    %v11238 = vlaneseq
    %v11239 = vshrl.u32 %v11238, 7
    %v11240 = vsub.s32 %v11237, %v11239
    %v11241 = vrot.slane %v11231, %v11240
    %v11243 = vunpack.c.l.s4 1966171168
    %v11244 = vunpack.c.0.s8 %v11243
    %v11245 = vlaneseq
    %v11246 = vshrl.u32 %v11245, 7
    %v11247 = vsub.s32 %v11244, %v11246
    %v11248 = vrot.slane %v11241, %v11247
    %v11250 = vunpack.c.l.s4 1966171168
    %v11251 = vunpack.c.0.s8 %v11250
    %v11252 = vlaneseq
    %v11253 = vshrl.u32 %v11252, 7
    %v11254 = vsub.s32 %v11251, %v11253
    %v11255 = vrot.slane %v11232, %v11254
    %v11257 = vunpack.c.l.s4 1966171168
    %v11258 = vunpack.c.0.s8 %v11257
    %v11259 = vlaneseq
    %v11260 = vshrl.u32 %v11259, 7
    %v11261 = vsub.s32 %v11258, %v11260
    %v11262 = vrot.slane %v11255, %v11261
    %v11264 = vunpack.c.l.s4 1935823168
    %v11265 = vunpack.c.0.s8 %v11264
    %v11266 = vlaneseq
    %v11267 = vshrl.u32 %v11266, 7
    %v11268 = vsub.s32 %v11265, %v11267
    %v11269 = vrot.slane %v11248, %v11268
    %v11271 = vunpack.c.l.s4 1935823168
    %v11272 = vunpack.c.0.s8 %v11271
    %v11273 = vlaneseq
    %v11274 = vshrl.u32 %v11273, 7
    %v11275 = vsub.s32 %v11272, %v11274
    %v11276 = vrot.slane %v11269, %v11275
    %v11278 = vunpack.c.l.s4 1935823168
    %v11279 = vunpack.c.0.s8 %v11278
    %v11280 = vlaneseq
    %v11281 = vshrl.u32 %v11280, 7
    %v11282 = vsub.s32 %v11279, %v11281
    %v11283 = vrot.slane %v11262, %v11282
    %v11285 = vunpack.c.l.s4 1935823168
    %v11286 = vunpack.c.0.s8 %v11285
    %v11287 = vlaneseq
    %v11288 = vshrl.u32 %v11287, 7
    %v11289 = vsub.s32 %v11286, %v11288
    %v11290 = vrot.slane %v11283, %v11289
    %v11291 = vunpack.c.l.b16 %v11276
    %v11292 = vunpack.c.l.b16 %v11290
    %v11293 = vrot.slane %v11292, 7
    %v11294 = vsel %vm11186, %v11293, %v11291
    %v11295 = vpack.c.b16 %v11294, %v11294
    %v11297 = vunpack.c.l.s4 1966171168
    %v11298 = vunpack.c.0.s8 %v11297
    %v11299 = vlaneseq
    %v11300 = vshrl.u32 %v11299, 7
    %v11301 = vsub.s32 %v11298, %v11300
    %v11302 = vrot.slane %v11295, %v11301
    %v11304 = vunpack.c.l.s4 1966171168
    %v11305 = vunpack.c.0.s8 %v11304
    %v11306 = vlaneseq
    %v11307 = vshrl.u32 %v11306, 7
    %v11308 = vsub.s32 %v11305, %v11307
    %v11309 = vrot.slane %v11302, %v11308
    %11310 = vrot.lane.b32.xlu0 %v11309, 64
    %v11311 = vpop.permute.xlu0 %11310
    %vm11313 = vcmask 1040896
    %11314 = vst.msk [vmem:[#allocation5] sm:$0x1] %vm11313, %v11311
    %v11315 = vld [vmem:[#allocation4 + $0x20] sm:$0x1]
    %v11316 = vld [vmem:[#allocation4 + $0x70] sm:$0x1]
    %v11317 = vld [vmem:[#allocation4 + $0x21] sm:$0x1]
    %v11318 = vld [vmem:[#allocation4 + $0x71] sm:$0x1]
    %v11319 = vmax.f32 %v11315, %v11317
    %v11320 = vmax.f32 %v11316, %v11318
    %v11321 = vld [vmem:[#allocation4 + $0x30] sm:$0x1]
    %v11322 = vld [vmem:[#allocation4 + $0x80] sm:$0x1]
    %v11323 = vmax.f32 %v11319, %v11321
    %v11324 = vmax.f32 %v11320, %v11322
    %v11325 = vld [vmem:[#allocation4 + $0x31] sm:$0x1]
    %v11326 = vld [vmem:[#allocation4 + $0x81] sm:$0x1]
    %v11327 = vmax.f32 %v11323, %v11325
    %v11328 = vmax.f32 %v11324, %v11326
    %v11329 = vld [vmem:[%s4] sm:$0x1]
    %v11331 = vlaneseq
    %v11332 = vshrl.u32 %v11331, 7
    %v11333 = vsub.s32 0, %v11332
    %v11334 = vrot.slane %v11329, %v11333
    %v11336 = vadd.f32 %v11327, %v11334
    %v11337 = vadd.f32 %v11328, %v11334
    %v11338 = vmax.f32 %v11336, 0.0
    %v11339 = vmax.f32 %v11337, 0.0
    %v11340 = vpack.c.bf16 %v11338, %v11338
    %v11341 = vpack.c.bf16 %v11339, %v11339
    %v11345 = vunpack.c.l.s4 1966171168
    %v11346 = vunpack.c.0.s8 %v11345
    %v11347 = vlaneseq
    %v11348 = vshrl.u32 %v11347, 7
    %v11349 = vsub.s32 %v11346, %v11348
    %v11350 = vrot.slane %v11340, %v11349
    %v11352 = vunpack.c.l.s4 1966171168
    %v11353 = vunpack.c.0.s8 %v11352
    %v11354 = vlaneseq
    %v11355 = vshrl.u32 %v11354, 7
    %v11356 = vsub.s32 %v11353, %v11355
    %v11357 = vrot.slane %v11350, %v11356
    %v11359 = vunpack.c.l.s4 1966171168
    %v11360 = vunpack.c.0.s8 %v11359
    %v11361 = vlaneseq
    %v11362 = vshrl.u32 %v11361, 7
    %v11363 = vsub.s32 %v11360, %v11362
    %v11364 = vrot.slane %v11341, %v11363
    %v11366 = vunpack.c.l.s4 1966171168
    %v11367 = vunpack.c.0.s8 %v11366
    %v11368 = vlaneseq
    %v11369 = vshrl.u32 %v11368, 7
    %v11370 = vsub.s32 %v11367, %v11369
    %v11371 = vrot.slane %v11364, %v11370
    %v11373 = vunpack.c.l.s4 1935823168
    %v11374 = vunpack.c.0.s8 %v11373
    %v11375 = vlaneseq
    %v11376 = vshrl.u32 %v11375, 7
    %v11377 = vsub.s32 %v11374, %v11376
    %v11378 = vrot.slane %v11357, %v11377
    %v11380 = vunpack.c.l.s4 1935823168
    %v11381 = vunpack.c.0.s8 %v11380
    %v11382 = vlaneseq
    %v11383 = vshrl.u32 %v11382, 7
    %v11384 = vsub.s32 %v11381, %v11383
    %v11385 = vrot.slane %v11378, %v11384
    %v11387 = vunpack.c.l.s4 1935823168
    %v11388 = vunpack.c.0.s8 %v11387
    %v11389 = vlaneseq
    %v11390 = vshrl.u32 %v11389, 7
    %v11391 = vsub.s32 %v11388, %v11390
    %v11392 = vrot.slane %v11371, %v11391
    %v11394 = vunpack.c.l.s4 1935823168
    %v11395 = vunpack.c.0.s8 %v11394
    %v11396 = vlaneseq
    %v11397 = vshrl.u32 %v11396, 7
    %v11398 = vsub.s32 %v11395, %v11397
    %v11399 = vrot.slane %v11392, %v11398
    %v11400 = vunpack.c.l.b16 %v11385
    %v11401 = vunpack.c.l.b16 %v11399
    %v11402 = vrot.slane %v11401, 7
    %v11403 = vsel %vm11186, %v11402, %v11400
    %v11404 = vpack.c.b16 %v11403, %v11403
    %v11406 = vunpack.c.l.s4 1966171168
    %v11407 = vunpack.c.0.s8 %v11406
    %v11408 = vlaneseq
    %v11409 = vshrl.u32 %v11408, 7
    %v11410 = vsub.s32 %v11407, %v11409
    %v11411 = vrot.slane %v11404, %v11410
    %v11413 = vunpack.c.l.s4 1966171168
    %v11414 = vunpack.c.0.s8 %v11413
    %v11415 = vlaneseq
    %v11416 = vshrl.u32 %v11415, 7
    %v11417 = vsub.s32 %v11414, %v11416
    %v11418 = vrot.slane %v11411, %v11417
    %11420 = vst.msk [vmem:[#allocation5 + $0x1] sm:$0x1] %vm11204, %v11418
    %v11421 = vld [vmem:[#allocation4 + $0x22] sm:$0x1]
    %v11422 = vld [vmem:[#allocation4 + $0x72] sm:$0x1]
    %v11423 = vld [vmem:[#allocation4 + $0x23] sm:$0x1]
    %v11424 = vld [vmem:[#allocation4 + $0x73] sm:$0x1]
    %v11425 = vmax.f32 %v11421, %v11423
    %v11426 = vmax.f32 %v11422, %v11424
    %v11427 = vld [vmem:[#allocation4 + $0x32] sm:$0x1]
    %v11428 = vld [vmem:[#allocation4 + $0x82] sm:$0x1]
    %v11429 = vmax.f32 %v11425, %v11427
    %v11430 = vmax.f32 %v11426, %v11428
    %v11431 = vld [vmem:[#allocation4 + $0x33] sm:$0x1]
    %v11432 = vld [vmem:[#allocation4 + $0x83] sm:$0x1]
    %v11433 = vmax.f32 %v11429, %v11431
    %v11434 = vmax.f32 %v11430, %v11432
    %v11435 = vld [vmem:[%s4] sm:$0x1]
    %v11437 = vlaneseq
    %v11438 = vshrl.u32 %v11437, 7
    %v11439 = vsub.s32 0, %v11438
    %v11440 = vrot.slane %v11435, %v11439
    %v11442 = vadd.f32 %v11433, %v11440
    %v11443 = vadd.f32 %v11434, %v11440
    %v11444 = vmax.f32 %v11442, 0.0
    %v11445 = vmax.f32 %v11443, 0.0
    %v11446 = vpack.c.bf16 %v11444, %v11444
    %v11447 = vpack.c.bf16 %v11445, %v11445
    %v11451 = vunpack.c.l.s4 1966171168
    %v11452 = vunpack.c.0.s8 %v11451
    %v11453 = vlaneseq
    %v11454 = vshrl.u32 %v11453, 7
    %v11455 = vsub.s32 %v11452, %v11454
    %v11456 = vrot.slane %v11446, %v11455
    %v11458 = vunpack.c.l.s4 1966171168
    %v11459 = vunpack.c.0.s8 %v11458
    %v11460 = vlaneseq
    %v11461 = vshrl.u32 %v11460, 7
    %v11462 = vsub.s32 %v11459, %v11461
    %v11463 = vrot.slane %v11456, %v11462
    %v11465 = vunpack.c.l.s4 1966171168
    %v11466 = vunpack.c.0.s8 %v11465
    %v11467 = vlaneseq
    %v11468 = vshrl.u32 %v11467, 7
    %v11469 = vsub.s32 %v11466, %v11468
    %v11470 = vrot.slane %v11447, %v11469
    %v11472 = vunpack.c.l.s4 1966171168
    %v11473 = vunpack.c.0.s8 %v11472
    %v11474 = vlaneseq
    %v11475 = vshrl.u32 %v11474, 7
    %v11476 = vsub.s32 %v11473, %v11475
    %v11477 = vrot.slane %v11470, %v11476
    %v11479 = vunpack.c.l.s4 1935823168
    %v11480 = vunpack.c.0.s8 %v11479
    %v11481 = vlaneseq
    %v11482 = vshrl.u32 %v11481, 7
    %v11483 = vsub.s32 %v11480, %v11482
    %v11484 = vrot.slane %v11463, %v11483
    %v11486 = vunpack.c.l.s4 1935823168
    %v11487 = vunpack.c.0.s8 %v11486
    %v11488 = vlaneseq
    %v11489 = vshrl.u32 %v11488, 7
    %v11490 = vsub.s32 %v11487, %v11489
    %v11491 = vrot.slane %v11484, %v11490
    %v11493 = vunpack.c.l.s4 1935823168
    %v11494 = vunpack.c.0.s8 %v11493
    %v11495 = vlaneseq
    %v11496 = vshrl.u32 %v11495, 7
    %v11497 = vsub.s32 %v11494, %v11496
    %v11498 = vrot.slane %v11477, %v11497
    %v11500 = vunpack.c.l.s4 1935823168
    %v11501 = vunpack.c.0.s8 %v11500
    %v11502 = vlaneseq
    %v11503 = vshrl.u32 %v11502, 7
    %v11504 = vsub.s32 %v11501, %v11503
    %v11505 = vrot.slane %v11498, %v11504
    %v11506 = vunpack.c.l.b16 %v11491
    %v11507 = vunpack.c.l.b16 %v11505
    %v11508 = vrot.slane %v11507, 7
    %v11509 = vsel %vm11186, %v11508, %v11506
    %v11510 = vpack.c.b16 %v11509, %v11509
    %v11512 = vunpack.c.l.s4 1966171168
    %v11513 = vunpack.c.0.s8 %v11512
    %v11514 = vlaneseq
    %v11515 = vshrl.u32 %v11514, 7
    %v11516 = vsub.s32 %v11513, %v11515
    %v11517 = vrot.slane %v11510, %v11516
    %v11519 = vunpack.c.l.s4 1966171168
    %v11520 = vunpack.c.0.s8 %v11519
    %v11521 = vlaneseq
    %v11522 = vshrl.u32 %v11521, 7
    %v11523 = vsub.s32 %v11520, %v11522
    %v11524 = vrot.slane %v11517, %v11523
    %11525 = vrot.lane.b32.xlu0 %v11524, 64
    %v11526 = vpop.permute.xlu0 %11525
    %11528 = vst.msk [vmem:[#allocation5 + $0x1] sm:$0x1] %vm11313, %v11526
    %v11529 = vld [vmem:[#allocation5] sm:$0x3]
    %v11530 = vld [vmem:[%s5] sm:$0xf]
    %v11531 = vld [vmem:[%s5 + $0x4] sm:$0xf]
    %v11532 = vld [vmem:[%s5 + $0x8] sm:$0xf]
    %v11533 = vld [vmem:[%s5 + $0xc] sm:$0xf]
    %v11534 = vld [vmem:[%s5 + $0x10] sm:$0xf]
    %v11535 = vld [vmem:[%s5 + $0x14] sm:$0xf]
    %v11536 = vld [vmem:[%s5 + $0x18] sm:$0xf]
    %v11537 = vld [vmem:[%s5 + $0x1c] sm:$0xf]
    %v11538 = vld [vmem:[%s5 + $0x20] sm:$0xf]
    %v11539 = vld [vmem:[%s5 + $0x24] sm:$0xf]
    %v11540 = vld [vmem:[%s5 + $0x28] sm:$0xf]
    %v11541 = vld [vmem:[%s5 + $0x2c] sm:$0xf]
    %v11542 = vld [vmem:[%s5 + $0x30] sm:$0xf]
    %v11543 = vld [vmem:[%s5 + $0x34] sm:$0xf]
    %v11544 = vld [vmem:[%s5 + $0x38] sm:$0xf]
    %v11545 = vld [vmem:[%s5 + $0x3c] sm:$0xf]
    %v11546 = vld [vmem:[%s5 + $0x40] sm:$0xf]
    %v11547 = vld [vmem:[%s5 + $0x44] sm:$0xf]
    %v11548 = vld [vmem:[%s5 + $0x48] sm:$0xf]
    %v11549 = vld [vmem:[%s5 + $0x4c] sm:$0xf]
    %v11550 = vld [vmem:[%s5 + $0x50] sm:$0xf]
    %v11551 = vld [vmem:[%s5 + $0x54] sm:$0xf]
    %v11552 = vld [vmem:[%s5 + $0x58] sm:$0xf]
    %v11553 = vld [vmem:[%s5 + $0x5c] sm:$0xf]
    %v11554 = vld [vmem:[%s5 + $0x60] sm:$0xf]
    %v11555 = vld [vmem:[%s5 + $0x64] sm:$0xf]
    %v11556 = vld [vmem:[%s5 + $0x68] sm:$0xf]
    %v11557 = vld [vmem:[%s5 + $0x6c] sm:$0xf]
    %v11558 = vld [vmem:[%s5 + $0x70] sm:$0xf]
    %v11559 = vld [vmem:[%s5 + $0x74] sm:$0xf]
    %v11560 = vld [vmem:[%s5 + $0x78] sm:$0xf]
    %v11561 = vld [vmem:[%s5 + $0x7c] sm:$0xf]
    %v11562 = vld [vmem:[%s6] sm:$0x1]
    %v11564 = vlaneseq
    %v11565 = vshrl.u32 %v11564, 7
    %v11566 = vsub.s32 0, %v11565
    %v11567 = vrot.slane %v11562, %v11566
    %v11571 = vunpack.c.l.s4 1966171168
    %v11572 = vunpack.c.0.s8 %v11571
    %v11573 = vlaneseq
    %v11574 = vshrl.u32 %v11573, 7
    %v11575 = vsub.s32 %v11572, %v11574
    %v11576 = vrot.slane %v11529, %v11575
    %v11577 = vcombine.high %v11576, %v11576
    %v11579 = vunpack.c.l.s4 1966171168
    %v11580 = vunpack.c.0.s8 %v11579
    %v11581 = vlaneseq
    %v11582 = vshrl.u32 %v11581, 7
    %v11583 = vsub.s32 %v11580, %v11582
    %v11584 = vrot.slane %v11576, %v11583
    %v11586 = vunpack.c.l.s4 1966171168
    %v11587 = vunpack.c.0.s8 %v11586
    %v11588 = vlaneseq
    %v11589 = vshrl.u32 %v11588, 7
    %v11590 = vsub.s32 %v11587, %v11589
    %v11591 = vrot.slane %v11577, %v11590
    %v11626 = vunpack.c.l.b16 %v11530
    %v11627 = vunpack.c.l.b16 %v11531
    %v11628 = vunpack.c.l.b16 %v11532
    %v11629 = vunpack.c.l.b16 %v11533
    %v11630 = vunpack.c.l.b16 %v11534
    %v11631 = vunpack.c.l.b16 %v11535
    %v11632 = vunpack.c.l.b16 %v11536
    %v11633 = vunpack.c.l.b16 %v11537
    %v11634 = vunpack.c.l.b16 %v11538
    %v11635 = vunpack.c.l.b16 %v11539
    %v11636 = vunpack.c.l.b16 %v11540
    %v11637 = vunpack.c.l.b16 %v11541
    %v11638 = vunpack.c.l.b16 %v11542
    %v11639 = vunpack.c.l.b16 %v11543
    %v11640 = vunpack.c.l.b16 %v11544
    %v11641 = vunpack.c.l.b16 %v11545
    %v11642 = vunpack.c.l.b16 %v11546
    %v11643 = vunpack.c.l.b16 %v11547
    %v11644 = vunpack.c.l.b16 %v11548
    %v11645 = vunpack.c.l.b16 %v11549
    %v11646 = vunpack.c.l.b16 %v11550
    %v11647 = vunpack.c.l.b16 %v11551
    %v11648 = vunpack.c.l.b16 %v11552
    %v11649 = vunpack.c.l.b16 %v11553
    %v11650 = vunpack.c.l.b16 %v11554
    %v11651 = vunpack.c.l.b16 %v11555
    %v11652 = vunpack.c.l.b16 %v11556
    %v11653 = vunpack.c.l.b16 %v11557
    %v11654 = vunpack.c.l.b16 %v11558
    %v11655 = vunpack.c.l.b16 %v11559
    %v11656 = vunpack.c.l.b16 %v11560
    %v11657 = vunpack.c.l.b16 %v11561
    %v11658 = vpack.c.b16 %v11627, %v11626
    %v11659 = vpack.c.b16 %v11629, %v11628
    %v11660 = vpack.c.b16 %v11631, %v11630
    %v11661 = vpack.c.b16 %v11633, %v11632
    %v11662 = vpack.c.b16 %v11635, %v11634
    %v11663 = vpack.c.b16 %v11637, %v11636
    %v11664 = vpack.c.b16 %v11639, %v11638
    %v11665 = vpack.c.b16 %v11641, %v11640
    %v11666 = vpack.c.b16 %v11643, %v11642
    %v11667 = vpack.c.b16 %v11645, %v11644
    %v11668 = vpack.c.b16 %v11647, %v11646
    %v11669 = vpack.c.b16 %v11649, %v11648
    %v11670 = vpack.c.b16 %v11651, %v11650
    %v11671 = vpack.c.b16 %v11653, %v11652
    %v11672 = vpack.c.b16 %v11655, %v11654
    %v11673 = vpack.c.b16 %v11657, %v11656
    %11690 = vmatprep.subr.bf16.mxu0 0
    %11691 = vmatpush1.bf16.msra.mxu0 %v11658
    %11692 = vmatprep.subr.bf16.mxu0 0
    %11693 = vmatpush1.bf16.msra.mxu0 %v11659
    %11694 = vmatprep.subr.bf16.mxu0 0
    %11695 = vmatpush1.bf16.msra.mxu0 %v11660
    %11696 = vmatprep.subr.bf16.mxu0 0
    %11697 = vmatpush1.bf16.msra.mxu0 %v11661
    %11698 = vmatprep.subr.bf16.mxu0 0
    %11699 = vmatpush1.bf16.msra.mxu0 %v11662
    %11700 = vmatprep.subr.bf16.mxu0 0
    %11701 = vmatpush1.bf16.msra.mxu0 %v11663
    %11702 = vmatprep.subr.bf16.mxu0 0
    %11703 = vmatpush1.bf16.msra.mxu0 %v11664
    %11704 = vmatprep.subr.bf16.mxu0 0
    %11705 = vmatpush1.bf16.msra.mxu0 %v11665
    %11706 = vmatprep.subr.bf16.mxu0 0
    %11707 = vmatpush1.bf16.msra.mxu0 %v11666
    %11708 = vmatprep.subr.bf16.mxu0 0
    %11709 = vmatpush1.bf16.msra.mxu0 %v11667
    %11710 = vmatprep.subr.bf16.mxu0 0
    %11711 = vmatpush1.bf16.msra.mxu0 %v11668
    %11712 = vmatprep.subr.bf16.mxu0 0
    %11713 = vmatpush1.bf16.msra.mxu0 %v11669
    %11714 = vmatprep.subr.bf16.mxu0 0
    %11715 = vmatpush1.bf16.msra.mxu0 %v11670
    %11716 = vmatprep.subr.bf16.mxu0 0
    %11717 = vmatpush1.bf16.msra.mxu0 %v11671
    %11718 = vmatprep.subr.bf16.mxu0 0
    %11719 = vmatpush1.bf16.msra.mxu0 %v11672
    %11720 = vmatprep.subr.bf16.mxu0 0
    %11721 = vmatpush1.bf16.msra.mxu0 %v11673
    %11722 = vmatprep.mubr.bf16.mxu0 %v11591
    %11723 = vmatmul.mubr.bf16.gmra.mrb[0].mxu0 %v11584
    %v11724 = vpop.f32.mrb[0].mxu0
    %v11725 = vadd.f32 %v11567, %v11724
    %v11726 = vpop.f32.mrb[0].mxu0
    %v11727 = vpop.f32.mrb[0].mxu0
    %v11728 = vpop.f32.mrb[0].mxu0
    %11729 = vdwg.mxu0
    %v11730 = vmax.f32 %v11725, 0.0
    %v11731 = vpack.c.bf16 %v11730, %v11730
    %v11732 = vld [vmem:[%s7] sm:$0xf]
    %v11733 = vld [vmem:[%s7 + $0x4] sm:$0xf]
    %v11734 = vld [vmem:[%s7 + $0x8] sm:$0xf]
    %v11735 = vld [vmem:[%s7 + $0xc] sm:$0xf]
    %v11736 = vld [vmem:[%s7 + $0x10] sm:$0xf]
    %v11737 = vld [vmem:[%s7 + $0x14] sm:$0xf]
    %v11738 = vld [vmem:[%s7 + $0x18] sm:$0xf]
    %v11739 = vld [vmem:[%s7 + $0x1c] sm:$0xf]
    %v11740 = vld [vmem:[%s7 + $0x20] sm:$0xf]
    %v11741 = vld [vmem:[%s7 + $0x24] sm:$0xf]
    %v11742 = vld [vmem:[%s7 + $0x28] sm:$0xf]
    %v11743 = vld [vmem:[%s7 + $0x2c] sm:$0xf]
    %v11744 = vld [vmem:[%s7 + $0x30] sm:$0xf]
    %v11745 = vld [vmem:[%s7 + $0x34] sm:$0xf]
    %v11746 = vld [vmem:[%s7 + $0x38] sm:$0xf]
    %v11747 = vld [vmem:[%s7 + $0x3c] sm:$0xf]
    %v11748 = vld [vmem:[%s8] sm:$0x1]
    %v11750 = vlaneseq
    %v11751 = vshrl.u32 %v11750, 7
    %v11752 = vsub.s32 0, %v11751
    %v11753 = vrot.slane %v11748, %v11752
    %v11771 = vunpack.c.l.b16 %v11732
    %v11772 = vunpack.c.l.b16 %v11733
    %v11773 = vunpack.c.l.b16 %v11734
    %v11774 = vunpack.c.l.b16 %v11735
    %v11775 = vunpack.c.l.b16 %v11736
    %v11776 = vunpack.c.l.b16 %v11737
    %v11777 = vunpack.c.l.b16 %v11738
    %v11778 = vunpack.c.l.b16 %v11739
    %v11779 = vunpack.c.l.b16 %v11740
    %v11780 = vunpack.c.l.b16 %v11741
    %v11781 = vunpack.c.l.b16 %v11742
    %v11782 = vunpack.c.l.b16 %v11743
    %v11783 = vunpack.c.l.b16 %v11744
    %v11784 = vunpack.c.l.b16 %v11745
    %v11785 = vunpack.c.l.b16 %v11746
    %v11786 = vunpack.c.l.b16 %v11747
    %v11787 = vpack.c.b16 %v11772, %v11771
    %v11788 = vpack.c.b16 %v11774, %v11773
    %v11789 = vpack.c.b16 %v11776, %v11775
    %v11790 = vpack.c.b16 %v11778, %v11777
    %v11791 = vpack.c.b16 %v11780, %v11779
    %v11792 = vpack.c.b16 %v11782, %v11781
    %v11793 = vpack.c.b16 %v11784, %v11783
    %v11794 = vpack.c.b16 %v11786, %v11785
    %11803 = vmatprep.subr.bf16.mxu0 0
    %11804 = vmatpush1.bf16.msra.mxu0 %v11787
    %11805 = vmatprep.subr.bf16.mxu0 0
    %11806 = vmatpush1.bf16.msra.mxu0 %v11788
    %11807 = vmatprep.subr.bf16.mxu0 0
    %11808 = vmatpush1.bf16.msra.mxu0 %v11789
    %11809 = vmatprep.subr.bf16.mxu0 0
    %11810 = vmatpush1.bf16.msra.mxu0 %v11790
    %11811 = vmatprep.subr.bf16.mxu0 0
    %11812 = vmatpush1.bf16.msra.mxu0 %v11791
    %11813 = vmatprep.subr.bf16.mxu0 0
    %11814 = vmatpush1.bf16.msra.mxu0 %v11792
    %11815 = vmatprep.subr.bf16.mxu0 0
    %11816 = vmatpush1.bf16.msra.mxu0 %v11793
    %11817 = vmatprep.subr.bf16.mxu0 0
    %11818 = vmatpush1.bf16.msra.mxu0 %v11794
    %11819 = vmatprep.subr.bf16.mxu0 0
    %11820 = vmatpush1.bf16.msra.mxu0 0
    %11821 = vmatprep.subr.bf16.mxu0 0
    %11822 = vmatpush1.bf16.msra.mxu0 0
    %11823 = vmatprep.subr.bf16.mxu0 0
    %11824 = vmatpush1.bf16.msra.mxu0 0
    %11825 = vmatprep.subr.bf16.mxu0 0
    %11826 = vmatpush1.bf16.msra.mxu0 0
    %11827 = vmatprep.subr.bf16.mxu0 0
    %11828 = vmatpush1.bf16.msra.mxu0 0
    %11829 = vmatprep.subr.bf16.mxu0 0
    %11830 = vmatpush1.bf16.msra.mxu0 0
    %11831 = vmatprep.subr.bf16.mxu0 0
    %11832 = vmatpush1.bf16.msra.mxu0 0
    %11833 = vmatprep.subr.bf16.mxu0 0
    %11834 = vmatpush1.bf16.msra.mxu0 0
    %11835 = vmatprep.mubr.bf16.mxu0 0
    %11836 = vmatmul.mubr.bf16.gmra.mrb[0].mxu0 %v11731
    %v11837 = vpop.f32.mrb[0].mxu0
    %v11838 = vadd.f32 %v11753, %v11837
    %v11839 = vpop.f32.mrb[0].mxu0
    %v11840 = vpop.f32.mrb[0].mxu0
    %v11841 = vpop.f32.mrb[0].mxu0
    %11842 = vdwg.mxu0
    %11843 = vst [vmem:[#allocation6] sm:$0x3] %v11838
    // Predicated region
    $region38: #{simple_cnn_forward.1} parent=1 // pred_check
      _
    $region39: #{simple_cnn_forward.1} parent=1 // pred_check_branch
      %11845 = sbr.rel (0) target = $region41
    $region40: #{simple_cnn_forward.1} parent=1 // pred_region
      %s11847 = ssub.s32 32, 32
      %11848 = vsyncadd [#allocation7], %s11847
      %s11850 = sshll.u32 [#allocation6], 4
      %s11851 = int_to_ptr.vmem [resolvable:$true] %s11850
      %11853 = dma.vmem_to_hbm [thread:$0]  %s11851, 32, %s9, [#allocation7]
    $region41: #{simple_cnn_forward.1} parent=1 // pred_fallthru
      _
    // Predicated region
    $region42: #{simple_cnn_forward.1} parent=1 // pred_check
      _
    $region43: #{simple_cnn_forward.1} parent=1 // pred_check_branch
      %11855 = sbr.rel (0) target = $region45
    $region44: #{simple_cnn_forward.1} parent=1 // pred_region
      %11856 = dma.done [#allocation7], 32
    $region45: #{simple_cnn_forward.1} parent=1 // pred_fallthru
      _
    %11857 = vsyncpa [#allocation7], 1

</llo_original>
